<compile_context>
chip_gen: v6e
topology: v6e:2x2x1
jax: 0.10.0
libtpu: 0.0.40
codegen_flags: <defaults>
</compile_context>

<pallas_src>
import functools

import jax
import jax.numpy as jnp
from jax.experimental import pallas as pl
from jax.experimental.pallas import tpu as pltpu


def _round_up(x, m):
    return ((x + m - 1) // m) * m


def _pick_tile_m(m):
    # Big tiles for big problems, but keep >= ~8 grid steps so the parallel M axis
    # can still feed both v7x TensorCores on small inputs.
    for tm in (512, 256, 128):
        if m >= 8 * tm:
            return tm
    return 128


# ----------------------------------------------------------------------------
# Kernel 1: fused matmul + bias + ReLU (BN scale pre-folded into the weights)
# ----------------------------------------------------------------------------
def _mm_bias_relu_kernel(a_ref, w_ref, b_ref, o_ref):
    acc = jnp.dot(a_ref[...], w_ref[...], preferred_element_type=jnp.float32)
    o_ref[...] = jnp.maximum(acc + b_ref[...], 0.0).astype(o_ref.dtype)


def matmul_bias_relu(a, w, b):
    """a: (M, K) bf16, w: (K, N) bf16, b: (1, N) f32 -> (M, N) f32."""
    M, K = a.shape
    Nout = w.shape[1]
    tm = _pick_tile_m(M)
    Mp = _round_up(M, tm)
    if Mp != M:                       # demo shapes never hit this path
        a = jnp.pad(a, ((0, Mp - M), (0, 0)))
    out = pl.pallas_call(
        _mm_bias_relu_kernel,
        out_shape=jax.ShapeDtypeStruct((Mp, Nout), jnp.float32),
        grid=(Mp // tm,),
        in_specs=[
            pl.BlockSpec((tm, K), lambda i: (i, 0)),
            pl.BlockSpec((K, Nout), lambda i: (0, 0)),
            pl.BlockSpec((1, Nout), lambda i: (0, 0)),
        ],
        out_specs=pl.BlockSpec((tm, Nout), lambda i: (i, 0)),
        compiler_params=pltpu.CompilerParams(dimension_semantics=("parallel",)),
    )(a, w, b)
    return out[:M] if Mp != M else out


# ----------------------------------------------------------------------------
# Kernel 2: (1,3,3) conv, stride 1, padding (0,1,1)
#   9 taps = 9 shifted matmuls over ONE resident, flattened frame block.
#   Rows of the block are the flattened (H+3, W+2) zero-padded frame, so tap
#   (dy, dx) is just a row offset dy*(W+2)+dx; no im2col in HBM.
# ----------------------------------------------------------------------------
def _spatial_conv_kernel(x_ref, w_ref, b_ref, o_ref, *, rv, offs):
    cout = o_ref.shape[-1]
    acc = jnp.zeros((rv, cout), jnp.float32)
    for t, off in enumerate(offs):
        xs = x_ref[pl.ds(off, rv), :].astype(jnp.bfloat16)
        acc = acc + jnp.dot(xs, w_ref[t], preferred_element_type=jnp.float32)
    o_ref[...] = jnp.maximum(acc + b_ref[...], 0.0).astype(o_ref.dtype)


def spatial_conv3x3(x5, w, b):
    """x5: (N, D, H, W, Cin) f32; w: (9, Cin, Cout) bf16; b: (1, Cout) f32.

    Returns (N, D, H, W, Cout) bf16.
    """
    N, D, H, W, Cin = x5.shape
    Cout = w.shape[-1]
    Wp = W + 2
    Rv = H * Wp                  # rows computed per frame (incl. 2 junk cols per row)
    R = (H + 3) * Wp             # rows stored per frame (extra pad keeps all taps in-bounds)
    xp = jnp.pad(x5, ((0, 0), (0, 0), (1, 2), (1, 1), (0, 0)))
    a = xp.reshape(N * D, R, Cin)
    offs = tuple(dy * Wp + dx for dy in range(3) for dx in range(3))
    out = pl.pallas_call(
        functools.partial(_spatial_conv_kernel, rv=Rv, offs=offs),
        out_shape=jax.ShapeDtypeStruct((N * D, Rv, Cout), jnp.bfloat16),
        grid=(N * D,),
        in_specs=[
            pl.BlockSpec((None, R, Cin), lambda g: (g, 0, 0)),
            pl.BlockSpec((9, Cin, Cout), lambda g: (0, 0, 0)),
            pl.BlockSpec((1, Cout), lambda g: (0, 0)),
        ],
        out_specs=pl.BlockSpec((None, Rv, Cout), lambda g: (g, 0, 0)),
        compiler_params=pltpu.CompilerParams(dimension_semantics=("parallel",)),
    )(a, w, b)
    # drop the 2 junk columns that come from the flattened-row formulation
    return out.reshape(N, D, H, Wp, Cout)[:, :, :, :W, :]


# ----------------------------------------------------------------------------
# Kernel 3: (3,1,1) conv, stride 1, padding (1,0,0)
#   3 taps = "arbitrary" grid reduction over D-shifted frame blocks, VMEM f32 acc.
# ----------------------------------------------------------------------------
def _temporal_conv_kernel(x_ref, w_ref, b_ref, o_ref, acc_ref):
    t = pl.program_id(2)

    @pl.when(t == 0)
    def _():
        acc_ref[...] = jnp.zeros_like(acc_ref)

    acc_ref[...] += jnp.dot(x_ref[...], w_ref[...],
                            preferred_element_type=jnp.float32)

    @pl.when(t == pl.num_programs(2) - 1)
    def _():
        o_ref[...] = jnp.maximum(acc_ref[...] + b_ref[...], 0.0).astype(o_ref.dtype)


def temporal_conv3(x5, w, b):
    """x5: (N, D, H, W, Cin) bf16; w: (3, Cin, Cout) bf16; b: (1, Cout) f32.

    Returns (N, D, H*W, Cout) f32.
    """
    N, D, H, W, Cin = x5.shape
    HW = H * W
    Cout = w.shape[-1]
    xp = jnp.pad(x5.reshape(N, D, HW, Cin), ((0, 0), (1, 1), (0, 0), (0, 0)))
    return pl.pallas_call(
        _temporal_conv_kernel,
        out_shape=jax.ShapeDtypeStruct((N, D, HW, Cout), jnp.float32),
        grid=(N, D, 3),
        in_specs=[
            pl.BlockSpec((None, None, HW, Cin), lambda n, d, t: (n, d + t, 0, 0)),
            pl.BlockSpec((None, Cin, Cout), lambda n, d, t: (t, 0, 0)),
            pl.BlockSpec((1, Cout), lambda n, d, t: (0, 0)),
        ],
        out_specs=pl.BlockSpec((None, None, HW, Cout), lambda n, d, t: (n, d, 0, 0)),
        scratch_shapes=[pltpu.VMEM((HW, Cout), jnp.float32)],
        compiler_params=pltpu.CompilerParams(
            dimension_semantics=("parallel", "parallel", "arbitrary")),
    )(xp, w, b)


# ----------------------------------------------------------------------------
# Kernels 4+5: MaxPool3d(3, stride=1, pad=1) fused with the branch3 1x1x1 conv
#   pass 1: 3x3 spatial running max over a resident flattened frame block
#   pass 2: 3-tap temporal max (grid reduction) + fused matmul + bias + ReLU
# ----------------------------------------------------------------------------
def _pool_spatial_kernel(x_ref, o_ref, *, rv, offs):
    m = x_ref[pl.ds(offs[0], rv), :]
    for off in offs[1:]:
        m = jnp.maximum(m, x_ref[pl.ds(off, rv), :])
    o_ref[...] = m


def _pool_dmax_mm_kernel(x_ref, w_ref, b_ref, o_ref, m_ref):
    t = pl.program_id(2)

    @pl.when(t == 0)
    def _():
        m_ref[...] = jnp.full_like(m_ref, -jnp.inf)

    m_ref[...] = jnp.maximum(m_ref[...], x_ref[...])

    @pl.when(t == pl.num_programs(2) - 1)
    def _():
        acc = jnp.dot(m_ref[...].astype(jnp.bfloat16), w_ref[...],
                      preferred_element_type=jnp.float32)
        o_ref[...] = jnp.maximum(acc + b_ref[...], 0.0).astype(o_ref.dtype)


def maxpool3_conv1x1(x5, w, b):
    """x5: (N, D, H, W, C) f32; w: (C, Cout) bf16; b: (1, Cout) f32 -> (M, Cout) f32."""
    N, D, H, W, C = x5.shape
    HW = H * W
    Cout = w.shape[-1]
    Wp = W + 2
    Rv = H * Wp
    R = (H + 3) * Wp
    offs = tuple(dy * Wp + dx for dy in range(3) for dx in range(3))

    # pass 1: spatial 3x3 max (pool padding is -inf, as in PyTorch MaxPool3d)
    xp = jnp.pad(x5, ((0, 0), (0, 0), (1, 2), (1, 1), (0, 0)),
                 constant_values=-jnp.inf).reshape(N * D, R, C)
    sp = pl.pallas_call(
        functools.partial(_pool_spatial_kernel, rv=Rv, offs=offs),
        out_shape=jax.ShapeDtypeStruct((N * D, Rv, C), jnp.float32),
        grid=(N * D,),
        in_specs=[pl.BlockSpec((None, R, C), lambda g: (g, 0, 0))],
        out_specs=pl.BlockSpec((None, Rv, C), lambda g: (g, 0, 0)),
        compiler_params=pltpu.CompilerParams(dimension_semantics=("parallel",)),
    )(xp)
    sp = sp.reshape(N, D, H, Wp, C)[:, :, :, :W, :].reshape(N, D, HW, C)

    # pass 2: temporal 3-tap max fused with the 1x1x1 conv + bias + ReLU
    spp = jnp.pad(sp, ((0, 0), (1, 1), (0, 0), (0, 0)),
                  constant_values=-jnp.inf)
    out = pl.pallas_call(
        _pool_dmax_mm_kernel,
        out_shape=jax.ShapeDtypeStruct((N, D, HW, Cout), jnp.float32),
        grid=(N, D, 3),
        in_specs=[
            pl.BlockSpec((None, None, HW, C), lambda n, d, t: (n, d + t, 0, 0)),
            pl.BlockSpec((C, Cout), lambda n, d, t: (0, 0)),
            pl.BlockSpec((1, Cout), lambda n, d, t: (0, 0)),
        ],
        out_specs=pl.BlockSpec((None, None, HW, Cout), lambda n, d, t: (n, d, 0, 0)),
        scratch_shapes=[pltpu.VMEM((HW, C), jnp.float32)],
        compiler_params=pltpu.CompilerParams(
            dimension_semantics=("parallel", "parallel", "arbitrary")),
    )(spp, w, b)
    return out.reshape(N * D * HW, Cout)


# ----------------------------------------------------------------------------
# Deterministic parameter construction (PyTorch layouts, BN folded, packed, bf16)
# ----------------------------------------------------------------------------
def init_params(seed=0):
    keys = iter(jax.random.split(jax.random.PRNGKey(seed + 1), 64))
    p = {}

    def bn(c, eps=1e-3):
        k1, k2, k3, k4 = jax.random.split(next(keys), 4)
        gamma = jax.random.uniform(k1, (c,), jnp.float32, 0.5, 1.5)
        beta = jax.random.normal(k2, (c,), jnp.float32) * 0.1
        mean = jax.random.normal(k3, (c,), jnp.float32) * 0.1
        var = jax.random.uniform(k4, (c,), jnp.float32, 0.5, 1.5)
        s = gamma / jnp.sqrt(var + eps)
        return s, beta - mean * s

    def conv_w(cout, cin, kd, kh, kw):
        fan_in = cin * kd * kh * kw
        # torch Conv3d weight layout: (Cout, Cin, kD, kH, kW)
        return jax.random.normal(next(keys), (cout, cin, kd, kh, kw),
                                 jnp.float32) / jnp.sqrt(fan_in)

    def fold_1x1(cout, cin):
        w = conv_w(cout, cin, 1, 1, 1).reshape(cout, cin).T          # (Cin, Cout)
        s, b = bn(cout)
        return w * s[None, :], b

    # fused (branch0 | branch1-1x1 | branch2-1x1) over the shared 512-ch input
    w0, b0 = fold_1x1(112, 512)
    w1a, b1a = fold_1x1(144, 512)
    w2a, b2a = fold_1x1(32, 512)
    p["c1_w"] = jnp.concatenate([w0, w1a, w2a], axis=1).astype(jnp.bfloat16)  # (512, 288)
    p["c1_b"] = jnp.concatenate([b0, b1a, b2a])[None, :]                      # (1, 288) f32

    def fold_spatial(cout, cin):                                     # (1,3,3) conv
        w = conv_w(cout, cin, 1, 3, 3)
        wm = jnp.transpose(w[:, :, 0], (2, 3, 1, 0)).reshape(9, cin, cout)
        s, b = bn(cout)
        return (wm * s[None, None, :]).astype(jnp.bfloat16), b[None, :]

    def fold_temporal(cout, cin):                                    # (3,1,1) conv
        w = conv_w(cout, cin, 3, 1, 1)
        wm = jnp.transpose(w[:, :, :, 0, 0], (2, 1, 0))              # (3, Cin, Cout)
        s, b = bn(cout)
        return (wm * s[None, None, :]).astype(jnp.bfloat16), b[None, :]

    p["b1s_w"], p["b1s_b"] = fold_spatial(288, 144)
    p["b1t_w"], p["b1t_b"] = fold_temporal(288, 288)
    p["b2s_w"], p["b2s_b"] = fold_spatial(64, 32)
    p["b2t_w"], p["b2t_b"] = fold_temporal(64, 64)

    w3, b3 = fold_1x1(64, 512)
    p["b3_w"] = w3.astype(jnp.bfloat16)
    p["b3_b"] = b3[None, :]
    return p


# ----------------------------------------------------------------------------
# Mixed4e forward
# ----------------------------------------------------------------------------
def mixed4e_forward(x_ncdhw, p):
    x = jnp.transpose(x_ncdhw, (0, 2, 3, 4, 1)).astype(jnp.float32)   # NDHWC
    N, D, H, W, C = x.shape
    M = N * D * H * W

    # Fused 1x1x1 convs (512 -> 112 | 144 | 32): the shared input is read once.
    xf = x.reshape(M, C).astype(jnp.bfloat16)
    y = matmul_bias_relu(xf, p["c1_w"], p["c1_b"])          # (M, 288) f32
    x0 = y[:, :112]
    h1 = y[:, 112:256].reshape(N, D, H, W, 144)
    h2 = y[:, 256:288].reshape(N, D, H, W, 32)

    # branch1: SepConv3d(144 -> 288, k=3, pad=1)
    s1 = spatial_conv3x3(h1, p["b1s_w"], p["b1s_b"])
    x1 = temporal_conv3(s1, p["b1t_w"], p["b1t_b"]).reshape(M, -1)

    # branch2: SepConv3d(32 -> 64, k=3, pad=1)
    s2 = spatial_conv3x3(h2, p["b2s_w"], p["b2s_b"])
    x2 = temporal_conv3(s2, p["b2t_w"], p["b2t_b"]).reshape(M, -1)

    # branch3: MaxPool3d(3, 1, 1) fused with BasicConv3d(512 -> 64)
    x3 = maxpool3_conv1x1(x, p["b3_w"], p["b3_b"])

    # TODO(synk): the final concat could also be folded into per-branch column-slice
    # stores of one (M, 528) buffer; kept as a plain concatenate for simplicity.
    out = jnp.concatenate([x0, x1, x2, x3], axis=-1)        # (M, 112+288+64+64 = 528)
    out = out.reshape(N, D, H, W, 528)
    return jnp.transpose(out, (0, 4, 1, 2, 3))              # back to NCDHW


if __name__ == "__main__":
    key = jax.random.PRNGKey(0)
    # Small but module-consistent shape: batch=2, Cin=512 (fixed by Mixed4e), D=4, H=W=8.
    x = jax.random.normal(key, (2, 512, 4, 8, 8), jnp.float32)
    params = init_params(0)

    fwd = jax.jit(mixed4e_forward)
    out = jax.block_until_ready(fwd(x, params))

    assert out.shape == (2, 528, 4, 8, 8), out.shape
    assert bool(jnp.all(jnp.isfinite(out)))
    print("KERNEL_OK")
</pallas_src>

<mosaic_0001>
module attributes {stable_mosaic.version = 11 : i64} {
  func.func @_pool_spatial_kernel(%arg0: i32, %arg1: memref<1x110x512xf32, #tpu.memory_space<vmem>>, %arg2: memref<1x80x512xf32, #tpu.memory_space<vmem>>) attributes {dimension_semantics = [#tpu.dimension_semantics<parallel>], iteration_bounds = array<i64: 8>, scalar_prefetch = 0 : i64, scratch_operands = 0 : i64, tpu.core_type = #tpu.core_type<tc>, window_params = [{transform_indices = @transform_0, window_bounds = array<i64: 1, 110, 512>}, {transform_indices = @transform_1, window_bounds = array<i64: 1, 80, 512>}]} {
    %c0 = arith.constant 0 : index
    %c0_0 = arith.constant 0 : index
    %c0_1 = arith.constant 0 : index
    %0 = vector.load %arg1[%c0, %c0_0, %c0_1] : memref<1x110x512xf32, #tpu.memory_space<vmem>>, vector<1x80x512xf32>
    %1 = vector.shape_cast %0 : vector<1x80x512xf32> to vector<80x512xf32>
    %c0_2 = arith.constant 0 : index
    %c1 = arith.constant 1 : index
    %c0_3 = arith.constant 0 : index
    %2 = vector.load %arg1[%c0_2, %c1, %c0_3] : memref<1x110x512xf32, #tpu.memory_space<vmem>>, vector<1x80x512xf32>
    %3 = vector.shape_cast %2 : vector<1x80x512xf32> to vector<80x512xf32>
    %4 = arith.maximumf %1, %3 : vector<80x512xf32>
    %c0_4 = arith.constant 0 : index
    %c2 = arith.constant 2 : index
    %c0_5 = arith.constant 0 : index
    %5 = vector.load %arg1[%c0_4, %c2, %c0_5] : memref<1x110x512xf32, #tpu.memory_space<vmem>>, vector<1x80x512xf32>
    %6 = vector.shape_cast %5 : vector<1x80x512xf32> to vector<80x512xf32>
    %7 = arith.maximumf %4, %6 : vector<80x512xf32>
    %c0_6 = arith.constant 0 : index
    %c10 = arith.constant 10 : index
    %c0_7 = arith.constant 0 : index
    %8 = vector.load %arg1[%c0_6, %c10, %c0_7] : memref<1x110x512xf32, #tpu.memory_space<vmem>>, vector<1x80x512xf32>
    %9 = vector.shape_cast %8 : vector<1x80x512xf32> to vector<80x512xf32>
    %10 = arith.maximumf %7, %9 : vector<80x512xf32>
    %c0_8 = arith.constant 0 : index
    %c11 = arith.constant 11 : index
    %c0_9 = arith.constant 0 : index
    %11 = vector.load %arg1[%c0_8, %c11, %c0_9] : memref<1x110x512xf32, #tpu.memory_space<vmem>>, vector<1x80x512xf32>
    %12 = vector.shape_cast %11 : vector<1x80x512xf32> to vector<80x512xf32>
    %13 = arith.maximumf %10, %12 : vector<80x512xf32>
    %c0_10 = arith.constant 0 : index
    %c12 = arith.constant 12 : index
    %c0_11 = arith.constant 0 : index
    %14 = vector.load %arg1[%c0_10, %c12, %c0_11] : memref<1x110x512xf32, #tpu.memory_space<vmem>>, vector<1x80x512xf32>
    %15 = vector.shape_cast %14 : vector<1x80x512xf32> to vector<80x512xf32>
    %16 = arith.maximumf %13, %15 : vector<80x512xf32>
    %c0_12 = arith.constant 0 : index
    %c20 = arith.constant 20 : index
    %c0_13 = arith.constant 0 : index
    %17 = vector.load %arg1[%c0_12, %c20, %c0_13] : memref<1x110x512xf32, #tpu.memory_space<vmem>>, vector<1x80x512xf32>
    %18 = vector.shape_cast %17 : vector<1x80x512xf32> to vector<80x512xf32>
    %19 = arith.maximumf %16, %18 : vector<80x512xf32>
    %c0_14 = arith.constant 0 : index
    %c21 = arith.constant 21 : index
    %c0_15 = arith.constant 0 : index
    %20 = vector.load %arg1[%c0_14, %c21, %c0_15] : memref<1x110x512xf32, #tpu.memory_space<vmem>>, vector<1x80x512xf32>
    %21 = vector.shape_cast %20 : vector<1x80x512xf32> to vector<80x512xf32>
    %22 = arith.maximumf %19, %21 : vector<80x512xf32>
    %c0_16 = arith.constant 0 : index
    %c22 = arith.constant 22 : index
    %c0_17 = arith.constant 0 : index
    %23 = vector.load %arg1[%c0_16, %c22, %c0_17] : memref<1x110x512xf32, #tpu.memory_space<vmem>>, vector<1x80x512xf32>
    %24 = vector.shape_cast %23 : vector<1x80x512xf32> to vector<80x512xf32>
    %25 = arith.maximumf %22, %24 : vector<80x512xf32>
    %c0_18 = arith.constant 0 : index
    %c0_19 = arith.constant 0 : index
    %c0_20 = arith.constant 0 : index
    %26 = vector.load %arg2[%c0_18, %c0_19, %c0_20] : memref<1x80x512xf32, #tpu.memory_space<vmem>>, vector<1x80x512xf32>
    %27 = vector.shape_cast %26 : vector<1x80x512xf32> to vector<80x512xf32>
    %28 = vector.shape_cast %25 : vector<80x512xf32> to vector<1x80x512xf32>
    tpu.vector_store %arg2[%c0_18, %c0_19, %c0_20], %28 {strides = array<i32>} : memref<1x80x512xf32, #tpu.memory_space<vmem>>, vector<1x80x512xf32>,
    return
  }
  func.func @transform_0(%arg0: i32) -> (i32, i32, i32) {
    %c0_i32 = arith.constant 0 : i32
    %c0_i32_0 = arith.constant 0 : i32
    %c0_i32_1 = arith.constant 0 : i32
    return %arg0, %c0_i32, %c0_i32_0 : i32, i32, i32
  }
  func.func @transform_1(%arg0: i32) -> (i32, i32, i32) {
    %c0_i32 = arith.constant 0 : i32
    %c0_i32_0 = arith.constant 0 : i32
    %c0_i32_1 = arith.constant 0 : i32
    return %arg0, %c0_i32, %c0_i32_0 : i32, i32, i32
  }
}

module attributes {stable_mosaic.version = 11 : i64} {
  func.func @_pool_dmax_mm_kernel(%arg0: i32, %arg1: i32, %arg2: i32, %arg3: memref<1x1x64x512xf32, #tpu.memory_space<vmem>>, %arg4: memref<512x64xbf16, #tpu.memory_space<vmem>>, %arg5: memref<1x64xf32, #tpu.memory_space<vmem>>, %arg6: memref<1x1x64x64xf32, #tpu.memory_space<vmem>>, %arg7: memref<64x512xf32, #tpu.memory_space<vmem>>) attributes {dimension_semantics = [#tpu.dimension_semantics<parallel>, #tpu.dimension_semantics<parallel>, #tpu.dimension_semantics<arbitrary>], iteration_bounds = array<i64: 2, 4, 3>, scalar_prefetch = 0 : i64, scratch_operands = 1 : i64, tpu.core_type = #tpu.core_type<tc>, window_params = [{transform_indices = @transform_0, window_bounds = array<i64: 1, 1, 64, 512>}, {pipeline_mode = #tpu.pipeline_mode<synchronous>, transform_indices = @transform_1, window_bounds = array<i64: 512, 64>}, {pipeline_mode = #tpu.pipeline_mode<synchronous>, transform_indices = @transform_2, window_bounds = array<i64: 1, 64>}, {transform_indices = @transform_3, window_bounds = array<i64: 1, 1, 64, 64>}]} {
    %c0_i32 = arith.constant 0 : i32
    %0 = arith.cmpi eq, %arg2, %c0_i32 : i32
    %1 = arith.extui %0 : i1 to i32
    %c0_i32_0 = arith.constant 0 : i32
    %2 = arith.cmpi ne, %1, %c0_i32_0 : i32
    scf.if %2 {
      %cst = arith.constant 0xFF800000 : f32
      %11 = vector.broadcast %cst : f32 to vector<64x512xf32>
      %c0_9 = arith.constant 0 : index
      %c0_10 = arith.constant 0 : index
      %12 = vector.load %arg7[%c0_9, %c0_10] : memref<64x512xf32, #tpu.memory_space<vmem>>, vector<64x512xf32>
      tpu.vector_store %arg7[%c0_9, %c0_10], %11 {strides = array<i32>} : memref<64x512xf32, #tpu.memory_space<vmem>>, vector<64x512xf32>,
    } else {
    }
    %c0 = arith.constant 0 : index
    %c0_1 = arith.constant 0 : index
    %3 = vector.load %arg7[%c0, %c0_1] : memref<64x512xf32, #tpu.memory_space<vmem>>, vector<64x512xf32>
    %c0_2 = arith.constant 0 : index
    %c0_3 = arith.constant 0 : index
    %c0_4 = arith.constant 0 : index
    %c0_5 = arith.constant 0 : index
    %4 = vector.load %arg3[%c0_2, %c0_3, %c0_4, %c0_5] : memref<1x1x64x512xf32, #tpu.memory_space<vmem>>, vector<1x1x64x512xf32>
    %5 = vector.shape_cast %4 : vector<1x1x64x512xf32> to vector<64x512xf32>
    %6 = arith.maximumf %3, %5 : vector<64x512xf32>
    %c0_6 = arith.constant 0 : index
    %c0_7 = arith.constant 0 : index
    %7 = vector.load %arg7[%c0_6, %c0_7] : memref<64x512xf32, #tpu.memory_space<vmem>>, vector<64x512xf32>
    tpu.vector_store %arg7[%c0_6, %c0_7], %6 {strides = array<i32>} : memref<64x512xf32, #tpu.memory_space<vmem>>, vector<64x512xf32>,
    %c2_i32 = arith.constant 2 : i32
    %8 = arith.cmpi eq, %arg2, %c2_i32 : i32
    %9 = arith.extui %8 : i1 to i32
    %c0_i32_8 = arith.constant 0 : i32
    %10 = arith.cmpi ne, %9, %c0_i32_8 : i32
    scf.if %10 {
      %c0_9 = arith.constant 0 : index
      %c0_10 = arith.constant 0 : index
      %11 = vector.load %arg7[%c0_9, %c0_10] : memref<64x512xf32, #tpu.memory_space<vmem>>, vector<64x512xf32>
      %12 = arith.truncf %11 : vector<64x512xf32> to vector<64x512xbf16>
      %c0_11 = arith.constant 0 : index
      %c0_12 = arith.constant 0 : index
      %13 = vector.load %arg4[%c0_11, %c0_12] : memref<512x64xbf16, #tpu.memory_space<vmem>>, vector<512x64xbf16>
      %cst = arith.constant dense<0.000000e+00> : vector<64x64xf32>
      %14 = tpu.matmul %12, %13, %cst {dimension_numbers = #tpu.dot_dimension_numbers<[1], [0], [0], [1], [0, 0, 1, 1], [], []>} : vector<64x512xbf16>, vector<512x64xbf16>, vector<64x64xf32> -> vector<64x64xf32>
      %c0_13 = arith.constant 0 : index
      %c0_14 = arith.constant 0 : index
      %15 = vector.load %arg5[%c0_13, %c0_14] : memref<1x64xf32, #tpu.memory_space<vmem>>, vector<1x64xf32>
      %16 = vector.broadcast %15 : vector<1x64xf32> to vector<64x64xf32>
      %17 = arith.addf %14, %16 : vector<64x64xf32>
      %cst_15 = arith.constant 0.000000e+00 : f32
      %18 = vector.broadcast %cst_15 : f32 to vector<64x64xf32>
      %19 = arith.maximumf %17, %18 : vector<64x64xf32>
      %c0_16 = arith.constant 0 : index
      %c0_17 = arith.constant 0 : index
      %c0_18 = arith.constant 0 : index
      %c0_19 = arith.constant 0 : index
      %20 = vector.load %arg6[%c0_16, %c0_17, %c0_18, %c0_19] : memref<1x1x64x64xf32, #tpu.memory_space<vmem>>, vector<1x1x64x64xf32>
      %21 = vector.shape_cast %20 : vector<1x1x64x64xf32> to vector<64x64xf32>
      %22 = vector.shape_cast %19 : vector<64x64xf32> to vector<1x1x64x64xf32>
      tpu.vector_store %arg6[%c0_16, %c0_17, %c0_18, %c0_19], %22 {strides = array<i32>} : memref<1x1x64x64xf32, #tpu.memory_space<vmem>>, vector<1x1x64x64xf32>,
    } else {
    }
    return
  }
  func.func @transform_0(%arg0: i32, %arg1: i32, %arg2: i32) -> (i32, i32, i32, i32) {
    %0 = arith.addi %arg1, %arg2 : i32
    %c0_i32 = arith.constant 0 : i32
    %c0_i32_0 = arith.constant 0 : i32
    %c0_i32_1 = arith.constant 0 : i32
    return %arg0, %0, %c0_i32, %c0_i32_0 : i32, i32, i32, i32
  }
  func.func @transform_1(%arg0: i32, %arg1: i32, %arg2: i32) -> (i32, i32) {
    %c0_i32 = arith.constant 0 : i32
    %c0_i32_0 = arith.constant 0 : i32
    %c0_i32_1 = arith.constant 0 : i32
    return %c0_i32, %c0_i32_0 : i32, i32
  }
  func.func @transform_2(%arg0: i32, %arg1: i32, %arg2: i32) -> (i32, i32) {
    %c0_i32 = arith.constant 0 : i32
    %c0_i32_0 = arith.constant 0 : i32
    %c0_i32_1 = arith.constant 0 : i32
    return %c0_i32, %c0_i32_0 : i32, i32
  }
  func.func @transform_3(%arg0: i32, %arg1: i32, %arg2: i32) -> (i32, i32, i32, i32) {
    %c0_i32 = arith.constant 0 : i32
    %c0_i32_0 = arith.constant 0 : i32
    %c0_i32_1 = arith.constant 0 : i32
    return %arg0, %arg1, %c0_i32, %c0_i32_0 : i32, i32, i32, i32
  }
}

module attributes {stable_mosaic.version = 11 : i64} {
  func.func @_mm_bias_relu_kernel(%arg0: i32, %arg1: memref<128x512xbf16, #tpu.memory_space<vmem>>, %arg2: memref<512x288xbf16, #tpu.memory_space<vmem>>, %arg3: memref<1x288xf32, #tpu.memory_space<vmem>>, %arg4: memref<128x288xf32, #tpu.memory_space<vmem>>) attributes {dimension_semantics = [#tpu.dimension_semantics<parallel>], iteration_bounds = array<i64: 4>, scalar_prefetch = 0 : i64, scratch_operands = 0 : i64, tpu.core_type = #tpu.core_type<tc>, window_params = [{transform_indices = @transform_0, window_bounds = array<i64: 128, 512>}, {pipeline_mode = #tpu.pipeline_mode<synchronous>, transform_indices = @transform_1, window_bounds = array<i64: 512, 288>}, {pipeline_mode = #tpu.pipeline_mode<synchronous>, transform_indices = @transform_2, window_bounds = array<i64: 1, 288>}, {transform_indices = @transform_3, window_bounds = array<i64: 128, 288>}]} {
    %c0 = arith.constant 0 : index
    %c0_0 = arith.constant 0 : index
    %0 = vector.load %arg1[%c0, %c0_0] : memref<128x512xbf16, #tpu.memory_space<vmem>>, vector<128x512xbf16>
    %c0_1 = arith.constant 0 : index
    %c0_2 = arith.constant 0 : index
    %1 = vector.load %arg2[%c0_1, %c0_2] : memref<512x288xbf16, #tpu.memory_space<vmem>>, vector<512x288xbf16>
    %cst = arith.constant dense<0.000000e+00> : vector<128x288xf32>
    %2 = tpu.matmul %0, %1, %cst {dimension_numbers = #tpu.dot_dimension_numbers<[1], [0], [0], [1], [0, 0, 1, 1], [], []>} : vector<128x512xbf16>, vector<512x288xbf16>, vector<128x288xf32> -> vector<128x288xf32>
    %c0_3 = arith.constant 0 : index
    %c0_4 = arith.constant 0 : index
    %3 = vector.load %arg3[%c0_3, %c0_4] : memref<1x288xf32, #tpu.memory_space<vmem>>, vector<1x288xf32>
    %4 = vector.broadcast %3 : vector<1x288xf32> to vector<128x288xf32>
    %5 = arith.addf %2, %4 : vector<128x288xf32>
    %cst_5 = arith.constant 0.000000e+00 : f32
    %6 = vector.broadcast %cst_5 : f32 to vector<128x288xf32>
    %7 = arith.maximumf %5, %6 : vector<128x288xf32>
    %c0_6 = arith.constant 0 : index
    %c0_7 = arith.constant 0 : index
    %8 = vector.load %arg4[%c0_6, %c0_7] : memref<128x288xf32, #tpu.memory_space<vmem>>, vector<128x288xf32>
    tpu.vector_store %arg4[%c0_6, %c0_7], %7 {strides = array<i32>} : memref<128x288xf32, #tpu.memory_space<vmem>>, vector<128x288xf32>,
    return
  }
  func.func @transform_0(%arg0: i32) -> (i32, i32) {
    %c0_i32 = arith.constant 0 : i32
    %c0_i32_0 = arith.constant 0 : i32
    return %arg0, %c0_i32 : i32, i32
  }
  func.func @transform_1(%arg0: i32) -> (i32, i32) {
    %c0_i32 = arith.constant 0 : i32
    %c0_i32_0 = arith.constant 0 : i32
    %c0_i32_1 = arith.constant 0 : i32
    return %c0_i32, %c0_i32_0 : i32, i32
  }
  func.func @transform_2(%arg0: i32) -> (i32, i32) {
    %c0_i32 = arith.constant 0 : i32
    %c0_i32_0 = arith.constant 0 : i32
    %c0_i32_1 = arith.constant 0 : i32
    return %c0_i32, %c0_i32_0 : i32, i32
  }
  func.func @transform_3(%arg0: i32) -> (i32, i32) {
    %c0_i32 = arith.constant 0 : i32
    %c0_i32_0 = arith.constant 0 : i32
    return %arg0, %c0_i32 : i32, i32
  }
}

module attributes {stable_mosaic.version = 11 : i64} {
  func.func @_spatial_conv_kernel(%arg0: i32, %arg1: memref<1x110x32xf32, #tpu.memory_space<vmem>>, %arg2: memref<9x32x64xbf16, #tpu.memory_space<vmem>>, %arg3: memref<1x64xf32, #tpu.memory_space<vmem>>, %arg4: memref<1x80x64xbf16, #tpu.memory_space<vmem>>) attributes {dimension_semantics = [#tpu.dimension_semantics<parallel>], iteration_bounds = array<i64: 8>, scalar_prefetch = 0 : i64, scratch_operands = 0 : i64, tpu.core_type = #tpu.core_type<tc>, window_params = [{transform_indices = @transform_0, window_bounds = array<i64: 1, 110, 32>}, {pipeline_mode = #tpu.pipeline_mode<synchronous>, transform_indices = @transform_1, window_bounds = array<i64: 9, 32, 64>}, {pipeline_mode = #tpu.pipeline_mode<synchronous>, transform_indices = @transform_2, window_bounds = array<i64: 1, 64>}, {transform_indices = @transform_3, window_bounds = array<i64: 1, 80, 64>}]} {
    %cst = arith.constant 0.000000e+00 : f32
    %0 = vector.broadcast %cst : f32 to vector<80x64xf32>
    %c0 = arith.constant 0 : index
    %c0_0 = arith.constant 0 : index
    %c0_1 = arith.constant 0 : index
    %1 = vector.load %arg1[%c0, %c0_0, %c0_1] : memref<1x110x32xf32, #tpu.memory_space<vmem>>, vector<1x80x32xf32>
    %2 = vector.shape_cast %1 : vector<1x80x32xf32> to vector<80x32xf32>
    %3 = arith.truncf %2 : vector<80x32xf32> to vector<80x32xbf16>
    %c0_2 = arith.constant 0 : index
    %c0_3 = arith.constant 0 : index
    %c0_4 = arith.constant 0 : index
    %4 = vector.load %arg2[%c0_2, %c0_3, %c0_4] : memref<9x32x64xbf16, #tpu.memory_space<vmem>>, vector<1x32x64xbf16>
    %5 = vector.shape_cast %4 : vector<1x32x64xbf16> to vector<32x64xbf16>
    %cst_5 = arith.constant dense<0.000000e+00> : vector<80x64xf32>
    %6 = tpu.matmul %3, %5, %cst_5 {dimension_numbers = #tpu.dot_dimension_numbers<[1], [0], [0], [1], [0, 0, 1, 1], [], []>} : vector<80x32xbf16>, vector<32x64xbf16>, vector<80x64xf32> -> vector<80x64xf32>
    %7 = arith.addf %0, %6 : vector<80x64xf32>
    %c0_6 = arith.constant 0 : index
    %c1 = arith.constant 1 : index
    %c0_7 = arith.constant 0 : index
    %8 = vector.load %arg1[%c0_6, %c1, %c0_7] : memref<1x110x32xf32, #tpu.memory_space<vmem>>, vector<1x80x32xf32>
    %9 = vector.shape_cast %8 : vector<1x80x32xf32> to vector<80x32xf32>
    %10 = arith.truncf %9 : vector<80x32xf32> to vector<80x32xbf16>
    %c1_8 = arith.constant 1 : index
    %c0_9 = arith.constant 0 : index
    %c0_10 = arith.constant 0 : index
    %11 = vector.load %arg2[%c1_8, %c0_9, %c0_10] : memref<9x32x64xbf16, #tpu.memory_space<vmem>>, vector<1x32x64xbf16>
    %12 = vector.shape_cast %11 : vector<1x32x64xbf16> to vector<32x64xbf16>
    %cst_11 = arith.constant dense<0.000000e+00> : vector<80x64xf32>
    %13 = tpu.matmul %10, %12, %cst_11 {dimension_numbers = #tpu.dot_dimension_numbers<[1], [0], [0], [1], [0, 0, 1, 1], [], []>} : vector<80x32xbf16>, vector<32x64xbf16>, vector<80x64xf32> -> vector<80x64xf32>
    %14 = arith.addf %7, %13 : vector<80x64xf32>
    %c0_12 = arith.constant 0 : index
    %c2 = arith.constant 2 : index
    %c0_13 = arith.constant 0 : index
    %15 = vector.load %arg1[%c0_12, %c2, %c0_13] : memref<1x110x32xf32, #tpu.memory_space<vmem>>, vector<1x80x32xf32>
    %16 = vector.shape_cast %15 : vector<1x80x32xf32> to vector<80x32xf32>
    %17 = arith.truncf %16 : vector<80x32xf32> to vector<80x32xbf16>
    %c2_14 = arith.constant 2 : index
    %c0_15 = arith.constant 0 : index
    %c0_16 = arith.constant 0 : index
    %18 = vector.load %arg2[%c2_14, %c0_15, %c0_16] : memref<9x32x64xbf16, #tpu.memory_space<vmem>>, vector<1x32x64xbf16>
    %19 = vector.shape_cast %18 : vector<1x32x64xbf16> to vector<32x64xbf16>
    %cst_17 = arith.constant dense<0.000000e+00> : vector<80x64xf32>
    %20 = tpu.matmul %17, %19, %cst_17 {dimension_numbers = #tpu.dot_dimension_numbers<[1], [0], [0], [1], [0, 0, 1, 1], [], []>} : vector<80x32xbf16>, vector<32x64xbf16>, vector<80x64xf32> -> vector<80x64xf32>
    %21 = arith.addf %14, %20 : vector<80x64xf32>
    %c0_18 = arith.constant 0 : index
    %c10 = arith.constant 10 : index
    %c0_19 = arith.constant 0 : index
    %22 = vector.load %arg1[%c0_18, %c10, %c0_19] : memref<1x110x32xf32, #tpu.memory_space<vmem>>, vector<1x80x32xf32>
    %23 = vector.shape_cast %22 : vector<1x80x32xf32> to vector<80x32xf32>
    %24 = arith.truncf %23 : vector<80x32xf32> to vector<80x32xbf16>
    %c3 = arith.constant 3 : index
    %c0_20 = arith.constant 0 : index
    %c0_21 = arith.constant 0 : index
    %25 = vector.load %arg2[%c3, %c0_20, %c0_21] : memref<9x32x64xbf16, #tpu.memory_space<vmem>>, vector<1x32x64xbf16>
    %26 = vector.shape_cast %25 : vector<1x32x64xbf16> to vector<32x64xbf16>
    %cst_22 = arith.constant dense<0.000000e+00> : vector<80x64xf32>
    %27 = tpu.matmul %24, %26, %cst_22 {dimension_numbers = #tpu.dot_dimension_numbers<[1], [0], [0], [1], [0, 0, 1, 1], [], []>} : vector<80x32xbf16>, vector<32x64xbf16>, vector<80x64xf32> -> vector<80x64xf32>
    %28 = arith.addf %21, %27 : vector<80x64xf32>
    %c0_23 = arith.constant 0 : index
    %c11 = arith.constant 11 : index
    %c0_24 = arith.constant 0 : index
    %29 = vector.load %arg1[%c0_23, %c11, %c0_24] : memref<1x110x32xf32, #tpu.memory_space<vmem>>, vector<1x80x32xf32>
    %30 = vector.shape_cast %29 : vector<1x80x32xf32> to vector<80x32xf32>
    %31 = arith.truncf %30 : vector<80x32xf32> to vector<80x32xbf16>
    %c4 = arith.constant 4 : index
    %c0_25 = arith.constant 0 : index
    %c0_26 = arith.constant 0 : index
    %32 = vector.load %arg2[%c4, %c0_25, %c0_26] : memref<9x32x64xbf16, #tpu.memory_space<vmem>>, vector<1x32x64xbf16>
    %33 = vector.shape_cast %32 : vector<1x32x64xbf16> to vector<32x64xbf16>
    %cst_27 = arith.constant dense<0.000000e+00> : vector<80x64xf32>
    %34 = tpu.matmul %31, %33, %cst_27 {dimension_numbers = #tpu.dot_dimension_numbers<[1], [0], [0], [1], [0, 0, 1, 1], [], []>} : vector<80x32xbf16>, vector<32x64xbf16>, vector<80x64xf32> -> vector<80x64xf32>
    %35 = arith.addf %28, %34 : vector<80x64xf32>
    %c0_28 = arith.constant 0 : index
    %c12 = arith.constant 12 : index
    %c0_29 = arith.constant 0 : index
    %36 = vector.load %arg1[%c0_28, %c12, %c0_29] : memref<1x110x32xf32, #tpu.memory_space<vmem>>, vector<1x80x32xf32>
    %37 = vector.shape_cast %36 : vector<1x80x32xf32> to vector<80x32xf32>
    %38 = arith.truncf %37 : vector<80x32xf32> to vector<80x32xbf16>
    %c5 = arith.constant 5 : index
    %c0_30 = arith.constant 0 : index
    %c0_31 = arith.constant 0 : index
    %39 = vector.load %arg2[%c5, %c0_30, %c0_31] : memref<9x32x64xbf16, #tpu.memory_space<vmem>>, vector<1x32x64xbf16>
    %40 = vector.shape_cast %39 : vector<1x32x64xbf16> to vector<32x64xbf16>
    %cst_32 = arith.constant dense<0.000000e+00> : vector<80x64xf32>
    %41 = tpu.matmul %38, %40, %cst_32 {dimension_numbers = #tpu.dot_dimension_numbers<[1], [0], [0], [1], [0, 0, 1, 1], [], []>} : vector<80x32xbf16>, vector<32x64xbf16>, vector<80x64xf32> -> vector<80x64xf32>
    %42 = arith.addf %35, %41 : vector<80x64xf32>
    %c0_33 = arith.constant 0 : index
    %c20 = arith.constant 20 : index
    %c0_34 = arith.constant 0 : index
    %43 = vector.load %arg1[%c0_33, %c20, %c0_34] : memref<1x110x32xf32, #tpu.memory_space<vmem>>, vector<1x80x32xf32>
    %44 = vector.shape_cast %43 : vector<1x80x32xf32> to vector<80x32xf32>
    %45 = arith.truncf %44 : vector<80x32xf32> to vector<80x32xbf16>
    %c6 = arith.constant 6 : index
    %c0_35 = arith.constant 0 : index
    %c0_36 = arith.constant 0 : index
    %46 = vector.load %arg2[%c6, %c0_35, %c0_36] : memref<9x32x64xbf16, #tpu.memory_space<vmem>>, vector<1x32x64xbf16>
    %47 = vector.shape_cast %46 : vector<1x32x64xbf16> to vector<32x64xbf16>
    %cst_37 = arith.constant dense<0.000000e+00> : vector<80x64xf32>
    %48 = tpu.matmul %45, %47, %cst_37 {dimension_numbers = #tpu.dot_dimension_numbers<[1], [0], [0], [1], [0, 0, 1, 1], [], []>} : vector<80x32xbf16>, vector<32x64xbf16>, vector<80x64xf32> -> vector<80x64xf32>
    %49 = arith.addf %42, %48 : vector<80x64xf32>
    %c0_38 = arith.constant 0 : index
    %c21 = arith.constant 21 : index
    %c0_39 = arith.constant 0 : index
    %50 = vector.load %arg1[%c0_38, %c21, %c0_39] : memref<1x110x32xf32, #tpu.memory_space<vmem>>, vector<1x80x32xf32>
    %51 = vector.shape_cast %50 : vector<1x80x32xf32> to vector<80x32xf32>
    %52 = arith.truncf %51 : vector<80x32xf32> to vector<80x32xbf16>
    %c7 = arith.constant 7 : index
    %c0_40 = arith.constant 0 : index
    %c0_41 = arith.constant 0 : index
    %53 = vector.load %arg2[%c7, %c0_40, %c0_41] : memref<9x32x64xbf16, #tpu.memory_space<vmem>>, vector<1x32x64xbf16>
    %54 = vector.shape_cast %53 : vector<1x32x64xbf16> to vector<32x64xbf16>
    %cst_42 = arith.constant dense<0.000000e+00> : vector<80x64xf32>
    %55 = tpu.matmul %52, %54, %cst_42 {dimension_numbers = #tpu.dot_dimension_numbers<[1], [0], [0], [1], [0, 0, 1, 1], [], []>} : vector<80x32xbf16>, vector<32x64xbf16>, vector<80x64xf32> -> vector<80x64xf32>
    %56 = arith.addf %49, %55 : vector<80x64xf32>
    %c0_43 = arith.constant 0 : index
    %c22 = arith.constant 22 : index
    %c0_44 = arith.constant 0 : index
    %57 = vector.load %arg1[%c0_43, %c22, %c0_44] : memref<1x110x32xf32, #tpu.memory_space<vmem>>, vector<1x80x32xf32>
    %58 = vector.shape_cast %57 : vector<1x80x32xf32> to vector<80x32xf32>
    %59 = arith.truncf %58 : vector<80x32xf32> to vector<80x32xbf16>
    %c8 = arith.constant 8 : index
    %c0_45 = arith.constant 0 : index
    %c0_46 = arith.constant 0 : index
    %60 = vector.load %arg2[%c8, %c0_45, %c0_46] : memref<9x32x64xbf16, #tpu.memory_space<vmem>>, vector<1x32x64xbf16>
    %61 = vector.shape_cast %60 : vector<1x32x64xbf16> to vector<32x64xbf16>
    %cst_47 = arith.constant dense<0.000000e+00> : vector<80x64xf32>
    %62 = tpu.matmul %59, %61, %cst_47 {dimension_numbers = #tpu.dot_dimension_numbers<[1], [0], [0], [1], [0, 0, 1, 1], [], []>} : vector<80x32xbf16>, vector<32x64xbf16>, vector<80x64xf32> -> vector<80x64xf32>
    %63 = arith.addf %56, %62 : vector<80x64xf32>
    %c0_48 = arith.constant 0 : index
    %c0_49 = arith.constant 0 : index
    %64 = vector.load %arg3[%c0_48, %c0_49] : memref<1x64xf32, #tpu.memory_space<vmem>>, vector<1x64xf32>
    %65 = vector.broadcast %64 : vector<1x64xf32> to vector<80x64xf32>
    %66 = arith.addf %63, %65 : vector<80x64xf32>
    %cst_50 = arith.constant 0.000000e+00 : f32
    %67 = vector.broadcast %cst_50 : f32 to vector<80x64xf32>
    %68 = arith.maximumf %66, %67 : vector<80x64xf32>
    %69 = arith.truncf %68 : vector<80x64xf32> to vector<80x64xbf16>
    %c0_51 = arith.constant 0 : index
    %c0_52 = arith.constant 0 : index
    %c0_53 = arith.constant 0 : index
    %70 = vector.load %arg4[%c0_51, %c0_52, %c0_53] : memref<1x80x64xbf16, #tpu.memory_space<vmem>>, vector<1x80x64xbf16>
    %71 = vector.shape_cast %70 : vector<1x80x64xbf16> to vector<80x64xbf16>
    %72 = vector.shape_cast %69 : vector<80x64xbf16> to vector<1x80x64xbf16>
    tpu.vector_store %arg4[%c0_51, %c0_52, %c0_53], %72 {strides = array<i32>} : memref<1x80x64xbf16, #tpu.memory_space<vmem>>, vector<1x80x64xbf16>,
    return
  }
  func.func @transform_0(%arg0: i32) -> (i32, i32, i32) {
    %c0_i32 = arith.constant 0 : i32
    %c0_i32_0 = arith.constant 0 : i32
    %c0_i32_1 = arith.constant 0 : i32
    return %arg0, %c0_i32, %c0_i32_0 : i32, i32, i32
  }
  func.func @transform_1(%arg0: i32) -> (i32, i32, i32) {
    %c0_i32 = arith.constant 0 : i32
    %c0_i32_0 = arith.constant 0 : i32
    %c0_i32_1 = arith.constant 0 : i32
    %c0_i32_2 = arith.constant 0 : i32
    return %c0_i32, %c0_i32_0, %c0_i32_1 : i32, i32, i32
  }
  func.func @transform_2(%arg0: i32) -> (i32, i32) {
    %c0_i32 = arith.constant 0 : i32
    %c0_i32_0 = arith.constant 0 : i32
    %c0_i32_1 = arith.constant 0 : i32
    return %c0_i32, %c0_i32_0 : i32, i32
  }
  func.func @transform_3(%arg0: i32) -> (i32, i32, i32) {
    %c0_i32 = arith.constant 0 : i32
    %c0_i32_0 = arith.constant 0 : i32
    %c0_i32_1 = arith.constant 0 : i32
    return %arg0, %c0_i32, %c0_i32_0 : i32, i32, i32
  }
}

module attributes {stable_mosaic.version = 11 : i64} {
  func.func @_temporal_conv_kernel(%arg0: i32, %arg1: i32, %arg2: i32, %arg3: memref<1x1x64x64xbf16, #tpu.memory_space<vmem>>, %arg4: memref<1x64x64xbf16, #tpu.memory_space<vmem>>, %arg5: memref<1x64xf32, #tpu.memory_space<vmem>>, %arg6: memref<1x1x64x64xf32, #tpu.memory_space<vmem>>, %arg7: memref<64x64xf32, #tpu.memory_space<vmem>>) attributes {dimension_semantics = [#tpu.dimension_semantics<parallel>, #tpu.dimension_semantics<parallel>, #tpu.dimension_semantics<arbitrary>], iteration_bounds = array<i64: 2, 4, 3>, scalar_prefetch = 0 : i64, scratch_operands = 1 : i64, tpu.core_type = #tpu.core_type<tc>, window_params = [{transform_indices = @transform_0, window_bounds = array<i64: 1, 1, 64, 64>}, {transform_indices = @transform_1, window_bounds = array<i64: 1, 64, 64>}, {pipeline_mode = #tpu.pipeline_mode<synchronous>, transform_indices = @transform_2, window_bounds = array<i64: 1, 64>}, {transform_indices = @transform_3, window_bounds = array<i64: 1, 1, 64, 64>}]} {
    %c0_i32 = arith.constant 0 : i32
    %0 = arith.cmpi eq, %arg2, %c0_i32 : i32
    %1 = arith.extui %0 : i1 to i32
    %c0_i32_0 = arith.constant 0 : i32
    %2 = arith.cmpi ne, %1, %c0_i32_0 : i32
    scf.if %2 {
      %cst_12 = arith.constant 0.000000e+00 : f32
      %14 = vector.broadcast %cst_12 : f32 to vector<64x64xf32>
      %c0_13 = arith.constant 0 : index
      %c0_14 = arith.constant 0 : index
      %15 = vector.load %arg7[%c0_13, %c0_14] : memref<64x64xf32, #tpu.memory_space<vmem>>, vector<64x64xf32>
      tpu.vector_store %arg7[%c0_13, %c0_14], %14 {strides = array<i32>} : memref<64x64xf32, #tpu.memory_space<vmem>>, vector<64x64xf32>,
    } else {
    }
    %c0 = arith.constant 0 : index
    %c0_1 = arith.constant 0 : index
    %3 = vector.load %arg7[%c0, %c0_1] : memref<64x64xf32, #tpu.memory_space<vmem>>, vector<64x64xf32>
    %c0_2 = arith.constant 0 : index
    %c0_3 = arith.constant 0 : index
    %c0_4 = arith.constant 0 : index
    %c0_5 = arith.constant 0 : index
    %4 = vector.load %arg3[%c0_2, %c0_3, %c0_4, %c0_5] : memref<1x1x64x64xbf16, #tpu.memory_space<vmem>>, vector<1x1x64x64xbf16>
    %5 = vector.shape_cast %4 : vector<1x1x64x64xbf16> to vector<64x64xbf16>
    %c0_6 = arith.constant 0 : index
    %c0_7 = arith.constant 0 : index
    %c0_8 = arith.constant 0 : index
    %6 = vector.load %arg4[%c0_6, %c0_7, %c0_8] : memref<1x64x64xbf16, #tpu.memory_space<vmem>>, vector<1x64x64xbf16>
    %7 = vector.shape_cast %6 : vector<1x64x64xbf16> to vector<64x64xbf16>
    %cst = arith.constant dense<0.000000e+00> : vector<64x64xf32>
    %8 = tpu.matmul %5, %7, %cst {dimension_numbers = #tpu.dot_dimension_numbers<[1], [0], [0], [1], [0, 0, 1, 1], [], []>} : vector<64x64xbf16>, vector<64x64xbf16>, vector<64x64xf32> -> vector<64x64xf32>
    %9 = arith.addf %3, %8 : vector<64x64xf32>
    %c0_9 = arith.constant 0 : index
    %c0_10 = arith.constant 0 : index
    %10 = vector.load %arg7[%c0_9, %c0_10] : memref<64x64xf32, #tpu.memory_space<vmem>>, vector<64x64xf32>
    tpu.vector_store %arg7[%c0_9, %c0_10], %9 {strides = array<i32>} : memref<64x64xf32, #tpu.memory_space<vmem>>, vector<64x64xf32>,
    %c2_i32 = arith.constant 2 : i32
    %11 = arith.cmpi eq, %arg2, %c2_i32 : i32
    %12 = arith.extui %11 : i1 to i32
    %c0_i32_11 = arith.constant 0 : i32
    %13 = arith.cmpi ne, %12, %c0_i32_11 : i32
    scf.if %13 {
      %c0_12 = arith.constant 0 : index
      %c0_13 = arith.constant 0 : index
      %14 = vector.load %arg7[%c0_12, %c0_13] : memref<64x64xf32, #tpu.memory_space<vmem>>, vector<64x64xf32>
      %c0_14 = arith.constant 0 : index
      %c0_15 = arith.constant 0 : index
      %15 = vector.load %arg5[%c0_14, %c0_15] : memref<1x64xf32, #tpu.memory_space<vmem>>, vector<1x64xf32>
      %16 = vector.broadcast %15 : vector<1x64xf32> to vector<64x64xf32>
      %17 = arith.addf %14, %16 : vector<64x64xf32>
      %cst_16 = arith.constant 0.000000e+00 : f32
      %18 = vector.broadcast %cst_16 : f32 to vector<64x64xf32>
      %19 = arith.maximumf %17, %18 : vector<64x64xf32>
      %c0_17 = arith.constant 0 : index
      %c0_18 = arith.constant 0 : index
      %c0_19 = arith.constant 0 : index
      %c0_20 = arith.constant 0 : index
      %20 = vector.load %arg6[%c0_17, %c0_18, %c0_19, %c0_20] : memref<1x1x64x64xf32, #tpu.memory_space<vmem>>, vector<1x1x64x64xf32>
      %21 = vector.shape_cast %20 : vector<1x1x64x64xf32> to vector<64x64xf32>
      %22 = vector.shape_cast %19 : vector<64x64xf32> to vector<1x1x64x64xf32>
      tpu.vector_store %arg6[%c0_17, %c0_18, %c0_19, %c0_20], %22 {strides = array<i32>} : memref<1x1x64x64xf32, #tpu.memory_space<vmem>>, vector<1x1x64x64xf32>,
    } else {
    }
    return
  }
  func.func @transform_0(%arg0: i32, %arg1: i32, %arg2: i32) -> (i32, i32, i32, i32) {
    %0 = arith.addi %arg1, %arg2 : i32
    %c0_i32 = arith.constant 0 : i32
    %c0_i32_0 = arith.constant 0 : i32
    %c0_i32_1 = arith.constant 0 : i32
    return %arg0, %0, %c0_i32, %c0_i32_0 : i32, i32, i32, i32
  }
  func.func @transform_1(%arg0: i32, %arg1: i32, %arg2: i32) -> (i32, i32, i32) {
    %c0_i32 = arith.constant 0 : i32
    %c0_i32_0 = arith.constant 0 : i32
    %c0_i32_1 = arith.constant 0 : i32
    return %arg2, %c0_i32, %c0_i32_0 : i32, i32, i32
  }
  func.func @transform_2(%arg0: i32, %arg1: i32, %arg2: i32) -> (i32, i32) {
    %c0_i32 = arith.constant 0 : i32
    %c0_i32_0 = arith.constant 0 : i32
    %c0_i32_1 = arith.constant 0 : i32
    return %c0_i32, %c0_i32_0 : i32, i32
  }
  func.func @transform_3(%arg0: i32, %arg1: i32, %arg2: i32) -> (i32, i32, i32, i32) {
    %c0_i32 = arith.constant 0 : i32
    %c0_i32_0 = arith.constant 0 : i32
    %c0_i32_1 = arith.constant 0 : i32
    return %arg0, %arg1, %c0_i32, %c0_i32_0 : i32, i32, i32, i32
  }
}

module attributes {stable_mosaic.version = 11 : i64} {
  func.func @_spatial_conv_kernel(%arg0: i32, %arg1: memref<1x110x144xf32, #tpu.memory_space<vmem>>, %arg2: memref<9x144x288xbf16, #tpu.memory_space<vmem>>, %arg3: memref<1x288xf32, #tpu.memory_space<vmem>>, %arg4: memref<1x80x288xbf16, #tpu.memory_space<vmem>>) attributes {dimension_semantics = [#tpu.dimension_semantics<parallel>], iteration_bounds = array<i64: 8>, scalar_prefetch = 0 : i64, scratch_operands = 0 : i64, tpu.core_type = #tpu.core_type<tc>, window_params = [{transform_indices = @transform_0, window_bounds = array<i64: 1, 110, 144>}, {pipeline_mode = #tpu.pipeline_mode<synchronous>, transform_indices = @transform_1, window_bounds = array<i64: 9, 144, 288>}, {pipeline_mode = #tpu.pipeline_mode<synchronous>, transform_indices = @transform_2, window_bounds = array<i64: 1, 288>}, {transform_indices = @transform_3, window_bounds = array<i64: 1, 80, 288>}]} {
    %cst = arith.constant 0.000000e+00 : f32
    %0 = vector.broadcast %cst : f32 to vector<80x288xf32>
    %c0 = arith.constant 0 : index
    %c0_0 = arith.constant 0 : index
    %c0_1 = arith.constant 0 : index
    %1 = vector.load %arg1[%c0, %c0_0, %c0_1] : memref<1x110x144xf32, #tpu.memory_space<vmem>>, vector<1x80x144xf32>
    %2 = vector.shape_cast %1 : vector<1x80x144xf32> to vector<80x144xf32>
    %3 = arith.truncf %2 : vector<80x144xf32> to vector<80x144xbf16>
    %c0_2 = arith.constant 0 : index
    %c0_3 = arith.constant 0 : index
    %c0_4 = arith.constant 0 : index
    %4 = vector.load %arg2[%c0_2, %c0_3, %c0_4] : memref<9x144x288xbf16, #tpu.memory_space<vmem>>, vector<1x144x288xbf16>
    %5 = vector.shape_cast %4 : vector<1x144x288xbf16> to vector<144x288xbf16>
    %cst_5 = arith.constant dense<0.000000e+00> : vector<80x288xf32>
    %6 = tpu.matmul %3, %5, %cst_5 {dimension_numbers = #tpu.dot_dimension_numbers<[1], [0], [0], [1], [0, 0, 1, 1], [], []>} : vector<80x144xbf16>, vector<144x288xbf16>, vector<80x288xf32> -> vector<80x288xf32>
    %7 = arith.addf %0, %6 : vector<80x288xf32>
    %c0_6 = arith.constant 0 : index
    %c1 = arith.constant 1 : index
    %c0_7 = arith.constant 0 : index
    %8 = vector.load %arg1[%c0_6, %c1, %c0_7] : memref<1x110x144xf32, #tpu.memory_space<vmem>>, vector<1x80x144xf32>
    %9 = vector.shape_cast %8 : vector<1x80x144xf32> to vector<80x144xf32>
    %10 = arith.truncf %9 : vector<80x144xf32> to vector<80x144xbf16>
    %c1_8 = arith.constant 1 : index
    %c0_9 = arith.constant 0 : index
    %c0_10 = arith.constant 0 : index
    %11 = vector.load %arg2[%c1_8, %c0_9, %c0_10] : memref<9x144x288xbf16, #tpu.memory_space<vmem>>, vector<1x144x288xbf16>
    %12 = vector.shape_cast %11 : vector<1x144x288xbf16> to vector<144x288xbf16>
    %cst_11 = arith.constant dense<0.000000e+00> : vector<80x288xf32>
    %13 = tpu.matmul %10, %12, %cst_11 {dimension_numbers = #tpu.dot_dimension_numbers<[1], [0], [0], [1], [0, 0, 1, 1], [], []>} : vector<80x144xbf16>, vector<144x288xbf16>, vector<80x288xf32> -> vector<80x288xf32>
    %14 = arith.addf %7, %13 : vector<80x288xf32>
    %c0_12 = arith.constant 0 : index
    %c2 = arith.constant 2 : index
    %c0_13 = arith.constant 0 : index
    %15 = vector.load %arg1[%c0_12, %c2, %c0_13] : memref<1x110x144xf32, #tpu.memory_space<vmem>>, vector<1x80x144xf32>
    %16 = vector.shape_cast %15 : vector<1x80x144xf32> to vector<80x144xf32>
    %17 = arith.truncf %16 : vector<80x144xf32> to vector<80x144xbf16>
    %c2_14 = arith.constant 2 : index
    %c0_15 = arith.constant 0 : index
    %c0_16 = arith.constant 0 : index
    %18 = vector.load %arg2[%c2_14, %c0_15, %c0_16] : memref<9x144x288xbf16, #tpu.memory_space<vmem>>, vector<1x144x288xbf16>
    %19 = vector.shape_cast %18 : vector<1x144x288xbf16> to vector<144x288xbf16>
    %cst_17 = arith.constant dense<0.000000e+00> : vector<80x288xf32>
    %20 = tpu.matmul %17, %19, %cst_17 {dimension_numbers = #tpu.dot_dimension_numbers<[1], [0], [0], [1], [0, 0, 1, 1], [], []>} : vector<80x144xbf16>, vector<144x288xbf16>, vector<80x288xf32> -> vector<80x288xf32>
    %21 = arith.addf %14, %20 : vector<80x288xf32>
    %c0_18 = arith.constant 0 : index
    %c10 = arith.constant 10 : index
    %c0_19 = arith.constant 0 : index
    %22 = vector.load %arg1[%c0_18, %c10, %c0_19] : memref<1x110x144xf32, #tpu.memory_space<vmem>>, vector<1x80x144xf32>
    %23 = vector.shape_cast %22 : vector<1x80x144xf32> to vector<80x144xf32>
    %24 = arith.truncf %23 : vector<80x144xf32> to vector<80x144xbf16>
    %c3 = arith.constant 3 : index
    %c0_20 = arith.constant 0 : index
    %c0_21 = arith.constant 0 : index
    %25 = vector.load %arg2[%c3, %c0_20, %c0_21] : memref<9x144x288xbf16, #tpu.memory_space<vmem>>, vector<1x144x288xbf16>
    %26 = vector.shape_cast %25 : vector<1x144x288xbf16> to vector<144x288xbf16>
    %cst_22 = arith.constant dense<0.000000e+00> : vector<80x288xf32>
    %27 = tpu.matmul %24, %26, %cst_22 {dimension_numbers = #tpu.dot_dimension_numbers<[1], [0], [0], [1], [0, 0, 1, 1], [], []>} : vector<80x144xbf16>, vector<144x288xbf16>, vector<80x288xf32> -> vector<80x288xf32>
    %28 = arith.addf %21, %27 : vector<80x288xf32>
    %c0_23 = arith.constant 0 : index
    %c11 = arith.constant 11 : index
    %c0_24 = arith.constant 0 : index
    %29 = vector.load %arg1[%c0_23, %c11, %c0_24] : memref<1x110x144xf32, #tpu.memory_space<vmem>>, vector<1x80x144xf32>
    %30 = vector.shape_cast %29 : vector<1x80x144xf32> to vector<80x144xf32>
    %31 = arith.truncf %30 : vector<80x144xf32> to vector<80x144xbf16>
    %c4 = arith.constant 4 : index
    %c0_25 = arith.constant 0 : index
    %c0_26 = arith.constant 0 : index
    %32 = vector.load %arg2[%c4, %c0_25, %c0_26] : memref<9x144x288xbf16, #tpu.memory_space<vmem>>, vector<1x144x288xbf16>
    %33 = vector.shape_cast %32 : vector<1x144x288xbf16> to vector<144x288xbf16>
    %cst_27 = arith.constant dense<0.000000e+00> : vector<80x288xf32>
    %34 = tpu.matmul %31, %33, %cst_27 {dimension_numbers = #tpu.dot_dimension_numbers<[1], [0], [0], [1], [0, 0, 1, 1], [], []>} : vector<80x144xbf16>, vector<144x288xbf16>, vector<80x288xf32> -> vector<80x288xf32>
    %35 = arith.addf %28, %34 : vector<80x288xf32>
    %c0_28 = arith.constant 0 : index
    %c12 = arith.constant 12 : index
    %c0_29 = arith.constant 0 : index
    %36 = vector.load %arg1[%c0_28, %c12, %c0_29] : memref<1x110x144xf32, #tpu.memory_space<vmem>>, vector<1x80x144xf32>
    %37 = vector.shape_cast %36 : vector<1x80x144xf32> to vector<80x144xf32>
    %38 = arith.truncf %37 : vector<80x144xf32> to vector<80x144xbf16>
    %c5 = arith.constant 5 : index
    %c0_30 = arith.constant 0 : index
    %c0_31 = arith.constant 0 : index
    %39 = vector.load %arg2[%c5, %c0_30, %c0_31] : memref<9x144x288xbf16, #tpu.memory_space<vmem>>, vector<1x144x288xbf16>
    %40 = vector.shape_cast %39 : vector<1x144x288xbf16> to vector<144x288xbf16>
    %cst_32 = arith.constant dense<0.000000e+00> : vector<80x288xf32>
    %41 = tpu.matmul %38, %40, %cst_32 {dimension_numbers = #tpu.dot_dimension_numbers<[1], [0], [0], [1], [0, 0, 1, 1], [], []>} : vector<80x144xbf16>, vector<144x288xbf16>, vector<80x288xf32> -> vector<80x288xf32>
    %42 = arith.addf %35, %41 : vector<80x288xf32>
    %c0_33 = arith.constant 0 : index
    %c20 = arith.constant 20 : index
    %c0_34 = arith.constant 0 : index
    %43 = vector.load %arg1[%c0_33, %c20, %c0_34] : memref<1x110x144xf32, #tpu.memory_space<vmem>>, vector<1x80x144xf32>
    %44 = vector.shape_cast %43 : vector<1x80x144xf32> to vector<80x144xf32>
    %45 = arith.truncf %44 : vector<80x144xf32> to vector<80x144xbf16>
    %c6 = arith.constant 6 : index
    %c0_35 = arith.constant 0 : index
    %c0_36 = arith.constant 0 : index
    %46 = vector.load %arg2[%c6, %c0_35, %c0_36] : memref<9x144x288xbf16, #tpu.memory_space<vmem>>, vector<1x144x288xbf16>
    %47 = vector.shape_cast %46 : vector<1x144x288xbf16> to vector<144x288xbf16>
    %cst_37 = arith.constant dense<0.000000e+00> : vector<80x288xf32>
    %48 = tpu.matmul %45, %47, %cst_37 {dimension_numbers = #tpu.dot_dimension_numbers<[1], [0], [0], [1], [0, 0, 1, 1], [], []>} : vector<80x144xbf16>, vector<144x288xbf16>, vector<80x288xf32> -> vector<80x288xf32>
    %49 = arith.addf %42, %48 : vector<80x288xf32>
    %c0_38 = arith.constant 0 : index
    %c21 = arith.constant 21 : index
    %c0_39 = arith.constant 0 : index
    %50 = vector.load %arg1[%c0_38, %c21, %c0_39] : memref<1x110x144xf32, #tpu.memory_space<vmem>>, vector<1x80x144xf32>
    %51 = vector.shape_cast %50 : vector<1x80x144xf32> to vector<80x144xf32>
    %52 = arith.truncf %51 : vector<80x144xf32> to vector<80x144xbf16>
    %c7 = arith.constant 7 : index
    %c0_40 = arith.constant 0 : index
    %c0_41 = arith.constant 0 : index
    %53 = vector.load %arg2[%c7, %c0_40, %c0_41] : memref<9x144x288xbf16, #tpu.memory_space<vmem>>, vector<1x144x288xbf16>
    %54 = vector.shape_cast %53 : vector<1x144x288xbf16> to vector<144x288xbf16>
    %cst_42 = arith.constant dense<0.000000e+00> : vector<80x288xf32>
    %55 = tpu.matmul %52, %54, %cst_42 {dimension_numbers = #tpu.dot_dimension_numbers<[1], [0], [0], [1], [0, 0, 1, 1], [], []>} : vector<80x144xbf16>, vector<144x288xbf16>, vector<80x288xf32> -> vector<80x288xf32>
    %56 = arith.addf %49, %55 : vector<80x288xf32>
    %c0_43 = arith.constant 0 : index
    %c22 = arith.constant 22 : index
    %c0_44 = arith.constant 0 : index
    %57 = vector.load %arg1[%c0_43, %c22, %c0_44] : memref<1x110x144xf32, #tpu.memory_space<vmem>>, vector<1x80x144xf32>
    %58 = vector.shape_cast %57 : vector<1x80x144xf32> to vector<80x144xf32>
    %59 = arith.truncf %58 : vector<80x144xf32> to vector<80x144xbf16>
    %c8 = arith.constant 8 : index
    %c0_45 = arith.constant 0 : index
    %c0_46 = arith.constant 0 : index
    %60 = vector.load %arg2[%c8, %c0_45, %c0_46] : memref<9x144x288xbf16, #tpu.memory_space<vmem>>, vector<1x144x288xbf16>
    %61 = vector.shape_cast %60 : vector<1x144x288xbf16> to vector<144x288xbf16>
    %cst_47 = arith.constant dense<0.000000e+00> : vector<80x288xf32>
    %62 = tpu.matmul %59, %61, %cst_47 {dimension_numbers = #tpu.dot_dimension_numbers<[1], [0], [0], [1], [0, 0, 1, 1], [], []>} : vector<80x144xbf16>, vector<144x288xbf16>, vector<80x288xf32> -> vector<80x288xf32>
    %63 = arith.addf %56, %62 : vector<80x288xf32>
    %c0_48 = arith.constant 0 : index
    %c0_49 = arith.constant 0 : index
    %64 = vector.load %arg3[%c0_48, %c0_49] : memref<1x288xf32, #tpu.memory_space<vmem>>, vector<1x288xf32>
    %65 = vector.broadcast %64 : vector<1x288xf32> to vector<80x288xf32>
    %66 = arith.addf %63, %65 : vector<80x288xf32>
    %cst_50 = arith.constant 0.000000e+00 : f32
    %67 = vector.broadcast %cst_50 : f32 to vector<80x288xf32>
    %68 = arith.maximumf %66, %67 : vector<80x288xf32>
    %69 = arith.truncf %68 : vector<80x288xf32> to vector<80x288xbf16>
    %c0_51 = arith.constant 0 : index
    %c0_52 = arith.constant 0 : index
    %c0_53 = arith.constant 0 : index
    %70 = vector.load %arg4[%c0_51, %c0_52, %c0_53] : memref<1x80x288xbf16, #tpu.memory_space<vmem>>, vector<1x80x288xbf16>
    %71 = vector.shape_cast %70 : vector<1x80x288xbf16> to vector<80x288xbf16>
    %72 = vector.shape_cast %69 : vector<80x288xbf16> to vector<1x80x288xbf16>
    tpu.vector_store %arg4[%c0_51, %c0_52, %c0_53], %72 {strides = array<i32>} : memref<1x80x288xbf16, #tpu.memory_space<vmem>>, vector<1x80x288xbf16>,
    return
  }
  func.func @transform_0(%arg0: i32) -> (i32, i32, i32) {
    %c0_i32 = arith.constant 0 : i32
    %c0_i32_0 = arith.constant 0 : i32
    %c0_i32_1 = arith.constant 0 : i32
    return %arg0, %c0_i32, %c0_i32_0 : i32, i32, i32
  }
  func.func @transform_1(%arg0: i32) -> (i32, i32, i32) {
    %c0_i32 = arith.constant 0 : i32
    %c0_i32_0 = arith.constant 0 : i32
    %c0_i32_1 = arith.constant 0 : i32
    %c0_i32_2 = arith.constant 0 : i32
    return %c0_i32, %c0_i32_0, %c0_i32_1 : i32, i32, i32
  }
  func.func @transform_2(%arg0: i32) -> (i32, i32) {
    %c0_i32 = arith.constant 0 : i32
    %c0_i32_0 = arith.constant 0 : i32
    %c0_i32_1 = arith.constant 0 : i32
    return %c0_i32, %c0_i32_0 : i32, i32
  }
  func.func @transform_3(%arg0: i32) -> (i32, i32, i32) {
    %c0_i32 = arith.constant 0 : i32
    %c0_i32_0 = arith.constant 0 : i32
    %c0_i32_1 = arith.constant 0 : i32
    return %arg0, %c0_i32, %c0_i32_0 : i32, i32, i32
  }
}

module attributes {stable_mosaic.version = 11 : i64} {
  func.func @_temporal_conv_kernel(%arg0: i32, %arg1: i32, %arg2: i32, %arg3: memref<1x1x64x288xbf16, #tpu.memory_space<vmem>>, %arg4: memref<1x288x288xbf16, #tpu.memory_space<vmem>>, %arg5: memref<1x288xf32, #tpu.memory_space<vmem>>, %arg6: memref<1x1x64x288xf32, #tpu.memory_space<vmem>>, %arg7: memref<64x288xf32, #tpu.memory_space<vmem>>) attributes {dimension_semantics = [#tpu.dimension_semantics<parallel>, #tpu.dimension_semantics<parallel>, #tpu.dimension_semantics<arbitrary>], iteration_bounds = array<i64: 2, 4, 3>, scalar_prefetch = 0 : i64, scratch_operands = 1 : i64, tpu.core_type = #tpu.core_type<tc>, window_params = [{transform_indices = @transform_0, window_bounds = array<i64: 1, 1, 64, 288>}, {transform_indices = @transform_1, window_bounds = array<i64: 1, 288, 288>}, {pipeline_mode = #tpu.pipeline_mode<synchronous>, transform_indices = @transform_2, window_bounds = array<i64: 1, 288>}, {transform_indices = @transform_3, window_bounds = array<i64: 1, 1, 64, 288>}]} {
    %c0_i32 = arith.constant 0 : i32
    %0 = arith.cmpi eq, %arg2, %c0_i32 : i32
    %1 = arith.extui %0 : i1 to i32
    %c0_i32_0 = arith.constant 0 : i32
    %2 = arith.cmpi ne, %1, %c0_i32_0 : i32
    scf.if %2 {
      %cst_12 = arith.constant 0.000000e+00 : f32
      %14 = vector.broadcast %cst_12 : f32 to vector<64x288xf32>
      %c0_13 = arith.constant 0 : index
      %c0_14 = arith.constant 0 : index
      %15 = vector.load %arg7[%c0_13, %c0_14] : memref<64x288xf32, #tpu.memory_space<vmem>>, vector<64x288xf32>
      tpu.vector_store %arg7[%c0_13, %c0_14], %14 {strides = array<i32>} : memref<64x288xf32, #tpu.memory_space<vmem>>, vector<64x288xf32>,
    } else {
    }
    %c0 = arith.constant 0 : index
    %c0_1 = arith.constant 0 : index
    %3 = vector.load %arg7[%c0, %c0_1] : memref<64x288xf32, #tpu.memory_space<vmem>>, vector<64x288xf32>
    %c0_2 = arith.constant 0 : index
    %c0_3 = arith.constant 0 : index
    %c0_4 = arith.constant 0 : index
    %c0_5 = arith.constant 0 : index
    %4 = vector.load %arg3[%c0_2, %c0_3, %c0_4, %c0_5] : memref<1x1x64x288xbf16, #tpu.memory_space<vmem>>, vector<1x1x64x288xbf16>
    %5 = vector.shape_cast %4 : vector<1x1x64x288xbf16> to vector<64x288xbf16>
    %c0_6 = arith.constant 0 : index
    %c0_7 = arith.constant 0 : index
    %c0_8 = arith.constant 0 : index
    %6 = vector.load %arg4[%c0_6, %c0_7, %c0_8] : memref<1x288x288xbf16, #tpu.memory_space<vmem>>, vector<1x288x288xbf16>
    %7 = vector.shape_cast %6 : vector<1x288x288xbf16> to vector<288x288xbf16>
    %cst = arith.constant dense<0.000000e+00> : vector<64x288xf32>
    %8 = tpu.matmul %5, %7, %cst {dimension_numbers = #tpu.dot_dimension_numbers<[1], [0], [0], [1], [0, 0, 1, 1], [], []>} : vector<64x288xbf16>, vector<288x288xbf16>, vector<64x288xf32> -> vector<64x288xf32>
    %9 = arith.addf %3, %8 : vector<64x288xf32>
    %c0_9 = arith.constant 0 : index
    %c0_10 = arith.constant 0 : index
    %10 = vector.load %arg7[%c0_9, %c0_10] : memref<64x288xf32, #tpu.memory_space<vmem>>, vector<64x288xf32>
    tpu.vector_store %arg7[%c0_9, %c0_10], %9 {strides = array<i32>} : memref<64x288xf32, #tpu.memory_space<vmem>>, vector<64x288xf32>,
    %c2_i32 = arith.constant 2 : i32
    %11 = arith.cmpi eq, %arg2, %c2_i32 : i32
    %12 = arith.extui %11 : i1 to i32
    %c0_i32_11 = arith.constant 0 : i32
    %13 = arith.cmpi ne, %12, %c0_i32_11 : i32
    scf.if %13 {
      %c0_12 = arith.constant 0 : index
      %c0_13 = arith.constant 0 : index
      %14 = vector.load %arg7[%c0_12, %c0_13] : memref<64x288xf32, #tpu.memory_space<vmem>>, vector<64x288xf32>
      %c0_14 = arith.constant 0 : index
      %c0_15 = arith.constant 0 : index
      %15 = vector.load %arg5[%c0_14, %c0_15] : memref<1x288xf32, #tpu.memory_space<vmem>>, vector<1x288xf32>
      %16 = vector.broadcast %15 : vector<1x288xf32> to vector<64x288xf32>
      %17 = arith.addf %14, %16 : vector<64x288xf32>
      %cst_16 = arith.constant 0.000000e+00 : f32
      %18 = vector.broadcast %cst_16 : f32 to vector<64x288xf32>
      %19 = arith.maximumf %17, %18 : vector<64x288xf32>
      %c0_17 = arith.constant 0 : index
      %c0_18 = arith.constant 0 : index
      %c0_19 = arith.constant 0 : index
      %c0_20 = arith.constant 0 : index
      %20 = vector.load %arg6[%c0_17, %c0_18, %c0_19, %c0_20] : memref<1x1x64x288xf32, #tpu.memory_space<vmem>>, vector<1x1x64x288xf32>
      %21 = vector.shape_cast %20 : vector<1x1x64x288xf32> to vector<64x288xf32>
      %22 = vector.shape_cast %19 : vector<64x288xf32> to vector<1x1x64x288xf32>
      tpu.vector_store %arg6[%c0_17, %c0_18, %c0_19, %c0_20], %22 {strides = array<i32>} : memref<1x1x64x288xf32, #tpu.memory_space<vmem>>, vector<1x1x64x288xf32>,
    } else {
    }
    return
  }
  func.func @transform_0(%arg0: i32, %arg1: i32, %arg2: i32) -> (i32, i32, i32, i32) {
    %0 = arith.addi %arg1, %arg2 : i32
    %c0_i32 = arith.constant 0 : i32
    %c0_i32_0 = arith.constant 0 : i32
    %c0_i32_1 = arith.constant 0 : i32
    return %arg0, %0, %c0_i32, %c0_i32_0 : i32, i32, i32, i32
  }
  func.func @transform_1(%arg0: i32, %arg1: i32, %arg2: i32) -> (i32, i32, i32) {
    %c0_i32 = arith.constant 0 : i32
    %c0_i32_0 = arith.constant 0 : i32
    %c0_i32_1 = arith.constant 0 : i32
    return %arg2, %c0_i32, %c0_i32_0 : i32, i32, i32
  }
  func.func @transform_2(%arg0: i32, %arg1: i32, %arg2: i32) -> (i32, i32) {
    %c0_i32 = arith.constant 0 : i32
    %c0_i32_0 = arith.constant 0 : i32
    %c0_i32_1 = arith.constant 0 : i32
    return %c0_i32, %c0_i32_0 : i32, i32
  }
  func.func @transform_3(%arg0: i32, %arg1: i32, %arg2: i32) -> (i32, i32, i32, i32) {
    %c0_i32 = arith.constant 0 : i32
    %c0_i32_0 = arith.constant 0 : i32
    %c0_i32_1 = arith.constant 0 : i32
    return %arg0, %arg1, %c0_i32, %c0_i32_0 : i32, i32, i32, i32
  }
}

</mosaic_0001>

<llo_original>
// kernel: mixed4e_forward.12
$region0: #{mixed4e_forward.12}
  #allocation0 [shape = 'u32[]', space=smem, size = 0x4, offset = 0x4, fixed_abs, tag = 'smem constant byte address 0x4 - core index']
  #allocation1 [shape = 'u32[144,128]{1,0:T(1,128)}', space=vmem, size = 0x12000, scoped, tag = 'internal scratch']
  %s0 = inlined_call_operand.vmem [shape: f32[8,110,512], index: 0, kind: input, shape index: {}]
  %s1 = inlined_call_operand.vmem [shape: f32[8,80,512], index: 1, kind: output, shape index: {}]
  %s2 = sld [smem:[#allocation0]]
  $region37: #{mixed4e_forward.12} parent=0
    _
  %s4 = ssub.s32 1, %s2
  %s5 = scalar_select 0, %s4, %s2
  loop: start=0, step=1, limit=10
  $region2: #{mixed4e_forward.12} parent=0 // loop_pre_header
    _
  $region3: #{mixed4e_forward.12} parent=0 // loop_header
    %s7 = sphi 0, %s11
    %p8 = scmp.ge.s32.totalorder %s7, 10
    %s17 = sphi 0, %s19
    %s20 = sphi 0, %s17
    %s21 = sphi 0, %s20
    %s37 = sphi 0, %s21
    %s43 = sphi 0, %s45
    %s46 = sphi 0, %s43
    %s47 = sphi 0, %s46
    %s63 = sphi 0, %s47
  $region4: #{mixed4e_forward.12} parent=0 // loop_header_branch
    %10 = sbr.rel (%p8) target = $region8
  $region5: #{mixed4e_forward.12} parent=0 // loop_body
    %s12 = ssub.s32 %s7, 1
    %s13 = ssub.s32 %s7, 2
    %s14 = sadd.s32 %s7, 1
    %s15 = ssub.s32 %s7, %s14
    %p16 = scmp.eq.s32.totalorder %s15, 0
    %s18 = sadd.s32 %s17, 1
    %s19 = scalar_select %p16, %s17, %s18
    %p22 = pneg %p16
    %p23 = scmp.eq.s32.totalorder %s7, 7
    %p24 = por %p22, %p23
    %p25 = scmp.ne.s32.totalorder %s17, %s20
    %p26 = scmp.eq.s32.totalorder %s7, 0
    %p27 = por %p25, %p26
    %p28 = scmp.ne.s32.totalorder %s17, %s20
    %p29 = scmp.eq.s32.totalorder %s12, 7
    %p30 = por %p28, %p29
    %p31 = scmp.ne.s32.totalorder %s20, %s21
    %p32 = scmp.eq.s32.totalorder %s12, 0
    %p33 = por %p31, %p32
    %p34 = scmp.ne.s32.totalorder %s20, %s21
    %p35 = scmp.eq.s32.totalorder %s13, 7
    %p36 = por %p34, %p35
    %p38 = scmp.ne.s32.totalorder %s21, %s37
    %p39 = scmp.eq.s32.totalorder %s13, 0
    %p40 = por %p38, %p39
    %s41 = ssub.s32 %s7, %s14
    %p42 = scmp.eq.s32.totalorder %s41, 0
    %s44 = sadd.s32 %s43, 1
    %s45 = scalar_select %p42, %s43, %s44
    %p48 = pneg %p42
    %p49 = scmp.eq.s32.totalorder %s7, 7
    %p50 = por %p48, %p49
    %p51 = scmp.ne.s32.totalorder %s43, %s46
    %p52 = scmp.eq.s32.totalorder %s7, 0
    %p53 = por %p51, %p52
    %p54 = scmp.ne.s32.totalorder %s43, %s46
    %p55 = scmp.eq.s32.totalorder %s12, 7
    %p56 = por %p54, %p55
    %p57 = scmp.ne.s32.totalorder %s46, %s47
    %p58 = scmp.eq.s32.totalorder %s12, 0
    %p59 = por %p57, %p58
    %p60 = scmp.ne.s32.totalorder %s46, %s47
    %p61 = scmp.eq.s32.totalorder %s13, 7
    %p62 = por %p60, %p61
    %p64 = scmp.ne.s32.totalorder %s47, %s63
    %p65 = scmp.eq.s32.totalorder %s13, 0
    %p66 = por %p64, %p65
    %p67 = scmp.le.s32.totalorder 1, %s7
    %p68 = scmp.lt.s32.totalorder %s7, 9
    %p69 = pnand %p67, %p68
    %p70 = pneg %p69
    // Predicated region
    $region9: #{mixed4e_forward.12} parent=5 // pred_check
      _
    $region10: #{mixed4e_forward.12} parent=5 // pred_check_branch
      %72 = sbr.rel (%p69) target = $region12
    $region11: #{mixed4e_forward.12} parent=5 // pred_region
      %s73 = ssub.s32 %s7, 1
    $region12: #{mixed4e_forward.12} parent=5 // pred_fallthru
      _
    %p74 = scmp.lt.s32.totalorder %s7, 8
    // Predicated region
    $region13: #{mixed4e_forward.12} parent=5 // pred_check
      %p75 = pneg %p74
    $region14: #{mixed4e_forward.12} parent=5 // pred_check_branch
      %77 = sbr.rel (%p75) target = $region16
    $region15: #{mixed4e_forward.12} parent=5 // pred_region
      // Predicated region
      $region17: #{mixed4e_forward.12} parent=15 // pred_check
        %p78 = pneg %p27
      $region18: #{mixed4e_forward.12} parent=15 // pred_check_branch
        %80 = sbr.rel (%p78) target = $region20
      $region19: #{mixed4e_forward.12} parent=15 // pred_region
        %p81 = scmp.lt.s32.totalorder %s7, 7
        %s82 = scalar_select %p81, %s7, 7
        %s83 = smul.addr %s82, 56
        %s84 = smul.addr %s83, 8
        %s85 = scalar_lea.vmem %s0, %s84
      $region20: #{mixed4e_forward.12} parent=15 // pred_fallthru
        _
    $region16: #{mixed4e_forward.12} parent=5 // pred_fallthru
      _
    %p86 = scmp.le.s32.totalorder 1, %s7
    %p87 = scmp.lt.s32.totalorder %s7, 9
    %p88 = pnand %p86, %p87
    %p89 = pneg %p88
    // Predicated region
    $region21: #{mixed4e_forward.12} parent=5 // pred_check
      _
    $region22: #{mixed4e_forward.12} parent=5 // pred_check_branch
      %91 = sbr.rel (%p88) target = $region24
    $region23: #{mixed4e_forward.12} parent=5 // pred_region
      %s92 = ssub.s32 %s7, 1
      %p93 = scmp.lt.s32.totalorder %s12, 7
      %s94 = scalar_select %p93, %s12, 7
      %s95 = smul.addr %s94, 56
      %s96 = smul.addr %s95, 8
      %s97 = scalar_lea.vmem %s0, %s96
      %p98 = pneg %p33
      %p99 = pneg %p30
      %p100 = pneg %p59
      %p101 = pneg %p56
      %p102 = scmp.lt.s32.totalorder %s12, 7
      %s103 = scalar_select %p102, %s12, 7
      %s104 = smul.addr %s103, 40
      %s105 = smul.addr %s104, 8
      %s106 = scalar_lea.vmem %s1, %s105
      %p107 = scmp.lt.s32.totalorder %s12, 7
      %s108 = scalar_select %p107, %s12, 7
      %s109 = smul.addr %s108, 56
      %s110 = smul.addr %s109, 8
      %s111 = scalar_lea.vmem %s0, %s110
      %p112 = scmp.lt.s32.totalorder %s12, 7
      %s113 = scalar_select %p112, %s12, 7
      %s114 = smul.addr %s113, 40
      %s115 = smul.addr %s114, 8
      %s116 = scalar_lea.vmem %s1, %s115
      %v117 = vld [vmem:[%s111] sm:$0xff]
      %v118 = vld [vmem:[%s111 + $0x8] sm:$0xff]
      %v119 = vld [vmem:[%s111 + $0x10] sm:$0xff]
      %v120 = vld [vmem:[%s111 + $0x18] sm:$0xff]
      %v121 = vld [vmem:[%s111 + $0x20] sm:$0xff]
      %v122 = vld [vmem:[%s111 + $0x28] sm:$0xff]
      %v123 = vld [vmem:[%s111 + $0x30] sm:$0xff]
      %v124 = vld [vmem:[%s111 + $0x38] sm:$0xff]
      %v125 = vld [vmem:[%s111 + $0x40] sm:$0xff]
      %v126 = vld [vmem:[%s111 + $0x48] sm:$0xff]
      %v127 = vld [vmem:[%s111 + $0x50] sm:$0xff]
      %v128 = vld [vmem:[%s111 + $0x58] sm:$0xff]
      %v129 = vld [vmem:[%s111 + $0x60] sm:$0xff]
      %v130 = vld [vmem:[%s111 + $0x68] sm:$0xff]
      %v131 = vld [vmem:[%s111 + $0x70] sm:$0xff]
      %v132 = vld [vmem:[%s111 + $0x78] sm:$0xff]
      %v133 = vld [vmem:[%s111 + $0x80] sm:$0xff]
      %v134 = vld [vmem:[%s111 + $0x88] sm:$0xff]
      %v135 = vld [vmem:[%s111 + $0x90] sm:$0xff]
      %v136 = vld [vmem:[%s111 + $0x98] sm:$0xff]
      %v137 = vld [vmem:[%s111 + $0xa0] sm:$0xff]
      %v138 = vld [vmem:[%s111 + $0xa8] sm:$0xff]
      %v139 = vld [vmem:[%s111 + $0xb0] sm:$0xff]
      %v140 = vld [vmem:[%s111 + $0xb8] sm:$0xff]
      %v141 = vld [vmem:[%s111 + $0xc0] sm:$0xff]
      %v142 = vld [vmem:[%s111 + $0xc8] sm:$0xff]
      %v143 = vld [vmem:[%s111 + $0xd0] sm:$0xff]
      %v144 = vld [vmem:[%s111 + $0xd8] sm:$0xff]
      %v145 = vld [vmem:[%s111 + $0xe0] sm:$0xff]
      %v146 = vld [vmem:[%s111 + $0xe8] sm:$0xff]
      %v147 = vld [vmem:[%s111 + $0xf0] sm:$0xff]
      %v148 = vld [vmem:[%s111 + $0xf8] sm:$0xff]
      %v149 = vld [vmem:[%s111 + $0x100] sm:$0xff]
      %v150 = vld [vmem:[%s111 + $0x108] sm:$0xff]
      %v151 = vld [vmem:[%s111 + $0x110] sm:$0xff]
      %v152 = vld [vmem:[%s111 + $0x118] sm:$0xff]
      %v153 = vld [vmem:[%s111 + $0x120] sm:$0xff]
      %v154 = vld [vmem:[%s111 + $0x128] sm:$0xff]
      %v155 = vld [vmem:[%s111 + $0x130] sm:$0xff]
      %v156 = vld [vmem:[%s111 + $0x138] sm:$0xff]
      %v157 = vld [vmem:[%s111] sm:$0xfe]
      %v158 = vld [vmem:[%s111 + $0x8] sm:$0xfe]
      %v159 = vld [vmem:[%s111 + $0x10] sm:$0xfe]
      %v160 = vld [vmem:[%s111 + $0x18] sm:$0xfe]
      %v161 = vld [vmem:[%s111 + $0x140] sm:$0x1]
      %v162 = vld [vmem:[%s111 + $0x148] sm:$0x1]
      %v163 = vld [vmem:[%s111 + $0x150] sm:$0x1]
      %v164 = vld [vmem:[%s111 + $0x158] sm:$0x1]
      %vm209 = vcmask 1046528
      %v210 = vrot.slane %v157, 1
      %v211 = vrot.slane %v121, 1
      %v212 = vsel %vm209, %v210, %v211
      %v213 = vrot.slane %v158, 1
      %v214 = vrot.slane %v122, 1
      %v215 = vsel %vm209, %v213, %v214
      %v216 = vrot.slane %v159, 1
      %v217 = vrot.slane %v123, 1
      %v218 = vsel %vm209, %v216, %v217
      %v219 = vrot.slane %v160, 1
      %v220 = vrot.slane %v124, 1
      %v221 = vsel %vm209, %v219, %v220
      %v222 = vrot.slane %v125, 1
      %v223 = vsel %vm209, %v211, %v222
      %v224 = vrot.slane %v126, 1
      %v225 = vsel %vm209, %v214, %v224
      %v226 = vrot.slane %v127, 1
      %v227 = vsel %vm209, %v217, %v226
      %v228 = vrot.slane %v128, 1
      %v229 = vsel %vm209, %v220, %v228
      %v230 = vrot.slane %v129, 1
      %v231 = vsel %vm209, %v222, %v230
      %v232 = vrot.slane %v130, 1
      %v233 = vsel %vm209, %v224, %v232
      %v234 = vrot.slane %v131, 1
      %v235 = vsel %vm209, %v226, %v234
      %v236 = vrot.slane %v132, 1
      %v237 = vsel %vm209, %v228, %v236
      %v238 = vrot.slane %v133, 1
      %v239 = vsel %vm209, %v230, %v238
      %v240 = vrot.slane %v134, 1
      %v241 = vsel %vm209, %v232, %v240
      %v242 = vrot.slane %v135, 1
      %v243 = vsel %vm209, %v234, %v242
      %v244 = vrot.slane %v136, 1
      %v245 = vsel %vm209, %v236, %v244
      %v246 = vrot.slane %v137, 1
      %v247 = vsel %vm209, %v238, %v246
      %v248 = vrot.slane %v138, 1
      %v249 = vsel %vm209, %v240, %v248
      %v250 = vrot.slane %v139, 1
      %v251 = vsel %vm209, %v242, %v250
      %v252 = vrot.slane %v140, 1
      %v253 = vsel %vm209, %v244, %v252
      %v254 = vrot.slane %v141, 1
      %v255 = vsel %vm209, %v246, %v254
      %v256 = vrot.slane %v142, 1
      %v257 = vsel %vm209, %v248, %v256
      %v258 = vrot.slane %v143, 1
      %v259 = vsel %vm209, %v250, %v258
      %v260 = vrot.slane %v144, 1
      %v261 = vsel %vm209, %v252, %v260
      %v262 = vrot.slane %v145, 1
      %v263 = vsel %vm209, %v254, %v262
      %v264 = vrot.slane %v146, 1
      %v265 = vsel %vm209, %v256, %v264
      %v266 = vrot.slane %v147, 1
      %v267 = vsel %vm209, %v258, %v266
      %v268 = vrot.slane %v148, 1
      %v269 = vsel %vm209, %v260, %v268
      %v270 = vrot.slane %v149, 1
      %v271 = vsel %vm209, %v262, %v270
      %v272 = vrot.slane %v150, 1
      %v273 = vsel %vm209, %v264, %v272
      %v274 = vrot.slane %v151, 1
      %v275 = vsel %vm209, %v266, %v274
      %v276 = vrot.slane %v152, 1
      %v277 = vsel %vm209, %v268, %v276
      %v278 = vrot.slane %v153, 1
      %v279 = vsel %vm209, %v270, %v278
      %v280 = vrot.slane %v154, 1
      %v281 = vsel %vm209, %v272, %v280
      %v282 = vrot.slane %v155, 1
      %v283 = vsel %vm209, %v274, %v282
      %v284 = vrot.slane %v156, 1
      %v285 = vsel %vm209, %v276, %v284
      %v286 = vrot.slane %v161, 1
      %v287 = vsel %vm209, %v278, %v286
      %v288 = vrot.slane %v162, 1
      %v289 = vsel %vm209, %v280, %v288
      %v290 = vrot.slane %v163, 1
      %v291 = vsel %vm209, %v282, %v290
      %v292 = vrot.slane %v164, 1
      %v293 = vsel %vm209, %v284, %v292
      %v334 = vmax.f32 %v117, %v212
      %v335 = vmax.f32 %v118, %v215
      %v336 = vmax.f32 %v119, %v218
      %v337 = vmax.f32 %v120, %v221
      %v338 = vmax.f32 %v121, %v223
      %v339 = vmax.f32 %v122, %v225
      %v340 = vmax.f32 %v123, %v227
      %v341 = vmax.f32 %v124, %v229
      %v342 = vmax.f32 %v125, %v231
      %v343 = vmax.f32 %v126, %v233
      %v344 = vmax.f32 %v127, %v235
      %v345 = vmax.f32 %v128, %v237
      %v346 = vmax.f32 %v129, %v239
      %v347 = vmax.f32 %v130, %v241
      %v348 = vmax.f32 %v131, %v243
      %v349 = vmax.f32 %v132, %v245
      %v350 = vmax.f32 %v133, %v247
      %v351 = vmax.f32 %v134, %v249
      %v352 = vmax.f32 %v135, %v251
      %v353 = vmax.f32 %v136, %v253
      %v354 = vmax.f32 %v137, %v255
      %v355 = vmax.f32 %v138, %v257
      %v356 = vmax.f32 %v139, %v259
      %v357 = vmax.f32 %v140, %v261
      %v358 = vmax.f32 %v141, %v263
      %v359 = vmax.f32 %v142, %v265
      %v360 = vmax.f32 %v143, %v267
      %v361 = vmax.f32 %v144, %v269
      %v362 = vmax.f32 %v145, %v271
      %v363 = vmax.f32 %v146, %v273
      %v364 = vmax.f32 %v147, %v275
      %v365 = vmax.f32 %v148, %v277
      %v366 = vmax.f32 %v149, %v279
      %v367 = vmax.f32 %v150, %v281
      %v368 = vmax.f32 %v151, %v283
      %v369 = vmax.f32 %v152, %v285
      %v370 = vmax.f32 %v153, %v287
      %v371 = vmax.f32 %v154, %v289
      %v372 = vmax.f32 %v155, %v291
      %v373 = vmax.f32 %v156, %v293
      %v374 = vld [vmem:[%s111] sm:$0xfc]
      %v375 = vld [vmem:[%s111 + $0x8] sm:$0xfc]
      %v376 = vld [vmem:[%s111 + $0x10] sm:$0xfc]
      %v377 = vld [vmem:[%s111 + $0x18] sm:$0xfc]
      %v378 = vld [vmem:[%s111 + $0x140] sm:$0x3]
      %v379 = vld [vmem:[%s111 + $0x148] sm:$0x3]
      %v380 = vld [vmem:[%s111 + $0x150] sm:$0x3]
      %v381 = vld [vmem:[%s111 + $0x158] sm:$0x3]
      %vm390 = vcmask 1045504
      %v391 = vrot.slane %v374, 2
      %v392 = vrot.slane %v121, 2
      %v393 = vsel %vm390, %v391, %v392
      %v394 = vrot.slane %v375, 2
      %v395 = vrot.slane %v122, 2
      %v396 = vsel %vm390, %v394, %v395
      %v397 = vrot.slane %v376, 2
      %v398 = vrot.slane %v123, 2
      %v399 = vsel %vm390, %v397, %v398
      %v400 = vrot.slane %v377, 2
      %v401 = vrot.slane %v124, 2
      %v402 = vsel %vm390, %v400, %v401
      %v403 = vrot.slane %v125, 2
      %v404 = vsel %vm390, %v392, %v403
      %v405 = vrot.slane %v126, 2
      %v406 = vsel %vm390, %v395, %v405
      %v407 = vrot.slane %v127, 2
      %v408 = vsel %vm390, %v398, %v407
      %v409 = vrot.slane %v128, 2
      %v410 = vsel %vm390, %v401, %v409
      %v411 = vrot.slane %v129, 2
      %v412 = vsel %vm390, %v403, %v411
      %v413 = vrot.slane %v130, 2
      %v414 = vsel %vm390, %v405, %v413
      %v415 = vrot.slane %v131, 2
      %v416 = vsel %vm390, %v407, %v415
      %v417 = vrot.slane %v132, 2
      %v418 = vsel %vm390, %v409, %v417
      %v419 = vrot.slane %v133, 2
      %v420 = vsel %vm390, %v411, %v419
      %v421 = vrot.slane %v134, 2
      %v422 = vsel %vm390, %v413, %v421
      %v423 = vrot.slane %v135, 2
      %v424 = vsel %vm390, %v415, %v423
      %v425 = vrot.slane %v136, 2
      %v426 = vsel %vm390, %v417, %v425
      %v427 = vrot.slane %v137, 2
      %v428 = vsel %vm390, %v419, %v427
      %v429 = vrot.slane %v138, 2
      %v430 = vsel %vm390, %v421, %v429
      %v431 = vrot.slane %v139, 2
      %v432 = vsel %vm390, %v423, %v431
      %v433 = vrot.slane %v140, 2
      %v434 = vsel %vm390, %v425, %v433
      %v435 = vrot.slane %v141, 2
      %v436 = vsel %vm390, %v427, %v435
      %v437 = vrot.slane %v142, 2
      %v438 = vsel %vm390, %v429, %v437
      %v439 = vrot.slane %v143, 2
      %v440 = vsel %vm390, %v431, %v439
      %v441 = vrot.slane %v144, 2
      %v442 = vsel %vm390, %v433, %v441
      %v443 = vrot.slane %v145, 2
      %v444 = vsel %vm390, %v435, %v443
      %v445 = vrot.slane %v146, 2
      %v446 = vsel %vm390, %v437, %v445
      %v447 = vrot.slane %v147, 2
      %v448 = vsel %vm390, %v439, %v447
      %v449 = vrot.slane %v148, 2
      %v450 = vsel %vm390, %v441, %v449
      %v451 = vrot.slane %v149, 2
      %v452 = vsel %vm390, %v443, %v451
      %v453 = vrot.slane %v150, 2
      %v454 = vsel %vm390, %v445, %v453
      %v455 = vrot.slane %v151, 2
      %v456 = vsel %vm390, %v447, %v455
      %v457 = vrot.slane %v152, 2
      %v458 = vsel %vm390, %v449, %v457
      %v459 = vrot.slane %v153, 2
      %v460 = vsel %vm390, %v451, %v459
      %v461 = vrot.slane %v154, 2
      %v462 = vsel %vm390, %v453, %v461
      %v463 = vrot.slane %v155, 2
      %v464 = vsel %vm390, %v455, %v463
      %v465 = vrot.slane %v156, 2
      %v466 = vsel %vm390, %v457, %v465
      %v467 = vrot.slane %v378, 2
      %v468 = vsel %vm390, %v459, %v467
      %v469 = vrot.slane %v379, 2
      %v470 = vsel %vm390, %v461, %v469
      %v471 = vrot.slane %v380, 2
      %v472 = vsel %vm390, %v463, %v471
      %v473 = vrot.slane %v381, 2
      %v474 = vsel %vm390, %v465, %v473
      %v515 = vmax.f32 %v334, %v393
      %v516 = vmax.f32 %v335, %v396
      %v517 = vmax.f32 %v336, %v399
      %v518 = vmax.f32 %v337, %v402
      %v519 = vmax.f32 %v338, %v404
      %v520 = vmax.f32 %v339, %v406
      %v521 = vmax.f32 %v340, %v408
      %v522 = vmax.f32 %v341, %v410
      %v523 = vmax.f32 %v342, %v412
      %v524 = vmax.f32 %v343, %v414
      %v525 = vmax.f32 %v344, %v416
      %v526 = vmax.f32 %v345, %v418
      %v527 = vmax.f32 %v346, %v420
      %v528 = vmax.f32 %v347, %v422
      %v529 = vmax.f32 %v348, %v424
      %v530 = vmax.f32 %v349, %v426
      %v531 = vmax.f32 %v350, %v428
      %v532 = vmax.f32 %v351, %v430
      %v533 = vmax.f32 %v352, %v432
      %v534 = vmax.f32 %v353, %v434
      %v535 = vmax.f32 %v354, %v436
      %v536 = vmax.f32 %v355, %v438
      %v537 = vmax.f32 %v356, %v440
      %v538 = vmax.f32 %v357, %v442
      %v539 = vmax.f32 %v358, %v444
      %v540 = vmax.f32 %v359, %v446
      %v541 = vmax.f32 %v360, %v448
      %v542 = vmax.f32 %v361, %v450
      %v543 = vmax.f32 %v362, %v452
      %v544 = vmax.f32 %v363, %v454
      %v545 = vmax.f32 %v364, %v456
      %v546 = vmax.f32 %v365, %v458
      %v547 = vmax.f32 %v366, %v460
      %v548 = vmax.f32 %v367, %v462
      %v549 = vmax.f32 %v368, %v464
      %v550 = vmax.f32 %v369, %v466
      %v551 = vmax.f32 %v370, %v468
      %v552 = vmax.f32 %v371, %v470
      %v553 = vmax.f32 %v372, %v472
      %v554 = vmax.f32 %v373, %v474
      %v555 = vld [vmem:[%s111 + $0x20] sm:$0xfc]
      %v556 = vld [vmem:[%s111 + $0x28] sm:$0xfc]
      %v557 = vld [vmem:[%s111 + $0x30] sm:$0xfc]
      %v558 = vld [vmem:[%s111 + $0x38] sm:$0xfc]
      %v559 = vld [vmem:[%s111 + $0x140] sm:$0xff]
      %v560 = vld [vmem:[%s111 + $0x148] sm:$0xff]
      %v561 = vld [vmem:[%s111 + $0x150] sm:$0xff]
      %v562 = vld [vmem:[%s111 + $0x158] sm:$0xff]
      %v563 = vld [vmem:[%s111 + $0x160] sm:$0x3]
      %v564 = vld [vmem:[%s111 + $0x168] sm:$0x3]
      %v565 = vld [vmem:[%s111 + $0x170] sm:$0x3]
      %v566 = vld [vmem:[%s111 + $0x178] sm:$0x3]
      %v579 = vrot.slane %v555, 2
      %v580 = vsel %vm390, %v579, %v403
      %v581 = vrot.slane %v556, 2
      %v582 = vsel %vm390, %v581, %v405
      %v583 = vrot.slane %v557, 2
      %v584 = vsel %vm390, %v583, %v407
      %v585 = vrot.slane %v558, 2
      %v586 = vsel %vm390, %v585, %v409
      %v587 = vrot.slane %v559, 2
      %v588 = vsel %vm390, %v459, %v587
      %v589 = vrot.slane %v560, 2
      %v590 = vsel %vm390, %v461, %v589
      %v591 = vrot.slane %v561, 2
      %v592 = vsel %vm390, %v463, %v591
      %v593 = vrot.slane %v562, 2
      %v594 = vsel %vm390, %v465, %v593
      %v595 = vrot.slane %v563, 2
      %v596 = vsel %vm390, %v587, %v595
      %v597 = vrot.slane %v564, 2
      %v598 = vsel %vm390, %v589, %v597
      %v599 = vrot.slane %v565, 2
      %v600 = vsel %vm390, %v591, %v599
      %v601 = vrot.slane %v566, 2
      %v602 = vsel %vm390, %v593, %v601
      %v615 = vmax.f32 %v515, %v580
      %v616 = vmax.f32 %v516, %v582
      %v617 = vmax.f32 %v517, %v584
      %v618 = vmax.f32 %v518, %v586
      %v619 = vmax.f32 %v519, %v412
      %v620 = vmax.f32 %v520, %v414
      %v621 = vmax.f32 %v521, %v416
      %v622 = vmax.f32 %v522, %v418
      %v623 = vmax.f32 %v523, %v420
      %v624 = vmax.f32 %v524, %v422
      %v625 = vmax.f32 %v525, %v424
      %v626 = vmax.f32 %v526, %v426
      %v627 = vmax.f32 %v527, %v428
      %v628 = vmax.f32 %v528, %v430
      %v629 = vmax.f32 %v529, %v432
      %v630 = vmax.f32 %v530, %v434
      %v631 = vmax.f32 %v531, %v436
      %v632 = vmax.f32 %v532, %v438
      %v633 = vmax.f32 %v533, %v440
      %v634 = vmax.f32 %v534, %v442
      %v635 = vmax.f32 %v535, %v444
      %v636 = vmax.f32 %v536, %v446
      %v637 = vmax.f32 %v537, %v448
      %v638 = vmax.f32 %v538, %v450
      %v639 = vmax.f32 %v539, %v452
      %v640 = vmax.f32 %v540, %v454
      %v641 = vmax.f32 %v541, %v456
      %v642 = vmax.f32 %v542, %v458
      %v643 = vmax.f32 %v543, %v460
      %v644 = vmax.f32 %v544, %v462
      %v645 = vmax.f32 %v545, %v464
      %v646 = vmax.f32 %v546, %v466
      %v647 = vmax.f32 %v547, %v588
      %v648 = vmax.f32 %v548, %v590
      %v649 = vmax.f32 %v549, %v592
      %v650 = vmax.f32 %v550, %v594
      %v651 = vmax.f32 %v551, %v596
      %v652 = vmax.f32 %v552, %v598
      %v653 = vmax.f32 %v553, %v600
      %v654 = vmax.f32 %v554, %v602
      %v655 = vld [vmem:[%s111 + $0x20] sm:$0xf8]
      %v656 = vld [vmem:[%s111 + $0x28] sm:$0xf8]
      %v657 = vld [vmem:[%s111 + $0x30] sm:$0xf8]
      %v658 = vld [vmem:[%s111 + $0x38] sm:$0xf8]
      %v659 = vld [vmem:[%s111 + $0x160] sm:$0x7]
      %v660 = vld [vmem:[%s111 + $0x168] sm:$0x7]
      %v661 = vld [vmem:[%s111 + $0x170] sm:$0x7]
      %v662 = vld [vmem:[%s111 + $0x178] sm:$0x7]
      %vm671 = vcmask 1044480
      %v672 = vrot.slane %v655, 3
      %v673 = vrot.slane %v125, 3
      %v674 = vsel %vm671, %v672, %v673
      %v675 = vrot.slane %v656, 3
      %v676 = vrot.slane %v126, 3
      %v677 = vsel %vm671, %v675, %v676
      %v678 = vrot.slane %v657, 3
      %v679 = vrot.slane %v127, 3
      %v680 = vsel %vm671, %v678, %v679
      %v681 = vrot.slane %v658, 3
      %v682 = vrot.slane %v128, 3
      %v683 = vsel %vm671, %v681, %v682
      %v684 = vrot.slane %v129, 3
      %v685 = vsel %vm671, %v673, %v684
      %v686 = vrot.slane %v130, 3
      %v687 = vsel %vm671, %v676, %v686
      %v688 = vrot.slane %v131, 3
      %v689 = vsel %vm671, %v679, %v688
      %v690 = vrot.slane %v132, 3
      %v691 = vsel %vm671, %v682, %v690
      %v692 = vrot.slane %v133, 3
      %v693 = vsel %vm671, %v684, %v692
      %v694 = vrot.slane %v134, 3
      %v695 = vsel %vm671, %v686, %v694
      %v696 = vrot.slane %v135, 3
      %v697 = vsel %vm671, %v688, %v696
      %v698 = vrot.slane %v136, 3
      %v699 = vsel %vm671, %v690, %v698
      %v700 = vrot.slane %v137, 3
      %v701 = vsel %vm671, %v692, %v700
      %v702 = vrot.slane %v138, 3
      %v703 = vsel %vm671, %v694, %v702
      %v704 = vrot.slane %v139, 3
      %v705 = vsel %vm671, %v696, %v704
      %v706 = vrot.slane %v140, 3
      %v707 = vsel %vm671, %v698, %v706
      %v708 = vrot.slane %v141, 3
      %v709 = vsel %vm671, %v700, %v708
      %v710 = vrot.slane %v142, 3
      %v711 = vsel %vm671, %v702, %v710
      %v712 = vrot.slane %v143, 3
      %v713 = vsel %vm671, %v704, %v712
      %v714 = vrot.slane %v144, 3
      %v715 = vsel %vm671, %v706, %v714
      %v716 = vrot.slane %v145, 3
      %v717 = vsel %vm671, %v708, %v716
      %v718 = vrot.slane %v146, 3
      %v719 = vsel %vm671, %v710, %v718
      %v720 = vrot.slane %v147, 3
      %v721 = vsel %vm671, %v712, %v720
      %v722 = vrot.slane %v148, 3
      %v723 = vsel %vm671, %v714, %v722
      %v724 = vrot.slane %v149, 3
      %v725 = vsel %vm671, %v716, %v724
      %v726 = vrot.slane %v150, 3
      %v727 = vsel %vm671, %v718, %v726
      %v728 = vrot.slane %v151, 3
      %v729 = vsel %vm671, %v720, %v728
      %v730 = vrot.slane %v152, 3
      %v731 = vsel %vm671, %v722, %v730
      %v732 = vrot.slane %v153, 3
      %v733 = vsel %vm671, %v724, %v732
      %v734 = vrot.slane %v154, 3
      %v735 = vsel %vm671, %v726, %v734
      %v736 = vrot.slane %v155, 3
      %v737 = vsel %vm671, %v728, %v736
      %v738 = vrot.slane %v156, 3
      %v739 = vsel %vm671, %v730, %v738
      %v740 = vrot.slane %v559, 3
      %v741 = vsel %vm671, %v732, %v740
      %v742 = vrot.slane %v560, 3
      %v743 = vsel %vm671, %v734, %v742
      %v744 = vrot.slane %v561, 3
      %v745 = vsel %vm671, %v736, %v744
      %v746 = vrot.slane %v562, 3
      %v747 = vsel %vm671, %v738, %v746
      %v748 = vrot.slane %v659, 3
      %v749 = vsel %vm671, %v740, %v748
      %v750 = vrot.slane %v660, 3
      %v751 = vsel %vm671, %v742, %v750
      %v752 = vrot.slane %v661, 3
      %v753 = vsel %vm671, %v744, %v752
      %v754 = vrot.slane %v662, 3
      %v755 = vsel %vm671, %v746, %v754
      %v796 = vmax.f32 %v615, %v674
      %v797 = vmax.f32 %v616, %v677
      %v798 = vmax.f32 %v617, %v680
      %v799 = vmax.f32 %v618, %v683
      %v800 = vmax.f32 %v619, %v685
      %v801 = vmax.f32 %v620, %v687
      %v802 = vmax.f32 %v621, %v689
      %v803 = vmax.f32 %v622, %v691
      %v804 = vmax.f32 %v623, %v693
      %v805 = vmax.f32 %v624, %v695
      %v806 = vmax.f32 %v625, %v697
      %v807 = vmax.f32 %v626, %v699
      %v808 = vmax.f32 %v627, %v701
      %v809 = vmax.f32 %v628, %v703
      %v810 = vmax.f32 %v629, %v705
      %v811 = vmax.f32 %v630, %v707
      %v812 = vmax.f32 %v631, %v709
      %v813 = vmax.f32 %v632, %v711
      %v814 = vmax.f32 %v633, %v713
      %v815 = vmax.f32 %v634, %v715
      %v816 = vmax.f32 %v635, %v717
      %v817 = vmax.f32 %v636, %v719
      %v818 = vmax.f32 %v637, %v721
      %v819 = vmax.f32 %v638, %v723
      %v820 = vmax.f32 %v639, %v725
      %v821 = vmax.f32 %v640, %v727
      %v822 = vmax.f32 %v641, %v729
      %v823 = vmax.f32 %v642, %v731
      %v824 = vmax.f32 %v643, %v733
      %v825 = vmax.f32 %v644, %v735
      %v826 = vmax.f32 %v645, %v737
      %v827 = vmax.f32 %v646, %v739
      %v828 = vmax.f32 %v647, %v741
      %v829 = vmax.f32 %v648, %v743
      %v830 = vmax.f32 %v649, %v745
      %v831 = vmax.f32 %v650, %v747
      %v832 = vmax.f32 %v651, %v749
      %v833 = vmax.f32 %v652, %v751
      %v834 = vmax.f32 %v653, %v753
      %v835 = vmax.f32 %v654, %v755
      %v836 = vld [vmem:[%s111 + $0x20] sm:$0xf0]
      %v837 = vld [vmem:[%s111 + $0x28] sm:$0xf0]
      %v838 = vld [vmem:[%s111 + $0x30] sm:$0xf0]
      %v839 = vld [vmem:[%s111 + $0x38] sm:$0xf0]
      %v840 = vld [vmem:[%s111 + $0x160] sm:$0xf]
      %v841 = vld [vmem:[%s111 + $0x168] sm:$0xf]
      %v842 = vld [vmem:[%s111 + $0x170] sm:$0xf]
      %v843 = vld [vmem:[%s111 + $0x178] sm:$0xf]
      %vm852 = vcmask 1043456
      %v853 = vrot.slane %v836, 4
      %v854 = vrot.slane %v125, 4
      %v855 = vsel %vm852, %v853, %v854
      %v856 = vrot.slane %v837, 4
      %v857 = vrot.slane %v126, 4
      %v858 = vsel %vm852, %v856, %v857
      %v859 = vrot.slane %v838, 4
      %v860 = vrot.slane %v127, 4
      %v861 = vsel %vm852, %v859, %v860
      %v862 = vrot.slane %v839, 4
      %v863 = vrot.slane %v128, 4
      %v864 = vsel %vm852, %v862, %v863
      %v865 = vrot.slane %v129, 4
      %v866 = vsel %vm852, %v854, %v865
      %v867 = vrot.slane %v130, 4
      %v868 = vsel %vm852, %v857, %v867
      %v869 = vrot.slane %v131, 4
      %v870 = vsel %vm852, %v860, %v869
      %v871 = vrot.slane %v132, 4
      %v872 = vsel %vm852, %v863, %v871
      %v873 = vrot.slane %v133, 4
      %v874 = vsel %vm852, %v865, %v873
      %v875 = vrot.slane %v134, 4
      %v876 = vsel %vm852, %v867, %v875
      %v877 = vrot.slane %v135, 4
      %v878 = vsel %vm852, %v869, %v877
      %v879 = vrot.slane %v136, 4
      %v880 = vsel %vm852, %v871, %v879
      %v881 = vrot.slane %v137, 4
      %v882 = vsel %vm852, %v873, %v881
      %v883 = vrot.slane %v138, 4
      %v884 = vsel %vm852, %v875, %v883
      %v885 = vrot.slane %v139, 4
      %v886 = vsel %vm852, %v877, %v885
      %v887 = vrot.slane %v140, 4
      %v888 = vsel %vm852, %v879, %v887
      %v889 = vrot.slane %v141, 4
      %v890 = vsel %vm852, %v881, %v889
      %v891 = vrot.slane %v142, 4
      %v892 = vsel %vm852, %v883, %v891
      %v893 = vrot.slane %v143, 4
      %v894 = vsel %vm852, %v885, %v893
      %v895 = vrot.slane %v144, 4
      %v896 = vsel %vm852, %v887, %v895
      %v897 = vrot.slane %v145, 4
      %v898 = vsel %vm852, %v889, %v897
      %v899 = vrot.slane %v146, 4
      %v900 = vsel %vm852, %v891, %v899
      %v901 = vrot.slane %v147, 4
      %v902 = vsel %vm852, %v893, %v901
      %v903 = vrot.slane %v148, 4
      %v904 = vsel %vm852, %v895, %v903
      %v905 = vrot.slane %v149, 4
      %v906 = vsel %vm852, %v897, %v905
      %v907 = vrot.slane %v150, 4
      %v908 = vsel %vm852, %v899, %v907
      %v909 = vrot.slane %v151, 4
      %v910 = vsel %vm852, %v901, %v909
      %v911 = vrot.slane %v152, 4
      %v912 = vsel %vm852, %v903, %v911
      %v913 = vrot.slane %v153, 4
      %v914 = vsel %vm852, %v905, %v913
      %v915 = vrot.slane %v154, 4
      %v916 = vsel %vm852, %v907, %v915
      %v917 = vrot.slane %v155, 4
      %v918 = vsel %vm852, %v909, %v917
      %v919 = vrot.slane %v156, 4
      %v920 = vsel %vm852, %v911, %v919
      %v921 = vrot.slane %v559, 4
      %v922 = vsel %vm852, %v913, %v921
      %v923 = vrot.slane %v560, 4
      %v924 = vsel %vm852, %v915, %v923
      %v925 = vrot.slane %v561, 4
      %v926 = vsel %vm852, %v917, %v925
      %v927 = vrot.slane %v562, 4
      %v928 = vsel %vm852, %v919, %v927
      %v929 = vrot.slane %v840, 4
      %v930 = vsel %vm852, %v921, %v929
      %v931 = vrot.slane %v841, 4
      %v932 = vsel %vm852, %v923, %v931
      %v933 = vrot.slane %v842, 4
      %v934 = vsel %vm852, %v925, %v933
      %v935 = vrot.slane %v843, 4
      %v936 = vsel %vm852, %v927, %v935
      %v977 = vmax.f32 %v796, %v855
      %v978 = vmax.f32 %v797, %v858
      %v979 = vmax.f32 %v798, %v861
      %v980 = vmax.f32 %v799, %v864
      %v981 = vmax.f32 %v800, %v866
      %v982 = vmax.f32 %v801, %v868
      %v983 = vmax.f32 %v802, %v870
      %v984 = vmax.f32 %v803, %v872
      %v985 = vmax.f32 %v804, %v874
      %v986 = vmax.f32 %v805, %v876
      %v987 = vmax.f32 %v806, %v878
      %v988 = vmax.f32 %v807, %v880
      %v989 = vmax.f32 %v808, %v882
      %v990 = vmax.f32 %v809, %v884
      %v991 = vmax.f32 %v810, %v886
      %v992 = vmax.f32 %v811, %v888
      %v993 = vmax.f32 %v812, %v890
      %v994 = vmax.f32 %v813, %v892
      %v995 = vmax.f32 %v814, %v894
      %v996 = vmax.f32 %v815, %v896
      %v997 = vmax.f32 %v816, %v898
      %v998 = vmax.f32 %v817, %v900
      %v999 = vmax.f32 %v818, %v902
      %v1000 = vmax.f32 %v819, %v904
      %v1001 = vmax.f32 %v820, %v906
      %v1002 = vmax.f32 %v821, %v908
      %v1003 = vmax.f32 %v822, %v910
      %v1004 = vmax.f32 %v823, %v912
      %v1005 = vmax.f32 %v824, %v914
      %v1006 = vmax.f32 %v825, %v916
      %v1007 = vmax.f32 %v826, %v918
      %v1008 = vmax.f32 %v827, %v920
      %v1009 = vmax.f32 %v828, %v922
      %v1010 = vmax.f32 %v829, %v924
      %v1011 = vmax.f32 %v830, %v926
      %v1012 = vmax.f32 %v831, %v928
      %v1013 = vmax.f32 %v832, %v930
      %v1014 = vmax.f32 %v833, %v932
      %v1015 = vmax.f32 %v834, %v934
      %v1016 = vmax.f32 %v835, %v936
      %v1017 = vld [vmem:[%s111 + $0x40] sm:$0xf0]
      %v1018 = vld [vmem:[%s111 + $0x48] sm:$0xf0]
      %v1019 = vld [vmem:[%s111 + $0x50] sm:$0xf0]
      %v1020 = vld [vmem:[%s111 + $0x58] sm:$0xf0]
      %v1021 = vld [vmem:[%s111 + $0x160] sm:$0xff]
      %v1022 = vld [vmem:[%s111 + $0x168] sm:$0xff]
      %v1023 = vld [vmem:[%s111 + $0x170] sm:$0xff]
      %v1024 = vld [vmem:[%s111 + $0x178] sm:$0xff]
      %v1025 = vld [vmem:[%s111 + $0x180] sm:$0xf]
      %v1026 = vld [vmem:[%s111 + $0x188] sm:$0xf]
      %v1027 = vld [vmem:[%s111 + $0x190] sm:$0xf]
      %v1028 = vld [vmem:[%s111 + $0x198] sm:$0xf]
      %v1041 = vrot.slane %v1017, 4
      %v1042 = vsel %vm852, %v1041, %v865
      %v1043 = vrot.slane %v1018, 4
      %v1044 = vsel %vm852, %v1043, %v867
      %v1045 = vrot.slane %v1019, 4
      %v1046 = vsel %vm852, %v1045, %v869
      %v1047 = vrot.slane %v1020, 4
      %v1048 = vsel %vm852, %v1047, %v871
      %v1049 = vrot.slane %v1021, 4
      %v1050 = vsel %vm852, %v921, %v1049
      %v1051 = vrot.slane %v1022, 4
      %v1052 = vsel %vm852, %v923, %v1051
      %v1053 = vrot.slane %v1023, 4
      %v1054 = vsel %vm852, %v925, %v1053
      %v1055 = vrot.slane %v1024, 4
      %v1056 = vsel %vm852, %v927, %v1055
      %v1057 = vrot.slane %v1025, 4
      %v1058 = vsel %vm852, %v1049, %v1057
      %v1059 = vrot.slane %v1026, 4
      %v1060 = vsel %vm852, %v1051, %v1059
      %v1061 = vrot.slane %v1027, 4
      %v1062 = vsel %vm852, %v1053, %v1061
      %v1063 = vrot.slane %v1028, 4
      %v1064 = vsel %vm852, %v1055, %v1063
      %v1077 = vmax.f32 %v977, %v1042
      %v1078 = vmax.f32 %v978, %v1044
      %v1079 = vmax.f32 %v979, %v1046
      %v1080 = vmax.f32 %v980, %v1048
      %v1081 = vmax.f32 %v981, %v874
      %v1082 = vmax.f32 %v982, %v876
      %v1083 = vmax.f32 %v983, %v878
      %v1084 = vmax.f32 %v984, %v880
      %v1085 = vmax.f32 %v985, %v882
      %v1086 = vmax.f32 %v986, %v884
      %v1087 = vmax.f32 %v987, %v886
      %v1088 = vmax.f32 %v988, %v888
      %v1089 = vmax.f32 %v989, %v890
      %v1090 = vmax.f32 %v990, %v892
      %v1091 = vmax.f32 %v991, %v894
      %v1092 = vmax.f32 %v992, %v896
      %v1093 = vmax.f32 %v993, %v898
      %v1094 = vmax.f32 %v994, %v900
      %v1095 = vmax.f32 %v995, %v902
      %v1096 = vmax.f32 %v996, %v904
      %v1097 = vmax.f32 %v997, %v906
      %v1098 = vmax.f32 %v998, %v908
      %v1099 = vmax.f32 %v999, %v910
      %v1100 = vmax.f32 %v1000, %v912
      %v1101 = vmax.f32 %v1001, %v914
      %v1102 = vmax.f32 %v1002, %v916
      %v1103 = vmax.f32 %v1003, %v918
      %v1104 = vmax.f32 %v1004, %v920
      %v1105 = vmax.f32 %v1005, %v922
      %v1106 = vmax.f32 %v1006, %v924
      %v1107 = vmax.f32 %v1007, %v926
      %v1108 = vmax.f32 %v1008, %v928
      %v1109 = vmax.f32 %v1009, %v1050
      %v1110 = vmax.f32 %v1010, %v1052
      %v1111 = vmax.f32 %v1011, %v1054
      %v1112 = vmax.f32 %v1012, %v1056
      %v1113 = vmax.f32 %v1013, %v1058
      %v1114 = vmax.f32 %v1014, %v1060
      %v1115 = vmax.f32 %v1015, %v1062
      %v1116 = vmax.f32 %v1016, %v1064
      %v1117 = vld [vmem:[%s111 + $0x40] sm:$0xe0]
      %v1118 = vld [vmem:[%s111 + $0x48] sm:$0xe0]
      %v1119 = vld [vmem:[%s111 + $0x50] sm:$0xe0]
      %v1120 = vld [vmem:[%s111 + $0x58] sm:$0xe0]
      %v1121 = vld [vmem:[%s111 + $0x180] sm:$0x1f]
      %v1122 = vld [vmem:[%s111 + $0x188] sm:$0x1f]
      %v1123 = vld [vmem:[%s111 + $0x190] sm:$0x1f]
      %v1124 = vld [vmem:[%s111 + $0x198] sm:$0x1f]
      %vm1133 = vcmask 1042432
      %v1134 = vrot.slane %v1117, 5
      %v1135 = vrot.slane %v129, 5
      %v1136 = vsel %vm1133, %v1134, %v1135
      %v1137 = vrot.slane %v1118, 5
      %v1138 = vrot.slane %v130, 5
      %v1139 = vsel %vm1133, %v1137, %v1138
      %v1140 = vrot.slane %v1119, 5
      %v1141 = vrot.slane %v131, 5
      %v1142 = vsel %vm1133, %v1140, %v1141
      %v1143 = vrot.slane %v1120, 5
      %v1144 = vrot.slane %v132, 5
      %v1145 = vsel %vm1133, %v1143, %v1144
      %v1146 = vrot.slane %v133, 5
      %v1147 = vsel %vm1133, %v1135, %v1146
      %v1148 = vrot.slane %v134, 5
      %v1149 = vsel %vm1133, %v1138, %v1148
      %v1150 = vrot.slane %v135, 5
      %v1151 = vsel %vm1133, %v1141, %v1150
      %v1152 = vrot.slane %v136, 5
      %v1153 = vsel %vm1133, %v1144, %v1152
      %v1154 = vrot.slane %v137, 5
      %v1155 = vsel %vm1133, %v1146, %v1154
      %v1156 = vrot.slane %v138, 5
      %v1157 = vsel %vm1133, %v1148, %v1156
      %v1158 = vrot.slane %v139, 5
      %v1159 = vsel %vm1133, %v1150, %v1158
      %v1160 = vrot.slane %v140, 5
      %v1161 = vsel %vm1133, %v1152, %v1160
      %v1162 = vrot.slane %v141, 5
      %v1163 = vsel %vm1133, %v1154, %v1162
      %v1164 = vrot.slane %v142, 5
      %v1165 = vsel %vm1133, %v1156, %v1164
      %v1166 = vrot.slane %v143, 5
      %v1167 = vsel %vm1133, %v1158, %v1166
      %v1168 = vrot.slane %v144, 5
      %v1169 = vsel %vm1133, %v1160, %v1168
      %v1170 = vrot.slane %v145, 5
      %v1171 = vsel %vm1133, %v1162, %v1170
      %v1172 = vrot.slane %v146, 5
      %v1173 = vsel %vm1133, %v1164, %v1172
      %v1174 = vrot.slane %v147, 5
      %v1175 = vsel %vm1133, %v1166, %v1174
      %v1176 = vrot.slane %v148, 5
      %v1177 = vsel %vm1133, %v1168, %v1176
      %v1178 = vrot.slane %v149, 5
      %v1179 = vsel %vm1133, %v1170, %v1178
      %v1180 = vrot.slane %v150, 5
      %v1181 = vsel %vm1133, %v1172, %v1180
      %v1182 = vrot.slane %v151, 5
      %v1183 = vsel %vm1133, %v1174, %v1182
      %v1184 = vrot.slane %v152, 5
      %v1185 = vsel %vm1133, %v1176, %v1184
      %v1186 = vrot.slane %v153, 5
      %v1187 = vsel %vm1133, %v1178, %v1186
      %v1188 = vrot.slane %v154, 5
      %v1189 = vsel %vm1133, %v1180, %v1188
      %v1190 = vrot.slane %v155, 5
      %v1191 = vsel %vm1133, %v1182, %v1190
      %v1192 = vrot.slane %v156, 5
      %v1193 = vsel %vm1133, %v1184, %v1192
      %v1194 = vrot.slane %v559, 5
      %v1195 = vsel %vm1133, %v1186, %v1194
      %v1196 = vrot.slane %v560, 5
      %v1197 = vsel %vm1133, %v1188, %v1196
      %v1198 = vrot.slane %v561, 5
      %v1199 = vsel %vm1133, %v1190, %v1198
      %v1200 = vrot.slane %v562, 5
      %v1201 = vsel %vm1133, %v1192, %v1200
      %v1202 = vrot.slane %v1021, 5
      %v1203 = vsel %vm1133, %v1194, %v1202
      %v1204 = vrot.slane %v1022, 5
      %v1205 = vsel %vm1133, %v1196, %v1204
      %v1206 = vrot.slane %v1023, 5
      %v1207 = vsel %vm1133, %v1198, %v1206
      %v1208 = vrot.slane %v1024, 5
      %v1209 = vsel %vm1133, %v1200, %v1208
      %v1210 = vrot.slane %v1121, 5
      %v1211 = vsel %vm1133, %v1202, %v1210
      %v1212 = vrot.slane %v1122, 5
      %v1213 = vsel %vm1133, %v1204, %v1212
      %v1214 = vrot.slane %v1123, 5
      %v1215 = vsel %vm1133, %v1206, %v1214
      %v1216 = vrot.slane %v1124, 5
      %v1217 = vsel %vm1133, %v1208, %v1216
      %v1258 = vmax.f32 %v1077, %v1136
      %v1259 = vmax.f32 %v1078, %v1139
      %v1260 = vmax.f32 %v1079, %v1142
      %v1261 = vmax.f32 %v1080, %v1145
      %v1262 = vmax.f32 %v1081, %v1147
      %v1263 = vmax.f32 %v1082, %v1149
      %v1264 = vmax.f32 %v1083, %v1151
      %v1265 = vmax.f32 %v1084, %v1153
      %v1266 = vmax.f32 %v1085, %v1155
      %v1267 = vmax.f32 %v1086, %v1157
      %v1268 = vmax.f32 %v1087, %v1159
      %v1269 = vmax.f32 %v1088, %v1161
      %v1270 = vmax.f32 %v1089, %v1163
      %v1271 = vmax.f32 %v1090, %v1165
      %v1272 = vmax.f32 %v1091, %v1167
      %v1273 = vmax.f32 %v1092, %v1169
      %v1274 = vmax.f32 %v1093, %v1171
      %v1275 = vmax.f32 %v1094, %v1173
      %v1276 = vmax.f32 %v1095, %v1175
      %v1277 = vmax.f32 %v1096, %v1177
      %v1278 = vmax.f32 %v1097, %v1179
      %v1279 = vmax.f32 %v1098, %v1181
      %v1280 = vmax.f32 %v1099, %v1183
      %v1281 = vmax.f32 %v1100, %v1185
      %v1282 = vmax.f32 %v1101, %v1187
      %v1283 = vmax.f32 %v1102, %v1189
      %v1284 = vmax.f32 %v1103, %v1191
      %v1285 = vmax.f32 %v1104, %v1193
      %v1286 = vmax.f32 %v1105, %v1195
      %v1287 = vmax.f32 %v1106, %v1197
      %v1288 = vmax.f32 %v1107, %v1199
      %v1289 = vmax.f32 %v1108, %v1201
      %v1290 = vmax.f32 %v1109, %v1203
      %v1291 = vmax.f32 %v1110, %v1205
      %v1292 = vmax.f32 %v1111, %v1207
      %v1293 = vmax.f32 %v1112, %v1209
      %v1294 = vmax.f32 %v1113, %v1211
      %v1295 = vmax.f32 %v1114, %v1213
      %v1296 = vmax.f32 %v1115, %v1215
      %v1297 = vmax.f32 %v1116, %v1217
      %v1298 = vld [vmem:[%s111 + $0x40] sm:$0xc0]
      %v1299 = vld [vmem:[%s111 + $0x48] sm:$0xc0]
      %v1300 = vld [vmem:[%s111 + $0x50] sm:$0xc0]
      %v1301 = vld [vmem:[%s111 + $0x58] sm:$0xc0]
      %v1302 = vld [vmem:[%s111 + $0x180] sm:$0x3f]
      %v1303 = vld [vmem:[%s111 + $0x188] sm:$0x3f]
      %v1304 = vld [vmem:[%s111 + $0x190] sm:$0x3f]
      %v1305 = vld [vmem:[%s111 + $0x198] sm:$0x3f]
      %vm1314 = vcmask 1041408
      %v1315 = vrot.slane %v1298, 6
      %v1316 = vrot.slane %v129, 6
      %v1317 = vsel %vm1314, %v1315, %v1316
      %v1318 = vrot.slane %v1299, 6
      %v1319 = vrot.slane %v130, 6
      %v1320 = vsel %vm1314, %v1318, %v1319
      %v1321 = vrot.slane %v1300, 6
      %v1322 = vrot.slane %v131, 6
      %v1323 = vsel %vm1314, %v1321, %v1322
      %v1324 = vrot.slane %v1301, 6
      %v1325 = vrot.slane %v132, 6
      %v1326 = vsel %vm1314, %v1324, %v1325
      %v1327 = vrot.slane %v133, 6
      %v1328 = vsel %vm1314, %v1316, %v1327
      %v1329 = vrot.slane %v134, 6
      %v1330 = vsel %vm1314, %v1319, %v1329
      %v1331 = vrot.slane %v135, 6
      %v1332 = vsel %vm1314, %v1322, %v1331
      %v1333 = vrot.slane %v136, 6
      %v1334 = vsel %vm1314, %v1325, %v1333
      %v1335 = vrot.slane %v137, 6
      %v1336 = vsel %vm1314, %v1327, %v1335
      %v1337 = vrot.slane %v138, 6
      %v1338 = vsel %vm1314, %v1329, %v1337
      %v1339 = vrot.slane %v139, 6
      %v1340 = vsel %vm1314, %v1331, %v1339
      %v1341 = vrot.slane %v140, 6
      %v1342 = vsel %vm1314, %v1333, %v1341
      %v1343 = vrot.slane %v141, 6
      %v1344 = vsel %vm1314, %v1335, %v1343
      %v1345 = vrot.slane %v142, 6
      %v1346 = vsel %vm1314, %v1337, %v1345
      %v1347 = vrot.slane %v143, 6
      %v1348 = vsel %vm1314, %v1339, %v1347
      %v1349 = vrot.slane %v144, 6
      %v1350 = vsel %vm1314, %v1341, %v1349
      %v1351 = vrot.slane %v145, 6
      %v1352 = vsel %vm1314, %v1343, %v1351
      %v1353 = vrot.slane %v146, 6
      %v1354 = vsel %vm1314, %v1345, %v1353
      %v1355 = vrot.slane %v147, 6
      %v1356 = vsel %vm1314, %v1347, %v1355
      %v1357 = vrot.slane %v148, 6
      %v1358 = vsel %vm1314, %v1349, %v1357
      %v1359 = vrot.slane %v149, 6
      %v1360 = vsel %vm1314, %v1351, %v1359
      %v1361 = vrot.slane %v150, 6
      %v1362 = vsel %vm1314, %v1353, %v1361
      %v1363 = vrot.slane %v151, 6
      %v1364 = vsel %vm1314, %v1355, %v1363
      %v1365 = vrot.slane %v152, 6
      %v1366 = vsel %vm1314, %v1357, %v1365
      %v1367 = vrot.slane %v153, 6
      %v1368 = vsel %vm1314, %v1359, %v1367
      %v1369 = vrot.slane %v154, 6
      %v1370 = vsel %vm1314, %v1361, %v1369
      %v1371 = vrot.slane %v155, 6
      %v1372 = vsel %vm1314, %v1363, %v1371
      %v1373 = vrot.slane %v156, 6
      %v1374 = vsel %vm1314, %v1365, %v1373
      %v1375 = vrot.slane %v559, 6
      %v1376 = vsel %vm1314, %v1367, %v1375
      %v1377 = vrot.slane %v560, 6
      %v1378 = vsel %vm1314, %v1369, %v1377
      %v1379 = vrot.slane %v561, 6
      %v1380 = vsel %vm1314, %v1371, %v1379
      %v1381 = vrot.slane %v562, 6
      %v1382 = vsel %vm1314, %v1373, %v1381
      %v1383 = vrot.slane %v1021, 6
      %v1384 = vsel %vm1314, %v1375, %v1383
      %v1385 = vrot.slane %v1022, 6
      %v1386 = vsel %vm1314, %v1377, %v1385
      %v1387 = vrot.slane %v1023, 6
      %v1388 = vsel %vm1314, %v1379, %v1387
      %v1389 = vrot.slane %v1024, 6
      %v1390 = vsel %vm1314, %v1381, %v1389
      %v1391 = vrot.slane %v1302, 6
      %v1392 = vsel %vm1314, %v1383, %v1391
      %v1393 = vrot.slane %v1303, 6
      %v1394 = vsel %vm1314, %v1385, %v1393
      %v1395 = vrot.slane %v1304, 6
      %v1396 = vsel %vm1314, %v1387, %v1395
      %v1397 = vrot.slane %v1305, 6
      %v1398 = vsel %vm1314, %v1389, %v1397
      %v1439 = vmax.f32 %v1258, %v1317
      %v1440 = vmax.f32 %v1259, %v1320
      %v1441 = vmax.f32 %v1260, %v1323
      %v1442 = vmax.f32 %v1261, %v1326
      %v1443 = vmax.f32 %v1262, %v1328
      %v1444 = vmax.f32 %v1263, %v1330
      %v1445 = vmax.f32 %v1264, %v1332
      %v1446 = vmax.f32 %v1265, %v1334
      %v1447 = vmax.f32 %v1266, %v1336
      %v1448 = vmax.f32 %v1267, %v1338
      %v1449 = vmax.f32 %v1268, %v1340
      %v1450 = vmax.f32 %v1269, %v1342
      %v1451 = vmax.f32 %v1270, %v1344
      %v1452 = vmax.f32 %v1271, %v1346
      %v1453 = vmax.f32 %v1272, %v1348
      %v1454 = vmax.f32 %v1273, %v1350
      %v1455 = vmax.f32 %v1274, %v1352
      %v1456 = vmax.f32 %v1275, %v1354
      %v1457 = vmax.f32 %v1276, %v1356
      %v1458 = vmax.f32 %v1277, %v1358
      %v1459 = vmax.f32 %v1278, %v1360
      %v1460 = vmax.f32 %v1279, %v1362
      %v1461 = vmax.f32 %v1280, %v1364
      %v1462 = vmax.f32 %v1281, %v1366
      %v1463 = vmax.f32 %v1282, %v1368
      %v1464 = vmax.f32 %v1283, %v1370
      %v1465 = vmax.f32 %v1284, %v1372
      %v1466 = vmax.f32 %v1285, %v1374
      %v1467 = vmax.f32 %v1286, %v1376
      %v1468 = vmax.f32 %v1287, %v1378
      %v1469 = vmax.f32 %v1288, %v1380
      %v1470 = vmax.f32 %v1289, %v1382
      %v1471 = vmax.f32 %v1290, %v1384
      %v1472 = vmax.f32 %v1291, %v1386
      %v1473 = vmax.f32 %v1292, %v1388
      %v1474 = vmax.f32 %v1293, %v1390
      %v1475 = vmax.f32 %v1294, %v1392
      %v1476 = vmax.f32 %v1295, %v1394
      %v1477 = vmax.f32 %v1296, %v1396
      %v1478 = vmax.f32 %v1297, %v1398
      %1479 = vst [vmem:[%s116] sm:$0xff] %v1439
      %1480 = vst [vmem:[%s116 + $0x8] sm:$0xff] %v1440
      %1481 = vst [vmem:[%s116 + $0x10] sm:$0xff] %v1441
      %1482 = vst [vmem:[%s116 + $0x18] sm:$0xff] %v1442
      %1483 = vst [vmem:[%s116 + $0x20] sm:$0xff] %v1443
      %1484 = vst [vmem:[%s116 + $0x28] sm:$0xff] %v1444
      %1485 = vst [vmem:[%s116 + $0x30] sm:$0xff] %v1445
      %1486 = vst [vmem:[%s116 + $0x38] sm:$0xff] %v1446
      %1487 = vst [vmem:[%s116 + $0x40] sm:$0xff] %v1447
      %1488 = vst [vmem:[%s116 + $0x48] sm:$0xff] %v1448
      %1489 = vst [vmem:[%s116 + $0x50] sm:$0xff] %v1449
      %1490 = vst [vmem:[%s116 + $0x58] sm:$0xff] %v1450
      %1491 = vst [vmem:[%s116 + $0x60] sm:$0xff] %v1451
      %1492 = vst [vmem:[%s116 + $0x68] sm:$0xff] %v1452
      %1493 = vst [vmem:[%s116 + $0x70] sm:$0xff] %v1453
      %1494 = vst [vmem:[%s116 + $0x78] sm:$0xff] %v1454
      %1495 = vst [vmem:[%s116 + $0x80] sm:$0xff] %v1455
      %1496 = vst [vmem:[%s116 + $0x88] sm:$0xff] %v1456
      %1497 = vst [vmem:[%s116 + $0x90] sm:$0xff] %v1457
      %1498 = vst [vmem:[%s116 + $0x98] sm:$0xff] %v1458
      %1499 = vst [vmem:[%s116 + $0xa0] sm:$0xff] %v1459
      %1500 = vst [vmem:[%s116 + $0xa8] sm:$0xff] %v1460
      %1501 = vst [vmem:[%s116 + $0xb0] sm:$0xff] %v1461
      %1502 = vst [vmem:[%s116 + $0xb8] sm:$0xff] %v1462
      %1503 = vst [vmem:[%s116 + $0xc0] sm:$0xff] %v1463
      %1504 = vst [vmem:[%s116 + $0xc8] sm:$0xff] %v1464
      %1505 = vst [vmem:[%s116 + $0xd0] sm:$0xff] %v1465
      %1506 = vst [vmem:[%s116 + $0xd8] sm:$0xff] %v1466
      %1507 = vst [vmem:[%s116 + $0xe0] sm:$0xff] %v1467
      %1508 = vst [vmem:[%s116 + $0xe8] sm:$0xff] %v1468
      %1509 = vst [vmem:[%s116 + $0xf0] sm:$0xff] %v1469
      %1510 = vst [vmem:[%s116 + $0xf8] sm:$0xff] %v1470
      %1511 = vst [vmem:[%s116 + $0x100] sm:$0xff] %v1471
      %1512 = vst [vmem:[%s116 + $0x108] sm:$0xff] %v1472
      %1513 = vst [vmem:[%s116 + $0x110] sm:$0xff] %v1473
      %1514 = vst [vmem:[%s116 + $0x118] sm:$0xff] %v1474
      %1515 = vst [vmem:[%s116 + $0x120] sm:$0xff] %v1475
      %1516 = vst [vmem:[%s116 + $0x128] sm:$0xff] %v1476
      %1517 = vst [vmem:[%s116 + $0x130] sm:$0xff] %v1477
      %1518 = vst [vmem:[%s116 + $0x138] sm:$0xff] %v1478
      %p1519 = scmp.lt.s32.totalorder %s12, 7
      %s1520 = scalar_select %p1519, %s12, 7
      %s1521 = smul.addr %s1520, 40
      %s1522 = smul.addr %s1521, 8
      %s1523 = scalar_lea.vmem %s1, %s1522
      // Predicated region
      $region25: #{mixed4e_forward.12} parent=23 // pred_check
        %p1524 = pneg %p56
      $region26: #{mixed4e_forward.12} parent=23 // pred_check_branch
        %1526 = sbr.rel (%p1524) target = $region28
      $region27: #{mixed4e_forward.12} parent=23 // pred_region
        _
      $region28: #{mixed4e_forward.12} parent=23 // pred_fallthru
        _
    $region24: #{mixed4e_forward.12} parent=5 // pred_fallthru
      _
    %p1527 = scmp.le.s32.totalorder 2, %s7
    // Predicated region
    $region29: #{mixed4e_forward.12} parent=5 // pred_check
      %p1528 = pneg %p1527
    $region30: #{mixed4e_forward.12} parent=5 // pred_check_branch
      %1530 = sbr.rel (%p1528) target = $region32
    $region31: #{mixed4e_forward.12} parent=5 // pred_region
      %s1531 = ssub.s32 %s7, 2
      // Predicated region
      $region33: #{mixed4e_forward.12} parent=31 // pred_check
        %p1532 = pneg %p62
      $region34: #{mixed4e_forward.12} parent=31 // pred_check_branch
        %1534 = sbr.rel (%p1532) target = $region36
      $region35: #{mixed4e_forward.12} parent=31 // pred_region
        %p1535 = scmp.lt.s32.totalorder %s13, 7
        %s1536 = scalar_select %p1535, %s13, 7
        %s1537 = smul.addr %s1536, 40
        %s1538 = smul.addr %s1537, 8
        %s1539 = scalar_lea.vmem %s1, %s1538
      $region36: #{mixed4e_forward.12} parent=31 // pred_fallthru
        _
    $region32: #{mixed4e_forward.12} parent=5 // pred_fallthru
      _
  $region6: #{mixed4e_forward.12} parent=0 // loop_footer
    %s11 = sadd.s32 1, %s7
  $region7: #{mixed4e_forward.12} parent=0 // loop_footer_branch
    %6 = sbr.rel target = $region3
  $region8: #{mixed4e_forward.12} parent=0 // loop_exit
    _

// kernel: mixed4e_forward.13
$region0: #{mixed4e_forward.13}
  #allocation0 [shape = 'u32[]', space=smem, size = 0x4, offset = 0x4, fixed_abs, tag = 'smem constant byte address 0x4 - core index']
  #allocation1 [shape = 'u32[144,128]{1,0:T(1,128)}', space=vmem, size = 0x12000, scoped, tag = 'internal scratch']
  #allocation2 [shape = 'f32[64,512]{1,0:T(8,128)}', space=vmem, size = 0x20000, scoped, tag = 'scratch operand']
  %s0 = inlined_call_operand.vmem [shape: f32[2,6,64,512], index: 0, kind: input, shape index: {}]
  %s1 = inlined_call_operand.vmem [shape: bf16[512,64], index: 1, kind: input, shape index: {}]
  %s2 = inlined_call_operand.vmem [shape: f32[1,64], index: 2, kind: input, shape index: {}]
  %s3 = inlined_call_operand.vmem [shape: f32[2,4,64,64], index: 3, kind: output, shape index: {}]
  %s4 = sld [smem:[#allocation0]]
  $region53: #{mixed4e_forward.13} parent=0
    _
  %s6 = ssub.s32 1, %s4
  %s7 = scalar_select 0, %s6, %s4
  loop: start=0, step=1, limit=26
  $region2: #{mixed4e_forward.13} parent=0 // loop_pre_header
    _
  $region3: #{mixed4e_forward.13} parent=0 // loop_header
    %s9 = sphi 0, %s13
    %p10 = scmp.ge.s32.totalorder %s9, 26
    %s16 = sphi 0, %s35
    %s17 = sphi 0, %s31
    %s18 = sphi 0, %s27
    %s19 = sphi 0, %s16
    %s20 = sphi 0, %s17
    %s21 = sphi 0, %s18
    %s22 = sphi 0, %s19
    %s23 = sphi 0, %s20
    %s24 = sphi 0, %s21
    %s42 = sphi 0, %s44
    %s45 = sphi 0, %s42
    %s46 = sphi 0, %s45
    %s62 = sphi 0, %s46
    %s66 = sphi 0, %s66
    %s68 = sphi 0, %s66
    %s69 = sphi 0, %s68
    %s83 = sphi 0, %s69
    %s87 = sphi 0, %s87
    %s89 = sphi 0, %s87
    %s90 = sphi 0, %s89
    %s104 = sphi 0, %s90
    %s112 = sphi 0, %s114
    %s115 = sphi 0, %s112
    %s116 = sphi 0, %s115
    %s132 = sphi 0, %s116
  $region4: #{mixed4e_forward.13} parent=0 // loop_header_branch
    %12 = sbr.rel (%p10) target = $region8
  $region5: #{mixed4e_forward.13} parent=0 // loop_body
    %s14 = ssub.s32 %s9, 1
    %s15 = ssub.s32 %s9, 2
    %s25 = sadd.s32 1, %s18
    %p26 = scmp.ge.s32.totalorder %s25, 3
    %s27 = scalar_select %p26, 0, %s25
    %s28 = sadd.s32 1, %s17
    %s29 = scalar_select %p26, %s28, %s17
    %p30 = scmp.ge.s32.totalorder %s29, 4
    %s31 = scalar_select %p30, 0, %s29
    %s32 = sadd.s32 1, %s16
    %s33 = scalar_select %p30, %s32, %s16
    %p34 = scmp.ge.s32.totalorder %s33, 2
    %s35 = scalar_select %p34, 0, %s33
    %s36 = sadd.s32 %s17, %s18
    %s37 = sadd.s32 %s31, %s27
    %s38 = ssub.s32 %s16, %s35
    %s39 = ssub.s32 %s36, %s37
    %s40 = sor.u32 %s38, %s39
    %p41 = scmp.eq.s32.totalorder %s40, 0
    %s43 = sadd.s32 %s42, 1
    %s44 = scalar_select %p41, %s42, %s43
    %p47 = pneg %p41
    %p48 = scmp.eq.s32.totalorder %s9, 23
    %p49 = por %p47, %p48
    %p50 = scmp.ne.s32.totalorder %s42, %s45
    %p51 = scmp.eq.s32.totalorder %s9, 0
    %p52 = por %p50, %p51
    %p53 = scmp.ne.s32.totalorder %s42, %s45
    %p54 = scmp.eq.s32.totalorder %s14, 23
    %p55 = por %p53, %p54
    %p56 = scmp.ne.s32.totalorder %s45, %s46
    %p57 = scmp.eq.s32.totalorder %s14, 0
    %p58 = por %p56, %p57
    %p59 = scmp.ne.s32.totalorder %s45, %s46
    %p60 = scmp.eq.s32.totalorder %s15, 23
    %p61 = por %p59, %p60
    %p63 = scmp.ne.s32.totalorder %s46, %s62
    %p64 = scmp.eq.s32.totalorder %s15, 0
    %p65 = por %p63, %p64
    %s67 = sadd.s32 %s66, 1
    %p70 = scmp.eq.s32.totalorder %s9, 23
    %p71 = scmp.ne.s32.totalorder %s66, %s68
    %p72 = scmp.eq.s32.totalorder %s9, 0
    %p73 = por %p71, %p72
    %p74 = scmp.ne.s32.totalorder %s66, %s68
    %p75 = scmp.eq.s32.totalorder %s14, 23
    %p76 = por %p74, %p75
    %p77 = scmp.ne.s32.totalorder %s68, %s69
    %p78 = scmp.eq.s32.totalorder %s14, 0
    %p79 = por %p77, %p78
    %p80 = scmp.ne.s32.totalorder %s68, %s69
    %p81 = scmp.eq.s32.totalorder %s15, 23
    %p82 = por %p80, %p81
    %p84 = scmp.ne.s32.totalorder %s69, %s83
    %p85 = scmp.eq.s32.totalorder %s15, 0
    %p86 = por %p84, %p85
    %s88 = sadd.s32 %s87, 1
    %p91 = scmp.eq.s32.totalorder %s9, 23
    %p92 = scmp.ne.s32.totalorder %s87, %s89
    %p93 = scmp.eq.s32.totalorder %s9, 0
    %p94 = por %p92, %p93
    %p95 = scmp.ne.s32.totalorder %s87, %s89
    %p96 = scmp.eq.s32.totalorder %s14, 23
    %p97 = por %p95, %p96
    %p98 = scmp.ne.s32.totalorder %s89, %s90
    %p99 = scmp.eq.s32.totalorder %s14, 0
    %p100 = por %p98, %p99
    %p101 = scmp.ne.s32.totalorder %s89, %s90
    %p102 = scmp.eq.s32.totalorder %s15, 23
    %p103 = por %p101, %p102
    %p105 = scmp.ne.s32.totalorder %s90, %s104
    %p106 = scmp.eq.s32.totalorder %s15, 0
    %p107 = por %p105, %p106
    %s108 = ssub.s32 %s16, %s35
    %s109 = ssub.s32 %s17, %s31
    %s110 = sor.u32 %s108, %s109
    %p111 = scmp.eq.s32.totalorder %s110, 0
    %s113 = sadd.s32 %s112, 1
    %s114 = scalar_select %p111, %s112, %s113
    %p117 = pneg %p111
    %p118 = scmp.eq.s32.totalorder %s9, 23
    %p119 = por %p117, %p118
    %p120 = scmp.ne.s32.totalorder %s112, %s115
    %p121 = scmp.eq.s32.totalorder %s9, 0
    %p122 = por %p120, %p121
    %p123 = scmp.ne.s32.totalorder %s112, %s115
    %p124 = scmp.eq.s32.totalorder %s14, 23
    %p125 = por %p123, %p124
    %p126 = scmp.ne.s32.totalorder %s115, %s116
    %p127 = scmp.eq.s32.totalorder %s14, 0
    %p128 = por %p126, %p127
    %p129 = scmp.ne.s32.totalorder %s115, %s116
    %p130 = scmp.eq.s32.totalorder %s15, 23
    %p131 = por %p129, %p130
    %p133 = scmp.ne.s32.totalorder %s116, %s132
    %p134 = scmp.eq.s32.totalorder %s15, 0
    %p135 = por %p133, %p134
    %p136 = scmp.le.s32.totalorder 1, %s9
    %p137 = scmp.lt.s32.totalorder %s9, 25
    %p138 = pnand %p136, %p137
    %p139 = pneg %p138
    // Predicated region
    $region9: #{mixed4e_forward.13} parent=5 // pred_check
      _
    $region10: #{mixed4e_forward.13} parent=5 // pred_check_branch
      %141 = sbr.rel (%p138) target = $region12
    $region11: #{mixed4e_forward.13} parent=5 // pred_region
      %s142 = ssub.s32 %s9, 1
      // Predicated region
      $region13: #{mixed4e_forward.13} parent=11 // pred_check
        %p143 = pneg %p79
      $region14: #{mixed4e_forward.13} parent=11 // pred_check_branch
        %145 = sbr.rel (%p143) target = $region16
      $region15: #{mixed4e_forward.13} parent=11 // pred_region
        _
      $region16: #{mixed4e_forward.13} parent=11 // pred_fallthru
        _
      // Predicated region
      $region17: #{mixed4e_forward.13} parent=11 // pred_check
        %p146 = pneg %p100
      $region18: #{mixed4e_forward.13} parent=11 // pred_check_branch
        %148 = sbr.rel (%p146) target = $region20
      $region19: #{mixed4e_forward.13} parent=11 // pred_region
        _
      $region20: #{mixed4e_forward.13} parent=11 // pred_fallthru
        _
    $region12: #{mixed4e_forward.13} parent=5 // pred_fallthru
      _
    %p149 = scmp.lt.s32.totalorder %s9, 24
    // Predicated region
    $region21: #{mixed4e_forward.13} parent=5 // pred_check
      %p150 = pneg %p149
    $region22: #{mixed4e_forward.13} parent=5 // pred_check_branch
      %152 = sbr.rel (%p150) target = $region24
    $region23: #{mixed4e_forward.13} parent=5 // pred_region
      // Predicated region
      $region25: #{mixed4e_forward.13} parent=23 // pred_check
        %p153 = pneg %p52
      $region26: #{mixed4e_forward.13} parent=23 // pred_check_branch
        %155 = sbr.rel (%p153) target = $region28
      $region27: #{mixed4e_forward.13} parent=23 // pred_region
        %s156 = sadd.s32 %s17, %s18
        %p157 = scmp.lt.s32.totalorder %s16, 1
        %s158 = scalar_select %p157, %s16, 1
        %p159 = scmp.lt.s32.totalorder %s156, 5
        %s160 = scalar_select %p159, %s156, 5
        %s161 = smul.addr %s160, 32
        %s162 = smul.addr %s158, 192
        %s163 = sadd.s32 %s161, %s162
        %s164 = smul.addr %s163, 8
        %s165 = scalar_lea.vmem %s0, %s164
        %s166 = sadd.s32 %s17, %s18
      $region28: #{mixed4e_forward.13} parent=23 // pred_fallthru
        _
    $region24: #{mixed4e_forward.13} parent=5 // pred_fallthru
      _
    %p167 = scmp.le.s32.totalorder 1, %s9
    %p168 = scmp.lt.s32.totalorder %s9, 25
    %p169 = pnand %p167, %p168
    %p170 = pneg %p169
    // Predicated region
    $region29: #{mixed4e_forward.13} parent=5 // pred_check
      _
    $region30: #{mixed4e_forward.13} parent=5 // pred_check_branch
      %172 = sbr.rel (%p169) target = $region32
    $region31: #{mixed4e_forward.13} parent=5 // pred_region
      %s173 = ssub.s32 %s9, 1
      %s174 = sadd.s32 %s20, %s21
      %p175 = scmp.lt.s32.totalorder %s19, 1
      %s176 = scalar_select %p175, %s19, 1
      %p177 = scmp.lt.s32.totalorder %s174, 5
      %s178 = scalar_select %p177, %s174, 5
      %s179 = smul.addr %s178, 32
      %s180 = smul.addr %s176, 192
      %s181 = sadd.s32 %s179, %s180
      %s182 = smul.addr %s181, 8
      %s183 = scalar_lea.vmem %s0, %s182
      %p184 = pneg %p58
      %p185 = pneg %p55
      %p186 = pneg %p79
      %p187 = pneg %p76
      %p188 = pneg %p100
      %p189 = pneg %p97
      %p190 = pneg %p128
      %p191 = pneg %p125
      %p192 = scmp.lt.s32.totalorder %s19, 1
      %s193 = scalar_select %p192, %s19, 1
      %p194 = scmp.lt.s32.totalorder %s20, 3
      %s195 = scalar_select %p194, %s20, 3
      %s196 = smul.addr %s195, 8
      %s197 = smul.addr %s193, 32
      %s198 = sadd.s32 %s196, %s197
      %s199 = smul.addr %s198, 8
      %s200 = scalar_lea.vmem %s3, %s199
      %s201 = sadd.s32 %s20, %s21
      %p202 = scmp.lt.s32.totalorder %s19, 1
      %s203 = scalar_select %p202, %s19, 1
      %p204 = scmp.lt.s32.totalorder %s201, 5
      %s205 = scalar_select %p204, %s201, 5
      %s206 = smul.addr %s205, 32
      %s207 = smul.addr %s203, 192
      %s208 = sadd.s32 %s206, %s207
      %s209 = smul.addr %s208, 8
      %s210 = scalar_lea.vmem %s0, %s209
      %s211 = sadd.s32 %s20, %s21
      %p212 = scmp.lt.s32.totalorder %s19, 1
      %s213 = scalar_select %p212, %s19, 1
      %p214 = scmp.lt.s32.totalorder %s20, 3
      %s215 = scalar_select %p214, %s20, 3
      %s216 = smul.addr %s215, 8
      %s217 = smul.addr %s213, 32
      %s218 = sadd.s32 %s216, %s217
      %s219 = smul.addr %s218, 8
      %s220 = scalar_lea.vmem %s3, %s219
      %p222 = scmp.eq.s32.totalorder %s21, 0
      // Predicated region
      $region33: #{mixed4e_forward.13} parent=31 // pred_check
        %p223 = pneg %p222
      $region34: #{mixed4e_forward.13} parent=31 // pred_check_branch
        %225 = sbr.rel (%p223) target = $region36
      $region35: #{mixed4e_forward.13} parent=31 // pred_region
        %226 = vst [vmem:[#allocation2] sm:$0xff] -inf
        %227 = vst [vmem:[#allocation2 + $0x8] sm:$0xff] -inf
        %228 = vst [vmem:[#allocation2 + $0x10] sm:$0xff] -inf
        %229 = vst [vmem:[#allocation2 + $0x18] sm:$0xff] -inf
        %230 = vst [vmem:[#allocation2 + $0x20] sm:$0xff] -inf
        %231 = vst [vmem:[#allocation2 + $0x28] sm:$0xff] -inf
        %232 = vst [vmem:[#allocation2 + $0x30] sm:$0xff] -inf
        %233 = vst [vmem:[#allocation2 + $0x38] sm:$0xff] -inf
        %234 = vst [vmem:[#allocation2 + $0x40] sm:$0xff] -inf
        %235 = vst [vmem:[#allocation2 + $0x48] sm:$0xff] -inf
        %236 = vst [vmem:[#allocation2 + $0x50] sm:$0xff] -inf
        %237 = vst [vmem:[#allocation2 + $0x58] sm:$0xff] -inf
        %238 = vst [vmem:[#allocation2 + $0x60] sm:$0xff] -inf
        %239 = vst [vmem:[#allocation2 + $0x68] sm:$0xff] -inf
        %240 = vst [vmem:[#allocation2 + $0x70] sm:$0xff] -inf
        %241 = vst [vmem:[#allocation2 + $0x78] sm:$0xff] -inf
        %242 = vst [vmem:[#allocation2 + $0x80] sm:$0xff] -inf
        %243 = vst [vmem:[#allocation2 + $0x88] sm:$0xff] -inf
        %244 = vst [vmem:[#allocation2 + $0x90] sm:$0xff] -inf
        %245 = vst [vmem:[#allocation2 + $0x98] sm:$0xff] -inf
        %246 = vst [vmem:[#allocation2 + $0xa0] sm:$0xff] -inf
        %247 = vst [vmem:[#allocation2 + $0xa8] sm:$0xff] -inf
        %248 = vst [vmem:[#allocation2 + $0xb0] sm:$0xff] -inf
        %249 = vst [vmem:[#allocation2 + $0xb8] sm:$0xff] -inf
        %250 = vst [vmem:[#allocation2 + $0xc0] sm:$0xff] -inf
        %251 = vst [vmem:[#allocation2 + $0xc8] sm:$0xff] -inf
        %252 = vst [vmem:[#allocation2 + $0xd0] sm:$0xff] -inf
        %253 = vst [vmem:[#allocation2 + $0xd8] sm:$0xff] -inf
        %254 = vst [vmem:[#allocation2 + $0xe0] sm:$0xff] -inf
        %255 = vst [vmem:[#allocation2 + $0xe8] sm:$0xff] -inf
        %256 = vst [vmem:[#allocation2 + $0xf0] sm:$0xff] -inf
        %257 = vst [vmem:[#allocation2 + $0xf8] sm:$0xff] -inf
      $region36: #{mixed4e_forward.13} parent=31 // pred_fallthru
        _
      %v258 = vld [vmem:[#allocation2] sm:$0xff]
      %v259 = vld [vmem:[#allocation2 + $0x8] sm:$0xff]
      %v260 = vld [vmem:[#allocation2 + $0x10] sm:$0xff]
      %v261 = vld [vmem:[#allocation2 + $0x18] sm:$0xff]
      %v262 = vld [vmem:[#allocation2 + $0x20] sm:$0xff]
      %v263 = vld [vmem:[#allocation2 + $0x28] sm:$0xff]
      %v264 = vld [vmem:[#allocation2 + $0x30] sm:$0xff]
      %v265 = vld [vmem:[#allocation2 + $0x38] sm:$0xff]
      %v266 = vld [vmem:[#allocation2 + $0x40] sm:$0xff]
      %v267 = vld [vmem:[#allocation2 + $0x48] sm:$0xff]
      %v268 = vld [vmem:[#allocation2 + $0x50] sm:$0xff]
      %v269 = vld [vmem:[#allocation2 + $0x58] sm:$0xff]
      %v270 = vld [vmem:[#allocation2 + $0x60] sm:$0xff]
      %v271 = vld [vmem:[#allocation2 + $0x68] sm:$0xff]
      %v272 = vld [vmem:[#allocation2 + $0x70] sm:$0xff]
      %v273 = vld [vmem:[#allocation2 + $0x78] sm:$0xff]
      %v274 = vld [vmem:[#allocation2 + $0x80] sm:$0xff]
      %v275 = vld [vmem:[#allocation2 + $0x88] sm:$0xff]
      %v276 = vld [vmem:[#allocation2 + $0x90] sm:$0xff]
      %v277 = vld [vmem:[#allocation2 + $0x98] sm:$0xff]
      %v278 = vld [vmem:[#allocation2 + $0xa0] sm:$0xff]
      %v279 = vld [vmem:[#allocation2 + $0xa8] sm:$0xff]
      %v280 = vld [vmem:[#allocation2 + $0xb0] sm:$0xff]
      %v281 = vld [vmem:[#allocation2 + $0xb8] sm:$0xff]
      %v282 = vld [vmem:[#allocation2 + $0xc0] sm:$0xff]
      %v283 = vld [vmem:[#allocation2 + $0xc8] sm:$0xff]
      %v284 = vld [vmem:[#allocation2 + $0xd0] sm:$0xff]
      %v285 = vld [vmem:[#allocation2 + $0xd8] sm:$0xff]
      %v286 = vld [vmem:[#allocation2 + $0xe0] sm:$0xff]
      %v287 = vld [vmem:[#allocation2 + $0xe8] sm:$0xff]
      %v288 = vld [vmem:[#allocation2 + $0xf0] sm:$0xff]
      %v289 = vld [vmem:[#allocation2 + $0xf8] sm:$0xff]
      %v290 = vld [vmem:[%s210] sm:$0xff]
      %v291 = vld [vmem:[%s210 + $0x8] sm:$0xff]
      %v292 = vld [vmem:[%s210 + $0x10] sm:$0xff]
      %v293 = vld [vmem:[%s210 + $0x18] sm:$0xff]
      %v294 = vld [vmem:[%s210 + $0x20] sm:$0xff]
      %v295 = vld [vmem:[%s210 + $0x28] sm:$0xff]
      %v296 = vld [vmem:[%s210 + $0x30] sm:$0xff]
      %v297 = vld [vmem:[%s210 + $0x38] sm:$0xff]
      %v298 = vld [vmem:[%s210 + $0x40] sm:$0xff]
      %v299 = vld [vmem:[%s210 + $0x48] sm:$0xff]
      %v300 = vld [vmem:[%s210 + $0x50] sm:$0xff]
      %v301 = vld [vmem:[%s210 + $0x58] sm:$0xff]
      %v302 = vld [vmem:[%s210 + $0x60] sm:$0xff]
      %v303 = vld [vmem:[%s210 + $0x68] sm:$0xff]
      %v304 = vld [vmem:[%s210 + $0x70] sm:$0xff]
      %v305 = vld [vmem:[%s210 + $0x78] sm:$0xff]
      %v306 = vld [vmem:[%s210 + $0x80] sm:$0xff]
      %v307 = vld [vmem:[%s210 + $0x88] sm:$0xff]
      %v308 = vld [vmem:[%s210 + $0x90] sm:$0xff]
      %v309 = vld [vmem:[%s210 + $0x98] sm:$0xff]
      %v310 = vld [vmem:[%s210 + $0xa0] sm:$0xff]
      %v311 = vld [vmem:[%s210 + $0xa8] sm:$0xff]
      %v312 = vld [vmem:[%s210 + $0xb0] sm:$0xff]
      %v313 = vld [vmem:[%s210 + $0xb8] sm:$0xff]
      %v314 = vld [vmem:[%s210 + $0xc0] sm:$0xff]
      %v315 = vld [vmem:[%s210 + $0xc8] sm:$0xff]
      %v316 = vld [vmem:[%s210 + $0xd0] sm:$0xff]
      %v317 = vld [vmem:[%s210 + $0xd8] sm:$0xff]
      %v318 = vld [vmem:[%s210 + $0xe0] sm:$0xff]
      %v319 = vld [vmem:[%s210 + $0xe8] sm:$0xff]
      %v320 = vld [vmem:[%s210 + $0xf0] sm:$0xff]
      %v321 = vld [vmem:[%s210 + $0xf8] sm:$0xff]
      %v322 = vmax.f32 %v258, %v290
      %v323 = vmax.f32 %v259, %v291
      %v324 = vmax.f32 %v260, %v292
      %v325 = vmax.f32 %v261, %v293
      %v326 = vmax.f32 %v262, %v294
      %v327 = vmax.f32 %v263, %v295
      %v328 = vmax.f32 %v264, %v296
      %v329 = vmax.f32 %v265, %v297
      %v330 = vmax.f32 %v266, %v298
      %v331 = vmax.f32 %v267, %v299
      %v332 = vmax.f32 %v268, %v300
      %v333 = vmax.f32 %v269, %v301
      %v334 = vmax.f32 %v270, %v302
      %v335 = vmax.f32 %v271, %v303
      %v336 = vmax.f32 %v272, %v304
      %v337 = vmax.f32 %v273, %v305
      %v338 = vmax.f32 %v274, %v306
      %v339 = vmax.f32 %v275, %v307
      %v340 = vmax.f32 %v276, %v308
      %v341 = vmax.f32 %v277, %v309
      %v342 = vmax.f32 %v278, %v310
      %v343 = vmax.f32 %v279, %v311
      %v344 = vmax.f32 %v280, %v312
      %v345 = vmax.f32 %v281, %v313
      %v346 = vmax.f32 %v282, %v314
      %v347 = vmax.f32 %v283, %v315
      %v348 = vmax.f32 %v284, %v316
      %v349 = vmax.f32 %v285, %v317
      %v350 = vmax.f32 %v286, %v318
      %v351 = vmax.f32 %v287, %v319
      %v352 = vmax.f32 %v288, %v320
      %v353 = vmax.f32 %v289, %v321
      %354 = vst [vmem:[#allocation2] sm:$0xff] %v322
      %355 = vst [vmem:[#allocation2 + $0x8] sm:$0xff] %v323
      %356 = vst [vmem:[#allocation2 + $0x10] sm:$0xff] %v324
      %357 = vst [vmem:[#allocation2 + $0x18] sm:$0xff] %v325
      %358 = vst [vmem:[#allocation2 + $0x20] sm:$0xff] %v326
      %359 = vst [vmem:[#allocation2 + $0x28] sm:$0xff] %v327
      %360 = vst [vmem:[#allocation2 + $0x30] sm:$0xff] %v328
      %361 = vst [vmem:[#allocation2 + $0x38] sm:$0xff] %v329
      %362 = vst [vmem:[#allocation2 + $0x40] sm:$0xff] %v330
      %363 = vst [vmem:[#allocation2 + $0x48] sm:$0xff] %v331
      %364 = vst [vmem:[#allocation2 + $0x50] sm:$0xff] %v332
      %365 = vst [vmem:[#allocation2 + $0x58] sm:$0xff] %v333
      %366 = vst [vmem:[#allocation2 + $0x60] sm:$0xff] %v334
      %367 = vst [vmem:[#allocation2 + $0x68] sm:$0xff] %v335
      %368 = vst [vmem:[#allocation2 + $0x70] sm:$0xff] %v336
      %369 = vst [vmem:[#allocation2 + $0x78] sm:$0xff] %v337
      %370 = vst [vmem:[#allocation2 + $0x80] sm:$0xff] %v338
      %371 = vst [vmem:[#allocation2 + $0x88] sm:$0xff] %v339
      %372 = vst [vmem:[#allocation2 + $0x90] sm:$0xff] %v340
      %373 = vst [vmem:[#allocation2 + $0x98] sm:$0xff] %v341
      %374 = vst [vmem:[#allocation2 + $0xa0] sm:$0xff] %v342
      %375 = vst [vmem:[#allocation2 + $0xa8] sm:$0xff] %v343
      %376 = vst [vmem:[#allocation2 + $0xb0] sm:$0xff] %v344
      %377 = vst [vmem:[#allocation2 + $0xb8] sm:$0xff] %v345
      %378 = vst [vmem:[#allocation2 + $0xc0] sm:$0xff] %v346
      %379 = vst [vmem:[#allocation2 + $0xc8] sm:$0xff] %v347
      %380 = vst [vmem:[#allocation2 + $0xd0] sm:$0xff] %v348
      %381 = vst [vmem:[#allocation2 + $0xd8] sm:$0xff] %v349
      %382 = vst [vmem:[#allocation2 + $0xe0] sm:$0xff] %v350
      %383 = vst [vmem:[#allocation2 + $0xe8] sm:$0xff] %v351
      %384 = vst [vmem:[#allocation2 + $0xf0] sm:$0xff] %v352
      %385 = vst [vmem:[#allocation2 + $0xf8] sm:$0xff] %v353
      %p386 = scmp.eq.s32.totalorder %s21, 2
      // Predicated region
      $region37: #{mixed4e_forward.13} parent=31 // pred_check
        %p387 = pneg %p386
      $region38: #{mixed4e_forward.13} parent=31 // pred_check_branch
        %389 = sbr.rel (%p387) target = $region40
      $region39: #{mixed4e_forward.13} parent=31 // pred_region
        %v390 = vld [vmem:[#allocation2] sm:$0xff]
        %v391 = vld [vmem:[#allocation2 + $0x8] sm:$0xff]
        %v392 = vld [vmem:[#allocation2 + $0x10] sm:$0xff]
        %v393 = vld [vmem:[#allocation2 + $0x18] sm:$0xff]
        %v394 = vld [vmem:[#allocation2 + $0x20] sm:$0xff]
        %v395 = vld [vmem:[#allocation2 + $0x28] sm:$0xff]
        %v396 = vld [vmem:[#allocation2 + $0x30] sm:$0xff]
        %v397 = vld [vmem:[#allocation2 + $0x38] sm:$0xff]
        %v398 = vld [vmem:[#allocation2 + $0x40] sm:$0xff]
        %v399 = vld [vmem:[#allocation2 + $0x48] sm:$0xff]
        %v400 = vld [vmem:[#allocation2 + $0x50] sm:$0xff]
        %v401 = vld [vmem:[#allocation2 + $0x58] sm:$0xff]
        %v402 = vld [vmem:[#allocation2 + $0x60] sm:$0xff]
        %v403 = vld [vmem:[#allocation2 + $0x68] sm:$0xff]
        %v404 = vld [vmem:[#allocation2 + $0x70] sm:$0xff]
        %v405 = vld [vmem:[#allocation2 + $0x78] sm:$0xff]
        %v406 = vld [vmem:[#allocation2 + $0x80] sm:$0xff]
        %v407 = vld [vmem:[#allocation2 + $0x88] sm:$0xff]
        %v408 = vld [vmem:[#allocation2 + $0x90] sm:$0xff]
        %v409 = vld [vmem:[#allocation2 + $0x98] sm:$0xff]
        %v410 = vld [vmem:[#allocation2 + $0xa0] sm:$0xff]
        %v411 = vld [vmem:[#allocation2 + $0xa8] sm:$0xff]
        %v412 = vld [vmem:[#allocation2 + $0xb0] sm:$0xff]
        %v413 = vld [vmem:[#allocation2 + $0xb8] sm:$0xff]
        %v414 = vld [vmem:[#allocation2 + $0xc0] sm:$0xff]
        %v415 = vld [vmem:[#allocation2 + $0xc8] sm:$0xff]
        %v416 = vld [vmem:[#allocation2 + $0xd0] sm:$0xff]
        %v417 = vld [vmem:[#allocation2 + $0xd8] sm:$0xff]
        %v418 = vld [vmem:[#allocation2 + $0xe0] sm:$0xff]
        %v419 = vld [vmem:[#allocation2 + $0xe8] sm:$0xff]
        %v420 = vld [vmem:[#allocation2 + $0xf0] sm:$0xff]
        %v421 = vld [vmem:[#allocation2 + $0xf8] sm:$0xff]
        %v422 = vpack.c.bf16 %v394, %v390
        %v423 = vpack.c.bf16 %v395, %v391
        %v424 = vpack.c.bf16 %v396, %v392
        %v425 = vpack.c.bf16 %v397, %v393
        %v426 = vpack.c.bf16 %v402, %v398
        %v427 = vpack.c.bf16 %v403, %v399
        %v428 = vpack.c.bf16 %v404, %v400
        %v429 = vpack.c.bf16 %v405, %v401
        %v430 = vpack.c.bf16 %v410, %v406
        %v431 = vpack.c.bf16 %v411, %v407
        %v432 = vpack.c.bf16 %v412, %v408
        %v433 = vpack.c.bf16 %v413, %v409
        %v434 = vpack.c.bf16 %v418, %v414
        %v435 = vpack.c.bf16 %v419, %v415
        %v436 = vpack.c.bf16 %v420, %v416
        %v437 = vpack.c.bf16 %v421, %v417
        %v438 = vld [vmem:[%s1] sm:$0xf]
        %v439 = vld [vmem:[%s1 + $0x4] sm:$0xf]
        %v440 = vld [vmem:[%s1 + $0x8] sm:$0xf]
        %v441 = vld [vmem:[%s1 + $0xc] sm:$0xf]
        %v442 = vld [vmem:[%s1 + $0x10] sm:$0xf]
        %v443 = vld [vmem:[%s1 + $0x14] sm:$0xf]
        %v444 = vld [vmem:[%s1 + $0x18] sm:$0xf]
        %v445 = vld [vmem:[%s1 + $0x1c] sm:$0xf]
        %v446 = vld [vmem:[%s1 + $0x20] sm:$0xf]
        %v447 = vld [vmem:[%s1 + $0x24] sm:$0xf]
        %v448 = vld [vmem:[%s1 + $0x28] sm:$0xf]
        %v449 = vld [vmem:[%s1 + $0x2c] sm:$0xf]
        %v450 = vld [vmem:[%s1 + $0x30] sm:$0xf]
        %v451 = vld [vmem:[%s1 + $0x34] sm:$0xf]
        %v452 = vld [vmem:[%s1 + $0x38] sm:$0xf]
        %v453 = vld [vmem:[%s1 + $0x3c] sm:$0xf]
        %v454 = vld [vmem:[%s1 + $0x40] sm:$0xf]
        %v455 = vld [vmem:[%s1 + $0x44] sm:$0xf]
        %v456 = vld [vmem:[%s1 + $0x48] sm:$0xf]
        %v457 = vld [vmem:[%s1 + $0x4c] sm:$0xf]
        %v458 = vld [vmem:[%s1 + $0x50] sm:$0xf]
        %v459 = vld [vmem:[%s1 + $0x54] sm:$0xf]
        %v460 = vld [vmem:[%s1 + $0x58] sm:$0xf]
        %v461 = vld [vmem:[%s1 + $0x5c] sm:$0xf]
        %v462 = vld [vmem:[%s1 + $0x60] sm:$0xf]
        %v463 = vld [vmem:[%s1 + $0x64] sm:$0xf]
        %v464 = vld [vmem:[%s1 + $0x68] sm:$0xf]
        %v465 = vld [vmem:[%s1 + $0x6c] sm:$0xf]
        %v466 = vld [vmem:[%s1 + $0x70] sm:$0xf]
        %v467 = vld [vmem:[%s1 + $0x74] sm:$0xf]
        %v468 = vld [vmem:[%s1 + $0x78] sm:$0xf]
        %v469 = vld [vmem:[%s1 + $0x7c] sm:$0xf]
        %v470 = vld [vmem:[%s1 + $0x80] sm:$0xf]
        %v471 = vld [vmem:[%s1 + $0x84] sm:$0xf]
        %v472 = vld [vmem:[%s1 + $0x88] sm:$0xf]
        %v473 = vld [vmem:[%s1 + $0x8c] sm:$0xf]
        %v474 = vld [vmem:[%s1 + $0x90] sm:$0xf]
        %v475 = vld [vmem:[%s1 + $0x94] sm:$0xf]
        %v476 = vld [vmem:[%s1 + $0x98] sm:$0xf]
        %v477 = vld [vmem:[%s1 + $0x9c] sm:$0xf]
        %v478 = vld [vmem:[%s1 + $0xa0] sm:$0xf]
        %v479 = vld [vmem:[%s1 + $0xa4] sm:$0xf]
        %v480 = vld [vmem:[%s1 + $0xa8] sm:$0xf]
        %v481 = vld [vmem:[%s1 + $0xac] sm:$0xf]
        %v482 = vld [vmem:[%s1 + $0xb0] sm:$0xf]
        %v483 = vld [vmem:[%s1 + $0xb4] sm:$0xf]
        %v484 = vld [vmem:[%s1 + $0xb8] sm:$0xf]
        %v485 = vld [vmem:[%s1 + $0xbc] sm:$0xf]
        %v486 = vld [vmem:[%s1 + $0xc0] sm:$0xf]
        %v487 = vld [vmem:[%s1 + $0xc4] sm:$0xf]
        %v488 = vld [vmem:[%s1 + $0xc8] sm:$0xf]
        %v489 = vld [vmem:[%s1 + $0xcc] sm:$0xf]
        %v490 = vld [vmem:[%s1 + $0xd0] sm:$0xf]
        %v491 = vld [vmem:[%s1 + $0xd4] sm:$0xf]
        %v492 = vld [vmem:[%s1 + $0xd8] sm:$0xf]
        %v493 = vld [vmem:[%s1 + $0xdc] sm:$0xf]
        %v494 = vld [vmem:[%s1 + $0xe0] sm:$0xf]
        %v495 = vld [vmem:[%s1 + $0xe4] sm:$0xf]
        %v496 = vld [vmem:[%s1 + $0xe8] sm:$0xf]
        %v497 = vld [vmem:[%s1 + $0xec] sm:$0xf]
        %v498 = vld [vmem:[%s1 + $0xf0] sm:$0xf]
        %v499 = vld [vmem:[%s1 + $0xf4] sm:$0xf]
        %v500 = vld [vmem:[%s1 + $0xf8] sm:$0xf]
        %v501 = vld [vmem:[%s1 + $0xfc] sm:$0xf]
        %v502 = vld [vmem:[%s2] sm:$0x1]
        %v504 = vlaneseq
        %v505 = vshrl.u32 %v504, 7
        %v506 = vsub.s32 0, %v505
        %v507 = vrot.slane %v502, %v506
        %v573 = vunpack.c.l.b16 %v438
        %v574 = vunpack.c.l.b16 %v439
        %v575 = vunpack.c.l.b16 %v440
        %v576 = vunpack.c.l.b16 %v441
        %v577 = vunpack.c.l.b16 %v442
        %v578 = vunpack.c.l.b16 %v443
        %v579 = vunpack.c.l.b16 %v444
        %v580 = vunpack.c.l.b16 %v445
        %v581 = vunpack.c.l.b16 %v446
        %v582 = vunpack.c.l.b16 %v447
        %v583 = vunpack.c.l.b16 %v448
        %v584 = vunpack.c.l.b16 %v449
        %v585 = vunpack.c.l.b16 %v450
        %v586 = vunpack.c.l.b16 %v451
        %v587 = vunpack.c.l.b16 %v452
        %v588 = vunpack.c.l.b16 %v453
        %v589 = vunpack.c.l.b16 %v454
        %v590 = vunpack.c.l.b16 %v455
        %v591 = vunpack.c.l.b16 %v456
        %v592 = vunpack.c.l.b16 %v457
        %v593 = vunpack.c.l.b16 %v458
        %v594 = vunpack.c.l.b16 %v459
        %v595 = vunpack.c.l.b16 %v460
        %v596 = vunpack.c.l.b16 %v461
        %v597 = vunpack.c.l.b16 %v462
        %v598 = vunpack.c.l.b16 %v463
        %v599 = vunpack.c.l.b16 %v464
        %v600 = vunpack.c.l.b16 %v465
        %v601 = vunpack.c.l.b16 %v466
        %v602 = vunpack.c.l.b16 %v467
        %v603 = vunpack.c.l.b16 %v468
        %v604 = vunpack.c.l.b16 %v469
        %v605 = vunpack.c.l.b16 %v470
        %v606 = vunpack.c.l.b16 %v471
        %v607 = vunpack.c.l.b16 %v472
        %v608 = vunpack.c.l.b16 %v473
        %v609 = vunpack.c.l.b16 %v474
        %v610 = vunpack.c.l.b16 %v475
        %v611 = vunpack.c.l.b16 %v476
        %v612 = vunpack.c.l.b16 %v477
        %v613 = vunpack.c.l.b16 %v478
        %v614 = vunpack.c.l.b16 %v479
        %v615 = vunpack.c.l.b16 %v480
        %v616 = vunpack.c.l.b16 %v481
        %v617 = vunpack.c.l.b16 %v482
        %v618 = vunpack.c.l.b16 %v483
        %v619 = vunpack.c.l.b16 %v484
        %v620 = vunpack.c.l.b16 %v485
        %v621 = vunpack.c.l.b16 %v486
        %v622 = vunpack.c.l.b16 %v487
        %v623 = vunpack.c.l.b16 %v488
        %v624 = vunpack.c.l.b16 %v489
        %v625 = vunpack.c.l.b16 %v490
        %v626 = vunpack.c.l.b16 %v491
        %v627 = vunpack.c.l.b16 %v492
        %v628 = vunpack.c.l.b16 %v493
        %v629 = vunpack.c.l.b16 %v494
        %v630 = vunpack.c.l.b16 %v495
        %v631 = vunpack.c.l.b16 %v496
        %v632 = vunpack.c.l.b16 %v497
        %v633 = vunpack.c.l.b16 %v498
        %v634 = vunpack.c.l.b16 %v499
        %v635 = vunpack.c.l.b16 %v500
        %v636 = vunpack.c.l.b16 %v501
        %v637 = vpack.c.b16 %v574, %v573
        %v638 = vpack.c.b16 %v576, %v575
        %v639 = vpack.c.b16 %v578, %v577
        %v640 = vpack.c.b16 %v580, %v579
        %v641 = vpack.c.b16 %v582, %v581
        %v642 = vpack.c.b16 %v584, %v583
        %v643 = vpack.c.b16 %v586, %v585
        %v644 = vpack.c.b16 %v588, %v587
        %v645 = vpack.c.b16 %v590, %v589
        %v646 = vpack.c.b16 %v592, %v591
        %v647 = vpack.c.b16 %v594, %v593
        %v648 = vpack.c.b16 %v596, %v595
        %v649 = vpack.c.b16 %v598, %v597
        %v650 = vpack.c.b16 %v600, %v599
        %v651 = vpack.c.b16 %v602, %v601
        %v652 = vpack.c.b16 %v604, %v603
        %v653 = vpack.c.b16 %v606, %v605
        %v654 = vpack.c.b16 %v608, %v607
        %v655 = vpack.c.b16 %v610, %v609
        %v656 = vpack.c.b16 %v612, %v611
        %v657 = vpack.c.b16 %v614, %v613
        %v658 = vpack.c.b16 %v616, %v615
        %v659 = vpack.c.b16 %v618, %v617
        %v660 = vpack.c.b16 %v620, %v619
        %v661 = vpack.c.b16 %v622, %v621
        %v662 = vpack.c.b16 %v624, %v623
        %v663 = vpack.c.b16 %v626, %v625
        %v664 = vpack.c.b16 %v628, %v627
        %v665 = vpack.c.b16 %v630, %v629
        %v666 = vpack.c.b16 %v632, %v631
        %v667 = vpack.c.b16 %v634, %v633
        %v668 = vpack.c.b16 %v636, %v635
        %701 = vmatprep.subr.bf16.mxu0 0
        %702 = vmatpush1.bf16.msra.mxu0 %v644
        %703 = vmatprep.subr.bf16.mxu0 0
        %704 = vmatpush1.bf16.msra.mxu0 %v643
        %705 = vmatprep.subr.bf16.mxu0 0
        %706 = vmatpush1.bf16.msra.mxu0 %v642
        %707 = vmatprep.subr.bf16.mxu0 0
        %708 = vmatpush1.bf16.msra.mxu0 %v641
        %709 = vmatprep.subr.bf16.mxu0 0
        %710 = vmatpush1.bf16.msra.mxu0 %v640
        %711 = vmatprep.subr.bf16.mxu0 0
        %712 = vmatpush1.bf16.msra.mxu0 %v639
        %713 = vmatprep.subr.bf16.mxu0 0
        %714 = vmatpush1.bf16.msra.mxu0 %v638
        %715 = vmatprep.subr.bf16.mxu0 0
        %716 = vmatpush1.bf16.msra.mxu0 %v637
        %717 = vmatprep.subr.bf16.mxu0 0
        %718 = vmatpush2.bf16.msra.mxu0 %v652
        %719 = vmatprep.subr.bf16.mxu0 0
        %720 = vmatpush2.bf16.msra.mxu0 %v651
        %721 = vmatprep.subr.bf16.mxu0 0
        %722 = vmatpush2.bf16.msra.mxu0 %v650
        %723 = vmatprep.subr.bf16.mxu0 0
        %724 = vmatpush2.bf16.msra.mxu0 %v649
        %725 = vmatprep.subr.bf16.mxu0 0
        %726 = vmatpush2.bf16.msra.mxu0 %v648
        %727 = vmatprep.subr.bf16.mxu0 0
        %728 = vmatpush2.bf16.msra.mxu0 %v647
        %729 = vmatprep.subr.bf16.mxu0 0
        %730 = vmatpush2.bf16.msra.mxu0 %v646
        %731 = vmatprep.subr.bf16.mxu0 0
        %732 = vmatpush2.bf16.msra.mxu0 %v645
        %733 = vmatprep.mubr.bf16.mxu0 %v423
        %734 = vmatmul.mubr.bf16.gmra.mxu0 %v422
        %v735 = vpop.f32.mrf.mxu0
        %v736 = vadd.f32 %v507, %v735
        %v737 = vpop.f32.mrf.mxu0
        %v738 = vpop.f32.mrf.mxu0
        %v739 = vadd.f32 %v507, %v738
        %v740 = vpop.f32.mrf.mxu0
        %741 = vmatprep.mubr.bf16.mxu0 %v427
        %742 = vmatmul.mubr.bf16.gmra.mxu0 %v426
        %v743 = vpop.f32.mrf.mxu0
        %v744 = vadd.f32 %v507, %v743
        %v745 = vpop.f32.mrf.mxu0
        %v746 = vpop.f32.mrf.mxu0
        %v747 = vadd.f32 %v507, %v746
        %v748 = vpop.f32.mrf.mxu0
        %749 = vmatprep.mubr.bf16.mxu0 %v431
        %750 = vmatmul.mubr.bf16.gmra.mxu0 %v430
        %v751 = vpop.f32.mrf.mxu0
        %v752 = vadd.f32 %v507, %v751
        %v753 = vpop.f32.mrf.mxu0
        %v754 = vpop.f32.mrf.mxu0
        %v755 = vadd.f32 %v507, %v754
        %v756 = vpop.f32.mrf.mxu0
        %757 = vmatprep.mubr.bf16.mxu0 %v435
        %758 = vmatmul.mubr.bf16.gmra.mxu0 %v434
        %v759 = vpop.f32.mrf.mxu0
        %v760 = vadd.f32 %v507, %v759
        %v761 = vpop.f32.mrf.mxu0
        %v762 = vpop.f32.mrf.mxu0
        %v763 = vadd.f32 %v507, %v762
        %v764 = vpop.f32.mrf.mxu0
        %765 = vdwg.mxu0
        %766 = vmatprep.subr.bf16.mxu0 0
        %767 = vmatpush1.bf16.msra.mxu0 %v660
        %768 = vmatprep.subr.bf16.mxu0 0
        %769 = vmatpush1.bf16.msra.mxu0 %v659
        %770 = vmatprep.subr.bf16.mxu0 0
        %771 = vmatpush1.bf16.msra.mxu0 %v658
        %772 = vmatprep.subr.bf16.mxu0 0
        %773 = vmatpush1.bf16.msra.mxu0 %v657
        %774 = vmatprep.subr.bf16.mxu0 0
        %775 = vmatpush1.bf16.msra.mxu0 %v656
        %776 = vmatprep.subr.bf16.mxu0 0
        %777 = vmatpush1.bf16.msra.mxu0 %v655
        %778 = vmatprep.subr.bf16.mxu0 0
        %779 = vmatpush1.bf16.msra.mxu0 %v654
        %780 = vmatprep.subr.bf16.mxu0 0
        %781 = vmatpush1.bf16.msra.mxu0 %v653
        %782 = vmatprep.subr.bf16.mxu0 0
        %783 = vmatpush2.bf16.msra.mxu0 %v668
        %784 = vmatprep.subr.bf16.mxu0 0
        %785 = vmatpush2.bf16.msra.mxu0 %v667
        %786 = vmatprep.subr.bf16.mxu0 0
        %787 = vmatpush2.bf16.msra.mxu0 %v666
        %788 = vmatprep.subr.bf16.mxu0 0
        %789 = vmatpush2.bf16.msra.mxu0 %v665
        %790 = vmatprep.subr.bf16.mxu0 0
        %791 = vmatpush2.bf16.msra.mxu0 %v664
        %792 = vmatprep.subr.bf16.mxu0 0
        %793 = vmatpush2.bf16.msra.mxu0 %v663
        %794 = vmatprep.subr.bf16.mxu0 0
        %795 = vmatpush2.bf16.msra.mxu0 %v662
        %796 = vmatprep.subr.bf16.mxu0 0
        %797 = vmatpush2.bf16.msra.mxu0 %v661
        %798 = vmatprep.mubr.bf16.mxu0 %v425
        %799 = vmatmul.mubr.bf16.gmra.mxu0 %v424
        %v800 = vpop.f32.mrf.mxu0
        %v801 = vadd.f32 %v736, %v800
        %v802 = vpop.f32.mrf.mxu0
        %v803 = vpop.f32.mrf.mxu0
        %v804 = vadd.f32 %v739, %v803
        %v805 = vpop.f32.mrf.mxu0
        %806 = vmatprep.mubr.bf16.mxu0 %v429
        %807 = vmatmul.mubr.bf16.gmra.mxu0 %v428
        %v808 = vpop.f32.mrf.mxu0
        %v809 = vadd.f32 %v744, %v808
        %v810 = vpop.f32.mrf.mxu0
        %v811 = vpop.f32.mrf.mxu0
        %v812 = vadd.f32 %v747, %v811
        %v813 = vpop.f32.mrf.mxu0
        %814 = vmatprep.mubr.bf16.mxu0 %v433
        %815 = vmatmul.mubr.bf16.gmra.mxu0 %v432
        %v816 = vpop.f32.mrf.mxu0
        %v817 = vadd.f32 %v752, %v816
        %v818 = vpop.f32.mrf.mxu0
        %v819 = vpop.f32.mrf.mxu0
        %v820 = vadd.f32 %v755, %v819
        %v821 = vpop.f32.mrf.mxu0
        %822 = vmatprep.mubr.bf16.mxu0 %v437
        %823 = vmatmul.mubr.bf16.gmra.mxu0 %v436
        %v824 = vpop.f32.mrf.mxu0
        %v825 = vadd.f32 %v760, %v824
        %v826 = vpop.f32.mrf.mxu0
        %v827 = vpop.f32.mrf.mxu0
        %v828 = vadd.f32 %v763, %v827
        %v829 = vpop.f32.mrf.mxu0
        %830 = vdwg.mxu0
        %v831 = vmax.f32 %v801, 0.0
        %v832 = vmax.f32 %v804, 0.0
        %v833 = vmax.f32 %v809, 0.0
        %v834 = vmax.f32 %v812, 0.0
        %v835 = vmax.f32 %v817, 0.0
        %v836 = vmax.f32 %v820, 0.0
        %v837 = vmax.f32 %v825, 0.0
        %v838 = vmax.f32 %v828, 0.0
        %vm839 = vcmask 523264
        %840 = vst.msk [vmem:[%s220] sm:$0xff] %vm839, %v831
        %841 = vst.msk [vmem:[%s220 + $0x8] sm:$0xff] %vm839, %v832
        %842 = vst.msk [vmem:[%s220 + $0x10] sm:$0xff] %vm839, %v833
        %843 = vst.msk [vmem:[%s220 + $0x18] sm:$0xff] %vm839, %v834
        %844 = vst.msk [vmem:[%s220 + $0x20] sm:$0xff] %vm839, %v835
        %845 = vst.msk [vmem:[%s220 + $0x28] sm:$0xff] %vm839, %v836
        %846 = vst.msk [vmem:[%s220 + $0x30] sm:$0xff] %vm839, %v837
        %847 = vst.msk [vmem:[%s220 + $0x38] sm:$0xff] %vm839, %v838
      $region40: #{mixed4e_forward.13} parent=31 // pred_fallthru
        _
      %p848 = scmp.lt.s32.totalorder %s19, 1
      %s849 = scalar_select %p848, %s19, 1
      %p850 = scmp.lt.s32.totalorder %s20, 3
      %s851 = scalar_select %p850, %s20, 3
      %s852 = smul.addr %s851, 8
      %s853 = smul.addr %s849, 32
      %s854 = sadd.s32 %s852, %s853
      %s855 = smul.addr %s854, 8
      %s856 = scalar_lea.vmem %s3, %s855
      // Predicated region
      $region41: #{mixed4e_forward.13} parent=31 // pred_check
        %p857 = pneg %p125
      $region42: #{mixed4e_forward.13} parent=31 // pred_check_branch
        %859 = sbr.rel (%p857) target = $region44
      $region43: #{mixed4e_forward.13} parent=31 // pred_region
        _
      $region44: #{mixed4e_forward.13} parent=31 // pred_fallthru
        _
    $region32: #{mixed4e_forward.13} parent=5 // pred_fallthru
      _
    %p860 = scmp.le.s32.totalorder 2, %s9
    // Predicated region
    $region45: #{mixed4e_forward.13} parent=5 // pred_check
      %p861 = pneg %p860
    $region46: #{mixed4e_forward.13} parent=5 // pred_check_branch
      %863 = sbr.rel (%p861) target = $region48
    $region47: #{mixed4e_forward.13} parent=5 // pred_region
      %s864 = ssub.s32 %s9, 2
      // Predicated region
      $region49: #{mixed4e_forward.13} parent=47 // pred_check
        %p865 = pneg %p131
      $region50: #{mixed4e_forward.13} parent=47 // pred_check_branch
        %867 = sbr.rel (%p865) target = $region52
      $region51: #{mixed4e_forward.13} parent=47 // pred_region
        %p868 = scmp.lt.s32.totalorder %s22, 1
        %s869 = scalar_select %p868, %s22, 1
        %p870 = scmp.lt.s32.totalorder %s23, 3
        %s871 = scalar_select %p870, %s23, 3
        %s872 = smul.addr %s871, 8
        %s873 = smul.addr %s869, 32
        %s874 = sadd.s32 %s872, %s873
        %s875 = smul.addr %s874, 8
        %s876 = scalar_lea.vmem %s3, %s875
      $region52: #{mixed4e_forward.13} parent=47 // pred_fallthru
        _
    $region48: #{mixed4e_forward.13} parent=5 // pred_fallthru
      _
  $region6: #{mixed4e_forward.13} parent=0 // loop_footer
    %s13 = sadd.s32 1, %s9
  $region7: #{mixed4e_forward.13} parent=0 // loop_footer_branch
    %8 = sbr.rel target = $region3
  $region8: #{mixed4e_forward.13} parent=0 // loop_exit
    _

// kernel: mixed4e_forward.7
$region0: #{mixed4e_forward.7}
  #allocation0 [shape = 'u32[]', space=smem, size = 0x4, offset = 0x4, fixed_abs, tag = 'smem constant byte address 0x4 - core index']
  #allocation1 [shape = 'u32[144,128]{1,0:T(1,128)}', space=vmem, size = 0x12000, scoped, tag = 'internal scratch']
  %s0 = inlined_call_operand.vmem [shape: bf16[512,512], index: 0, kind: input, shape index: {}]
  %s1 = inlined_call_operand.vmem [shape: bf16[512,288], index: 1, kind: input, shape index: {}]
  %s2 = inlined_call_operand.vmem [shape: f32[1,288], index: 2, kind: input, shape index: {}]
  %s3 = inlined_call_operand.vmem [shape: f32[512,288], index: 3, kind: output, shape index: {}]
  %s4 = sld [smem:[#allocation0]]
  $region45: #{mixed4e_forward.7} parent=0
    _
  %s6 = ssub.s32 1, %s4
  %s7 = scalar_select 0, %s6, %s4
  loop: start=0, step=1, limit=6
  $region2: #{mixed4e_forward.7} parent=0 // loop_pre_header
    _
  $region3: #{mixed4e_forward.7} parent=0 // loop_header
    %s9 = sphi 0, %s13
    %p10 = scmp.ge.s32.totalorder %s9, 6
    %s19 = sphi 0, %s21
    %s22 = sphi 0, %s19
    %s23 = sphi 0, %s22
    %s39 = sphi 0, %s23
    %s43 = sphi 0, %s43
    %s45 = sphi 0, %s43
    %s46 = sphi 0, %s45
    %s60 = sphi 0, %s46
    %s64 = sphi 0, %s64
    %s66 = sphi 0, %s64
    %s67 = sphi 0, %s66
    %s81 = sphi 0, %s67
    %s87 = sphi 0, %s89
    %s90 = sphi 0, %s87
    %s91 = sphi 0, %s90
    %s107 = sphi 0, %s91
  $region4: #{mixed4e_forward.7} parent=0 // loop_header_branch
    %12 = sbr.rel (%p10) target = $region8
  $region5: #{mixed4e_forward.7} parent=0 // loop_body
    %s14 = ssub.s32 %s9, 1
    %s15 = ssub.s32 %s9, 2
    %s16 = sadd.s32 %s9, 1
    %s17 = ssub.s32 %s9, %s16
    %p18 = scmp.eq.s32.totalorder %s17, 0
    %s20 = sadd.s32 %s19, 1
    %s21 = scalar_select %p18, %s19, %s20
    %p24 = pneg %p18
    %p25 = scmp.eq.s32.totalorder %s9, 3
    %p26 = por %p24, %p25
    %p27 = scmp.ne.s32.totalorder %s19, %s22
    %p28 = scmp.eq.s32.totalorder %s9, 0
    %p29 = por %p27, %p28
    %p30 = scmp.ne.s32.totalorder %s19, %s22
    %p31 = scmp.eq.s32.totalorder %s14, 3
    %p32 = por %p30, %p31
    %p33 = scmp.ne.s32.totalorder %s22, %s23
    %p34 = scmp.eq.s32.totalorder %s14, 0
    %p35 = por %p33, %p34
    %p36 = scmp.ne.s32.totalorder %s22, %s23
    %p37 = scmp.eq.s32.totalorder %s15, 3
    %p38 = por %p36, %p37
    %p40 = scmp.ne.s32.totalorder %s23, %s39
    %p41 = scmp.eq.s32.totalorder %s15, 0
    %p42 = por %p40, %p41
    %s44 = sadd.s32 %s43, 1
    %p47 = scmp.eq.s32.totalorder %s9, 3
    %p48 = scmp.ne.s32.totalorder %s43, %s45
    %p49 = scmp.eq.s32.totalorder %s9, 0
    %p50 = por %p48, %p49
    %p51 = scmp.ne.s32.totalorder %s43, %s45
    %p52 = scmp.eq.s32.totalorder %s14, 3
    %p53 = por %p51, %p52
    %p54 = scmp.ne.s32.totalorder %s45, %s46
    %p55 = scmp.eq.s32.totalorder %s14, 0
    %p56 = por %p54, %p55
    %p57 = scmp.ne.s32.totalorder %s45, %s46
    %p58 = scmp.eq.s32.totalorder %s15, 3
    %p59 = por %p57, %p58
    %p61 = scmp.ne.s32.totalorder %s46, %s60
    %p62 = scmp.eq.s32.totalorder %s15, 0
    %p63 = por %p61, %p62
    %s65 = sadd.s32 %s64, 1
    %p68 = scmp.eq.s32.totalorder %s9, 3
    %p69 = scmp.ne.s32.totalorder %s64, %s66
    %p70 = scmp.eq.s32.totalorder %s9, 0
    %p71 = por %p69, %p70
    %p72 = scmp.ne.s32.totalorder %s64, %s66
    %p73 = scmp.eq.s32.totalorder %s14, 3
    %p74 = por %p72, %p73
    %p75 = scmp.ne.s32.totalorder %s66, %s67
    %p76 = scmp.eq.s32.totalorder %s14, 0
    %p77 = por %p75, %p76
    %p78 = scmp.ne.s32.totalorder %s66, %s67
    %p79 = scmp.eq.s32.totalorder %s15, 3
    %p80 = por %p78, %p79
    %p82 = scmp.ne.s32.totalorder %s67, %s81
    %p83 = scmp.eq.s32.totalorder %s15, 0
    %p84 = por %p82, %p83
    %s85 = ssub.s32 %s9, %s16
    %p86 = scmp.eq.s32.totalorder %s85, 0
    %s88 = sadd.s32 %s87, 1
    %s89 = scalar_select %p86, %s87, %s88
    %p92 = pneg %p86
    %p93 = scmp.eq.s32.totalorder %s9, 3
    %p94 = por %p92, %p93
    %p95 = scmp.ne.s32.totalorder %s87, %s90
    %p96 = scmp.eq.s32.totalorder %s9, 0
    %p97 = por %p95, %p96
    %p98 = scmp.ne.s32.totalorder %s87, %s90
    %p99 = scmp.eq.s32.totalorder %s14, 3
    %p100 = por %p98, %p99
    %p101 = scmp.ne.s32.totalorder %s90, %s91
    %p102 = scmp.eq.s32.totalorder %s14, 0
    %p103 = por %p101, %p102
    %p104 = scmp.ne.s32.totalorder %s90, %s91
    %p105 = scmp.eq.s32.totalorder %s15, 3
    %p106 = por %p104, %p105
    %p108 = scmp.ne.s32.totalorder %s91, %s107
    %p109 = scmp.eq.s32.totalorder %s15, 0
    %p110 = por %p108, %p109
    %p111 = scmp.le.s32.totalorder 1, %s9
    %p112 = scmp.lt.s32.totalorder %s9, 5
    %p113 = pnand %p111, %p112
    %p114 = pneg %p113
    // Predicated region
    $region9: #{mixed4e_forward.7} parent=5 // pred_check
      _
    $region10: #{mixed4e_forward.7} parent=5 // pred_check_branch
      %116 = sbr.rel (%p113) target = $region12
    $region11: #{mixed4e_forward.7} parent=5 // pred_region
      %s117 = ssub.s32 %s9, 1
      // Predicated region
      $region13: #{mixed4e_forward.7} parent=11 // pred_check
        %p118 = pneg %p56
      $region14: #{mixed4e_forward.7} parent=11 // pred_check_branch
        %120 = sbr.rel (%p118) target = $region16
      $region15: #{mixed4e_forward.7} parent=11 // pred_region
        _
      $region16: #{mixed4e_forward.7} parent=11 // pred_fallthru
        _
      // Predicated region
      $region17: #{mixed4e_forward.7} parent=11 // pred_check
        %p121 = pneg %p77
      $region18: #{mixed4e_forward.7} parent=11 // pred_check_branch
        %123 = sbr.rel (%p121) target = $region20
      $region19: #{mixed4e_forward.7} parent=11 // pred_region
        _
      $region20: #{mixed4e_forward.7} parent=11 // pred_fallthru
        _
    $region12: #{mixed4e_forward.7} parent=5 // pred_fallthru
      _
    %p124 = scmp.lt.s32.totalorder %s9, 4
    // Predicated region
    $region21: #{mixed4e_forward.7} parent=5 // pred_check
      %p125 = pneg %p124
    $region22: #{mixed4e_forward.7} parent=5 // pred_check_branch
      %127 = sbr.rel (%p125) target = $region24
    $region23: #{mixed4e_forward.7} parent=5 // pred_region
      // Predicated region
      $region25: #{mixed4e_forward.7} parent=23 // pred_check
        %p128 = pneg %p29
      $region26: #{mixed4e_forward.7} parent=23 // pred_check_branch
        %130 = sbr.rel (%p128) target = $region28
      $region27: #{mixed4e_forward.7} parent=23 // pred_region
        %s131 = smul.u32 16, %s9
        %p132 = scmp.lt.s32.totalorder %s131, 63
        %s133 = scalar_select %p132, %s131, 63
        %s134 = smul.addr %s133, 4
        %s135 = smul.addr %s134, 4
        %s136 = scalar_lea.vmem %s0, %s135
        %s137 = smul.u32 16, %s9
      $region28: #{mixed4e_forward.7} parent=23 // pred_fallthru
        _
    $region24: #{mixed4e_forward.7} parent=5 // pred_fallthru
      _
    %p138 = scmp.le.s32.totalorder 1, %s9
    %p139 = scmp.lt.s32.totalorder %s9, 5
    %p140 = pnand %p138, %p139
    %p141 = pneg %p140
    // Predicated region
    $region29: #{mixed4e_forward.7} parent=5 // pred_check
      _
    $region30: #{mixed4e_forward.7} parent=5 // pred_check_branch
      %143 = sbr.rel (%p140) target = $region32
    $region31: #{mixed4e_forward.7} parent=5 // pred_region
      %s144 = ssub.s32 %s9, 1
      %s145 = smul.u32 16, %s14
      %p146 = scmp.lt.s32.totalorder %s145, 63
      %s147 = scalar_select %p146, %s145, 63
      %s148 = smul.addr %s147, 4
      %s149 = smul.addr %s148, 4
      %s150 = scalar_lea.vmem %s0, %s149
      %p151 = pneg %p35
      %p152 = pneg %p32
      %p153 = pneg %p56
      %p154 = pneg %p53
      %p155 = pneg %p77
      %p156 = pneg %p74
      %p157 = pneg %p103
      %p158 = pneg %p100
      %s159 = smul.u32 16, %s14
      %p160 = scmp.lt.s32.totalorder %s159, 63
      %s161 = scalar_select %p160, %s159, 63
      %s162 = smul.addr %s161, 3
      %s163 = smul.addr %s162, 8
      %s164 = scalar_lea.vmem %s3, %s163
      %s165 = smul.u32 16, %s14
      %p166 = scmp.lt.s32.totalorder %s165, 63
      %s167 = scalar_select %p166, %s165, 63
      %s168 = smul.addr %s167, 4
      %s169 = smul.addr %s168, 4
      %s170 = scalar_lea.vmem %s0, %s169
      %s171 = smul.u32 16, %s14
      %s172 = smul.u32 16, %s14
      %p173 = scmp.lt.s32.totalorder %s172, 63
      %s174 = scalar_select %p173, %s172, 63
      %s175 = smul.addr %s174, 3
      %s176 = smul.addr %s175, 8
      %s177 = scalar_lea.vmem %s3, %s176
      %s178 = smul.u32 16, %s14
      %v180 = vld [vmem:[%s170] sm:$0xff]
      %v181 = vld [vmem:[%s170 + $0x8] sm:$0xff]
      %v182 = vld [vmem:[%s170 + $0x10] sm:$0xff]
      %v183 = vld [vmem:[%s170 + $0x18] sm:$0xff]
      %v184 = vld [vmem:[%s170 + $0x20] sm:$0xff]
      %v185 = vld [vmem:[%s170 + $0x28] sm:$0xff]
      %v186 = vld [vmem:[%s170 + $0x30] sm:$0xff]
      %v187 = vld [vmem:[%s170 + $0x38] sm:$0xff]
      %v188 = vld [vmem:[%s170 + $0x40] sm:$0xff]
      %v189 = vld [vmem:[%s170 + $0x48] sm:$0xff]
      %v190 = vld [vmem:[%s170 + $0x50] sm:$0xff]
      %v191 = vld [vmem:[%s170 + $0x58] sm:$0xff]
      %v192 = vld [vmem:[%s170 + $0x60] sm:$0xff]
      %v193 = vld [vmem:[%s170 + $0x68] sm:$0xff]
      %v194 = vld [vmem:[%s170 + $0x70] sm:$0xff]
      %v195 = vld [vmem:[%s170 + $0x78] sm:$0xff]
      %v196 = vld [vmem:[%s170 + $0x80] sm:$0xff]
      %v197 = vld [vmem:[%s170 + $0x88] sm:$0xff]
      %v198 = vld [vmem:[%s170 + $0x90] sm:$0xff]
      %v199 = vld [vmem:[%s170 + $0x98] sm:$0xff]
      %v200 = vld [vmem:[%s170 + $0xa0] sm:$0xff]
      %v201 = vld [vmem:[%s170 + $0xa8] sm:$0xff]
      %v202 = vld [vmem:[%s170 + $0xb0] sm:$0xff]
      %v203 = vld [vmem:[%s170 + $0xb8] sm:$0xff]
      %v204 = vld [vmem:[%s170 + $0xc0] sm:$0xff]
      %v205 = vld [vmem:[%s170 + $0xc8] sm:$0xff]
      %v206 = vld [vmem:[%s170 + $0xd0] sm:$0xff]
      %v207 = vld [vmem:[%s170 + $0xd8] sm:$0xff]
      %v208 = vld [vmem:[%s170 + $0xe0] sm:$0xff]
      %v209 = vld [vmem:[%s170 + $0xe8] sm:$0xff]
      %v210 = vld [vmem:[%s170 + $0xf0] sm:$0xff]
      %v211 = vld [vmem:[%s170 + $0xf8] sm:$0xff]
      %v212 = vld [vmem:[%s1] sm:$0xff]
      %v213 = vld [vmem:[%s1 + $0x8] sm:$0xf]
      %v214 = vld [vmem:[%s1 + $0xc] sm:$0xff]
      %v215 = vld [vmem:[%s1 + $0x14] sm:$0xf]
      %v216 = vld [vmem:[%s1 + $0x18] sm:$0xff]
      %v217 = vld [vmem:[%s1 + $0x20] sm:$0xf]
      %v218 = vld [vmem:[%s1 + $0x24] sm:$0xff]
      %v219 = vld [vmem:[%s1 + $0x2c] sm:$0xf]
      %v220 = vld [vmem:[%s1 + $0x30] sm:$0xff]
      %v221 = vld [vmem:[%s1 + $0x38] sm:$0xf]
      %v222 = vld [vmem:[%s1 + $0x3c] sm:$0xff]
      %v223 = vld [vmem:[%s1 + $0x44] sm:$0xf]
      %v224 = vld [vmem:[%s1 + $0x48] sm:$0xff]
      %v225 = vld [vmem:[%s1 + $0x50] sm:$0xf]
      %v226 = vld [vmem:[%s1 + $0x54] sm:$0xff]
      %v227 = vld [vmem:[%s1 + $0x5c] sm:$0xf]
      %v228 = vld [vmem:[%s1 + $0x60] sm:$0xff]
      %v229 = vld [vmem:[%s1 + $0x68] sm:$0xf]
      %v230 = vld [vmem:[%s1 + $0x6c] sm:$0xff]
      %v231 = vld [vmem:[%s1 + $0x74] sm:$0xf]
      %v232 = vld [vmem:[%s1 + $0x78] sm:$0xff]
      %v233 = vld [vmem:[%s1 + $0x80] sm:$0xf]
      %v234 = vld [vmem:[%s1 + $0x84] sm:$0xff]
      %v235 = vld [vmem:[%s1 + $0x8c] sm:$0xf]
      %v236 = vld [vmem:[%s1 + $0x90] sm:$0xff]
      %v237 = vld [vmem:[%s1 + $0x98] sm:$0xf]
      %v238 = vld [vmem:[%s1 + $0x9c] sm:$0xff]
      %v239 = vld [vmem:[%s1 + $0xa4] sm:$0xf]
      %v240 = vld [vmem:[%s1 + $0xa8] sm:$0xff]
      %v241 = vld [vmem:[%s1 + $0xb0] sm:$0xf]
      %v242 = vld [vmem:[%s1 + $0xb4] sm:$0xff]
      %v243 = vld [vmem:[%s1 + $0xbc] sm:$0xf]
      %v244 = vld [vmem:[%s1 + $0xc0] sm:$0xff]
      %v245 = vld [vmem:[%s1 + $0xc8] sm:$0xf]
      %v246 = vld [vmem:[%s1 + $0xcc] sm:$0xff]
      %v247 = vld [vmem:[%s1 + $0xd4] sm:$0xf]
      %v248 = vld [vmem:[%s1 + $0xd8] sm:$0xff]
      %v249 = vld [vmem:[%s1 + $0xe0] sm:$0xf]
      %v250 = vld [vmem:[%s1 + $0xe4] sm:$0xff]
      %v251 = vld [vmem:[%s1 + $0xec] sm:$0xf]
      %v252 = vld [vmem:[%s1 + $0xf0] sm:$0xff]
      %v253 = vld [vmem:[%s1 + $0xf8] sm:$0xf]
      %v254 = vld [vmem:[%s1 + $0xfc] sm:$0xff]
      %v255 = vld [vmem:[%s1 + $0x104] sm:$0xf]
      %v256 = vld [vmem:[%s1 + $0x108] sm:$0xff]
      %v257 = vld [vmem:[%s1 + $0x110] sm:$0xf]
      %v258 = vld [vmem:[%s1 + $0x114] sm:$0xff]
      %v259 = vld [vmem:[%s1 + $0x11c] sm:$0xf]
      %v260 = vld [vmem:[%s1 + $0x120] sm:$0xff]
      %v261 = vld [vmem:[%s1 + $0x128] sm:$0xf]
      %v262 = vld [vmem:[%s1 + $0x12c] sm:$0xff]
      %v263 = vld [vmem:[%s1 + $0x134] sm:$0xf]
      %v264 = vld [vmem:[%s1 + $0x138] sm:$0xff]
      %v265 = vld [vmem:[%s1 + $0x140] sm:$0xf]
      %v266 = vld [vmem:[%s1 + $0x144] sm:$0xff]
      %v267 = vld [vmem:[%s1 + $0x14c] sm:$0xf]
      %v268 = vld [vmem:[%s1 + $0x150] sm:$0xff]
      %v269 = vld [vmem:[%s1 + $0x158] sm:$0xf]
      %v270 = vld [vmem:[%s1 + $0x15c] sm:$0xff]
      %v271 = vld [vmem:[%s1 + $0x164] sm:$0xf]
      %v272 = vld [vmem:[%s1 + $0x168] sm:$0xff]
      %v273 = vld [vmem:[%s1 + $0x170] sm:$0xf]
      %v274 = vld [vmem:[%s1 + $0x174] sm:$0xff]
      %v275 = vld [vmem:[%s1 + $0x17c] sm:$0xf]
      %v276 = vld [vmem:[%s1 + $0x180] sm:$0xff]
      %v277 = vld [vmem:[%s1 + $0x188] sm:$0xf]
      %v278 = vld [vmem:[%s1 + $0x18c] sm:$0xff]
      %v279 = vld [vmem:[%s1 + $0x194] sm:$0xf]
      %v280 = vld [vmem:[%s1 + $0x198] sm:$0xff]
      %v281 = vld [vmem:[%s1 + $0x1a0] sm:$0xf]
      %v282 = vld [vmem:[%s1 + $0x1a4] sm:$0xff]
      %v283 = vld [vmem:[%s1 + $0x1ac] sm:$0xf]
      %v284 = vld [vmem:[%s1 + $0x1b0] sm:$0xff]
      %v285 = vld [vmem:[%s1 + $0x1b8] sm:$0xf]
      %v286 = vld [vmem:[%s1 + $0x1bc] sm:$0xff]
      %v287 = vld [vmem:[%s1 + $0x1c4] sm:$0xf]
      %v288 = vld [vmem:[%s1 + $0x1c8] sm:$0xff]
      %v289 = vld [vmem:[%s1 + $0x1d0] sm:$0xf]
      %v290 = vld [vmem:[%s1 + $0x1d4] sm:$0xff]
      %v291 = vld [vmem:[%s1 + $0x1dc] sm:$0xf]
      %v292 = vld [vmem:[%s1 + $0x1e0] sm:$0xff]
      %v293 = vld [vmem:[%s1 + $0x1e8] sm:$0xf]
      %v294 = vld [vmem:[%s1 + $0x1ec] sm:$0xff]
      %v295 = vld [vmem:[%s1 + $0x1f4] sm:$0xf]
      %v296 = vld [vmem:[%s1 + $0x1f8] sm:$0xff]
      %v297 = vld [vmem:[%s1 + $0x200] sm:$0xf]
      %v298 = vld [vmem:[%s1 + $0x204] sm:$0xff]
      %v299 = vld [vmem:[%s1 + $0x20c] sm:$0xf]
      %v300 = vld [vmem:[%s1 + $0x210] sm:$0xff]
      %v301 = vld [vmem:[%s1 + $0x218] sm:$0xf]
      %v302 = vld [vmem:[%s1 + $0x21c] sm:$0xff]
      %v303 = vld [vmem:[%s1 + $0x224] sm:$0xf]
      %v304 = vld [vmem:[%s1 + $0x228] sm:$0xff]
      %v305 = vld [vmem:[%s1 + $0x230] sm:$0xf]
      %v306 = vld [vmem:[%s1 + $0x234] sm:$0xff]
      %v307 = vld [vmem:[%s1 + $0x23c] sm:$0xf]
      %v308 = vld [vmem:[%s1 + $0x240] sm:$0xff]
      %v309 = vld [vmem:[%s1 + $0x248] sm:$0xf]
      %v310 = vld [vmem:[%s1 + $0x24c] sm:$0xff]
      %v311 = vld [vmem:[%s1 + $0x254] sm:$0xf]
      %v312 = vld [vmem:[%s1 + $0x258] sm:$0xff]
      %v313 = vld [vmem:[%s1 + $0x260] sm:$0xf]
      %v314 = vld [vmem:[%s1 + $0x264] sm:$0xff]
      %v315 = vld [vmem:[%s1 + $0x26c] sm:$0xf]
      %v316 = vld [vmem:[%s1 + $0x270] sm:$0xff]
      %v317 = vld [vmem:[%s1 + $0x278] sm:$0xf]
      %v318 = vld [vmem:[%s1 + $0x27c] sm:$0xff]
      %v319 = vld [vmem:[%s1 + $0x284] sm:$0xf]
      %v320 = vld [vmem:[%s1 + $0x288] sm:$0xff]
      %v321 = vld [vmem:[%s1 + $0x290] sm:$0xf]
      %v322 = vld [vmem:[%s1 + $0x294] sm:$0xff]
      %v323 = vld [vmem:[%s1 + $0x29c] sm:$0xf]
      %v324 = vld [vmem:[%s1 + $0x2a0] sm:$0xff]
      %v325 = vld [vmem:[%s1 + $0x2a8] sm:$0xf]
      %v326 = vld [vmem:[%s1 + $0x2ac] sm:$0xff]
      %v327 = vld [vmem:[%s1 + $0x2b4] sm:$0xf]
      %v328 = vld [vmem:[%s1 + $0x2b8] sm:$0xff]
      %v329 = vld [vmem:[%s1 + $0x2c0] sm:$0xf]
      %v330 = vld [vmem:[%s1 + $0x2c4] sm:$0xff]
      %v331 = vld [vmem:[%s1 + $0x2cc] sm:$0xf]
      %v332 = vld [vmem:[%s1 + $0x2d0] sm:$0xff]
      %v333 = vld [vmem:[%s1 + $0x2d8] sm:$0xf]
      %v334 = vld [vmem:[%s1 + $0x2dc] sm:$0xff]
      %v335 = vld [vmem:[%s1 + $0x2e4] sm:$0xf]
      %v336 = vld [vmem:[%s1 + $0x2e8] sm:$0xff]
      %v337 = vld [vmem:[%s1 + $0x2f0] sm:$0xf]
      %v338 = vld [vmem:[%s1 + $0x2f4] sm:$0xff]
      %v339 = vld [vmem:[%s1 + $0x2fc] sm:$0xf]
      %v340 = vld [vmem:[%s2] sm:$0x7]
      %v342 = vlaneseq
      %v343 = vshrl.u32 %v342, 7
      %v344 = vsub.s32 0, %v343
      %v345 = vrot.slane %v340, %v344
      %v346 = vlaneseq
      %v347 = vshrl.u32 %v346, 7
      %v348 = vsub.s32 1, %v347
      %v349 = vrot.slane %v340, %v348
      %v350 = vlaneseq
      %v351 = vshrl.u32 %v350, 7
      %v352 = vsub.s32 2, %v351
      %v353 = vrot.slane %v340, %v352
      %v389 = vunpack.c.l.b16 %v180
      %v390 = vunpack.c.h.b16 %v180
      %v391 = vunpack.c.l.b16 %v181
      %v392 = vunpack.c.h.b16 %v181
      %v393 = vunpack.c.l.b16 %v182
      %v394 = vunpack.c.h.b16 %v182
      %v395 = vunpack.c.l.b16 %v183
      %v396 = vunpack.c.h.b16 %v183
      %v397 = vunpack.c.l.b16 %v184
      %v398 = vunpack.c.h.b16 %v184
      %v399 = vunpack.c.l.b16 %v185
      %v400 = vunpack.c.h.b16 %v185
      %v401 = vunpack.c.l.b16 %v186
      %v402 = vunpack.c.h.b16 %v186
      %v403 = vunpack.c.l.b16 %v187
      %v404 = vunpack.c.h.b16 %v187
      %v405 = vunpack.c.l.b16 %v188
      %v406 = vunpack.c.h.b16 %v188
      %v407 = vunpack.c.l.b16 %v189
      %v408 = vunpack.c.h.b16 %v189
      %v409 = vunpack.c.l.b16 %v190
      %v410 = vunpack.c.h.b16 %v190
      %v411 = vunpack.c.l.b16 %v191
      %v412 = vunpack.c.h.b16 %v191
      %v413 = vunpack.c.l.b16 %v192
      %v414 = vunpack.c.h.b16 %v192
      %v415 = vunpack.c.l.b16 %v193
      %v416 = vunpack.c.h.b16 %v193
      %v417 = vunpack.c.l.b16 %v194
      %v418 = vunpack.c.h.b16 %v194
      %v419 = vunpack.c.l.b16 %v195
      %v420 = vunpack.c.h.b16 %v195
      %v421 = vunpack.c.l.b16 %v196
      %v422 = vunpack.c.h.b16 %v196
      %v423 = vunpack.c.l.b16 %v197
      %v424 = vunpack.c.h.b16 %v197
      %v425 = vunpack.c.l.b16 %v198
      %v426 = vunpack.c.h.b16 %v198
      %v427 = vunpack.c.l.b16 %v199
      %v428 = vunpack.c.h.b16 %v199
      %v429 = vunpack.c.l.b16 %v200
      %v430 = vunpack.c.h.b16 %v200
      %v431 = vunpack.c.l.b16 %v201
      %v432 = vunpack.c.h.b16 %v201
      %v433 = vunpack.c.l.b16 %v202
      %v434 = vunpack.c.h.b16 %v202
      %v435 = vunpack.c.l.b16 %v203
      %v436 = vunpack.c.h.b16 %v203
      %v437 = vunpack.c.l.b16 %v204
      %v438 = vunpack.c.h.b16 %v204
      %v439 = vunpack.c.l.b16 %v205
      %v440 = vunpack.c.h.b16 %v205
      %v441 = vunpack.c.l.b16 %v206
      %v442 = vunpack.c.h.b16 %v206
      %v443 = vunpack.c.l.b16 %v207
      %v444 = vunpack.c.h.b16 %v207
      %v445 = vunpack.c.l.b16 %v208
      %v446 = vunpack.c.h.b16 %v208
      %v447 = vunpack.c.l.b16 %v209
      %v448 = vunpack.c.h.b16 %v209
      %v449 = vunpack.c.l.b16 %v210
      %v450 = vunpack.c.h.b16 %v210
      %v451 = vunpack.c.l.b16 %v211
      %v452 = vunpack.c.h.b16 %v211
      %v453 = vpack.c.b16 %v393, %v389
      %v454 = vpack.c.b16 %v394, %v390
      %v455 = vpack.c.b16 %v395, %v391
      %v456 = vpack.c.b16 %v396, %v392
      %v457 = vpack.c.b16 %v401, %v397
      %v458 = vpack.c.b16 %v402, %v398
      %v459 = vpack.c.b16 %v403, %v399
      %v460 = vpack.c.b16 %v404, %v400
      %v461 = vpack.c.b16 %v409, %v405
      %v462 = vpack.c.b16 %v410, %v406
      %v463 = vpack.c.b16 %v411, %v407
      %v464 = vpack.c.b16 %v412, %v408
      %v465 = vpack.c.b16 %v417, %v413
      %v466 = vpack.c.b16 %v418, %v414
      %v467 = vpack.c.b16 %v419, %v415
      %v468 = vpack.c.b16 %v420, %v416
      %v469 = vpack.c.b16 %v425, %v421
      %v470 = vpack.c.b16 %v426, %v422
      %v471 = vpack.c.b16 %v427, %v423
      %v472 = vpack.c.b16 %v428, %v424
      %v473 = vpack.c.b16 %v433, %v429
      %v474 = vpack.c.b16 %v434, %v430
      %v475 = vpack.c.b16 %v435, %v431
      %v476 = vpack.c.b16 %v436, %v432
      %v477 = vpack.c.b16 %v441, %v437
      %v478 = vpack.c.b16 %v442, %v438
      %v479 = vpack.c.b16 %v443, %v439
      %v480 = vpack.c.b16 %v444, %v440
      %v481 = vpack.c.b16 %v449, %v445
      %v482 = vpack.c.b16 %v450, %v446
      %v483 = vpack.c.b16 %v451, %v447
      %v484 = vpack.c.b16 %v452, %v448
      %v645 = vunpack.c.l.b16 %v212
      %v646 = vunpack.c.h.b16 %v212
      %v647 = vunpack.c.l.b16 %v213
      %v648 = vunpack.c.l.b16 %v214
      %v649 = vunpack.c.h.b16 %v214
      %v650 = vunpack.c.l.b16 %v215
      %v651 = vunpack.c.l.b16 %v216
      %v652 = vunpack.c.h.b16 %v216
      %v653 = vunpack.c.l.b16 %v217
      %v654 = vunpack.c.l.b16 %v218
      %v655 = vunpack.c.h.b16 %v218
      %v656 = vunpack.c.l.b16 %v219
      %v657 = vunpack.c.l.b16 %v220
      %v658 = vunpack.c.h.b16 %v220
      %v659 = vunpack.c.l.b16 %v221
      %v660 = vunpack.c.l.b16 %v222
      %v661 = vunpack.c.h.b16 %v222
      %v662 = vunpack.c.l.b16 %v223
      %v663 = vunpack.c.l.b16 %v224
      %v664 = vunpack.c.h.b16 %v224
      %v665 = vunpack.c.l.b16 %v225
      %v666 = vunpack.c.l.b16 %v226
      %v667 = vunpack.c.h.b16 %v226
      %v668 = vunpack.c.l.b16 %v227
      %v669 = vunpack.c.l.b16 %v228
      %v670 = vunpack.c.h.b16 %v228
      %v671 = vunpack.c.l.b16 %v229
      %v672 = vunpack.c.l.b16 %v230
      %v673 = vunpack.c.h.b16 %v230
      %v674 = vunpack.c.l.b16 %v231
      %v675 = vunpack.c.l.b16 %v232
      %v676 = vunpack.c.h.b16 %v232
      %v677 = vunpack.c.l.b16 %v233
      %v678 = vunpack.c.l.b16 %v234
      %v679 = vunpack.c.h.b16 %v234
      %v680 = vunpack.c.l.b16 %v235
      %v681 = vunpack.c.l.b16 %v236
      %v682 = vunpack.c.h.b16 %v236
      %v683 = vunpack.c.l.b16 %v237
      %v684 = vunpack.c.l.b16 %v238
      %v685 = vunpack.c.h.b16 %v238
      %v686 = vunpack.c.l.b16 %v239
      %v687 = vunpack.c.l.b16 %v240
      %v688 = vunpack.c.h.b16 %v240
      %v689 = vunpack.c.l.b16 %v241
      %v690 = vunpack.c.l.b16 %v242
      %v691 = vunpack.c.h.b16 %v242
      %v692 = vunpack.c.l.b16 %v243
      %v693 = vunpack.c.l.b16 %v244
      %v694 = vunpack.c.h.b16 %v244
      %v695 = vunpack.c.l.b16 %v245
      %v696 = vunpack.c.l.b16 %v246
      %v697 = vunpack.c.h.b16 %v246
      %v698 = vunpack.c.l.b16 %v247
      %v699 = vunpack.c.l.b16 %v248
      %v700 = vunpack.c.h.b16 %v248
      %v701 = vunpack.c.l.b16 %v249
      %v702 = vunpack.c.l.b16 %v250
      %v703 = vunpack.c.h.b16 %v250
      %v704 = vunpack.c.l.b16 %v251
      %v705 = vunpack.c.l.b16 %v252
      %v706 = vunpack.c.h.b16 %v252
      %v707 = vunpack.c.l.b16 %v253
      %v708 = vunpack.c.l.b16 %v254
      %v709 = vunpack.c.h.b16 %v254
      %v710 = vunpack.c.l.b16 %v255
      %v711 = vunpack.c.l.b16 %v256
      %v712 = vunpack.c.h.b16 %v256
      %v713 = vunpack.c.l.b16 %v257
      %v714 = vunpack.c.l.b16 %v258
      %v715 = vunpack.c.h.b16 %v258
      %v716 = vunpack.c.l.b16 %v259
      %v717 = vunpack.c.l.b16 %v260
      %v718 = vunpack.c.h.b16 %v260
      %v719 = vunpack.c.l.b16 %v261
      %v720 = vunpack.c.l.b16 %v262
      %v721 = vunpack.c.h.b16 %v262
      %v722 = vunpack.c.l.b16 %v263
      %v723 = vunpack.c.l.b16 %v264
      %v724 = vunpack.c.h.b16 %v264
      %v725 = vunpack.c.l.b16 %v265
      %v726 = vunpack.c.l.b16 %v266
      %v727 = vunpack.c.h.b16 %v266
      %v728 = vunpack.c.l.b16 %v267
      %v729 = vunpack.c.l.b16 %v268
      %v730 = vunpack.c.h.b16 %v268
      %v731 = vunpack.c.l.b16 %v269
      %v732 = vunpack.c.l.b16 %v270
      %v733 = vunpack.c.h.b16 %v270
      %v734 = vunpack.c.l.b16 %v271
      %v735 = vunpack.c.l.b16 %v272
      %v736 = vunpack.c.h.b16 %v272
      %v737 = vunpack.c.l.b16 %v273
      %v738 = vunpack.c.l.b16 %v274
      %v739 = vunpack.c.h.b16 %v274
      %v740 = vunpack.c.l.b16 %v275
      %v741 = vunpack.c.l.b16 %v276
      %v742 = vunpack.c.h.b16 %v276
      %v743 = vunpack.c.l.b16 %v277
      %v744 = vunpack.c.l.b16 %v278
      %v745 = vunpack.c.h.b16 %v278
      %v746 = vunpack.c.l.b16 %v279
      %v747 = vunpack.c.l.b16 %v280
      %v748 = vunpack.c.h.b16 %v280
      %v749 = vunpack.c.l.b16 %v281
      %v750 = vunpack.c.l.b16 %v282
      %v751 = vunpack.c.h.b16 %v282
      %v752 = vunpack.c.l.b16 %v283
      %v753 = vunpack.c.l.b16 %v284
      %v754 = vunpack.c.h.b16 %v284
      %v755 = vunpack.c.l.b16 %v285
      %v756 = vunpack.c.l.b16 %v286
      %v757 = vunpack.c.h.b16 %v286
      %v758 = vunpack.c.l.b16 %v287
      %v759 = vunpack.c.l.b16 %v288
      %v760 = vunpack.c.h.b16 %v288
      %v761 = vunpack.c.l.b16 %v289
      %v762 = vunpack.c.l.b16 %v290
      %v763 = vunpack.c.h.b16 %v290
      %v764 = vunpack.c.l.b16 %v291
      %v765 = vunpack.c.l.b16 %v292
      %v766 = vunpack.c.h.b16 %v292
      %v767 = vunpack.c.l.b16 %v293
      %v768 = vunpack.c.l.b16 %v294
      %v769 = vunpack.c.h.b16 %v294
      %v770 = vunpack.c.l.b16 %v295
      %v771 = vunpack.c.l.b16 %v296
      %v772 = vunpack.c.h.b16 %v296
      %v773 = vunpack.c.l.b16 %v297
      %v774 = vunpack.c.l.b16 %v298
      %v775 = vunpack.c.h.b16 %v298
      %v776 = vunpack.c.l.b16 %v299
      %v777 = vunpack.c.l.b16 %v300
      %v778 = vunpack.c.h.b16 %v300
      %v779 = vunpack.c.l.b16 %v301
      %v780 = vunpack.c.l.b16 %v302
      %v781 = vunpack.c.h.b16 %v302
      %v782 = vunpack.c.l.b16 %v303
      %v783 = vunpack.c.l.b16 %v304
      %v784 = vunpack.c.h.b16 %v304
      %v785 = vunpack.c.l.b16 %v305
      %v786 = vunpack.c.l.b16 %v306
      %v787 = vunpack.c.h.b16 %v306
      %v788 = vunpack.c.l.b16 %v307
      %v789 = vunpack.c.l.b16 %v308
      %v790 = vunpack.c.h.b16 %v308
      %v791 = vunpack.c.l.b16 %v309
      %v792 = vunpack.c.l.b16 %v310
      %v793 = vunpack.c.h.b16 %v310
      %v794 = vunpack.c.l.b16 %v311
      %v795 = vunpack.c.l.b16 %v312
      %v796 = vunpack.c.h.b16 %v312
      %v797 = vunpack.c.l.b16 %v313
      %v798 = vunpack.c.l.b16 %v314
      %v799 = vunpack.c.h.b16 %v314
      %v800 = vunpack.c.l.b16 %v315
      %v801 = vunpack.c.l.b16 %v316
      %v802 = vunpack.c.h.b16 %v316
      %v803 = vunpack.c.l.b16 %v317
      %v804 = vunpack.c.l.b16 %v318
      %v805 = vunpack.c.h.b16 %v318
      %v806 = vunpack.c.l.b16 %v319
      %v807 = vunpack.c.l.b16 %v320
      %v808 = vunpack.c.h.b16 %v320
      %v809 = vunpack.c.l.b16 %v321
      %v810 = vunpack.c.l.b16 %v322
      %v811 = vunpack.c.h.b16 %v322
      %v812 = vunpack.c.l.b16 %v323
      %v813 = vunpack.c.l.b16 %v324
      %v814 = vunpack.c.h.b16 %v324
      %v815 = vunpack.c.l.b16 %v325
      %v816 = vunpack.c.l.b16 %v326
      %v817 = vunpack.c.h.b16 %v326
      %v818 = vunpack.c.l.b16 %v327
      %v819 = vunpack.c.l.b16 %v328
      %v820 = vunpack.c.h.b16 %v328
      %v821 = vunpack.c.l.b16 %v329
      %v822 = vunpack.c.l.b16 %v330
      %v823 = vunpack.c.h.b16 %v330
      %v824 = vunpack.c.l.b16 %v331
      %v825 = vunpack.c.l.b16 %v332
      %v826 = vunpack.c.h.b16 %v332
      %v827 = vunpack.c.l.b16 %v333
      %v828 = vunpack.c.l.b16 %v334
      %v829 = vunpack.c.h.b16 %v334
      %v830 = vunpack.c.l.b16 %v335
      %v831 = vunpack.c.l.b16 %v336
      %v832 = vunpack.c.h.b16 %v336
      %v833 = vunpack.c.l.b16 %v337
      %v834 = vunpack.c.l.b16 %v338
      %v835 = vunpack.c.h.b16 %v338
      %v836 = vunpack.c.l.b16 %v339
      %v837 = vpack.c.b16 %v648, %v645
      %v838 = vpack.c.b16 %v649, %v646
      %v839 = vpack.c.b16 %v650, %v647
      %v840 = vpack.c.b16 %v654, %v651
      %v841 = vpack.c.b16 %v655, %v652
      %v842 = vpack.c.b16 %v656, %v653
      %v843 = vpack.c.b16 %v660, %v657
      %v844 = vpack.c.b16 %v661, %v658
      %v845 = vpack.c.b16 %v662, %v659
      %v846 = vpack.c.b16 %v666, %v663
      %v847 = vpack.c.b16 %v667, %v664
      %v848 = vpack.c.b16 %v668, %v665
      %v849 = vpack.c.b16 %v672, %v669
      %v850 = vpack.c.b16 %v673, %v670
      %v851 = vpack.c.b16 %v674, %v671
      %v852 = vpack.c.b16 %v678, %v675
      %v853 = vpack.c.b16 %v679, %v676
      %v854 = vpack.c.b16 %v680, %v677
      %v855 = vpack.c.b16 %v684, %v681
      %v856 = vpack.c.b16 %v685, %v682
      %v857 = vpack.c.b16 %v686, %v683
      %v858 = vpack.c.b16 %v690, %v687
      %v859 = vpack.c.b16 %v691, %v688
      %v860 = vpack.c.b16 %v692, %v689
      %v861 = vpack.c.b16 %v696, %v693
      %v862 = vpack.c.b16 %v697, %v694
      %v863 = vpack.c.b16 %v698, %v695
      %v864 = vpack.c.b16 %v702, %v699
      %v865 = vpack.c.b16 %v703, %v700
      %v866 = vpack.c.b16 %v704, %v701
      %v867 = vpack.c.b16 %v708, %v705
      %v868 = vpack.c.b16 %v709, %v706
      %v869 = vpack.c.b16 %v710, %v707
      %v870 = vpack.c.b16 %v714, %v711
      %v871 = vpack.c.b16 %v715, %v712
      %v872 = vpack.c.b16 %v716, %v713
      %v873 = vpack.c.b16 %v720, %v717
      %v874 = vpack.c.b16 %v721, %v718
      %v875 = vpack.c.b16 %v722, %v719
      %v876 = vpack.c.b16 %v726, %v723
      %v877 = vpack.c.b16 %v727, %v724
      %v878 = vpack.c.b16 %v728, %v725
      %v879 = vpack.c.b16 %v732, %v729
      %v880 = vpack.c.b16 %v733, %v730
      %v881 = vpack.c.b16 %v734, %v731
      %v882 = vpack.c.b16 %v738, %v735
      %v883 = vpack.c.b16 %v739, %v736
      %v884 = vpack.c.b16 %v740, %v737
      %v885 = vpack.c.b16 %v744, %v741
      %v886 = vpack.c.b16 %v745, %v742
      %v887 = vpack.c.b16 %v746, %v743
      %v888 = vpack.c.b16 %v750, %v747
      %v889 = vpack.c.b16 %v751, %v748
      %v890 = vpack.c.b16 %v752, %v749
      %v891 = vpack.c.b16 %v756, %v753
      %v892 = vpack.c.b16 %v757, %v754
      %v893 = vpack.c.b16 %v758, %v755
      %v894 = vpack.c.b16 %v762, %v759
      %v895 = vpack.c.b16 %v763, %v760
      %v896 = vpack.c.b16 %v764, %v761
      %v897 = vpack.c.b16 %v768, %v765
      %v898 = vpack.c.b16 %v769, %v766
      %v899 = vpack.c.b16 %v770, %v767
      %v900 = vpack.c.b16 %v774, %v771
      %v901 = vpack.c.b16 %v775, %v772
      %v902 = vpack.c.b16 %v776, %v773
      %v903 = vpack.c.b16 %v780, %v777
      %v904 = vpack.c.b16 %v781, %v778
      %v905 = vpack.c.b16 %v782, %v779
      %v906 = vpack.c.b16 %v786, %v783
      %v907 = vpack.c.b16 %v787, %v784
      %v908 = vpack.c.b16 %v788, %v785
      %v909 = vpack.c.b16 %v792, %v789
      %v910 = vpack.c.b16 %v793, %v790
      %v911 = vpack.c.b16 %v794, %v791
      %v912 = vpack.c.b16 %v798, %v795
      %v913 = vpack.c.b16 %v799, %v796
      %v914 = vpack.c.b16 %v800, %v797
      %v915 = vpack.c.b16 %v804, %v801
      %v916 = vpack.c.b16 %v805, %v802
      %v917 = vpack.c.b16 %v806, %v803
      %v918 = vpack.c.b16 %v810, %v807
      %v919 = vpack.c.b16 %v811, %v808
      %v920 = vpack.c.b16 %v812, %v809
      %v921 = vpack.c.b16 %v816, %v813
      %v922 = vpack.c.b16 %v817, %v814
      %v923 = vpack.c.b16 %v818, %v815
      %v924 = vpack.c.b16 %v822, %v819
      %v925 = vpack.c.b16 %v823, %v820
      %v926 = vpack.c.b16 %v824, %v821
      %v927 = vpack.c.b16 %v828, %v825
      %v928 = vpack.c.b16 %v829, %v826
      %v929 = vpack.c.b16 %v830, %v827
      %v930 = vpack.c.b16 %v834, %v831
      %v931 = vpack.c.b16 %v835, %v832
      %v932 = vpack.c.b16 %v836, %v833
      %1029 = vmatprep.subr.bf16.mxu0 %v859
      %1030 = vmatpush1.bf16.msra.mxu0 %v858
      %1031 = vmatprep.subr.bf16.mxu0 %v856
      %1032 = vmatpush1.bf16.msra.mxu0 %v855
      %1033 = vmatprep.subr.bf16.mxu0 %v853
      %1034 = vmatpush1.bf16.msra.mxu0 %v852
      %1035 = vmatprep.subr.bf16.mxu0 %v850
      %1036 = vmatpush1.bf16.msra.mxu0 %v849
      %1037 = vmatprep.subr.bf16.mxu0 %v847
      %1038 = vmatpush1.bf16.msra.mxu0 %v846
      %1039 = vmatprep.subr.bf16.mxu0 %v844
      %1040 = vmatpush1.bf16.msra.mxu0 %v843
      %1041 = vmatprep.subr.bf16.mxu0 %v841
      %1042 = vmatpush1.bf16.msra.mxu0 %v840
      %1043 = vmatprep.subr.bf16.mxu0 %v838
      %1044 = vmatpush1.bf16.msra.mxu0 %v837
      %1045 = vmatprep.subr.bf16.mxu0 %v883
      %1046 = vmatpush2.bf16.msra.mxu0 %v882
      %1047 = vmatprep.subr.bf16.mxu0 %v880
      %1048 = vmatpush2.bf16.msra.mxu0 %v879
      %1049 = vmatprep.subr.bf16.mxu0 %v877
      %1050 = vmatpush2.bf16.msra.mxu0 %v876
      %1051 = vmatprep.subr.bf16.mxu0 %v874
      %1052 = vmatpush2.bf16.msra.mxu0 %v873
      %1053 = vmatprep.subr.bf16.mxu0 %v871
      %1054 = vmatpush2.bf16.msra.mxu0 %v870
      %1055 = vmatprep.subr.bf16.mxu0 %v868
      %1056 = vmatpush2.bf16.msra.mxu0 %v867
      %1057 = vmatprep.subr.bf16.mxu0 %v865
      %1058 = vmatpush2.bf16.msra.mxu0 %v864
      %1059 = vmatprep.subr.bf16.mxu0 %v862
      %1060 = vmatpush2.bf16.msra.mxu0 %v861
      %1061 = vmatprep.mubr.bf16.mxu0 %v454
      %1062 = vmatmul.mubr.bf16.gmra.mxu0 %v453
      %v1063 = vpop.f32.mrf.mxu0
      %v1064 = vadd.f32 %v345, %v1063
      %v1065 = vpop.f32.mrf.mxu0
      %v1066 = vadd.f32 %v349, %v1065
      %v1067 = vpop.f32.mrf.mxu0
      %v1068 = vadd.f32 %v345, %v1067
      %v1069 = vpop.f32.mrf.mxu0
      %v1070 = vadd.f32 %v349, %v1069
      %1071 = vmatprep.mubr.bf16.mxu0 %v458
      %1072 = vmatmul.mubr.bf16.gmra.mxu0 %v457
      %v1073 = vpop.f32.mrf.mxu0
      %v1074 = vadd.f32 %v345, %v1073
      %v1075 = vpop.f32.mrf.mxu0
      %v1076 = vadd.f32 %v349, %v1075
      %v1077 = vpop.f32.mrf.mxu0
      %v1078 = vadd.f32 %v345, %v1077
      %v1079 = vpop.f32.mrf.mxu0
      %v1080 = vadd.f32 %v349, %v1079
      %1081 = vmatprep.mubr.bf16.mxu0 %v462
      %1082 = vmatmul.mubr.bf16.gmra.mxu0 %v461
      %v1083 = vpop.f32.mrf.mxu0
      %v1084 = vadd.f32 %v345, %v1083
      %v1085 = vpop.f32.mrf.mxu0
      %v1086 = vadd.f32 %v349, %v1085
      %v1087 = vpop.f32.mrf.mxu0
      %v1088 = vadd.f32 %v345, %v1087
      %v1089 = vpop.f32.mrf.mxu0
      %v1090 = vadd.f32 %v349, %v1089
      %1091 = vmatprep.mubr.bf16.mxu0 %v466
      %1092 = vmatmul.mubr.bf16.gmra.mxu0 %v465
      %v1093 = vpop.f32.mrf.mxu0
      %v1094 = vadd.f32 %v345, %v1093
      %v1095 = vpop.f32.mrf.mxu0
      %v1096 = vadd.f32 %v349, %v1095
      %v1097 = vpop.f32.mrf.mxu0
      %v1098 = vadd.f32 %v345, %v1097
      %v1099 = vpop.f32.mrf.mxu0
      %v1100 = vadd.f32 %v349, %v1099
      %1101 = vmatprep.mubr.bf16.mxu0 %v470
      %1102 = vmatmul.mubr.bf16.gmra.mxu0 %v469
      %v1103 = vpop.f32.mrf.mxu0
      %v1104 = vadd.f32 %v345, %v1103
      %v1105 = vpop.f32.mrf.mxu0
      %v1106 = vadd.f32 %v349, %v1105
      %v1107 = vpop.f32.mrf.mxu0
      %v1108 = vadd.f32 %v345, %v1107
      %v1109 = vpop.f32.mrf.mxu0
      %v1110 = vadd.f32 %v349, %v1109
      %1111 = vmatprep.mubr.bf16.mxu0 %v474
      %1112 = vmatmul.mubr.bf16.gmra.mxu0 %v473
      %v1113 = vpop.f32.mrf.mxu0
      %v1114 = vadd.f32 %v345, %v1113
      %v1115 = vpop.f32.mrf.mxu0
      %v1116 = vadd.f32 %v349, %v1115
      %v1117 = vpop.f32.mrf.mxu0
      %v1118 = vadd.f32 %v345, %v1117
      %v1119 = vpop.f32.mrf.mxu0
      %v1120 = vadd.f32 %v349, %v1119
      %1121 = vmatprep.mubr.bf16.mxu0 %v478
      %1122 = vmatmul.mubr.bf16.gmra.mxu0 %v477
      %v1123 = vpop.f32.mrf.mxu0
      %v1124 = vadd.f32 %v345, %v1123
      %v1125 = vpop.f32.mrf.mxu0
      %v1126 = vadd.f32 %v349, %v1125
      %v1127 = vpop.f32.mrf.mxu0
      %v1128 = vadd.f32 %v345, %v1127
      %v1129 = vpop.f32.mrf.mxu0
      %v1130 = vadd.f32 %v349, %v1129
      %1131 = vmatprep.mubr.bf16.mxu0 %v482
      %1132 = vmatmul.mubr.bf16.gmra.mxu0 %v481
      %v1133 = vpop.f32.mrf.mxu0
      %v1134 = vadd.f32 %v345, %v1133
      %v1135 = vpop.f32.mrf.mxu0
      %v1136 = vadd.f32 %v349, %v1135
      %v1137 = vpop.f32.mrf.mxu0
      %v1138 = vadd.f32 %v345, %v1137
      %v1139 = vpop.f32.mrf.mxu0
      %v1140 = vadd.f32 %v349, %v1139
      %1141 = vdwg.mxu0
      %1142 = vmatprep.subr.bf16.mxu0 %v907
      %1143 = vmatpush1.bf16.msra.mxu0 %v906
      %1144 = vmatprep.subr.bf16.mxu0 %v904
      %1145 = vmatpush1.bf16.msra.mxu0 %v903
      %1146 = vmatprep.subr.bf16.mxu0 %v901
      %1147 = vmatpush1.bf16.msra.mxu0 %v900
      %1148 = vmatprep.subr.bf16.mxu0 %v898
      %1149 = vmatpush1.bf16.msra.mxu0 %v897
      %1150 = vmatprep.subr.bf16.mxu0 %v895
      %1151 = vmatpush1.bf16.msra.mxu0 %v894
      %1152 = vmatprep.subr.bf16.mxu0 %v892
      %1153 = vmatpush1.bf16.msra.mxu0 %v891
      %1154 = vmatprep.subr.bf16.mxu0 %v889
      %1155 = vmatpush1.bf16.msra.mxu0 %v888
      %1156 = vmatprep.subr.bf16.mxu0 %v886
      %1157 = vmatpush1.bf16.msra.mxu0 %v885
      %1158 = vmatprep.subr.bf16.mxu0 %v931
      %1159 = vmatpush2.bf16.msra.mxu0 %v930
      %1160 = vmatprep.subr.bf16.mxu0 %v928
      %1161 = vmatpush2.bf16.msra.mxu0 %v927
      %1162 = vmatprep.subr.bf16.mxu0 %v925
      %1163 = vmatpush2.bf16.msra.mxu0 %v924
      %1164 = vmatprep.subr.bf16.mxu0 %v922
      %1165 = vmatpush2.bf16.msra.mxu0 %v921
      %1166 = vmatprep.subr.bf16.mxu0 %v919
      %1167 = vmatpush2.bf16.msra.mxu0 %v918
      %1168 = vmatprep.subr.bf16.mxu0 %v916
      %1169 = vmatpush2.bf16.msra.mxu0 %v915
      %1170 = vmatprep.subr.bf16.mxu0 %v913
      %1171 = vmatpush2.bf16.msra.mxu0 %v912
      %1172 = vmatprep.subr.bf16.mxu0 %v910
      %1173 = vmatpush2.bf16.msra.mxu0 %v909
      %1174 = vmatprep.mubr.bf16.mxu0 %v456
      %1175 = vmatmul.mubr.bf16.gmra.mxu0 %v455
      %v1176 = vpop.f32.mrf.mxu0
      %v1177 = vadd.f32 %v1064, %v1176
      %v1178 = vpop.f32.mrf.mxu0
      %v1179 = vadd.f32 %v1066, %v1178
      %v1180 = vpop.f32.mrf.mxu0
      %v1181 = vadd.f32 %v1068, %v1180
      %v1182 = vpop.f32.mrf.mxu0
      %v1183 = vadd.f32 %v1070, %v1182
      %1184 = vmatprep.mubr.bf16.mxu0 %v460
      %1185 = vmatmul.mubr.bf16.gmra.mxu0 %v459
      %v1186 = vpop.f32.mrf.mxu0
      %v1187 = vadd.f32 %v1074, %v1186
      %v1188 = vpop.f32.mrf.mxu0
      %v1189 = vadd.f32 %v1076, %v1188
      %v1190 = vpop.f32.mrf.mxu0
      %v1191 = vadd.f32 %v1078, %v1190
      %v1192 = vpop.f32.mrf.mxu0
      %v1193 = vadd.f32 %v1080, %v1192
      %1194 = vmatprep.mubr.bf16.mxu0 %v464
      %1195 = vmatmul.mubr.bf16.gmra.mxu0 %v463
      %v1196 = vpop.f32.mrf.mxu0
      %v1197 = vadd.f32 %v1084, %v1196
      %v1198 = vpop.f32.mrf.mxu0
      %v1199 = vadd.f32 %v1086, %v1198
      %v1200 = vpop.f32.mrf.mxu0
      %v1201 = vadd.f32 %v1088, %v1200
      %v1202 = vpop.f32.mrf.mxu0
      %v1203 = vadd.f32 %v1090, %v1202
      %1204 = vmatprep.mubr.bf16.mxu0 %v468
      %1205 = vmatmul.mubr.bf16.gmra.mxu0 %v467
      %v1206 = vpop.f32.mrf.mxu0
      %v1207 = vadd.f32 %v1094, %v1206
      %v1208 = vpop.f32.mrf.mxu0
      %v1209 = vadd.f32 %v1096, %v1208
      %v1210 = vpop.f32.mrf.mxu0
      %v1211 = vadd.f32 %v1098, %v1210
      %v1212 = vpop.f32.mrf.mxu0
      %v1213 = vadd.f32 %v1100, %v1212
      %1214 = vmatprep.mubr.bf16.mxu0 %v472
      %1215 = vmatmul.mubr.bf16.gmra.mxu0 %v471
      %v1216 = vpop.f32.mrf.mxu0
      %v1217 = vadd.f32 %v1104, %v1216
      %v1218 = vpop.f32.mrf.mxu0
      %v1219 = vadd.f32 %v1106, %v1218
      %v1220 = vpop.f32.mrf.mxu0
      %v1221 = vadd.f32 %v1108, %v1220
      %v1222 = vpop.f32.mrf.mxu0
      %v1223 = vadd.f32 %v1110, %v1222
      %1224 = vmatprep.mubr.bf16.mxu0 %v476
      %1225 = vmatmul.mubr.bf16.gmra.mxu0 %v475
      %v1226 = vpop.f32.mrf.mxu0
      %v1227 = vadd.f32 %v1114, %v1226
      %v1228 = vpop.f32.mrf.mxu0
      %v1229 = vadd.f32 %v1116, %v1228
      %v1230 = vpop.f32.mrf.mxu0
      %v1231 = vadd.f32 %v1118, %v1230
      %v1232 = vpop.f32.mrf.mxu0
      %v1233 = vadd.f32 %v1120, %v1232
      %1234 = vmatprep.mubr.bf16.mxu0 %v480
      %1235 = vmatmul.mubr.bf16.gmra.mxu0 %v479
      %v1236 = vpop.f32.mrf.mxu0
      %v1237 = vadd.f32 %v1124, %v1236
      %v1238 = vpop.f32.mrf.mxu0
      %v1239 = vadd.f32 %v1126, %v1238
      %v1240 = vpop.f32.mrf.mxu0
      %v1241 = vadd.f32 %v1128, %v1240
      %v1242 = vpop.f32.mrf.mxu0
      %v1243 = vadd.f32 %v1130, %v1242
      %1244 = vmatprep.mubr.bf16.mxu0 %v484
      %1245 = vmatmul.mubr.bf16.gmra.mxu0 %v483
      %v1246 = vpop.f32.mrf.mxu0
      %v1247 = vadd.f32 %v1134, %v1246
      %v1248 = vpop.f32.mrf.mxu0
      %v1249 = vadd.f32 %v1136, %v1248
      %v1250 = vpop.f32.mrf.mxu0
      %v1251 = vadd.f32 %v1138, %v1250
      %v1252 = vpop.f32.mrf.mxu0
      %v1253 = vadd.f32 %v1140, %v1252
      %1254 = vdwg.mxu0
      %1255 = vmatprep.subr.bf16.mxu0 0
      %1256 = vmatpush1.bf16.msra.mxu0 %v860
      %1257 = vmatprep.subr.bf16.mxu0 0
      %1258 = vmatpush1.bf16.msra.mxu0 %v857
      %1259 = vmatprep.subr.bf16.mxu0 0
      %1260 = vmatpush1.bf16.msra.mxu0 %v854
      %1261 = vmatprep.subr.bf16.mxu0 0
      %1262 = vmatpush1.bf16.msra.mxu0 %v851
      %1263 = vmatprep.subr.bf16.mxu0 0
      %1264 = vmatpush1.bf16.msra.mxu0 %v848
      %1265 = vmatprep.subr.bf16.mxu0 0
      %1266 = vmatpush1.bf16.msra.mxu0 %v845
      %1267 = vmatprep.subr.bf16.mxu0 0
      %1268 = vmatpush1.bf16.msra.mxu0 %v842
      %1269 = vmatprep.subr.bf16.mxu0 0
      %1270 = vmatpush1.bf16.msra.mxu0 %v839
      %1271 = vmatprep.subr.bf16.mxu0 0
      %1272 = vmatpush2.bf16.msra.mxu0 %v884
      %1273 = vmatprep.subr.bf16.mxu0 0
      %1274 = vmatpush2.bf16.msra.mxu0 %v881
      %1275 = vmatprep.subr.bf16.mxu0 0
      %1276 = vmatpush2.bf16.msra.mxu0 %v878
      %1277 = vmatprep.subr.bf16.mxu0 0
      %1278 = vmatpush2.bf16.msra.mxu0 %v875
      %1279 = vmatprep.subr.bf16.mxu0 0
      %1280 = vmatpush2.bf16.msra.mxu0 %v872
      %1281 = vmatprep.subr.bf16.mxu0 0
      %1282 = vmatpush2.bf16.msra.mxu0 %v869
      %1283 = vmatprep.subr.bf16.mxu0 0
      %1284 = vmatpush2.bf16.msra.mxu0 %v866
      %1285 = vmatprep.subr.bf16.mxu0 0
      %1286 = vmatpush2.bf16.msra.mxu0 %v863
      %1287 = vmatprep.mubr.bf16.mxu0 %v454
      %1288 = vmatmul.mubr.bf16.gmra.mxu0 %v453
      %v1289 = vpop.f32.mrf.mxu0
      %v1290 = vadd.f32 %v353, %v1289
      %v1291 = vpop.f32.mrf.mxu0
      %v1292 = vpop.f32.mrf.mxu0
      %v1293 = vadd.f32 %v353, %v1292
      %v1294 = vpop.f32.mrf.mxu0
      %1295 = vmatprep.mubr.bf16.mxu0 %v458
      %1296 = vmatmul.mubr.bf16.gmra.mxu0 %v457
      %v1297 = vpop.f32.mrf.mxu0
      %v1298 = vadd.f32 %v353, %v1297
      %v1299 = vpop.f32.mrf.mxu0
      %v1300 = vpop.f32.mrf.mxu0
      %v1301 = vadd.f32 %v353, %v1300
      %v1302 = vpop.f32.mrf.mxu0
      %1303 = vmatprep.mubr.bf16.mxu0 %v462
      %1304 = vmatmul.mubr.bf16.gmra.mxu0 %v461
      %v1305 = vpop.f32.mrf.mxu0
      %v1306 = vadd.f32 %v353, %v1305
      %v1307 = vpop.f32.mrf.mxu0
      %v1308 = vpop.f32.mrf.mxu0
      %v1309 = vadd.f32 %v353, %v1308
      %v1310 = vpop.f32.mrf.mxu0
      %1311 = vmatprep.mubr.bf16.mxu0 %v466
      %1312 = vmatmul.mubr.bf16.gmra.mxu0 %v465
      %v1313 = vpop.f32.mrf.mxu0
      %v1314 = vadd.f32 %v353, %v1313
      %v1315 = vpop.f32.mrf.mxu0
      %v1316 = vpop.f32.mrf.mxu0
      %v1317 = vadd.f32 %v353, %v1316
      %v1318 = vpop.f32.mrf.mxu0
      %1319 = vmatprep.mubr.bf16.mxu0 %v470
      %1320 = vmatmul.mubr.bf16.gmra.mxu0 %v469
      %v1321 = vpop.f32.mrf.mxu0
      %v1322 = vadd.f32 %v353, %v1321
      %v1323 = vpop.f32.mrf.mxu0
      %v1324 = vpop.f32.mrf.mxu0
      %v1325 = vadd.f32 %v353, %v1324
      %v1326 = vpop.f32.mrf.mxu0
      %1327 = vmatprep.mubr.bf16.mxu0 %v474
      %1328 = vmatmul.mubr.bf16.gmra.mxu0 %v473
      %v1329 = vpop.f32.mrf.mxu0
      %v1330 = vadd.f32 %v353, %v1329
      %v1331 = vpop.f32.mrf.mxu0
      %v1332 = vpop.f32.mrf.mxu0
      %v1333 = vadd.f32 %v353, %v1332
      %v1334 = vpop.f32.mrf.mxu0
      %1335 = vmatprep.mubr.bf16.mxu0 %v478
      %1336 = vmatmul.mubr.bf16.gmra.mxu0 %v477
      %v1337 = vpop.f32.mrf.mxu0
      %v1338 = vadd.f32 %v353, %v1337
      %v1339 = vpop.f32.mrf.mxu0
      %v1340 = vpop.f32.mrf.mxu0
      %v1341 = vadd.f32 %v353, %v1340
      %v1342 = vpop.f32.mrf.mxu0
      %1343 = vmatprep.mubr.bf16.mxu0 %v482
      %1344 = vmatmul.mubr.bf16.gmra.mxu0 %v481
      %v1345 = vpop.f32.mrf.mxu0
      %v1346 = vadd.f32 %v353, %v1345
      %v1347 = vpop.f32.mrf.mxu0
      %v1348 = vpop.f32.mrf.mxu0
      %v1349 = vadd.f32 %v353, %v1348
      %v1350 = vpop.f32.mrf.mxu0
      %1351 = vdwg.mxu0
      %1352 = vmatprep.subr.bf16.mxu0 0
      %1353 = vmatpush1.bf16.msra.mxu0 %v908
      %1354 = vmatprep.subr.bf16.mxu0 0
      %1355 = vmatpush1.bf16.msra.mxu0 %v905
      %1356 = vmatprep.subr.bf16.mxu0 0
      %1357 = vmatpush1.bf16.msra.mxu0 %v902
      %1358 = vmatprep.subr.bf16.mxu0 0
      %1359 = vmatpush1.bf16.msra.mxu0 %v899
      %1360 = vmatprep.subr.bf16.mxu0 0
      %1361 = vmatpush1.bf16.msra.mxu0 %v896
      %1362 = vmatprep.subr.bf16.mxu0 0
      %1363 = vmatpush1.bf16.msra.mxu0 %v893
      %1364 = vmatprep.subr.bf16.mxu0 0
      %1365 = vmatpush1.bf16.msra.mxu0 %v890
      %1366 = vmatprep.subr.bf16.mxu0 0
      %1367 = vmatpush1.bf16.msra.mxu0 %v887
      %1368 = vmatprep.subr.bf16.mxu0 0
      %1369 = vmatpush2.bf16.msra.mxu0 %v932
      %1370 = vmatprep.subr.bf16.mxu0 0
      %1371 = vmatpush2.bf16.msra.mxu0 %v929
      %1372 = vmatprep.subr.bf16.mxu0 0
      %1373 = vmatpush2.bf16.msra.mxu0 %v926
      %1374 = vmatprep.subr.bf16.mxu0 0
      %1375 = vmatpush2.bf16.msra.mxu0 %v923
      %1376 = vmatprep.subr.bf16.mxu0 0
      %1377 = vmatpush2.bf16.msra.mxu0 %v920
      %1378 = vmatprep.subr.bf16.mxu0 0
      %1379 = vmatpush2.bf16.msra.mxu0 %v917
      %1380 = vmatprep.subr.bf16.mxu0 0
      %1381 = vmatpush2.bf16.msra.mxu0 %v914
      %1382 = vmatprep.subr.bf16.mxu0 0
      %1383 = vmatpush2.bf16.msra.mxu0 %v911
      %1384 = vmatprep.mubr.bf16.mxu0 %v456
      %1385 = vmatmul.mubr.bf16.gmra.mxu0 %v455
      %v1386 = vpop.f32.mrf.mxu0
      %v1387 = vadd.f32 %v1290, %v1386
      %v1388 = vpop.f32.mrf.mxu0
      %v1389 = vpop.f32.mrf.mxu0
      %v1390 = vadd.f32 %v1293, %v1389
      %v1391 = vpop.f32.mrf.mxu0
      %1392 = vmatprep.mubr.bf16.mxu0 %v460
      %1393 = vmatmul.mubr.bf16.gmra.mxu0 %v459
      %v1394 = vpop.f32.mrf.mxu0
      %v1395 = vadd.f32 %v1298, %v1394
      %v1396 = vpop.f32.mrf.mxu0
      %v1397 = vpop.f32.mrf.mxu0
      %v1398 = vadd.f32 %v1301, %v1397
      %v1399 = vpop.f32.mrf.mxu0
      %1400 = vmatprep.mubr.bf16.mxu0 %v464
      %1401 = vmatmul.mubr.bf16.gmra.mxu0 %v463
      %v1402 = vpop.f32.mrf.mxu0
      %v1403 = vadd.f32 %v1306, %v1402
      %v1404 = vpop.f32.mrf.mxu0
      %v1405 = vpop.f32.mrf.mxu0
      %v1406 = vadd.f32 %v1309, %v1405
      %v1407 = vpop.f32.mrf.mxu0
      %1408 = vmatprep.mubr.bf16.mxu0 %v468
      %1409 = vmatmul.mubr.bf16.gmra.mxu0 %v467
      %v1410 = vpop.f32.mrf.mxu0
      %v1411 = vadd.f32 %v1314, %v1410
      %v1412 = vpop.f32.mrf.mxu0
      %v1413 = vpop.f32.mrf.mxu0
      %v1414 = vadd.f32 %v1317, %v1413
      %v1415 = vpop.f32.mrf.mxu0
      %1416 = vmatprep.mubr.bf16.mxu0 %v472
      %1417 = vmatmul.mubr.bf16.gmra.mxu0 %v471
      %v1418 = vpop.f32.mrf.mxu0
      %v1419 = vadd.f32 %v1322, %v1418
      %v1420 = vpop.f32.mrf.mxu0
      %v1421 = vpop.f32.mrf.mxu0
      %v1422 = vadd.f32 %v1325, %v1421
      %v1423 = vpop.f32.mrf.mxu0
      %1424 = vmatprep.mubr.bf16.mxu0 %v476
      %1425 = vmatmul.mubr.bf16.gmra.mxu0 %v475
      %v1426 = vpop.f32.mrf.mxu0
      %v1427 = vadd.f32 %v1330, %v1426
      %v1428 = vpop.f32.mrf.mxu0
      %v1429 = vpop.f32.mrf.mxu0
      %v1430 = vadd.f32 %v1333, %v1429
      %v1431 = vpop.f32.mrf.mxu0
      %1432 = vmatprep.mubr.bf16.mxu0 %v480
      %1433 = vmatmul.mubr.bf16.gmra.mxu0 %v479
      %v1434 = vpop.f32.mrf.mxu0
      %v1435 = vadd.f32 %v1338, %v1434
      %v1436 = vpop.f32.mrf.mxu0
      %v1437 = vpop.f32.mrf.mxu0
      %v1438 = vadd.f32 %v1341, %v1437
      %v1439 = vpop.f32.mrf.mxu0
      %1440 = vmatprep.mubr.bf16.mxu0 %v484
      %1441 = vmatmul.mubr.bf16.gmra.mxu0 %v483
      %v1442 = vpop.f32.mrf.mxu0
      %v1443 = vadd.f32 %v1346, %v1442
      %v1444 = vpop.f32.mrf.mxu0
      %v1445 = vpop.f32.mrf.mxu0
      %v1446 = vadd.f32 %v1349, %v1445
      %v1447 = vpop.f32.mrf.mxu0
      %1448 = vdwg.mxu0
      %v1449 = vmax.f32 %v1177, 0.0
      %v1450 = vmax.f32 %v1179, 0.0
      %v1451 = vmax.f32 %v1387, 0.0
      %v1452 = vmax.f32 %v1181, 0.0
      %v1453 = vmax.f32 %v1183, 0.0
      %v1454 = vmax.f32 %v1390, 0.0
      %v1455 = vmax.f32 %v1187, 0.0
      %v1456 = vmax.f32 %v1189, 0.0
      %v1457 = vmax.f32 %v1395, 0.0
      %v1458 = vmax.f32 %v1191, 0.0
      %v1459 = vmax.f32 %v1193, 0.0
      %v1460 = vmax.f32 %v1398, 0.0
      %v1461 = vmax.f32 %v1197, 0.0
      %v1462 = vmax.f32 %v1199, 0.0
      %v1463 = vmax.f32 %v1403, 0.0
      %v1464 = vmax.f32 %v1201, 0.0
      %v1465 = vmax.f32 %v1203, 0.0
      %v1466 = vmax.f32 %v1406, 0.0
      %v1467 = vmax.f32 %v1207, 0.0
      %v1468 = vmax.f32 %v1209, 0.0
      %v1469 = vmax.f32 %v1411, 0.0
      %v1470 = vmax.f32 %v1211, 0.0
      %v1471 = vmax.f32 %v1213, 0.0
      %v1472 = vmax.f32 %v1414, 0.0
      %v1473 = vmax.f32 %v1217, 0.0
      %v1474 = vmax.f32 %v1219, 0.0
      %v1475 = vmax.f32 %v1419, 0.0
      %v1476 = vmax.f32 %v1221, 0.0
      %v1477 = vmax.f32 %v1223, 0.0
      %v1478 = vmax.f32 %v1422, 0.0
      %v1479 = vmax.f32 %v1227, 0.0
      %v1480 = vmax.f32 %v1229, 0.0
      %v1481 = vmax.f32 %v1427, 0.0
      %v1482 = vmax.f32 %v1231, 0.0
      %v1483 = vmax.f32 %v1233, 0.0
      %v1484 = vmax.f32 %v1430, 0.0
      %v1485 = vmax.f32 %v1237, 0.0
      %v1486 = vmax.f32 %v1239, 0.0
      %v1487 = vmax.f32 %v1435, 0.0
      %v1488 = vmax.f32 %v1241, 0.0
      %v1489 = vmax.f32 %v1243, 0.0
      %v1490 = vmax.f32 %v1438, 0.0
      %v1491 = vmax.f32 %v1247, 0.0
      %v1492 = vmax.f32 %v1249, 0.0
      %v1493 = vmax.f32 %v1443, 0.0
      %v1494 = vmax.f32 %v1251, 0.0
      %v1495 = vmax.f32 %v1253, 0.0
      %v1496 = vmax.f32 %v1446, 0.0
      %1497 = vst [vmem:[%s177] sm:$0xff] %v1449
      %1498 = vst [vmem:[%s177 + $0x8] sm:$0xff] %v1450
      %vm1499 = vcmask 261120
      %1500 = vst.msk [vmem:[%s177 + $0x10] sm:$0xff] %vm1499, %v1451
      %1501 = vst [vmem:[%s177 + $0x18] sm:$0xff] %v1452
      %1502 = vst [vmem:[%s177 + $0x20] sm:$0xff] %v1453
      %1503 = vst.msk [vmem:[%s177 + $0x28] sm:$0xff] %vm1499, %v1454
      %1504 = vst [vmem:[%s177 + $0x30] sm:$0xff] %v1455
      %1505 = vst [vmem:[%s177 + $0x38] sm:$0xff] %v1456
      %1506 = vst.msk [vmem:[%s177 + $0x40] sm:$0xff] %vm1499, %v1457
      %1507 = vst [vmem:[%s177 + $0x48] sm:$0xff] %v1458
      %1508 = vst [vmem:[%s177 + $0x50] sm:$0xff] %v1459
      %1509 = vst.msk [vmem:[%s177 + $0x58] sm:$0xff] %vm1499, %v1460
      %1510 = vst [vmem:[%s177 + $0x60] sm:$0xff] %v1461
      %1511 = vst [vmem:[%s177 + $0x68] sm:$0xff] %v1462
      %1512 = vst.msk [vmem:[%s177 + $0x70] sm:$0xff] %vm1499, %v1463
      %1513 = vst [vmem:[%s177 + $0x78] sm:$0xff] %v1464
      %1514 = vst [vmem:[%s177 + $0x80] sm:$0xff] %v1465
      %1515 = vst.msk [vmem:[%s177 + $0x88] sm:$0xff] %vm1499, %v1466
      %1516 = vst [vmem:[%s177 + $0x90] sm:$0xff] %v1467
      %1517 = vst [vmem:[%s177 + $0x98] sm:$0xff] %v1468
      %1518 = vst.msk [vmem:[%s177 + $0xa0] sm:$0xff] %vm1499, %v1469
      %1519 = vst [vmem:[%s177 + $0xa8] sm:$0xff] %v1470
      %1520 = vst [vmem:[%s177 + $0xb0] sm:$0xff] %v1471
      %1521 = vst.msk [vmem:[%s177 + $0xb8] sm:$0xff] %vm1499, %v1472
      %1522 = vst [vmem:[%s177 + $0xc0] sm:$0xff] %v1473
      %1523 = vst [vmem:[%s177 + $0xc8] sm:$0xff] %v1474
      %1524 = vst.msk [vmem:[%s177 + $0xd0] sm:$0xff] %vm1499, %v1475
      %1525 = vst [vmem:[%s177 + $0xd8] sm:$0xff] %v1476
      %1526 = vst [vmem:[%s177 + $0xe0] sm:$0xff] %v1477
      %1527 = vst.msk [vmem:[%s177 + $0xe8] sm:$0xff] %vm1499, %v1478
      %1528 = vst [vmem:[%s177 + $0xf0] sm:$0xff] %v1479
      %1529 = vst [vmem:[%s177 + $0xf8] sm:$0xff] %v1480
      %1530 = vst.msk [vmem:[%s177 + $0x100] sm:$0xff] %vm1499, %v1481
      %1531 = vst [vmem:[%s177 + $0x108] sm:$0xff] %v1482
      %1532 = vst [vmem:[%s177 + $0x110] sm:$0xff] %v1483
      %1533 = vst.msk [vmem:[%s177 + $0x118] sm:$0xff] %vm1499, %v1484
      %1534 = vst [vmem:[%s177 + $0x120] sm:$0xff] %v1485
      %1535 = vst [vmem:[%s177 + $0x128] sm:$0xff] %v1486
      %1536 = vst.msk [vmem:[%s177 + $0x130] sm:$0xff] %vm1499, %v1487
      %1537 = vst [vmem:[%s177 + $0x138] sm:$0xff] %v1488
      %1538 = vst [vmem:[%s177 + $0x140] sm:$0xff] %v1489
      %1539 = vst.msk [vmem:[%s177 + $0x148] sm:$0xff] %vm1499, %v1490
      %1540 = vst [vmem:[%s177 + $0x150] sm:$0xff] %v1491
      %1541 = vst [vmem:[%s177 + $0x158] sm:$0xff] %v1492
      %1542 = vst.msk [vmem:[%s177 + $0x160] sm:$0xff] %vm1499, %v1493
      %1543 = vst [vmem:[%s177 + $0x168] sm:$0xff] %v1494
      %1544 = vst [vmem:[%s177 + $0x170] sm:$0xff] %v1495
      %1545 = vst.msk [vmem:[%s177 + $0x178] sm:$0xff] %vm1499, %v1496
      %s1546 = smul.u32 16, %s14
      %p1547 = scmp.lt.s32.totalorder %s1546, 63
      %s1548 = scalar_select %p1547, %s1546, 63
      %s1549 = smul.addr %s1548, 3
      %s1550 = smul.addr %s1549, 8
      %s1551 = scalar_lea.vmem %s3, %s1550
      // Predicated region
      $region33: #{mixed4e_forward.7} parent=31 // pred_check
        %p1552 = pneg %p100
      $region34: #{mixed4e_forward.7} parent=31 // pred_check_branch
        %1554 = sbr.rel (%p1552) target = $region36
      $region35: #{mixed4e_forward.7} parent=31 // pred_region
        %s1555 = smul.u32 16, %s14
      $region36: #{mixed4e_forward.7} parent=31 // pred_fallthru
        _
    $region32: #{mixed4e_forward.7} parent=5 // pred_fallthru
      _
    %p1556 = scmp.le.s32.totalorder 2, %s9
    // Predicated region
    $region37: #{mixed4e_forward.7} parent=5 // pred_check
      %p1557 = pneg %p1556
    $region38: #{mixed4e_forward.7} parent=5 // pred_check_branch
      %1559 = sbr.rel (%p1557) target = $region40
    $region39: #{mixed4e_forward.7} parent=5 // pred_region
      %s1560 = ssub.s32 %s9, 2
      // Predicated region
      $region41: #{mixed4e_forward.7} parent=39 // pred_check
        %p1561 = pneg %p106
      $region42: #{mixed4e_forward.7} parent=39 // pred_check_branch
        %1563 = sbr.rel (%p1561) target = $region44
      $region43: #{mixed4e_forward.7} parent=39 // pred_region
        %s1564 = smul.u32 16, %s15
        %p1565 = scmp.lt.s32.totalorder %s1564, 63
        %s1566 = scalar_select %p1565, %s1564, 63
        %s1567 = smul.addr %s1566, 3
        %s1568 = smul.addr %s1567, 8
        %s1569 = scalar_lea.vmem %s3, %s1568
      $region44: #{mixed4e_forward.7} parent=39 // pred_fallthru
        _
    $region40: #{mixed4e_forward.7} parent=5 // pred_fallthru
      _
  $region6: #{mixed4e_forward.7} parent=0 // loop_footer
    %s13 = sadd.s32 1, %s9
  $region7: #{mixed4e_forward.7} parent=0 // loop_footer_branch
    %8 = sbr.rel target = $region3
  $region8: #{mixed4e_forward.7} parent=0 // loop_exit
    _

// kernel: mixed4e_forward.10
$region0: #{mixed4e_forward.10}
  #allocation0 [shape = 'u32[]', space=smem, size = 0x4, offset = 0x4, fixed_abs, tag = 'smem constant byte address 0x4 - core index']
  #allocation1 [shape = 'u32[144,128]{1,0:T(1,128)}', space=vmem, size = 0x12000, scoped, tag = 'internal scratch']
  %s0 = inlined_call_operand.vmem [shape: f32[8,110,32], index: 0, kind: input, shape index: {}]
  %s1 = inlined_call_operand.vmem [shape: bf16[9,32,64], index: 1, kind: input, shape index: {}]
  %s2 = inlined_call_operand.vmem [shape: f32[1,64], index: 2, kind: input, shape index: {}]
  %s3 = inlined_call_operand.vmem [shape: bf16[8,80,64], index: 3, kind: output, shape index: {}]
  %s4 = sld [smem:[#allocation0]]
  $region45: #{mixed4e_forward.10} parent=0
    _
  %s6 = ssub.s32 1, %s4
  %s7 = scalar_select 0, %s6, %s4
  loop: start=0, step=1, limit=10
  $region2: #{mixed4e_forward.10} parent=0 // loop_pre_header
    _
  $region3: #{mixed4e_forward.10} parent=0 // loop_header
    %s9 = sphi 0, %s13
    %p10 = scmp.ge.s32.totalorder %s9, 10
    %s19 = sphi 0, %s21
    %s22 = sphi 0, %s19
    %s23 = sphi 0, %s22
    %s39 = sphi 0, %s23
    %s43 = sphi 0, %s43
    %s45 = sphi 0, %s43
    %s46 = sphi 0, %s45
    %s60 = sphi 0, %s46
    %s64 = sphi 0, %s64
    %s66 = sphi 0, %s64
    %s67 = sphi 0, %s66
    %s81 = sphi 0, %s67
    %s87 = sphi 0, %s89
    %s90 = sphi 0, %s87
    %s91 = sphi 0, %s90
    %s107 = sphi 0, %s91
  $region4: #{mixed4e_forward.10} parent=0 // loop_header_branch
    %12 = sbr.rel (%p10) target = $region8
  $region5: #{mixed4e_forward.10} parent=0 // loop_body
    %s14 = ssub.s32 %s9, 1
    %s15 = ssub.s32 %s9, 2
    %s16 = sadd.s32 %s9, 1
    %s17 = ssub.s32 %s9, %s16
    %p18 = scmp.eq.s32.totalorder %s17, 0
    %s20 = sadd.s32 %s19, 1
    %s21 = scalar_select %p18, %s19, %s20
    %p24 = pneg %p18
    %p25 = scmp.eq.s32.totalorder %s9, 7
    %p26 = por %p24, %p25
    %p27 = scmp.ne.s32.totalorder %s19, %s22
    %p28 = scmp.eq.s32.totalorder %s9, 0
    %p29 = por %p27, %p28
    %p30 = scmp.ne.s32.totalorder %s19, %s22
    %p31 = scmp.eq.s32.totalorder %s14, 7
    %p32 = por %p30, %p31
    %p33 = scmp.ne.s32.totalorder %s22, %s23
    %p34 = scmp.eq.s32.totalorder %s14, 0
    %p35 = por %p33, %p34
    %p36 = scmp.ne.s32.totalorder %s22, %s23
    %p37 = scmp.eq.s32.totalorder %s15, 7
    %p38 = por %p36, %p37
    %p40 = scmp.ne.s32.totalorder %s23, %s39
    %p41 = scmp.eq.s32.totalorder %s15, 0
    %p42 = por %p40, %p41
    %s44 = sadd.s32 %s43, 1
    %p47 = scmp.eq.s32.totalorder %s9, 7
    %p48 = scmp.ne.s32.totalorder %s43, %s45
    %p49 = scmp.eq.s32.totalorder %s9, 0
    %p50 = por %p48, %p49
    %p51 = scmp.ne.s32.totalorder %s43, %s45
    %p52 = scmp.eq.s32.totalorder %s14, 7
    %p53 = por %p51, %p52
    %p54 = scmp.ne.s32.totalorder %s45, %s46
    %p55 = scmp.eq.s32.totalorder %s14, 0
    %p56 = por %p54, %p55
    %p57 = scmp.ne.s32.totalorder %s45, %s46
    %p58 = scmp.eq.s32.totalorder %s15, 7
    %p59 = por %p57, %p58
    %p61 = scmp.ne.s32.totalorder %s46, %s60
    %p62 = scmp.eq.s32.totalorder %s15, 0
    %p63 = por %p61, %p62
    %s65 = sadd.s32 %s64, 1
    %p68 = scmp.eq.s32.totalorder %s9, 7
    %p69 = scmp.ne.s32.totalorder %s64, %s66
    %p70 = scmp.eq.s32.totalorder %s9, 0
    %p71 = por %p69, %p70
    %p72 = scmp.ne.s32.totalorder %s64, %s66
    %p73 = scmp.eq.s32.totalorder %s14, 7
    %p74 = por %p72, %p73
    %p75 = scmp.ne.s32.totalorder %s66, %s67
    %p76 = scmp.eq.s32.totalorder %s14, 0
    %p77 = por %p75, %p76
    %p78 = scmp.ne.s32.totalorder %s66, %s67
    %p79 = scmp.eq.s32.totalorder %s15, 7
    %p80 = por %p78, %p79
    %p82 = scmp.ne.s32.totalorder %s67, %s81
    %p83 = scmp.eq.s32.totalorder %s15, 0
    %p84 = por %p82, %p83
    %s85 = ssub.s32 %s9, %s16
    %p86 = scmp.eq.s32.totalorder %s85, 0
    %s88 = sadd.s32 %s87, 1
    %s89 = scalar_select %p86, %s87, %s88
    %p92 = pneg %p86
    %p93 = scmp.eq.s32.totalorder %s9, 7
    %p94 = por %p92, %p93
    %p95 = scmp.ne.s32.totalorder %s87, %s90
    %p96 = scmp.eq.s32.totalorder %s9, 0
    %p97 = por %p95, %p96
    %p98 = scmp.ne.s32.totalorder %s87, %s90
    %p99 = scmp.eq.s32.totalorder %s14, 7
    %p100 = por %p98, %p99
    %p101 = scmp.ne.s32.totalorder %s90, %s91
    %p102 = scmp.eq.s32.totalorder %s14, 0
    %p103 = por %p101, %p102
    %p104 = scmp.ne.s32.totalorder %s90, %s91
    %p105 = scmp.eq.s32.totalorder %s15, 7
    %p106 = por %p104, %p105
    %p108 = scmp.ne.s32.totalorder %s91, %s107
    %p109 = scmp.eq.s32.totalorder %s15, 0
    %p110 = por %p108, %p109
    %p111 = scmp.le.s32.totalorder 1, %s9
    %p112 = scmp.lt.s32.totalorder %s9, 9
    %p113 = pnand %p111, %p112
    %p114 = pneg %p113
    // Predicated region
    $region9: #{mixed4e_forward.10} parent=5 // pred_check
      _
    $region10: #{mixed4e_forward.10} parent=5 // pred_check_branch
      %116 = sbr.rel (%p113) target = $region12
    $region11: #{mixed4e_forward.10} parent=5 // pred_region
      %s117 = ssub.s32 %s9, 1
      // Predicated region
      $region13: #{mixed4e_forward.10} parent=11 // pred_check
        %p118 = pneg %p56
      $region14: #{mixed4e_forward.10} parent=11 // pred_check_branch
        %120 = sbr.rel (%p118) target = $region16
      $region15: #{mixed4e_forward.10} parent=11 // pred_region
        _
      $region16: #{mixed4e_forward.10} parent=11 // pred_fallthru
        _
      // Predicated region
      $region17: #{mixed4e_forward.10} parent=11 // pred_check
        %p121 = pneg %p77
      $region18: #{mixed4e_forward.10} parent=11 // pred_check_branch
        %123 = sbr.rel (%p121) target = $region20
      $region19: #{mixed4e_forward.10} parent=11 // pred_region
        _
      $region20: #{mixed4e_forward.10} parent=11 // pred_fallthru
        _
    $region12: #{mixed4e_forward.10} parent=5 // pred_fallthru
      _
    %p124 = scmp.lt.s32.totalorder %s9, 8
    // Predicated region
    $region21: #{mixed4e_forward.10} parent=5 // pred_check
      %p125 = pneg %p124
    $region22: #{mixed4e_forward.10} parent=5 // pred_check_branch
      %127 = sbr.rel (%p125) target = $region24
    $region23: #{mixed4e_forward.10} parent=5 // pred_region
      // Predicated region
      $region25: #{mixed4e_forward.10} parent=23 // pred_check
        %p128 = pneg %p29
      $region26: #{mixed4e_forward.10} parent=23 // pred_check_branch
        %130 = sbr.rel (%p128) target = $region28
      $region27: #{mixed4e_forward.10} parent=23 // pred_region
        %p131 = scmp.lt.s32.totalorder %s9, 7
        %s132 = scalar_select %p131, %s9, 7
        %s133 = smul.addr %s132, 14
        %s134 = smul.addr %s133, 8
        %s135 = scalar_lea.vmem %s0, %s134
      $region28: #{mixed4e_forward.10} parent=23 // pred_fallthru
        _
    $region24: #{mixed4e_forward.10} parent=5 // pred_fallthru
      _
    %p136 = scmp.le.s32.totalorder 1, %s9
    %p137 = scmp.lt.s32.totalorder %s9, 9
    %p138 = pnand %p136, %p137
    %p139 = pneg %p138
    // Predicated region
    $region29: #{mixed4e_forward.10} parent=5 // pred_check
      _
    $region30: #{mixed4e_forward.10} parent=5 // pred_check_branch
      %141 = sbr.rel (%p138) target = $region32
    $region31: #{mixed4e_forward.10} parent=5 // pred_region
      %s142 = ssub.s32 %s9, 1
      %p143 = scmp.lt.s32.totalorder %s14, 7
      %s144 = scalar_select %p143, %s14, 7
      %s145 = smul.addr %s144, 14
      %s146 = smul.addr %s145, 8
      %s147 = scalar_lea.vmem %s0, %s146
      %p148 = pneg %p35
      %p149 = pneg %p32
      %p150 = pneg %p56
      %p151 = pneg %p53
      %p152 = pneg %p77
      %p153 = pneg %p74
      %p154 = pneg %p103
      %p155 = pneg %p100
      %p156 = scmp.lt.s32.totalorder %s14, 7
      %s157 = scalar_select %p156, %s14, 7
      %s158 = smul.addr %s157, 10
      %s159 = smul.addr %s158, 4
      %s160 = scalar_lea.vmem %s3, %s159
      %p161 = scmp.lt.s32.totalorder %s14, 7
      %s162 = scalar_select %p161, %s14, 7
      %s163 = smul.addr %s162, 14
      %s164 = smul.addr %s163, 8
      %s165 = scalar_lea.vmem %s0, %s164
      %p166 = scmp.lt.s32.totalorder %s14, 7
      %s167 = scalar_select %p166, %s14, 7
      %s168 = smul.addr %s167, 10
      %s169 = smul.addr %s168, 4
      %s170 = scalar_lea.vmem %s3, %s169
      %v172 = vld [vmem:[%s165] sm:$0xff]
      %v173 = vld [vmem:[%s165 + $0x8] sm:$0xff]
      %v174 = vld [vmem:[%s165 + $0x10] sm:$0xff]
      %v175 = vld [vmem:[%s165 + $0x18] sm:$0xff]
      %v176 = vld [vmem:[%s165 + $0x20] sm:$0xff]
      %v177 = vld [vmem:[%s165 + $0x28] sm:$0xff]
      %v178 = vld [vmem:[%s165 + $0x30] sm:$0xff]
      %v179 = vld [vmem:[%s165 + $0x38] sm:$0xff]
      %v180 = vld [vmem:[%s165 + $0x40] sm:$0xff]
      %v181 = vld [vmem:[%s165 + $0x48] sm:$0xff]
      %v182 = vpack.c.bf16 %v173, %v172
      %v183 = vpack.c.bf16 %v175, %v174
      %v184 = vpack.c.bf16 %v177, %v176
      %v185 = vpack.c.bf16 %v179, %v178
      %v186 = vpack.c.bf16 %v181, %v180
      %v187 = vld [vmem:[%s1] sm:$0xf]
      %v188 = vld [vmem:[%s1 + $0x4] sm:$0xf]
      %v189 = vld [vmem:[%s1 + $0x8] sm:$0xf]
      %v190 = vld [vmem:[%s1 + $0xc] sm:$0xf]
      %v191 = vld [vmem:[%s165 + $0x1] sm:$0xff]
      %v192 = vld [vmem:[%s165 + $0x9] sm:$0xff]
      %v193 = vld [vmem:[%s165 + $0x11] sm:$0xff]
      %v194 = vld [vmem:[%s165 + $0x19] sm:$0xff]
      %v195 = vld [vmem:[%s165 + $0x21] sm:$0xff]
      %v196 = vld [vmem:[%s165 + $0x29] sm:$0xff]
      %v197 = vld [vmem:[%s165 + $0x31] sm:$0xff]
      %v198 = vld [vmem:[%s165 + $0x39] sm:$0xff]
      %v199 = vld [vmem:[%s165 + $0x41] sm:$0xff]
      %v200 = vld [vmem:[%s165 + $0x49] sm:$0xff]
      %v201 = vpack.c.bf16 %v192, %v191
      %v202 = vpack.c.bf16 %v194, %v193
      %v203 = vpack.c.bf16 %v196, %v195
      %v204 = vpack.c.bf16 %v198, %v197
      %v205 = vpack.c.bf16 %v200, %v199
      %s206 = scalar_lea.vmem %s1, 16
      %v207 = vld [vmem:[%s206] sm:$0xf]
      %v208 = vld [vmem:[%s206 + $0x4] sm:$0xf]
      %v209 = vld [vmem:[%s206 + $0x8] sm:$0xf]
      %v210 = vld [vmem:[%s206 + $0xc] sm:$0xf]
      %v215 = vunpack.c.l.b16 %v207
      %v216 = vunpack.c.l.b16 %v208
      %v217 = vunpack.c.l.b16 %v209
      %v218 = vunpack.c.l.b16 %v210
      %v219 = vpack.c.b16 %v216, %v215
      %v220 = vpack.c.b16 %v218, %v217
      %vm223 = vcmask 261120
      %v225 = vsel %vm223, %v201, 0
      %v228 = vsel %vm223, %v202, 0
      %v231 = vsel %vm223, %v203, 0
      %v234 = vsel %vm223, %v204, 0
      %v237 = vsel %vm223, %v205, 0
      %239 = vmatprep.subr.bf16.mxu0 0
      %240 = vmatpush1.bf16.msra.mxu0 0
      %241 = vmatprep.subr.bf16.mxu0 0
      %242 = vmatpush1.bf16.msra.mxu0 0
      %243 = vmatprep.subr.bf16.mxu0 0
      %244 = vmatpush1.bf16.msra.mxu0 0
      %245 = vmatprep.subr.bf16.mxu0 0
      %246 = vmatpush1.bf16.msra.mxu0 0
      %247 = vmatprep.subr.bf16.mxu0 0
      %248 = vmatpush1.bf16.msra.mxu0 0
      %249 = vmatprep.subr.bf16.mxu0 0
      %250 = vmatpush1.bf16.msra.mxu0 0
      %251 = vmatprep.subr.bf16.mxu0 0
      %252 = vmatpush1.bf16.msra.mxu0 %v220
      %253 = vmatprep.subr.bf16.mxu0 0
      %254 = vmatpush1.bf16.msra.mxu0 %v219
      %255 = vmatprep.subr.bf16.mxu0 0
      %256 = vmatpush2.bf16.msra.mxu0 0
      %257 = vmatprep.subr.bf16.mxu0 0
      %258 = vmatpush2.bf16.msra.mxu0 0
      %259 = vmatprep.subr.bf16.mxu0 0
      %260 = vmatpush2.bf16.msra.mxu0 0
      %261 = vmatprep.subr.bf16.mxu0 0
      %262 = vmatpush2.bf16.msra.mxu0 0
      %263 = vmatprep.subr.bf16.mxu0 0
      %264 = vmatpush2.bf16.msra.mxu0 0
      %265 = vmatprep.subr.bf16.mxu0 0
      %266 = vmatpush2.bf16.msra.mxu0 0
      %267 = vmatprep.subr.bf16.mxu0 0
      %268 = vmatpush2.bf16.msra.mxu0 0
      %269 = vmatprep.subr.bf16.mxu0 0
      %270 = vmatpush2.bf16.msra.mxu0 0
      %271 = vmatprep.mubr.bf16.mxu0 0
      %272 = vmatmul.mubr.bf16.gmra.mxu0 %v225
      %v273 = vpop.f32.mrf.mxu0
      %v274 = vadd.f32 0.0, %v273
      %v275 = vpop.f32.mrf.mxu0
      %v276 = vpop.f32.mrf.mxu0
      %v277 = vadd.f32 0.0, %v276
      %v278 = vpop.f32.mrf.mxu0
      %279 = vmatprep.mubr.bf16.mxu0 0
      %280 = vmatmul.mubr.bf16.gmra.mxu0 %v228
      %v281 = vpop.f32.mrf.mxu0
      %v282 = vadd.f32 0.0, %v281
      %v283 = vpop.f32.mrf.mxu0
      %v284 = vpop.f32.mrf.mxu0
      %v285 = vadd.f32 0.0, %v284
      %v286 = vpop.f32.mrf.mxu0
      %287 = vmatprep.mubr.bf16.mxu0 0
      %288 = vmatmul.mubr.bf16.gmra.mxu0 %v231
      %v289 = vpop.f32.mrf.mxu0
      %v290 = vadd.f32 0.0, %v289
      %v291 = vpop.f32.mrf.mxu0
      %v292 = vpop.f32.mrf.mxu0
      %v293 = vadd.f32 0.0, %v292
      %v294 = vpop.f32.mrf.mxu0
      %295 = vmatprep.mubr.bf16.mxu0 0
      %296 = vmatmul.mubr.bf16.gmra.mxu0 %v234
      %v297 = vpop.f32.mrf.mxu0
      %v298 = vadd.f32 0.0, %v297
      %v299 = vpop.f32.mrf.mxu0
      %v300 = vpop.f32.mrf.mxu0
      %v301 = vadd.f32 0.0, %v300
      %v302 = vpop.f32.mrf.mxu0
      %303 = vmatprep.mubr.bf16.mxu0 0
      %304 = vmatmul.mubr.bf16.gmra.mxu0 %v237
      %v305 = vpop.f32.mrf.mxu0
      %v306 = vadd.f32 0.0, %v305
      %v307 = vpop.f32.mrf.mxu0
      %v308 = vpop.f32.mrf.mxu0
      %v309 = vadd.f32 0.0, %v308
      %v310 = vpop.f32.mrf.mxu0
      %311 = vdwg.mxu0
      %v316 = vunpack.c.l.b16 %v187
      %v317 = vunpack.c.l.b16 %v188
      %v318 = vunpack.c.l.b16 %v189
      %v319 = vunpack.c.l.b16 %v190
      %v320 = vpack.c.b16 %v317, %v316
      %v321 = vpack.c.b16 %v319, %v318
      %v325 = vsel %vm223, %v182, 0
      %v328 = vsel %vm223, %v183, 0
      %v331 = vsel %vm223, %v184, 0
      %v334 = vsel %vm223, %v185, 0
      %v337 = vsel %vm223, %v186, 0
      %339 = vmatprep.subr.bf16.mxu0 0
      %340 = vmatpush1.bf16.msra.mxu0 0
      %341 = vmatprep.subr.bf16.mxu0 0
      %342 = vmatpush1.bf16.msra.mxu0 0
      %343 = vmatprep.subr.bf16.mxu0 0
      %344 = vmatpush1.bf16.msra.mxu0 0
      %345 = vmatprep.subr.bf16.mxu0 0
      %346 = vmatpush1.bf16.msra.mxu0 0
      %347 = vmatprep.subr.bf16.mxu0 0
      %348 = vmatpush1.bf16.msra.mxu0 0
      %349 = vmatprep.subr.bf16.mxu0 0
      %350 = vmatpush1.bf16.msra.mxu0 0
      %351 = vmatprep.subr.bf16.mxu0 0
      %352 = vmatpush1.bf16.msra.mxu0 %v321
      %353 = vmatprep.subr.bf16.mxu0 0
      %354 = vmatpush1.bf16.msra.mxu0 %v320
      %355 = vmatprep.subr.bf16.mxu0 0
      %356 = vmatpush2.bf16.msra.mxu0 0
      %357 = vmatprep.subr.bf16.mxu0 0
      %358 = vmatpush2.bf16.msra.mxu0 0
      %359 = vmatprep.subr.bf16.mxu0 0
      %360 = vmatpush2.bf16.msra.mxu0 0
      %361 = vmatprep.subr.bf16.mxu0 0
      %362 = vmatpush2.bf16.msra.mxu0 0
      %363 = vmatprep.subr.bf16.mxu0 0
      %364 = vmatpush2.bf16.msra.mxu0 0
      %365 = vmatprep.subr.bf16.mxu0 0
      %366 = vmatpush2.bf16.msra.mxu0 0
      %367 = vmatprep.subr.bf16.mxu0 0
      %368 = vmatpush2.bf16.msra.mxu0 0
      %369 = vmatprep.subr.bf16.mxu0 0
      %370 = vmatpush2.bf16.msra.mxu0 0
      %371 = vmatprep.mubr.bf16.mxu0 0
      %372 = vmatmul.mubr.bf16.gmra.mxu0 %v325
      %v373 = vpop.f32.mrf.mxu0
      %v374 = vadd.f32 %v274, %v373
      %v375 = vpop.f32.mrf.mxu0
      %v376 = vpop.f32.mrf.mxu0
      %v377 = vadd.f32 %v277, %v376
      %v378 = vpop.f32.mrf.mxu0
      %379 = vmatprep.mubr.bf16.mxu0 0
      %380 = vmatmul.mubr.bf16.gmra.mxu0 %v328
      %v381 = vpop.f32.mrf.mxu0
      %v382 = vadd.f32 %v282, %v381
      %v383 = vpop.f32.mrf.mxu0
      %v384 = vpop.f32.mrf.mxu0
      %v385 = vadd.f32 %v285, %v384
      %v386 = vpop.f32.mrf.mxu0
      %387 = vmatprep.mubr.bf16.mxu0 0
      %388 = vmatmul.mubr.bf16.gmra.mxu0 %v331
      %v389 = vpop.f32.mrf.mxu0
      %v390 = vadd.f32 %v290, %v389
      %v391 = vpop.f32.mrf.mxu0
      %v392 = vpop.f32.mrf.mxu0
      %v393 = vadd.f32 %v293, %v392
      %v394 = vpop.f32.mrf.mxu0
      %395 = vmatprep.mubr.bf16.mxu0 0
      %396 = vmatmul.mubr.bf16.gmra.mxu0 %v334
      %v397 = vpop.f32.mrf.mxu0
      %v398 = vadd.f32 %v298, %v397
      %v399 = vpop.f32.mrf.mxu0
      %v400 = vpop.f32.mrf.mxu0
      %v401 = vadd.f32 %v301, %v400
      %v402 = vpop.f32.mrf.mxu0
      %403 = vmatprep.mubr.bf16.mxu0 0
      %404 = vmatmul.mubr.bf16.gmra.mxu0 %v337
      %v405 = vpop.f32.mrf.mxu0
      %v406 = vadd.f32 %v306, %v405
      %v407 = vpop.f32.mrf.mxu0
      %v408 = vpop.f32.mrf.mxu0
      %v409 = vadd.f32 %v309, %v408
      %v410 = vpop.f32.mrf.mxu0
      %411 = vdwg.mxu0
      %v412 = vld [vmem:[%s165 + $0x2] sm:$0xff]
      %v413 = vld [vmem:[%s165 + $0xa] sm:$0xff]
      %v414 = vld [vmem:[%s165 + $0x12] sm:$0xff]
      %v415 = vld [vmem:[%s165 + $0x1a] sm:$0xff]
      %v416 = vld [vmem:[%s165 + $0x22] sm:$0xff]
      %v417 = vld [vmem:[%s165 + $0x2a] sm:$0xff]
      %v418 = vld [vmem:[%s165 + $0x32] sm:$0xff]
      %v419 = vld [vmem:[%s165 + $0x3a] sm:$0xff]
      %v420 = vld [vmem:[%s165 + $0x42] sm:$0xff]
      %v421 = vld [vmem:[%s165 + $0x4a] sm:$0xff]
      %v422 = vpack.c.bf16 %v413, %v412
      %v423 = vpack.c.bf16 %v415, %v414
      %v424 = vpack.c.bf16 %v417, %v416
      %v425 = vpack.c.bf16 %v419, %v418
      %v426 = vpack.c.bf16 %v421, %v420
      %s427 = scalar_lea.vmem %s1, 32
      %v428 = vld [vmem:[%s427] sm:$0xf]
      %v429 = vld [vmem:[%s427 + $0x4] sm:$0xf]
      %v430 = vld [vmem:[%s427 + $0x8] sm:$0xf]
      %v431 = vld [vmem:[%s427 + $0xc] sm:$0xf]
      %v436 = vunpack.c.l.b16 %v428
      %v437 = vunpack.c.l.b16 %v429
      %v438 = vunpack.c.l.b16 %v430
      %v439 = vunpack.c.l.b16 %v431
      %v440 = vpack.c.b16 %v437, %v436
      %v441 = vpack.c.b16 %v439, %v438
      %v445 = vsel %vm223, %v422, 0
      %v448 = vsel %vm223, %v423, 0
      %v451 = vsel %vm223, %v424, 0
      %v454 = vsel %vm223, %v425, 0
      %v457 = vsel %vm223, %v426, 0
      %459 = vmatprep.subr.bf16.mxu0 0
      %460 = vmatpush1.bf16.msra.mxu0 0
      %461 = vmatprep.subr.bf16.mxu0 0
      %462 = vmatpush1.bf16.msra.mxu0 0
      %463 = vmatprep.subr.bf16.mxu0 0
      %464 = vmatpush1.bf16.msra.mxu0 0
      %465 = vmatprep.subr.bf16.mxu0 0
      %466 = vmatpush1.bf16.msra.mxu0 0
      %467 = vmatprep.subr.bf16.mxu0 0
      %468 = vmatpush1.bf16.msra.mxu0 0
      %469 = vmatprep.subr.bf16.mxu0 0
      %470 = vmatpush1.bf16.msra.mxu0 0
      %471 = vmatprep.subr.bf16.mxu0 0
      %472 = vmatpush1.bf16.msra.mxu0 %v441
      %473 = vmatprep.subr.bf16.mxu0 0
      %474 = vmatpush1.bf16.msra.mxu0 %v440
      %475 = vmatprep.subr.bf16.mxu0 0
      %476 = vmatpush2.bf16.msra.mxu0 0
      %477 = vmatprep.subr.bf16.mxu0 0
      %478 = vmatpush2.bf16.msra.mxu0 0
      %479 = vmatprep.subr.bf16.mxu0 0
      %480 = vmatpush2.bf16.msra.mxu0 0
      %481 = vmatprep.subr.bf16.mxu0 0
      %482 = vmatpush2.bf16.msra.mxu0 0
      %483 = vmatprep.subr.bf16.mxu0 0
      %484 = vmatpush2.bf16.msra.mxu0 0
      %485 = vmatprep.subr.bf16.mxu0 0
      %486 = vmatpush2.bf16.msra.mxu0 0
      %487 = vmatprep.subr.bf16.mxu0 0
      %488 = vmatpush2.bf16.msra.mxu0 0
      %489 = vmatprep.subr.bf16.mxu0 0
      %490 = vmatpush2.bf16.msra.mxu0 0
      %491 = vmatprep.mubr.bf16.mxu0 0
      %492 = vmatmul.mubr.bf16.gmra.mxu0 %v445
      %v493 = vpop.f32.mrf.mxu0
      %v494 = vadd.f32 0.0, %v493
      %v495 = vpop.f32.mrf.mxu0
      %v496 = vpop.f32.mrf.mxu0
      %v497 = vadd.f32 0.0, %v496
      %v498 = vpop.f32.mrf.mxu0
      %499 = vmatprep.mubr.bf16.mxu0 0
      %500 = vmatmul.mubr.bf16.gmra.mxu0 %v448
      %v501 = vpop.f32.mrf.mxu0
      %v502 = vadd.f32 0.0, %v501
      %v503 = vpop.f32.mrf.mxu0
      %v504 = vpop.f32.mrf.mxu0
      %v505 = vadd.f32 0.0, %v504
      %v506 = vpop.f32.mrf.mxu0
      %507 = vmatprep.mubr.bf16.mxu0 0
      %508 = vmatmul.mubr.bf16.gmra.mxu0 %v451
      %v509 = vpop.f32.mrf.mxu0
      %v510 = vadd.f32 0.0, %v509
      %v511 = vpop.f32.mrf.mxu0
      %v512 = vpop.f32.mrf.mxu0
      %v513 = vadd.f32 0.0, %v512
      %v514 = vpop.f32.mrf.mxu0
      %515 = vmatprep.mubr.bf16.mxu0 0
      %516 = vmatmul.mubr.bf16.gmra.mxu0 %v454
      %v517 = vpop.f32.mrf.mxu0
      %v518 = vadd.f32 0.0, %v517
      %v519 = vpop.f32.mrf.mxu0
      %v520 = vpop.f32.mrf.mxu0
      %v521 = vadd.f32 0.0, %v520
      %v522 = vpop.f32.mrf.mxu0
      %523 = vmatprep.mubr.bf16.mxu0 0
      %524 = vmatmul.mubr.bf16.gmra.mxu0 %v457
      %v525 = vpop.f32.mrf.mxu0
      %v526 = vadd.f32 0.0, %v525
      %v527 = vpop.f32.mrf.mxu0
      %v528 = vpop.f32.mrf.mxu0
      %v529 = vadd.f32 0.0, %v528
      %v530 = vpop.f32.mrf.mxu0
      %531 = vdwg.mxu0
      %v532 = vadd.f32 %v374, %v494
      %v533 = vadd.f32 %v377, %v497
      %v534 = vadd.f32 %v382, %v502
      %v535 = vadd.f32 %v385, %v505
      %v536 = vadd.f32 %v390, %v510
      %v537 = vadd.f32 %v393, %v513
      %v538 = vadd.f32 %v398, %v518
      %v539 = vadd.f32 %v401, %v521
      %v540 = vadd.f32 %v406, %v526
      %v541 = vadd.f32 %v409, %v529
      %v542 = vld [vmem:[%s165 + $0xa] sm:$0xff]
      %v543 = vld [vmem:[%s165 + $0x12] sm:$0xff]
      %v544 = vld [vmem:[%s165 + $0x1a] sm:$0xff]
      %v545 = vld [vmem:[%s165 + $0x22] sm:$0xff]
      %v546 = vld [vmem:[%s165 + $0x2a] sm:$0xff]
      %v547 = vld [vmem:[%s165 + $0x32] sm:$0xff]
      %v548 = vld [vmem:[%s165 + $0x3a] sm:$0xff]
      %v549 = vld [vmem:[%s165 + $0x42] sm:$0xff]
      %v550 = vld [vmem:[%s165 + $0x4a] sm:$0xff]
      %v551 = vld [vmem:[%s165 + $0x52] sm:$0xff]
      %v552 = vpack.c.bf16 %v543, %v542
      %v553 = vpack.c.bf16 %v545, %v544
      %v554 = vpack.c.bf16 %v547, %v546
      %v555 = vpack.c.bf16 %v549, %v548
      %v556 = vpack.c.bf16 %v551, %v550
      %s557 = scalar_lea.vmem %s1, 48
      %v558 = vld [vmem:[%s557] sm:$0xf]
      %v559 = vld [vmem:[%s557 + $0x4] sm:$0xf]
      %v560 = vld [vmem:[%s557 + $0x8] sm:$0xf]
      %v561 = vld [vmem:[%s557 + $0xc] sm:$0xf]
      %v566 = vunpack.c.l.b16 %v558
      %v567 = vunpack.c.l.b16 %v559
      %v568 = vunpack.c.l.b16 %v560
      %v569 = vunpack.c.l.b16 %v561
      %v570 = vpack.c.b16 %v567, %v566
      %v571 = vpack.c.b16 %v569, %v568
      %v575 = vsel %vm223, %v552, 0
      %v578 = vsel %vm223, %v553, 0
      %v581 = vsel %vm223, %v554, 0
      %v584 = vsel %vm223, %v555, 0
      %v587 = vsel %vm223, %v556, 0
      %589 = vmatprep.subr.bf16.mxu0 0
      %590 = vmatpush1.bf16.msra.mxu0 0
      %591 = vmatprep.subr.bf16.mxu0 0
      %592 = vmatpush1.bf16.msra.mxu0 0
      %593 = vmatprep.subr.bf16.mxu0 0
      %594 = vmatpush1.bf16.msra.mxu0 0
      %595 = vmatprep.subr.bf16.mxu0 0
      %596 = vmatpush1.bf16.msra.mxu0 0
      %597 = vmatprep.subr.bf16.mxu0 0
      %598 = vmatpush1.bf16.msra.mxu0 0
      %599 = vmatprep.subr.bf16.mxu0 0
      %600 = vmatpush1.bf16.msra.mxu0 0
      %601 = vmatprep.subr.bf16.mxu0 0
      %602 = vmatpush1.bf16.msra.mxu0 %v571
      %603 = vmatprep.subr.bf16.mxu0 0
      %604 = vmatpush1.bf16.msra.mxu0 %v570
      %605 = vmatprep.subr.bf16.mxu0 0
      %606 = vmatpush2.bf16.msra.mxu0 0
      %607 = vmatprep.subr.bf16.mxu0 0
      %608 = vmatpush2.bf16.msra.mxu0 0
      %609 = vmatprep.subr.bf16.mxu0 0
      %610 = vmatpush2.bf16.msra.mxu0 0
      %611 = vmatprep.subr.bf16.mxu0 0
      %612 = vmatpush2.bf16.msra.mxu0 0
      %613 = vmatprep.subr.bf16.mxu0 0
      %614 = vmatpush2.bf16.msra.mxu0 0
      %615 = vmatprep.subr.bf16.mxu0 0
      %616 = vmatpush2.bf16.msra.mxu0 0
      %617 = vmatprep.subr.bf16.mxu0 0
      %618 = vmatpush2.bf16.msra.mxu0 0
      %619 = vmatprep.subr.bf16.mxu0 0
      %620 = vmatpush2.bf16.msra.mxu0 0
      %621 = vmatprep.mubr.bf16.mxu0 0
      %622 = vmatmul.mubr.bf16.gmra.mxu0 %v575
      %v623 = vpop.f32.mrf.mxu0
      %v624 = vadd.f32 0.0, %v623
      %v625 = vpop.f32.mrf.mxu0
      %v626 = vpop.f32.mrf.mxu0
      %v627 = vadd.f32 0.0, %v626
      %v628 = vpop.f32.mrf.mxu0
      %629 = vmatprep.mubr.bf16.mxu0 0
      %630 = vmatmul.mubr.bf16.gmra.mxu0 %v578
      %v631 = vpop.f32.mrf.mxu0
      %v632 = vadd.f32 0.0, %v631
      %v633 = vpop.f32.mrf.mxu0
      %v634 = vpop.f32.mrf.mxu0
      %v635 = vadd.f32 0.0, %v634
      %v636 = vpop.f32.mrf.mxu0
      %637 = vmatprep.mubr.bf16.mxu0 0
      %638 = vmatmul.mubr.bf16.gmra.mxu0 %v581
      %v639 = vpop.f32.mrf.mxu0
      %v640 = vadd.f32 0.0, %v639
      %v641 = vpop.f32.mrf.mxu0
      %v642 = vpop.f32.mrf.mxu0
      %v643 = vadd.f32 0.0, %v642
      %v644 = vpop.f32.mrf.mxu0
      %645 = vmatprep.mubr.bf16.mxu0 0
      %646 = vmatmul.mubr.bf16.gmra.mxu0 %v584
      %v647 = vpop.f32.mrf.mxu0
      %v648 = vadd.f32 0.0, %v647
      %v649 = vpop.f32.mrf.mxu0
      %v650 = vpop.f32.mrf.mxu0
      %v651 = vadd.f32 0.0, %v650
      %v652 = vpop.f32.mrf.mxu0
      %653 = vmatprep.mubr.bf16.mxu0 0
      %654 = vmatmul.mubr.bf16.gmra.mxu0 %v587
      %v655 = vpop.f32.mrf.mxu0
      %v656 = vadd.f32 0.0, %v655
      %v657 = vpop.f32.mrf.mxu0
      %v658 = vpop.f32.mrf.mxu0
      %v659 = vadd.f32 0.0, %v658
      %v660 = vpop.f32.mrf.mxu0
      %661 = vdwg.mxu0
      %v662 = vadd.f32 %v532, %v624
      %v663 = vadd.f32 %v533, %v627
      %v664 = vadd.f32 %v534, %v632
      %v665 = vadd.f32 %v535, %v635
      %v666 = vadd.f32 %v536, %v640
      %v667 = vadd.f32 %v537, %v643
      %v668 = vadd.f32 %v538, %v648
      %v669 = vadd.f32 %v539, %v651
      %v670 = vadd.f32 %v540, %v656
      %v671 = vadd.f32 %v541, %v659
      %v672 = vld [vmem:[%s165 + $0xb] sm:$0xff]
      %v673 = vld [vmem:[%s165 + $0x13] sm:$0xff]
      %v674 = vld [vmem:[%s165 + $0x1b] sm:$0xff]
      %v675 = vld [vmem:[%s165 + $0x23] sm:$0xff]
      %v676 = vld [vmem:[%s165 + $0x2b] sm:$0xff]
      %v677 = vld [vmem:[%s165 + $0x33] sm:$0xff]
      %v678 = vld [vmem:[%s165 + $0x3b] sm:$0xff]
      %v679 = vld [vmem:[%s165 + $0x43] sm:$0xff]
      %v680 = vld [vmem:[%s165 + $0x4b] sm:$0xff]
      %v681 = vld [vmem:[%s165 + $0x53] sm:$0xff]
      %v682 = vpack.c.bf16 %v673, %v672
      %v683 = vpack.c.bf16 %v675, %v674
      %v684 = vpack.c.bf16 %v677, %v676
      %v685 = vpack.c.bf16 %v679, %v678
      %v686 = vpack.c.bf16 %v681, %v680
      %s687 = scalar_lea.vmem %s1, 64
      %v688 = vld [vmem:[%s687] sm:$0xf]
      %v689 = vld [vmem:[%s687 + $0x4] sm:$0xf]
      %v690 = vld [vmem:[%s687 + $0x8] sm:$0xf]
      %v691 = vld [vmem:[%s687 + $0xc] sm:$0xf]
      %v696 = vunpack.c.l.b16 %v688
      %v697 = vunpack.c.l.b16 %v689
      %v698 = vunpack.c.l.b16 %v690
      %v699 = vunpack.c.l.b16 %v691
      %v700 = vpack.c.b16 %v697, %v696
      %v701 = vpack.c.b16 %v699, %v698
      %v705 = vsel %vm223, %v682, 0
      %v708 = vsel %vm223, %v683, 0
      %v711 = vsel %vm223, %v684, 0
      %v714 = vsel %vm223, %v685, 0
      %v717 = vsel %vm223, %v686, 0
      %719 = vmatprep.subr.bf16.mxu0 0
      %720 = vmatpush1.bf16.msra.mxu0 0
      %721 = vmatprep.subr.bf16.mxu0 0
      %722 = vmatpush1.bf16.msra.mxu0 0
      %723 = vmatprep.subr.bf16.mxu0 0
      %724 = vmatpush1.bf16.msra.mxu0 0
      %725 = vmatprep.subr.bf16.mxu0 0
      %726 = vmatpush1.bf16.msra.mxu0 0
      %727 = vmatprep.subr.bf16.mxu0 0
      %728 = vmatpush1.bf16.msra.mxu0 0
      %729 = vmatprep.subr.bf16.mxu0 0
      %730 = vmatpush1.bf16.msra.mxu0 0
      %731 = vmatprep.subr.bf16.mxu0 0
      %732 = vmatpush1.bf16.msra.mxu0 %v701
      %733 = vmatprep.subr.bf16.mxu0 0
      %734 = vmatpush1.bf16.msra.mxu0 %v700
      %735 = vmatprep.subr.bf16.mxu0 0
      %736 = vmatpush2.bf16.msra.mxu0 0
      %737 = vmatprep.subr.bf16.mxu0 0
      %738 = vmatpush2.bf16.msra.mxu0 0
      %739 = vmatprep.subr.bf16.mxu0 0
      %740 = vmatpush2.bf16.msra.mxu0 0
      %741 = vmatprep.subr.bf16.mxu0 0
      %742 = vmatpush2.bf16.msra.mxu0 0
      %743 = vmatprep.subr.bf16.mxu0 0
      %744 = vmatpush2.bf16.msra.mxu0 0
      %745 = vmatprep.subr.bf16.mxu0 0
      %746 = vmatpush2.bf16.msra.mxu0 0
      %747 = vmatprep.subr.bf16.mxu0 0
      %748 = vmatpush2.bf16.msra.mxu0 0
      %749 = vmatprep.subr.bf16.mxu0 0
      %750 = vmatpush2.bf16.msra.mxu0 0
      %751 = vmatprep.mubr.bf16.mxu0 0
      %752 = vmatmul.mubr.bf16.gmra.mxu0 %v705
      %v753 = vpop.f32.mrf.mxu0
      %v754 = vadd.f32 0.0, %v753
      %v755 = vpop.f32.mrf.mxu0
      %v756 = vpop.f32.mrf.mxu0
      %v757 = vadd.f32 0.0, %v756
      %v758 = vpop.f32.mrf.mxu0
      %759 = vmatprep.mubr.bf16.mxu0 0
      %760 = vmatmul.mubr.bf16.gmra.mxu0 %v708
      %v761 = vpop.f32.mrf.mxu0
      %v762 = vadd.f32 0.0, %v761
      %v763 = vpop.f32.mrf.mxu0
      %v764 = vpop.f32.mrf.mxu0
      %v765 = vadd.f32 0.0, %v764
      %v766 = vpop.f32.mrf.mxu0
      %767 = vmatprep.mubr.bf16.mxu0 0
      %768 = vmatmul.mubr.bf16.gmra.mxu0 %v711
      %v769 = vpop.f32.mrf.mxu0
      %v770 = vadd.f32 0.0, %v769
      %v771 = vpop.f32.mrf.mxu0
      %v772 = vpop.f32.mrf.mxu0
      %v773 = vadd.f32 0.0, %v772
      %v774 = vpop.f32.mrf.mxu0
      %775 = vmatprep.mubr.bf16.mxu0 0
      %776 = vmatmul.mubr.bf16.gmra.mxu0 %v714
      %v777 = vpop.f32.mrf.mxu0
      %v778 = vadd.f32 0.0, %v777
      %v779 = vpop.f32.mrf.mxu0
      %v780 = vpop.f32.mrf.mxu0
      %v781 = vadd.f32 0.0, %v780
      %v782 = vpop.f32.mrf.mxu0
      %783 = vmatprep.mubr.bf16.mxu0 0
      %784 = vmatmul.mubr.bf16.gmra.mxu0 %v717
      %v785 = vpop.f32.mrf.mxu0
      %v786 = vadd.f32 0.0, %v785
      %v787 = vpop.f32.mrf.mxu0
      %v788 = vpop.f32.mrf.mxu0
      %v789 = vadd.f32 0.0, %v788
      %v790 = vpop.f32.mrf.mxu0
      %791 = vdwg.mxu0
      %v792 = vadd.f32 %v662, %v754
      %v793 = vadd.f32 %v663, %v757
      %v794 = vadd.f32 %v664, %v762
      %v795 = vadd.f32 %v665, %v765
      %v796 = vadd.f32 %v666, %v770
      %v797 = vadd.f32 %v667, %v773
      %v798 = vadd.f32 %v668, %v778
      %v799 = vadd.f32 %v669, %v781
      %v800 = vadd.f32 %v670, %v786
      %v801 = vadd.f32 %v671, %v789
      %v802 = vld [vmem:[%s165 + $0xc] sm:$0xff]
      %v803 = vld [vmem:[%s165 + $0x14] sm:$0xff]
      %v804 = vld [vmem:[%s165 + $0x1c] sm:$0xff]
      %v805 = vld [vmem:[%s165 + $0x24] sm:$0xff]
      %v806 = vld [vmem:[%s165 + $0x2c] sm:$0xff]
      %v807 = vld [vmem:[%s165 + $0x34] sm:$0xff]
      %v808 = vld [vmem:[%s165 + $0x3c] sm:$0xff]
      %v809 = vld [vmem:[%s165 + $0x44] sm:$0xff]
      %v810 = vld [vmem:[%s165 + $0x4c] sm:$0xff]
      %v811 = vld [vmem:[%s165 + $0x54] sm:$0xff]
      %v812 = vpack.c.bf16 %v803, %v802
      %v813 = vpack.c.bf16 %v805, %v804
      %v814 = vpack.c.bf16 %v807, %v806
      %v815 = vpack.c.bf16 %v809, %v808
      %v816 = vpack.c.bf16 %v811, %v810
      %s817 = scalar_lea.vmem %s1, 80
      %v818 = vld [vmem:[%s817] sm:$0xf]
      %v819 = vld [vmem:[%s817 + $0x4] sm:$0xf]
      %v820 = vld [vmem:[%s817 + $0x8] sm:$0xf]
      %v821 = vld [vmem:[%s817 + $0xc] sm:$0xf]
      %v826 = vunpack.c.l.b16 %v818
      %v827 = vunpack.c.l.b16 %v819
      %v828 = vunpack.c.l.b16 %v820
      %v829 = vunpack.c.l.b16 %v821
      %v830 = vpack.c.b16 %v827, %v826
      %v831 = vpack.c.b16 %v829, %v828
      %v835 = vsel %vm223, %v812, 0
      %v838 = vsel %vm223, %v813, 0
      %v841 = vsel %vm223, %v814, 0
      %v844 = vsel %vm223, %v815, 0
      %v847 = vsel %vm223, %v816, 0
      %849 = vmatprep.subr.bf16.mxu0 0
      %850 = vmatpush1.bf16.msra.mxu0 0
      %851 = vmatprep.subr.bf16.mxu0 0
      %852 = vmatpush1.bf16.msra.mxu0 0
      %853 = vmatprep.subr.bf16.mxu0 0
      %854 = vmatpush1.bf16.msra.mxu0 0
      %855 = vmatprep.subr.bf16.mxu0 0
      %856 = vmatpush1.bf16.msra.mxu0 0
      %857 = vmatprep.subr.bf16.mxu0 0
      %858 = vmatpush1.bf16.msra.mxu0 0
      %859 = vmatprep.subr.bf16.mxu0 0
      %860 = vmatpush1.bf16.msra.mxu0 0
      %861 = vmatprep.subr.bf16.mxu0 0
      %862 = vmatpush1.bf16.msra.mxu0 %v831
      %863 = vmatprep.subr.bf16.mxu0 0
      %864 = vmatpush1.bf16.msra.mxu0 %v830
      %865 = vmatprep.subr.bf16.mxu0 0
      %866 = vmatpush2.bf16.msra.mxu0 0
      %867 = vmatprep.subr.bf16.mxu0 0
      %868 = vmatpush2.bf16.msra.mxu0 0
      %869 = vmatprep.subr.bf16.mxu0 0
      %870 = vmatpush2.bf16.msra.mxu0 0
      %871 = vmatprep.subr.bf16.mxu0 0
      %872 = vmatpush2.bf16.msra.mxu0 0
      %873 = vmatprep.subr.bf16.mxu0 0
      %874 = vmatpush2.bf16.msra.mxu0 0
      %875 = vmatprep.subr.bf16.mxu0 0
      %876 = vmatpush2.bf16.msra.mxu0 0
      %877 = vmatprep.subr.bf16.mxu0 0
      %878 = vmatpush2.bf16.msra.mxu0 0
      %879 = vmatprep.subr.bf16.mxu0 0
      %880 = vmatpush2.bf16.msra.mxu0 0
      %881 = vmatprep.mubr.bf16.mxu0 0
      %882 = vmatmul.mubr.bf16.gmra.mxu0 %v835
      %v883 = vpop.f32.mrf.mxu0
      %v884 = vadd.f32 0.0, %v883
      %v885 = vpop.f32.mrf.mxu0
      %v886 = vpop.f32.mrf.mxu0
      %v887 = vadd.f32 0.0, %v886
      %v888 = vpop.f32.mrf.mxu0
      %889 = vmatprep.mubr.bf16.mxu0 0
      %890 = vmatmul.mubr.bf16.gmra.mxu0 %v838
      %v891 = vpop.f32.mrf.mxu0
      %v892 = vadd.f32 0.0, %v891
      %v893 = vpop.f32.mrf.mxu0
      %v894 = vpop.f32.mrf.mxu0
      %v895 = vadd.f32 0.0, %v894
      %v896 = vpop.f32.mrf.mxu0
      %897 = vmatprep.mubr.bf16.mxu0 0
      %898 = vmatmul.mubr.bf16.gmra.mxu0 %v841
      %v899 = vpop.f32.mrf.mxu0
      %v900 = vadd.f32 0.0, %v899
      %v901 = vpop.f32.mrf.mxu0
      %v902 = vpop.f32.mrf.mxu0
      %v903 = vadd.f32 0.0, %v902
      %v904 = vpop.f32.mrf.mxu0
      %905 = vmatprep.mubr.bf16.mxu0 0
      %906 = vmatmul.mubr.bf16.gmra.mxu0 %v844
      %v907 = vpop.f32.mrf.mxu0
      %v908 = vadd.f32 0.0, %v907
      %v909 = vpop.f32.mrf.mxu0
      %v910 = vpop.f32.mrf.mxu0
      %v911 = vadd.f32 0.0, %v910
      %v912 = vpop.f32.mrf.mxu0
      %913 = vmatprep.mubr.bf16.mxu0 0
      %914 = vmatmul.mubr.bf16.gmra.mxu0 %v847
      %v915 = vpop.f32.mrf.mxu0
      %v916 = vadd.f32 0.0, %v915
      %v917 = vpop.f32.mrf.mxu0
      %v918 = vpop.f32.mrf.mxu0
      %v919 = vadd.f32 0.0, %v918
      %v920 = vpop.f32.mrf.mxu0
      %921 = vdwg.mxu0
      %v922 = vadd.f32 %v792, %v884
      %v923 = vadd.f32 %v793, %v887
      %v924 = vadd.f32 %v794, %v892
      %v925 = vadd.f32 %v795, %v895
      %v926 = vadd.f32 %v796, %v900
      %v927 = vadd.f32 %v797, %v903
      %v928 = vadd.f32 %v798, %v908
      %v929 = vadd.f32 %v799, %v911
      %v930 = vadd.f32 %v800, %v916
      %v931 = vadd.f32 %v801, %v919
      %v932 = vld [vmem:[%s165 + $0x14] sm:$0xff]
      %v933 = vld [vmem:[%s165 + $0x1c] sm:$0xff]
      %v934 = vld [vmem:[%s165 + $0x24] sm:$0xff]
      %v935 = vld [vmem:[%s165 + $0x2c] sm:$0xff]
      %v936 = vld [vmem:[%s165 + $0x34] sm:$0xff]
      %v937 = vld [vmem:[%s165 + $0x3c] sm:$0xff]
      %v938 = vld [vmem:[%s165 + $0x44] sm:$0xff]
      %v939 = vld [vmem:[%s165 + $0x4c] sm:$0xff]
      %v940 = vld [vmem:[%s165 + $0x54] sm:$0xff]
      %v941 = vld [vmem:[%s165 + $0x5c] sm:$0xff]
      %v942 = vpack.c.bf16 %v933, %v932
      %v943 = vpack.c.bf16 %v935, %v934
      %v944 = vpack.c.bf16 %v937, %v936
      %v945 = vpack.c.bf16 %v939, %v938
      %v946 = vpack.c.bf16 %v941, %v940
      %s947 = scalar_lea.vmem %s1, 96
      %v948 = vld [vmem:[%s947] sm:$0xf]
      %v949 = vld [vmem:[%s947 + $0x4] sm:$0xf]
      %v950 = vld [vmem:[%s947 + $0x8] sm:$0xf]
      %v951 = vld [vmem:[%s947 + $0xc] sm:$0xf]
      %v956 = vunpack.c.l.b16 %v948
      %v957 = vunpack.c.l.b16 %v949
      %v958 = vunpack.c.l.b16 %v950
      %v959 = vunpack.c.l.b16 %v951
      %v960 = vpack.c.b16 %v957, %v956
      %v961 = vpack.c.b16 %v959, %v958
      %v965 = vsel %vm223, %v942, 0
      %v968 = vsel %vm223, %v943, 0
      %v971 = vsel %vm223, %v944, 0
      %v974 = vsel %vm223, %v945, 0
      %v977 = vsel %vm223, %v946, 0
      %979 = vmatprep.subr.bf16.mxu0 0
      %980 = vmatpush1.bf16.msra.mxu0 0
      %981 = vmatprep.subr.bf16.mxu0 0
      %982 = vmatpush1.bf16.msra.mxu0 0
      %983 = vmatprep.subr.bf16.mxu0 0
      %984 = vmatpush1.bf16.msra.mxu0 0
      %985 = vmatprep.subr.bf16.mxu0 0
      %986 = vmatpush1.bf16.msra.mxu0 0
      %987 = vmatprep.subr.bf16.mxu0 0
      %988 = vmatpush1.bf16.msra.mxu0 0
      %989 = vmatprep.subr.bf16.mxu0 0
      %990 = vmatpush1.bf16.msra.mxu0 0
      %991 = vmatprep.subr.bf16.mxu0 0
      %992 = vmatpush1.bf16.msra.mxu0 %v961
      %993 = vmatprep.subr.bf16.mxu0 0
      %994 = vmatpush1.bf16.msra.mxu0 %v960
      %995 = vmatprep.subr.bf16.mxu0 0
      %996 = vmatpush2.bf16.msra.mxu0 0
      %997 = vmatprep.subr.bf16.mxu0 0
      %998 = vmatpush2.bf16.msra.mxu0 0
      %999 = vmatprep.subr.bf16.mxu0 0
      %1000 = vmatpush2.bf16.msra.mxu0 0
      %1001 = vmatprep.subr.bf16.mxu0 0
      %1002 = vmatpush2.bf16.msra.mxu0 0
      %1003 = vmatprep.subr.bf16.mxu0 0
      %1004 = vmatpush2.bf16.msra.mxu0 0
      %1005 = vmatprep.subr.bf16.mxu0 0
      %1006 = vmatpush2.bf16.msra.mxu0 0
      %1007 = vmatprep.subr.bf16.mxu0 0
      %1008 = vmatpush2.bf16.msra.mxu0 0
      %1009 = vmatprep.subr.bf16.mxu0 0
      %1010 = vmatpush2.bf16.msra.mxu0 0
      %1011 = vmatprep.mubr.bf16.mxu0 0
      %1012 = vmatmul.mubr.bf16.gmra.mxu0 %v965
      %v1013 = vpop.f32.mrf.mxu0
      %v1014 = vadd.f32 0.0, %v1013
      %v1015 = vpop.f32.mrf.mxu0
      %v1016 = vpop.f32.mrf.mxu0
      %v1017 = vadd.f32 0.0, %v1016
      %v1018 = vpop.f32.mrf.mxu0
      %1019 = vmatprep.mubr.bf16.mxu0 0
      %1020 = vmatmul.mubr.bf16.gmra.mxu0 %v968
      %v1021 = vpop.f32.mrf.mxu0
      %v1022 = vadd.f32 0.0, %v1021
      %v1023 = vpop.f32.mrf.mxu0
      %v1024 = vpop.f32.mrf.mxu0
      %v1025 = vadd.f32 0.0, %v1024
      %v1026 = vpop.f32.mrf.mxu0
      %1027 = vmatprep.mubr.bf16.mxu0 0
      %1028 = vmatmul.mubr.bf16.gmra.mxu0 %v971
      %v1029 = vpop.f32.mrf.mxu0
      %v1030 = vadd.f32 0.0, %v1029
      %v1031 = vpop.f32.mrf.mxu0
      %v1032 = vpop.f32.mrf.mxu0
      %v1033 = vadd.f32 0.0, %v1032
      %v1034 = vpop.f32.mrf.mxu0
      %1035 = vmatprep.mubr.bf16.mxu0 0
      %1036 = vmatmul.mubr.bf16.gmra.mxu0 %v974
      %v1037 = vpop.f32.mrf.mxu0
      %v1038 = vadd.f32 0.0, %v1037
      %v1039 = vpop.f32.mrf.mxu0
      %v1040 = vpop.f32.mrf.mxu0
      %v1041 = vadd.f32 0.0, %v1040
      %v1042 = vpop.f32.mrf.mxu0
      %1043 = vmatprep.mubr.bf16.mxu0 0
      %1044 = vmatmul.mubr.bf16.gmra.mxu0 %v977
      %v1045 = vpop.f32.mrf.mxu0
      %v1046 = vadd.f32 0.0, %v1045
      %v1047 = vpop.f32.mrf.mxu0
      %v1048 = vpop.f32.mrf.mxu0
      %v1049 = vadd.f32 0.0, %v1048
      %v1050 = vpop.f32.mrf.mxu0
      %1051 = vdwg.mxu0
      %v1052 = vadd.f32 %v922, %v1014
      %v1053 = vadd.f32 %v923, %v1017
      %v1054 = vadd.f32 %v924, %v1022
      %v1055 = vadd.f32 %v925, %v1025
      %v1056 = vadd.f32 %v926, %v1030
      %v1057 = vadd.f32 %v927, %v1033
      %v1058 = vadd.f32 %v928, %v1038
      %v1059 = vadd.f32 %v929, %v1041
      %v1060 = vadd.f32 %v930, %v1046
      %v1061 = vadd.f32 %v931, %v1049
      %v1062 = vld [vmem:[%s165 + $0x15] sm:$0xff]
      %v1063 = vld [vmem:[%s165 + $0x1d] sm:$0xff]
      %v1064 = vld [vmem:[%s165 + $0x25] sm:$0xff]
      %v1065 = vld [vmem:[%s165 + $0x2d] sm:$0xff]
      %v1066 = vld [vmem:[%s165 + $0x35] sm:$0xff]
      %v1067 = vld [vmem:[%s165 + $0x3d] sm:$0xff]
      %v1068 = vld [vmem:[%s165 + $0x45] sm:$0xff]
      %v1069 = vld [vmem:[%s165 + $0x4d] sm:$0xff]
      %v1070 = vld [vmem:[%s165 + $0x55] sm:$0xff]
      %v1071 = vld [vmem:[%s165 + $0x5d] sm:$0xff]
      %v1072 = vpack.c.bf16 %v1063, %v1062
      %v1073 = vpack.c.bf16 %v1065, %v1064
      %v1074 = vpack.c.bf16 %v1067, %v1066
      %v1075 = vpack.c.bf16 %v1069, %v1068
      %v1076 = vpack.c.bf16 %v1071, %v1070
      %s1077 = scalar_lea.vmem %s1, 112
      %v1078 = vld [vmem:[%s1077] sm:$0xf]
      %v1079 = vld [vmem:[%s1077 + $0x4] sm:$0xf]
      %v1080 = vld [vmem:[%s1077 + $0x8] sm:$0xf]
      %v1081 = vld [vmem:[%s1077 + $0xc] sm:$0xf]
      %v1086 = vunpack.c.l.b16 %v1078
      %v1087 = vunpack.c.l.b16 %v1079
      %v1088 = vunpack.c.l.b16 %v1080
      %v1089 = vunpack.c.l.b16 %v1081
      %v1090 = vpack.c.b16 %v1087, %v1086
      %v1091 = vpack.c.b16 %v1089, %v1088
      %v1095 = vsel %vm223, %v1072, 0
      %v1098 = vsel %vm223, %v1073, 0
      %v1101 = vsel %vm223, %v1074, 0
      %v1104 = vsel %vm223, %v1075, 0
      %v1107 = vsel %vm223, %v1076, 0
      %1109 = vmatprep.subr.bf16.mxu0 0
      %1110 = vmatpush1.bf16.msra.mxu0 0
      %1111 = vmatprep.subr.bf16.mxu0 0
      %1112 = vmatpush1.bf16.msra.mxu0 0
      %1113 = vmatprep.subr.bf16.mxu0 0
      %1114 = vmatpush1.bf16.msra.mxu0 0
      %1115 = vmatprep.subr.bf16.mxu0 0
      %1116 = vmatpush1.bf16.msra.mxu0 0
      %1117 = vmatprep.subr.bf16.mxu0 0
      %1118 = vmatpush1.bf16.msra.mxu0 0
      %1119 = vmatprep.subr.bf16.mxu0 0
      %1120 = vmatpush1.bf16.msra.mxu0 0
      %1121 = vmatprep.subr.bf16.mxu0 0
      %1122 = vmatpush1.bf16.msra.mxu0 %v1091
      %1123 = vmatprep.subr.bf16.mxu0 0
      %1124 = vmatpush1.bf16.msra.mxu0 %v1090
      %1125 = vmatprep.subr.bf16.mxu0 0
      %1126 = vmatpush2.bf16.msra.mxu0 0
      %1127 = vmatprep.subr.bf16.mxu0 0
      %1128 = vmatpush2.bf16.msra.mxu0 0
      %1129 = vmatprep.subr.bf16.mxu0 0
      %1130 = vmatpush2.bf16.msra.mxu0 0
      %1131 = vmatprep.subr.bf16.mxu0 0
      %1132 = vmatpush2.bf16.msra.mxu0 0
      %1133 = vmatprep.subr.bf16.mxu0 0
      %1134 = vmatpush2.bf16.msra.mxu0 0
      %1135 = vmatprep.subr.bf16.mxu0 0
      %1136 = vmatpush2.bf16.msra.mxu0 0
      %1137 = vmatprep.subr.bf16.mxu0 0
      %1138 = vmatpush2.bf16.msra.mxu0 0
      %1139 = vmatprep.subr.bf16.mxu0 0
      %1140 = vmatpush2.bf16.msra.mxu0 0
      %1141 = vmatprep.mubr.bf16.mxu0 0
      %1142 = vmatmul.mubr.bf16.gmra.mxu0 %v1095
      %v1143 = vpop.f32.mrf.mxu0
      %v1144 = vadd.f32 0.0, %v1143
      %v1145 = vpop.f32.mrf.mxu0
      %v1146 = vpop.f32.mrf.mxu0
      %v1147 = vadd.f32 0.0, %v1146
      %v1148 = vpop.f32.mrf.mxu0
      %1149 = vmatprep.mubr.bf16.mxu0 0
      %1150 = vmatmul.mubr.bf16.gmra.mxu0 %v1098
      %v1151 = vpop.f32.mrf.mxu0
      %v1152 = vadd.f32 0.0, %v1151
      %v1153 = vpop.f32.mrf.mxu0
      %v1154 = vpop.f32.mrf.mxu0
      %v1155 = vadd.f32 0.0, %v1154
      %v1156 = vpop.f32.mrf.mxu0
      %1157 = vmatprep.mubr.bf16.mxu0 0
      %1158 = vmatmul.mubr.bf16.gmra.mxu0 %v1101
      %v1159 = vpop.f32.mrf.mxu0
      %v1160 = vadd.f32 0.0, %v1159
      %v1161 = vpop.f32.mrf.mxu0
      %v1162 = vpop.f32.mrf.mxu0
      %v1163 = vadd.f32 0.0, %v1162
      %v1164 = vpop.f32.mrf.mxu0
      %1165 = vmatprep.mubr.bf16.mxu0 0
      %1166 = vmatmul.mubr.bf16.gmra.mxu0 %v1104
      %v1167 = vpop.f32.mrf.mxu0
      %v1168 = vadd.f32 0.0, %v1167
      %v1169 = vpop.f32.mrf.mxu0
      %v1170 = vpop.f32.mrf.mxu0
      %v1171 = vadd.f32 0.0, %v1170
      %v1172 = vpop.f32.mrf.mxu0
      %1173 = vmatprep.mubr.bf16.mxu0 0
      %1174 = vmatmul.mubr.bf16.gmra.mxu0 %v1107
      %v1175 = vpop.f32.mrf.mxu0
      %v1176 = vadd.f32 0.0, %v1175
      %v1177 = vpop.f32.mrf.mxu0
      %v1178 = vpop.f32.mrf.mxu0
      %v1179 = vadd.f32 0.0, %v1178
      %v1180 = vpop.f32.mrf.mxu0
      %1181 = vdwg.mxu0
      %v1182 = vadd.f32 %v1052, %v1144
      %v1183 = vadd.f32 %v1053, %v1147
      %v1184 = vadd.f32 %v1054, %v1152
      %v1185 = vadd.f32 %v1055, %v1155
      %v1186 = vadd.f32 %v1056, %v1160
      %v1187 = vadd.f32 %v1057, %v1163
      %v1188 = vadd.f32 %v1058, %v1168
      %v1189 = vadd.f32 %v1059, %v1171
      %v1190 = vadd.f32 %v1060, %v1176
      %v1191 = vadd.f32 %v1061, %v1179
      %v1192 = vld [vmem:[%s165 + $0x16] sm:$0xff]
      %v1193 = vld [vmem:[%s165 + $0x1e] sm:$0xff]
      %v1194 = vld [vmem:[%s165 + $0x26] sm:$0xff]
      %v1195 = vld [vmem:[%s165 + $0x2e] sm:$0xff]
      %v1196 = vld [vmem:[%s165 + $0x36] sm:$0xff]
      %v1197 = vld [vmem:[%s165 + $0x3e] sm:$0xff]
      %v1198 = vld [vmem:[%s165 + $0x46] sm:$0xff]
      %v1199 = vld [vmem:[%s165 + $0x4e] sm:$0xff]
      %v1200 = vld [vmem:[%s165 + $0x56] sm:$0xff]
      %v1201 = vld [vmem:[%s165 + $0x5e] sm:$0xff]
      %v1202 = vpack.c.bf16 %v1193, %v1192
      %v1203 = vpack.c.bf16 %v1195, %v1194
      %v1204 = vpack.c.bf16 %v1197, %v1196
      %v1205 = vpack.c.bf16 %v1199, %v1198
      %v1206 = vpack.c.bf16 %v1201, %v1200
      %s1207 = scalar_lea.vmem %s1, 128
      %v1208 = vld [vmem:[%s1207] sm:$0xf]
      %v1209 = vld [vmem:[%s1207 + $0x4] sm:$0xf]
      %v1210 = vld [vmem:[%s1207 + $0x8] sm:$0xf]
      %v1211 = vld [vmem:[%s1207 + $0xc] sm:$0xf]
      %v1216 = vunpack.c.l.b16 %v1208
      %v1217 = vunpack.c.l.b16 %v1209
      %v1218 = vunpack.c.l.b16 %v1210
      %v1219 = vunpack.c.l.b16 %v1211
      %v1220 = vpack.c.b16 %v1217, %v1216
      %v1221 = vpack.c.b16 %v1219, %v1218
      %v1225 = vsel %vm223, %v1202, 0
      %v1228 = vsel %vm223, %v1203, 0
      %v1231 = vsel %vm223, %v1204, 0
      %v1234 = vsel %vm223, %v1205, 0
      %v1237 = vsel %vm223, %v1206, 0
      %1239 = vmatprep.subr.bf16.mxu0 0
      %1240 = vmatpush1.bf16.msra.mxu0 0
      %1241 = vmatprep.subr.bf16.mxu0 0
      %1242 = vmatpush1.bf16.msra.mxu0 0
      %1243 = vmatprep.subr.bf16.mxu0 0
      %1244 = vmatpush1.bf16.msra.mxu0 0
      %1245 = vmatprep.subr.bf16.mxu0 0
      %1246 = vmatpush1.bf16.msra.mxu0 0
      %1247 = vmatprep.subr.bf16.mxu0 0
      %1248 = vmatpush1.bf16.msra.mxu0 0
      %1249 = vmatprep.subr.bf16.mxu0 0
      %1250 = vmatpush1.bf16.msra.mxu0 0
      %1251 = vmatprep.subr.bf16.mxu0 0
      %1252 = vmatpush1.bf16.msra.mxu0 %v1221
      %1253 = vmatprep.subr.bf16.mxu0 0
      %1254 = vmatpush1.bf16.msra.mxu0 %v1220
      %1255 = vmatprep.subr.bf16.mxu0 0
      %1256 = vmatpush2.bf16.msra.mxu0 0
      %1257 = vmatprep.subr.bf16.mxu0 0
      %1258 = vmatpush2.bf16.msra.mxu0 0
      %1259 = vmatprep.subr.bf16.mxu0 0
      %1260 = vmatpush2.bf16.msra.mxu0 0
      %1261 = vmatprep.subr.bf16.mxu0 0
      %1262 = vmatpush2.bf16.msra.mxu0 0
      %1263 = vmatprep.subr.bf16.mxu0 0
      %1264 = vmatpush2.bf16.msra.mxu0 0
      %1265 = vmatprep.subr.bf16.mxu0 0
      %1266 = vmatpush2.bf16.msra.mxu0 0
      %1267 = vmatprep.subr.bf16.mxu0 0
      %1268 = vmatpush2.bf16.msra.mxu0 0
      %1269 = vmatprep.subr.bf16.mxu0 0
      %1270 = vmatpush2.bf16.msra.mxu0 0
      %1271 = vmatprep.mubr.bf16.mxu0 0
      %1272 = vmatmul.mubr.bf16.gmra.mxu0 %v1225
      %v1273 = vpop.f32.mrf.mxu0
      %v1274 = vadd.f32 0.0, %v1273
      %v1275 = vpop.f32.mrf.mxu0
      %v1276 = vpop.f32.mrf.mxu0
      %v1277 = vadd.f32 0.0, %v1276
      %v1278 = vpop.f32.mrf.mxu0
      %1279 = vmatprep.mubr.bf16.mxu0 0
      %1280 = vmatmul.mubr.bf16.gmra.mxu0 %v1228
      %v1281 = vpop.f32.mrf.mxu0
      %v1282 = vadd.f32 0.0, %v1281
      %v1283 = vpop.f32.mrf.mxu0
      %v1284 = vpop.f32.mrf.mxu0
      %v1285 = vadd.f32 0.0, %v1284
      %v1286 = vpop.f32.mrf.mxu0
      %1287 = vmatprep.mubr.bf16.mxu0 0
      %1288 = vmatmul.mubr.bf16.gmra.mxu0 %v1231
      %v1289 = vpop.f32.mrf.mxu0
      %v1290 = vadd.f32 0.0, %v1289
      %v1291 = vpop.f32.mrf.mxu0
      %v1292 = vpop.f32.mrf.mxu0
      %v1293 = vadd.f32 0.0, %v1292
      %v1294 = vpop.f32.mrf.mxu0
      %1295 = vmatprep.mubr.bf16.mxu0 0
      %1296 = vmatmul.mubr.bf16.gmra.mxu0 %v1234
      %v1297 = vpop.f32.mrf.mxu0
      %v1298 = vadd.f32 0.0, %v1297
      %v1299 = vpop.f32.mrf.mxu0
      %v1300 = vpop.f32.mrf.mxu0
      %v1301 = vadd.f32 0.0, %v1300
      %v1302 = vpop.f32.mrf.mxu0
      %1303 = vmatprep.mubr.bf16.mxu0 0
      %1304 = vmatmul.mubr.bf16.gmra.mxu0 %v1237
      %v1305 = vpop.f32.mrf.mxu0
      %v1306 = vadd.f32 0.0, %v1305
      %v1307 = vpop.f32.mrf.mxu0
      %v1308 = vpop.f32.mrf.mxu0
      %v1309 = vadd.f32 0.0, %v1308
      %v1310 = vpop.f32.mrf.mxu0
      %1311 = vdwg.mxu0
      %v1312 = vadd.f32 %v1182, %v1274
      %v1313 = vadd.f32 %v1183, %v1277
      %v1314 = vadd.f32 %v1184, %v1282
      %v1315 = vadd.f32 %v1185, %v1285
      %v1316 = vadd.f32 %v1186, %v1290
      %v1317 = vadd.f32 %v1187, %v1293
      %v1318 = vadd.f32 %v1188, %v1298
      %v1319 = vadd.f32 %v1189, %v1301
      %v1320 = vadd.f32 %v1190, %v1306
      %v1321 = vadd.f32 %v1191, %v1309
      %v1322 = vld [vmem:[%s2] sm:$0x1]
      %v1324 = vlaneseq
      %v1325 = vshrl.u32 %v1324, 7
      %v1326 = vsub.s32 0, %v1325
      %v1327 = vrot.slane %v1322, %v1326
      %v1329 = vadd.f32 %v1312, %v1327
      %v1330 = vadd.f32 %v1313, %v1327
      %v1331 = vadd.f32 %v1314, %v1327
      %v1332 = vadd.f32 %v1315, %v1327
      %v1333 = vadd.f32 %v1316, %v1327
      %v1334 = vadd.f32 %v1317, %v1327
      %v1335 = vadd.f32 %v1318, %v1327
      %v1336 = vadd.f32 %v1319, %v1327
      %v1337 = vadd.f32 %v1320, %v1327
      %v1338 = vadd.f32 %v1321, %v1327
      %v1339 = vmax.f32 %v1329, 0.0
      %v1340 = vmax.f32 %v1330, 0.0
      %v1341 = vmax.f32 %v1331, 0.0
      %v1342 = vmax.f32 %v1332, 0.0
      %v1343 = vmax.f32 %v1333, 0.0
      %v1344 = vmax.f32 %v1334, 0.0
      %v1345 = vmax.f32 %v1335, 0.0
      %v1346 = vmax.f32 %v1336, 0.0
      %v1347 = vmax.f32 %v1337, 0.0
      %v1348 = vmax.f32 %v1338, 0.0
      %v1349 = vpack.c.bf16 %v1340, %v1339
      %v1350 = vpack.c.bf16 %v1342, %v1341
      %v1351 = vpack.c.bf16 %v1344, %v1343
      %v1352 = vpack.c.bf16 %v1346, %v1345
      %v1353 = vpack.c.bf16 %v1348, %v1347
      %v1359 = vunpack.c.l.b16 %v1349
      %v1360 = vunpack.c.h.b16 %v1349
      %v1361 = vunpack.c.l.b16 %v1350
      %v1362 = vunpack.c.h.b16 %v1350
      %v1363 = vunpack.c.l.b16 %v1351
      %v1364 = vunpack.c.h.b16 %v1351
      %v1365 = vunpack.c.l.b16 %v1352
      %v1366 = vunpack.c.h.b16 %v1352
      %v1367 = vunpack.c.l.b16 %v1353
      %v1368 = vunpack.c.h.b16 %v1353
      %v1369 = vpack.c.b16 %v1359, %v1359
      %v1370 = vpack.c.b16 %v1360, %v1360
      %v1371 = vpack.c.b16 %v1361, %v1361
      %v1372 = vpack.c.b16 %v1362, %v1362
      %v1373 = vpack.c.b16 %v1363, %v1363
      %v1374 = vpack.c.b16 %v1364, %v1364
      %v1375 = vpack.c.b16 %v1365, %v1365
      %v1376 = vpack.c.b16 %v1366, %v1366
      %v1377 = vpack.c.b16 %v1367, %v1367
      %v1378 = vpack.c.b16 %v1368, %v1368
      %vm1389 = vcmask 519168
      %1390 = vst.msk [vmem:[%s170] sm:$0xf] %vm1389, %v1369
      %1391 = vst.msk [vmem:[%s170 + $0x4] sm:$0xf] %vm1389, %v1370
      %1392 = vst.msk [vmem:[%s170 + $0x8] sm:$0xf] %vm1389, %v1371
      %1393 = vst.msk [vmem:[%s170 + $0xc] sm:$0xf] %vm1389, %v1372
      %1394 = vst.msk [vmem:[%s170 + $0x10] sm:$0xf] %vm1389, %v1373
      %1395 = vst.msk [vmem:[%s170 + $0x14] sm:$0xf] %vm1389, %v1374
      %1396 = vst.msk [vmem:[%s170 + $0x18] sm:$0xf] %vm1389, %v1375
      %1397 = vst.msk [vmem:[%s170 + $0x1c] sm:$0xf] %vm1389, %v1376
      %1398 = vst.msk [vmem:[%s170 + $0x20] sm:$0xf] %vm1389, %v1377
      %1399 = vst.msk [vmem:[%s170 + $0x24] sm:$0xf] %vm1389, %v1378
      %p1400 = scmp.lt.s32.totalorder %s14, 7
      %s1401 = scalar_select %p1400, %s14, 7
      %s1402 = smul.addr %s1401, 10
      %s1403 = smul.addr %s1402, 4
      %s1404 = scalar_lea.vmem %s3, %s1403
      // Predicated region
      $region33: #{mixed4e_forward.10} parent=31 // pred_check
        %p1405 = pneg %p100
      $region34: #{mixed4e_forward.10} parent=31 // pred_check_branch
        %1407 = sbr.rel (%p1405) target = $region36
      $region35: #{mixed4e_forward.10} parent=31 // pred_region
        _
      $region36: #{mixed4e_forward.10} parent=31 // pred_fallthru
        _
    $region32: #{mixed4e_forward.10} parent=5 // pred_fallthru
      _
    %p1408 = scmp.le.s32.totalorder 2, %s9
    // Predicated region
    $region37: #{mixed4e_forward.10} parent=5 // pred_check
      %p1409 = pneg %p1408
    $region38: #{mixed4e_forward.10} parent=5 // pred_check_branch
      %1411 = sbr.rel (%p1409) target = $region40
    $region39: #{mixed4e_forward.10} parent=5 // pred_region
      %s1412 = ssub.s32 %s9, 2
      // Predicated region
      $region41: #{mixed4e_forward.10} parent=39 // pred_check
        %p1413 = pneg %p106
      $region42: #{mixed4e_forward.10} parent=39 // pred_check_branch
        %1415 = sbr.rel (%p1413) target = $region44
      $region43: #{mixed4e_forward.10} parent=39 // pred_region
        %p1416 = scmp.lt.s32.totalorder %s15, 7
        %s1417 = scalar_select %p1416, %s15, 7
        %s1418 = smul.addr %s1417, 10
        %s1419 = smul.addr %s1418, 4
        %s1420 = scalar_lea.vmem %s3, %s1419
      $region44: #{mixed4e_forward.10} parent=39 // pred_fallthru
        _
    $region40: #{mixed4e_forward.10} parent=5 // pred_fallthru
      _
  $region6: #{mixed4e_forward.10} parent=0 // loop_footer
    %s13 = sadd.s32 1, %s9
  $region7: #{mixed4e_forward.10} parent=0 // loop_footer_branch
    %8 = sbr.rel target = $region3
  $region8: #{mixed4e_forward.10} parent=0 // loop_exit
    _

// kernel: mixed4e_forward.11
$region0: #{mixed4e_forward.11}
  #allocation0 [shape = 'u32[]', space=smem, size = 0x4, offset = 0x4, fixed_abs, tag = 'smem constant byte address 0x4 - core index']
  #allocation1 [shape = 'u32[144,128]{1,0:T(1,128)}', space=vmem, size = 0x12000, scoped, tag = 'internal scratch']
  #allocation2 [shape = 'f32[64,64]{1,0:T(8,128)}', space=vmem, size = 0x8000, scoped, tag = 'scratch operand']
  %s0 = inlined_call_operand.vmem [shape: bf16[2,6,64,64], index: 0, kind: input, shape index: {}]
  %s1 = inlined_call_operand.vmem [shape: bf16[3,64,64], index: 1, kind: input, shape index: {}]
  %s2 = inlined_call_operand.vmem [shape: f32[1,64], index: 2, kind: input, shape index: {}]
  %s3 = inlined_call_operand.vmem [shape: f32[2,4,64,64], index: 3, kind: output, shape index: {}]
  %s4 = sld [smem:[#allocation0]]
  $region53: #{mixed4e_forward.11} parent=0
    _
  %s6 = ssub.s32 1, %s4
  %s7 = scalar_select 0, %s6, %s4
  loop: start=0, step=1, limit=26
  $region2: #{mixed4e_forward.11} parent=0 // loop_pre_header
    _
  $region3: #{mixed4e_forward.11} parent=0 // loop_header
    %s9 = sphi 0, %s13
    %p10 = scmp.ge.s32.totalorder %s9, 26
    %s16 = sphi 0, %s35
    %s17 = sphi 0, %s31
    %s18 = sphi 0, %s27
    %s19 = sphi 0, %s16
    %s20 = sphi 0, %s17
    %s21 = sphi 0, %s18
    %s22 = sphi 0, %s19
    %s23 = sphi 0, %s20
    %s24 = sphi 0, %s21
    %s42 = sphi 0, %s44
    %s45 = sphi 0, %s42
    %s46 = sphi 0, %s45
    %s62 = sphi 0, %s46
    %s68 = sphi 0, %s70
    %s71 = sphi 0, %s68
    %s72 = sphi 0, %s71
    %s88 = sphi 0, %s72
    %s92 = sphi 0, %s92
    %s94 = sphi 0, %s92
    %s95 = sphi 0, %s94
    %s109 = sphi 0, %s95
    %s117 = sphi 0, %s119
    %s120 = sphi 0, %s117
    %s121 = sphi 0, %s120
    %s137 = sphi 0, %s121
  $region4: #{mixed4e_forward.11} parent=0 // loop_header_branch
    %12 = sbr.rel (%p10) target = $region8
  $region5: #{mixed4e_forward.11} parent=0 // loop_body
    %s14 = ssub.s32 %s9, 1
    %s15 = ssub.s32 %s9, 2
    %s25 = sadd.s32 1, %s18
    %p26 = scmp.ge.s32.totalorder %s25, 3
    %s27 = scalar_select %p26, 0, %s25
    %s28 = sadd.s32 1, %s17
    %s29 = scalar_select %p26, %s28, %s17
    %p30 = scmp.ge.s32.totalorder %s29, 4
    %s31 = scalar_select %p30, 0, %s29
    %s32 = sadd.s32 1, %s16
    %s33 = scalar_select %p30, %s32, %s16
    %p34 = scmp.ge.s32.totalorder %s33, 2
    %s35 = scalar_select %p34, 0, %s33
    %s36 = sadd.s32 %s17, %s18
    %s37 = sadd.s32 %s31, %s27
    %s38 = ssub.s32 %s16, %s35
    %s39 = ssub.s32 %s36, %s37
    %s40 = sor.u32 %s38, %s39
    %p41 = scmp.eq.s32.totalorder %s40, 0
    %s43 = sadd.s32 %s42, 1
    %s44 = scalar_select %p41, %s42, %s43
    %p47 = pneg %p41
    %p48 = scmp.eq.s32.totalorder %s9, 23
    %p49 = por %p47, %p48
    %p50 = scmp.ne.s32.totalorder %s42, %s45
    %p51 = scmp.eq.s32.totalorder %s9, 0
    %p52 = por %p50, %p51
    %p53 = scmp.ne.s32.totalorder %s42, %s45
    %p54 = scmp.eq.s32.totalorder %s14, 23
    %p55 = por %p53, %p54
    %p56 = scmp.ne.s32.totalorder %s45, %s46
    %p57 = scmp.eq.s32.totalorder %s14, 0
    %p58 = por %p56, %p57
    %p59 = scmp.ne.s32.totalorder %s45, %s46
    %p60 = scmp.eq.s32.totalorder %s15, 23
    %p61 = por %p59, %p60
    %p63 = scmp.ne.s32.totalorder %s46, %s62
    %p64 = scmp.eq.s32.totalorder %s15, 0
    %p65 = por %p63, %p64
    %s66 = ssub.s32 %s18, %s27
    %p67 = scmp.eq.s32.totalorder %s66, 0
    %s69 = sadd.s32 %s68, 1
    %s70 = scalar_select %p67, %s68, %s69
    %p73 = pneg %p67
    %p74 = scmp.eq.s32.totalorder %s9, 23
    %p75 = por %p73, %p74
    %p76 = scmp.ne.s32.totalorder %s68, %s71
    %p77 = scmp.eq.s32.totalorder %s9, 0
    %p78 = por %p76, %p77
    %p79 = scmp.ne.s32.totalorder %s68, %s71
    %p80 = scmp.eq.s32.totalorder %s14, 23
    %p81 = por %p79, %p80
    %p82 = scmp.ne.s32.totalorder %s71, %s72
    %p83 = scmp.eq.s32.totalorder %s14, 0
    %p84 = por %p82, %p83
    %p85 = scmp.ne.s32.totalorder %s71, %s72
    %p86 = scmp.eq.s32.totalorder %s15, 23
    %p87 = por %p85, %p86
    %p89 = scmp.ne.s32.totalorder %s72, %s88
    %p90 = scmp.eq.s32.totalorder %s15, 0
    %p91 = por %p89, %p90
    %s93 = sadd.s32 %s92, 1
    %p96 = scmp.eq.s32.totalorder %s9, 23
    %p97 = scmp.ne.s32.totalorder %s92, %s94
    %p98 = scmp.eq.s32.totalorder %s9, 0
    %p99 = por %p97, %p98
    %p100 = scmp.ne.s32.totalorder %s92, %s94
    %p101 = scmp.eq.s32.totalorder %s14, 23
    %p102 = por %p100, %p101
    %p103 = scmp.ne.s32.totalorder %s94, %s95
    %p104 = scmp.eq.s32.totalorder %s14, 0
    %p105 = por %p103, %p104
    %p106 = scmp.ne.s32.totalorder %s94, %s95
    %p107 = scmp.eq.s32.totalorder %s15, 23
    %p108 = por %p106, %p107
    %p110 = scmp.ne.s32.totalorder %s95, %s109
    %p111 = scmp.eq.s32.totalorder %s15, 0
    %p112 = por %p110, %p111
    %s113 = ssub.s32 %s16, %s35
    %s114 = ssub.s32 %s17, %s31
    %s115 = sor.u32 %s113, %s114
    %p116 = scmp.eq.s32.totalorder %s115, 0
    %s118 = sadd.s32 %s117, 1
    %s119 = scalar_select %p116, %s117, %s118
    %p122 = pneg %p116
    %p123 = scmp.eq.s32.totalorder %s9, 23
    %p124 = por %p122, %p123
    %p125 = scmp.ne.s32.totalorder %s117, %s120
    %p126 = scmp.eq.s32.totalorder %s9, 0
    %p127 = por %p125, %p126
    %p128 = scmp.ne.s32.totalorder %s117, %s120
    %p129 = scmp.eq.s32.totalorder %s14, 23
    %p130 = por %p128, %p129
    %p131 = scmp.ne.s32.totalorder %s120, %s121
    %p132 = scmp.eq.s32.totalorder %s14, 0
    %p133 = por %p131, %p132
    %p134 = scmp.ne.s32.totalorder %s120, %s121
    %p135 = scmp.eq.s32.totalorder %s15, 23
    %p136 = por %p134, %p135
    %p138 = scmp.ne.s32.totalorder %s121, %s137
    %p139 = scmp.eq.s32.totalorder %s15, 0
    %p140 = por %p138, %p139
    %p141 = scmp.le.s32.totalorder 1, %s9
    %p142 = scmp.lt.s32.totalorder %s9, 25
    %p143 = pnand %p141, %p142
    %p144 = pneg %p143
    // Predicated region
    $region9: #{mixed4e_forward.11} parent=5 // pred_check
      _
    $region10: #{mixed4e_forward.11} parent=5 // pred_check_branch
      %146 = sbr.rel (%p143) target = $region12
    $region11: #{mixed4e_forward.11} parent=5 // pred_region
      %s147 = ssub.s32 %s9, 1
      // Predicated region
      $region13: #{mixed4e_forward.11} parent=11 // pred_check
        %p148 = pneg %p105
      $region14: #{mixed4e_forward.11} parent=11 // pred_check_branch
        %150 = sbr.rel (%p148) target = $region16
      $region15: #{mixed4e_forward.11} parent=11 // pred_region
        _
      $region16: #{mixed4e_forward.11} parent=11 // pred_fallthru
        _
    $region12: #{mixed4e_forward.11} parent=5 // pred_fallthru
      _
    %p151 = scmp.lt.s32.totalorder %s9, 24
    // Predicated region
    $region17: #{mixed4e_forward.11} parent=5 // pred_check
      %p152 = pneg %p151
    $region18: #{mixed4e_forward.11} parent=5 // pred_check_branch
      %154 = sbr.rel (%p152) target = $region20
    $region19: #{mixed4e_forward.11} parent=5 // pred_region
      // Predicated region
      $region21: #{mixed4e_forward.11} parent=19 // pred_check
        %p155 = pneg %p52
      $region22: #{mixed4e_forward.11} parent=19 // pred_check_branch
        %157 = sbr.rel (%p155) target = $region24
      $region23: #{mixed4e_forward.11} parent=19 // pred_region
        %s158 = sadd.s32 %s17, %s18
        %p159 = scmp.lt.s32.totalorder %s16, 1
        %s160 = scalar_select %p159, %s16, 1
        %p161 = scmp.lt.s32.totalorder %s158, 5
        %s162 = scalar_select %p161, %s158, 5
        %s163 = smul.addr %s162, 8
        %s164 = smul.addr %s160, 48
        %s165 = sadd.s32 %s163, %s164
        %s166 = smul.addr %s165, 4
        %s167 = scalar_lea.vmem %s0, %s166
        %s168 = sadd.s32 %s17, %s18
      $region24: #{mixed4e_forward.11} parent=19 // pred_fallthru
        _
      // Predicated region
      $region25: #{mixed4e_forward.11} parent=19 // pred_check
        %p169 = pneg %p78
      $region26: #{mixed4e_forward.11} parent=19 // pred_check_branch
        %171 = sbr.rel (%p169) target = $region28
      $region27: #{mixed4e_forward.11} parent=19 // pred_region
        %p172 = scmp.lt.s32.totalorder %s18, 2
        %s173 = scalar_select %p172, %s18, 2
        %s174 = smul.addr %s173, 8
        %s175 = smul.addr %s174, 4
        %s176 = scalar_lea.vmem %s1, %s175
      $region28: #{mixed4e_forward.11} parent=19 // pred_fallthru
        _
    $region20: #{mixed4e_forward.11} parent=5 // pred_fallthru
      _
    %p177 = scmp.le.s32.totalorder 1, %s9
    %p178 = scmp.lt.s32.totalorder %s9, 25
    %p179 = pnand %p177, %p178
    %p180 = pneg %p179
    // Predicated region
    $region29: #{mixed4e_forward.11} parent=5 // pred_check
      _
    $region30: #{mixed4e_forward.11} parent=5 // pred_check_branch
      %182 = sbr.rel (%p179) target = $region32
    $region31: #{mixed4e_forward.11} parent=5 // pred_region
      %s183 = ssub.s32 %s9, 1
      %s184 = sadd.s32 %s20, %s21
      %p185 = scmp.lt.s32.totalorder %s19, 1
      %s186 = scalar_select %p185, %s19, 1
      %p187 = scmp.lt.s32.totalorder %s184, 5
      %s188 = scalar_select %p187, %s184, 5
      %s189 = smul.addr %s188, 8
      %s190 = smul.addr %s186, 48
      %s191 = sadd.s32 %s189, %s190
      %s192 = smul.addr %s191, 4
      %s193 = scalar_lea.vmem %s0, %s192
      %p194 = pneg %p58
      %p195 = pneg %p55
      %p196 = scmp.lt.s32.totalorder %s21, 2
      %s197 = scalar_select %p196, %s21, 2
      %s198 = smul.addr %s197, 8
      %s199 = smul.addr %s198, 4
      %s200 = scalar_lea.vmem %s1, %s199
      %p201 = pneg %p84
      %p202 = pneg %p81
      %p203 = pneg %p105
      %p204 = pneg %p102
      %p205 = pneg %p133
      %p206 = pneg %p130
      %p207 = scmp.lt.s32.totalorder %s19, 1
      %s208 = scalar_select %p207, %s19, 1
      %p209 = scmp.lt.s32.totalorder %s20, 3
      %s210 = scalar_select %p209, %s20, 3
      %s211 = smul.addr %s210, 8
      %s212 = smul.addr %s208, 32
      %s213 = sadd.s32 %s211, %s212
      %s214 = smul.addr %s213, 8
      %s215 = scalar_lea.vmem %s3, %s214
      %s216 = sadd.s32 %s20, %s21
      %p217 = scmp.lt.s32.totalorder %s19, 1
      %s218 = scalar_select %p217, %s19, 1
      %p219 = scmp.lt.s32.totalorder %s216, 5
      %s220 = scalar_select %p219, %s216, 5
      %s221 = smul.addr %s220, 8
      %s222 = smul.addr %s218, 48
      %s223 = sadd.s32 %s221, %s222
      %s224 = smul.addr %s223, 4
      %s225 = scalar_lea.vmem %s0, %s224
      %s226 = sadd.s32 %s20, %s21
      %p227 = scmp.lt.s32.totalorder %s21, 2
      %s228 = scalar_select %p227, %s21, 2
      %s229 = smul.addr %s228, 8
      %s230 = smul.addr %s229, 4
      %s231 = scalar_lea.vmem %s1, %s230
      %p232 = scmp.lt.s32.totalorder %s19, 1
      %s233 = scalar_select %p232, %s19, 1
      %p234 = scmp.lt.s32.totalorder %s20, 3
      %s235 = scalar_select %p234, %s20, 3
      %s236 = smul.addr %s235, 8
      %s237 = smul.addr %s233, 32
      %s238 = sadd.s32 %s236, %s237
      %s239 = smul.addr %s238, 8
      %s240 = scalar_lea.vmem %s3, %s239
      %p242 = scmp.eq.s32.totalorder %s21, 0
      // Predicated region
      $region33: #{mixed4e_forward.11} parent=31 // pred_check
        %p243 = pneg %p242
      $region34: #{mixed4e_forward.11} parent=31 // pred_check_branch
        %245 = sbr.rel (%p243) target = $region36
      $region35: #{mixed4e_forward.11} parent=31 // pred_region
        %vm246 = vcmask 523264
        %247 = vst.msk [vmem:[#allocation2] sm:$0xff] %vm246, 0.0
        %248 = vst.msk [vmem:[#allocation2 + $0x8] sm:$0xff] %vm246, 0.0
        %249 = vst.msk [vmem:[#allocation2 + $0x10] sm:$0xff] %vm246, 0.0
        %250 = vst.msk [vmem:[#allocation2 + $0x18] sm:$0xff] %vm246, 0.0
        %251 = vst.msk [vmem:[#allocation2 + $0x20] sm:$0xff] %vm246, 0.0
        %252 = vst.msk [vmem:[#allocation2 + $0x28] sm:$0xff] %vm246, 0.0
        %253 = vst.msk [vmem:[#allocation2 + $0x30] sm:$0xff] %vm246, 0.0
        %254 = vst.msk [vmem:[#allocation2 + $0x38] sm:$0xff] %vm246, 0.0
      $region36: #{mixed4e_forward.11} parent=31 // pred_fallthru
        _
      %v255 = vld [vmem:[#allocation2] sm:$0xff]
      %v256 = vld [vmem:[#allocation2 + $0x8] sm:$0xff]
      %v257 = vld [vmem:[#allocation2 + $0x10] sm:$0xff]
      %v258 = vld [vmem:[#allocation2 + $0x18] sm:$0xff]
      %v259 = vld [vmem:[#allocation2 + $0x20] sm:$0xff]
      %v260 = vld [vmem:[#allocation2 + $0x28] sm:$0xff]
      %v261 = vld [vmem:[#allocation2 + $0x30] sm:$0xff]
      %v262 = vld [vmem:[#allocation2 + $0x38] sm:$0xff]
      %v263 = vld [vmem:[%s225] sm:$0xf]
      %v264 = vld [vmem:[%s225 + $0x4] sm:$0xf]
      %v265 = vld [vmem:[%s225 + $0x8] sm:$0xf]
      %v266 = vld [vmem:[%s225 + $0xc] sm:$0xf]
      %v267 = vld [vmem:[%s225 + $0x10] sm:$0xf]
      %v268 = vld [vmem:[%s225 + $0x14] sm:$0xf]
      %v269 = vld [vmem:[%s225 + $0x18] sm:$0xf]
      %v270 = vld [vmem:[%s225 + $0x1c] sm:$0xf]
      %v271 = vld [vmem:[%s231] sm:$0xf]
      %v272 = vld [vmem:[%s231 + $0x4] sm:$0xf]
      %v273 = vld [vmem:[%s231 + $0x8] sm:$0xf]
      %v274 = vld [vmem:[%s231 + $0xc] sm:$0xf]
      %v275 = vld [vmem:[%s231 + $0x10] sm:$0xf]
      %v276 = vld [vmem:[%s231 + $0x14] sm:$0xf]
      %v277 = vld [vmem:[%s231 + $0x18] sm:$0xf]
      %v278 = vld [vmem:[%s231 + $0x1c] sm:$0xf]
      %v287 = vunpack.c.l.b16 %v263
      %v288 = vunpack.c.l.b16 %v264
      %v289 = vunpack.c.l.b16 %v265
      %v290 = vunpack.c.l.b16 %v266
      %v291 = vunpack.c.l.b16 %v267
      %v292 = vunpack.c.l.b16 %v268
      %v293 = vunpack.c.l.b16 %v269
      %v294 = vunpack.c.l.b16 %v270
      %v295 = vpack.c.b16 %v288, %v287
      %v296 = vpack.c.b16 %v290, %v289
      %v297 = vpack.c.b16 %v292, %v291
      %v298 = vpack.c.b16 %v294, %v293
      %v307 = vunpack.c.l.b16 %v271
      %v308 = vunpack.c.l.b16 %v272
      %v309 = vunpack.c.l.b16 %v273
      %v310 = vunpack.c.l.b16 %v274
      %v311 = vunpack.c.l.b16 %v275
      %v312 = vunpack.c.l.b16 %v276
      %v313 = vunpack.c.l.b16 %v277
      %v314 = vunpack.c.l.b16 %v278
      %v315 = vpack.c.b16 %v308, %v307
      %v316 = vpack.c.b16 %v310, %v309
      %v317 = vpack.c.b16 %v312, %v311
      %v318 = vpack.c.b16 %v314, %v313
      %vm323 = vcmask 523264
      %v325 = vsel %vm323, %v295, 0
      %v328 = vsel %vm323, %v296, 0
      %v331 = vsel %vm323, %v297, 0
      %v334 = vsel %vm323, %v298, 0
      %336 = vmatprep.subr.bf16.mxu0 0
      %337 = vmatpush1.bf16.msra.mxu0 0
      %338 = vmatprep.subr.bf16.mxu0 0
      %339 = vmatpush1.bf16.msra.mxu0 0
      %340 = vmatprep.subr.bf16.mxu0 0
      %341 = vmatpush1.bf16.msra.mxu0 0
      %342 = vmatprep.subr.bf16.mxu0 0
      %343 = vmatpush1.bf16.msra.mxu0 0
      %344 = vmatprep.subr.bf16.mxu0 0
      %345 = vmatpush1.bf16.msra.mxu0 %v318
      %346 = vmatprep.subr.bf16.mxu0 0
      %347 = vmatpush1.bf16.msra.mxu0 %v317
      %348 = vmatprep.subr.bf16.mxu0 0
      %349 = vmatpush1.bf16.msra.mxu0 %v316
      %350 = vmatprep.subr.bf16.mxu0 0
      %351 = vmatpush1.bf16.msra.mxu0 %v315
      %352 = vmatprep.subr.bf16.mxu0 0
      %353 = vmatpush2.bf16.msra.mxu0 0
      %354 = vmatprep.subr.bf16.mxu0 0
      %355 = vmatpush2.bf16.msra.mxu0 0
      %356 = vmatprep.subr.bf16.mxu0 0
      %357 = vmatpush2.bf16.msra.mxu0 0
      %358 = vmatprep.subr.bf16.mxu0 0
      %359 = vmatpush2.bf16.msra.mxu0 0
      %360 = vmatprep.subr.bf16.mxu0 0
      %361 = vmatpush2.bf16.msra.mxu0 0
      %362 = vmatprep.subr.bf16.mxu0 0
      %363 = vmatpush2.bf16.msra.mxu0 0
      %364 = vmatprep.subr.bf16.mxu0 0
      %365 = vmatpush2.bf16.msra.mxu0 0
      %366 = vmatprep.subr.bf16.mxu0 0
      %367 = vmatpush2.bf16.msra.mxu0 0
      %368 = vmatprep.mubr.bf16.mxu0 0
      %369 = vmatmul.mubr.bf16.gmra.mxu0 %v325
      %v370 = vpop.f32.mrf.mxu0
      %v371 = vadd.f32 0.0, %v370
      %v372 = vpop.f32.mrf.mxu0
      %v373 = vpop.f32.mrf.mxu0
      %v374 = vadd.f32 0.0, %v373
      %v375 = vpop.f32.mrf.mxu0
      %376 = vmatprep.mubr.bf16.mxu0 0
      %377 = vmatmul.mubr.bf16.gmra.mxu0 %v328
      %v378 = vpop.f32.mrf.mxu0
      %v379 = vadd.f32 0.0, %v378
      %v380 = vpop.f32.mrf.mxu0
      %v381 = vpop.f32.mrf.mxu0
      %v382 = vadd.f32 0.0, %v381
      %v383 = vpop.f32.mrf.mxu0
      %384 = vmatprep.mubr.bf16.mxu0 0
      %385 = vmatmul.mubr.bf16.gmra.mxu0 %v331
      %v386 = vpop.f32.mrf.mxu0
      %v387 = vadd.f32 0.0, %v386
      %v388 = vpop.f32.mrf.mxu0
      %v389 = vpop.f32.mrf.mxu0
      %v390 = vadd.f32 0.0, %v389
      %v391 = vpop.f32.mrf.mxu0
      %392 = vmatprep.mubr.bf16.mxu0 0
      %393 = vmatmul.mubr.bf16.gmra.mxu0 %v334
      %v394 = vpop.f32.mrf.mxu0
      %v395 = vadd.f32 0.0, %v394
      %v396 = vpop.f32.mrf.mxu0
      %v397 = vpop.f32.mrf.mxu0
      %v398 = vadd.f32 0.0, %v397
      %v399 = vpop.f32.mrf.mxu0
      %400 = vdwg.mxu0
      %v401 = vadd.f32 %v255, %v371
      %v402 = vadd.f32 %v256, %v374
      %v403 = vadd.f32 %v257, %v379
      %v404 = vadd.f32 %v258, %v382
      %v405 = vadd.f32 %v259, %v387
      %v406 = vadd.f32 %v260, %v390
      %v407 = vadd.f32 %v261, %v395
      %v408 = vadd.f32 %v262, %v398
      %409 = vst.msk [vmem:[#allocation2] sm:$0xff] %vm323, %v401
      %410 = vst.msk [vmem:[#allocation2 + $0x8] sm:$0xff] %vm323, %v402
      %411 = vst.msk [vmem:[#allocation2 + $0x10] sm:$0xff] %vm323, %v403
      %412 = vst.msk [vmem:[#allocation2 + $0x18] sm:$0xff] %vm323, %v404
      %413 = vst.msk [vmem:[#allocation2 + $0x20] sm:$0xff] %vm323, %v405
      %414 = vst.msk [vmem:[#allocation2 + $0x28] sm:$0xff] %vm323, %v406
      %415 = vst.msk [vmem:[#allocation2 + $0x30] sm:$0xff] %vm323, %v407
      %416 = vst.msk [vmem:[#allocation2 + $0x38] sm:$0xff] %vm323, %v408
      %p417 = scmp.eq.s32.totalorder %s21, 2
      // Predicated region
      $region37: #{mixed4e_forward.11} parent=31 // pred_check
        %p418 = pneg %p417
      $region38: #{mixed4e_forward.11} parent=31 // pred_check_branch
        %420 = sbr.rel (%p418) target = $region40
      $region39: #{mixed4e_forward.11} parent=31 // pred_region
        %v421 = vld [vmem:[#allocation2] sm:$0xff]
        %v422 = vld [vmem:[#allocation2 + $0x8] sm:$0xff]
        %v423 = vld [vmem:[#allocation2 + $0x10] sm:$0xff]
        %v424 = vld [vmem:[#allocation2 + $0x18] sm:$0xff]
        %v425 = vld [vmem:[#allocation2 + $0x20] sm:$0xff]
        %v426 = vld [vmem:[#allocation2 + $0x28] sm:$0xff]
        %v427 = vld [vmem:[#allocation2 + $0x30] sm:$0xff]
        %v428 = vld [vmem:[#allocation2 + $0x38] sm:$0xff]
        %v429 = vld [vmem:[%s2] sm:$0x1]
        %v431 = vlaneseq
        %v432 = vshrl.u32 %v431, 7
        %v433 = vsub.s32 0, %v432
        %v434 = vrot.slane %v429, %v433
        %v436 = vadd.f32 %v421, %v434
        %v437 = vadd.f32 %v422, %v434
        %v438 = vadd.f32 %v423, %v434
        %v439 = vadd.f32 %v424, %v434
        %v440 = vadd.f32 %v425, %v434
        %v441 = vadd.f32 %v426, %v434
        %v442 = vadd.f32 %v427, %v434
        %v443 = vadd.f32 %v428, %v434
        %v444 = vmax.f32 %v436, 0.0
        %v445 = vmax.f32 %v437, 0.0
        %v446 = vmax.f32 %v438, 0.0
        %v447 = vmax.f32 %v439, 0.0
        %v448 = vmax.f32 %v440, 0.0
        %v449 = vmax.f32 %v441, 0.0
        %v450 = vmax.f32 %v442, 0.0
        %v451 = vmax.f32 %v443, 0.0
        %452 = vst.msk [vmem:[%s240] sm:$0xff] %vm323, %v444
        %453 = vst.msk [vmem:[%s240 + $0x8] sm:$0xff] %vm323, %v445
        %454 = vst.msk [vmem:[%s240 + $0x10] sm:$0xff] %vm323, %v446
        %455 = vst.msk [vmem:[%s240 + $0x18] sm:$0xff] %vm323, %v447
        %456 = vst.msk [vmem:[%s240 + $0x20] sm:$0xff] %vm323, %v448
        %457 = vst.msk [vmem:[%s240 + $0x28] sm:$0xff] %vm323, %v449
        %458 = vst.msk [vmem:[%s240 + $0x30] sm:$0xff] %vm323, %v450
        %459 = vst.msk [vmem:[%s240 + $0x38] sm:$0xff] %vm323, %v451
      $region40: #{mixed4e_forward.11} parent=31 // pred_fallthru
        _
      %p460 = scmp.lt.s32.totalorder %s19, 1
      %s461 = scalar_select %p460, %s19, 1
      %p462 = scmp.lt.s32.totalorder %s20, 3
      %s463 = scalar_select %p462, %s20, 3
      %s464 = smul.addr %s463, 8
      %s465 = smul.addr %s461, 32
      %s466 = sadd.s32 %s464, %s465
      %s467 = smul.addr %s466, 8
      %s468 = scalar_lea.vmem %s3, %s467
      // Predicated region
      $region41: #{mixed4e_forward.11} parent=31 // pred_check
        %p469 = pneg %p130
      $region42: #{mixed4e_forward.11} parent=31 // pred_check_branch
        %471 = sbr.rel (%p469) target = $region44
      $region43: #{mixed4e_forward.11} parent=31 // pred_region
        _
      $region44: #{mixed4e_forward.11} parent=31 // pred_fallthru
        _
    $region32: #{mixed4e_forward.11} parent=5 // pred_fallthru
      _
    %p472 = scmp.le.s32.totalorder 2, %s9
    // Predicated region
    $region45: #{mixed4e_forward.11} parent=5 // pred_check
      %p473 = pneg %p472
    $region46: #{mixed4e_forward.11} parent=5 // pred_check_branch
      %475 = sbr.rel (%p473) target = $region48
    $region47: #{mixed4e_forward.11} parent=5 // pred_region
      %s476 = ssub.s32 %s9, 2
      // Predicated region
      $region49: #{mixed4e_forward.11} parent=47 // pred_check
        %p477 = pneg %p136
      $region50: #{mixed4e_forward.11} parent=47 // pred_check_branch
        %479 = sbr.rel (%p477) target = $region52
      $region51: #{mixed4e_forward.11} parent=47 // pred_region
        %p480 = scmp.lt.s32.totalorder %s22, 1
        %s481 = scalar_select %p480, %s22, 1
        %p482 = scmp.lt.s32.totalorder %s23, 3
        %s483 = scalar_select %p482, %s23, 3
        %s484 = smul.addr %s483, 8
        %s485 = smul.addr %s481, 32
        %s486 = sadd.s32 %s484, %s485
        %s487 = smul.addr %s486, 8
        %s488 = scalar_lea.vmem %s3, %s487
      $region52: #{mixed4e_forward.11} parent=47 // pred_fallthru
        _
    $region48: #{mixed4e_forward.11} parent=5 // pred_fallthru
      _
  $region6: #{mixed4e_forward.11} parent=0 // loop_footer
    %s13 = sadd.s32 1, %s9
  $region7: #{mixed4e_forward.11} parent=0 // loop_footer_branch
    %8 = sbr.rel target = $region3
  $region8: #{mixed4e_forward.11} parent=0 // loop_exit
    _

// kernel: mixed4e_forward.8
$region0: #{mixed4e_forward.8}
  #allocation0 [shape = 'u32[]', space=smem, size = 0x4, offset = 0x4, fixed_abs, tag = 'smem constant byte address 0x4 - core index']
  #allocation1 [shape = 'u32[144,128]{1,0:T(1,128)}', space=vmem, size = 0x12000, scoped, tag = 'internal scratch']
  %s0 = inlined_call_operand.vmem [shape: f32[8,110,144], index: 0, kind: input, shape index: {}]
  %s1 = inlined_call_operand.vmem [shape: bf16[9,144,288], index: 1, kind: input, shape index: {}]
  %s2 = inlined_call_operand.vmem [shape: f32[1,288], index: 2, kind: input, shape index: {}]
  %s3 = inlined_call_operand.vmem [shape: bf16[8,80,288], index: 3, kind: output, shape index: {}]
  %s4 = sld [smem:[#allocation0]]
  $region45: #{mixed4e_forward.8} parent=0
    _
  %s6 = ssub.s32 1, %s4
  %s7 = scalar_select 0, %s6, %s4
  loop: start=0, step=1, limit=10
  $region2: #{mixed4e_forward.8} parent=0 // loop_pre_header
    _
  $region3: #{mixed4e_forward.8} parent=0 // loop_header
    %s9 = sphi 0, %s13
    %p10 = scmp.ge.s32.totalorder %s9, 10
    %s19 = sphi 0, %s21
    %s22 = sphi 0, %s19
    %s23 = sphi 0, %s22
    %s39 = sphi 0, %s23
    %s43 = sphi 0, %s43
    %s45 = sphi 0, %s43
    %s46 = sphi 0, %s45
    %s60 = sphi 0, %s46
    %s64 = sphi 0, %s64
    %s66 = sphi 0, %s64
    %s67 = sphi 0, %s66
    %s81 = sphi 0, %s67
    %s87 = sphi 0, %s89
    %s90 = sphi 0, %s87
    %s91 = sphi 0, %s90
    %s107 = sphi 0, %s91
  $region4: #{mixed4e_forward.8} parent=0 // loop_header_branch
    %12 = sbr.rel (%p10) target = $region8
  $region5: #{mixed4e_forward.8} parent=0 // loop_body
    %s14 = ssub.s32 %s9, 1
    %s15 = ssub.s32 %s9, 2
    %s16 = sadd.s32 %s9, 1
    %s17 = ssub.s32 %s9, %s16
    %p18 = scmp.eq.s32.totalorder %s17, 0
    %s20 = sadd.s32 %s19, 1
    %s21 = scalar_select %p18, %s19, %s20
    %p24 = pneg %p18
    %p25 = scmp.eq.s32.totalorder %s9, 7
    %p26 = por %p24, %p25
    %p27 = scmp.ne.s32.totalorder %s19, %s22
    %p28 = scmp.eq.s32.totalorder %s9, 0
    %p29 = por %p27, %p28
    %p30 = scmp.ne.s32.totalorder %s19, %s22
    %p31 = scmp.eq.s32.totalorder %s14, 7
    %p32 = por %p30, %p31
    %p33 = scmp.ne.s32.totalorder %s22, %s23
    %p34 = scmp.eq.s32.totalorder %s14, 0
    %p35 = por %p33, %p34
    %p36 = scmp.ne.s32.totalorder %s22, %s23
    %p37 = scmp.eq.s32.totalorder %s15, 7
    %p38 = por %p36, %p37
    %p40 = scmp.ne.s32.totalorder %s23, %s39
    %p41 = scmp.eq.s32.totalorder %s15, 0
    %p42 = por %p40, %p41
    %s44 = sadd.s32 %s43, 1
    %p47 = scmp.eq.s32.totalorder %s9, 7
    %p48 = scmp.ne.s32.totalorder %s43, %s45
    %p49 = scmp.eq.s32.totalorder %s9, 0
    %p50 = por %p48, %p49
    %p51 = scmp.ne.s32.totalorder %s43, %s45
    %p52 = scmp.eq.s32.totalorder %s14, 7
    %p53 = por %p51, %p52
    %p54 = scmp.ne.s32.totalorder %s45, %s46
    %p55 = scmp.eq.s32.totalorder %s14, 0
    %p56 = por %p54, %p55
    %p57 = scmp.ne.s32.totalorder %s45, %s46
    %p58 = scmp.eq.s32.totalorder %s15, 7
    %p59 = por %p57, %p58
    %p61 = scmp.ne.s32.totalorder %s46, %s60
    %p62 = scmp.eq.s32.totalorder %s15, 0
    %p63 = por %p61, %p62
    %s65 = sadd.s32 %s64, 1
    %p68 = scmp.eq.s32.totalorder %s9, 7
    %p69 = scmp.ne.s32.totalorder %s64, %s66
    %p70 = scmp.eq.s32.totalorder %s9, 0
    %p71 = por %p69, %p70
    %p72 = scmp.ne.s32.totalorder %s64, %s66
    %p73 = scmp.eq.s32.totalorder %s14, 7
    %p74 = por %p72, %p73
    %p75 = scmp.ne.s32.totalorder %s66, %s67
    %p76 = scmp.eq.s32.totalorder %s14, 0
    %p77 = por %p75, %p76
    %p78 = scmp.ne.s32.totalorder %s66, %s67
    %p79 = scmp.eq.s32.totalorder %s15, 7
    %p80 = por %p78, %p79
    %p82 = scmp.ne.s32.totalorder %s67, %s81
    %p83 = scmp.eq.s32.totalorder %s15, 0
    %p84 = por %p82, %p83
    %s85 = ssub.s32 %s9, %s16
    %p86 = scmp.eq.s32.totalorder %s85, 0
    %s88 = sadd.s32 %s87, 1
    %s89 = scalar_select %p86, %s87, %s88
    %p92 = pneg %p86
    %p93 = scmp.eq.s32.totalorder %s9, 7
    %p94 = por %p92, %p93
    %p95 = scmp.ne.s32.totalorder %s87, %s90
    %p96 = scmp.eq.s32.totalorder %s9, 0
    %p97 = por %p95, %p96
    %p98 = scmp.ne.s32.totalorder %s87, %s90
    %p99 = scmp.eq.s32.totalorder %s14, 7
    %p100 = por %p98, %p99
    %p101 = scmp.ne.s32.totalorder %s90, %s91
    %p102 = scmp.eq.s32.totalorder %s14, 0
    %p103 = por %p101, %p102
    %p104 = scmp.ne.s32.totalorder %s90, %s91
    %p105 = scmp.eq.s32.totalorder %s15, 7
    %p106 = por %p104, %p105
    %p108 = scmp.ne.s32.totalorder %s91, %s107
    %p109 = scmp.eq.s32.totalorder %s15, 0
    %p110 = por %p108, %p109
    %p111 = scmp.le.s32.totalorder 1, %s9
    %p112 = scmp.lt.s32.totalorder %s9, 9
    %p113 = pnand %p111, %p112
    %p114 = pneg %p113
    // Predicated region
    $region9: #{mixed4e_forward.8} parent=5 // pred_check
      _
    $region10: #{mixed4e_forward.8} parent=5 // pred_check_branch
      %116 = sbr.rel (%p113) target = $region12
    $region11: #{mixed4e_forward.8} parent=5 // pred_region
      %s117 = ssub.s32 %s9, 1
      // Predicated region
      $region13: #{mixed4e_forward.8} parent=11 // pred_check
        %p118 = pneg %p56
      $region14: #{mixed4e_forward.8} parent=11 // pred_check_branch
        %120 = sbr.rel (%p118) target = $region16
      $region15: #{mixed4e_forward.8} parent=11 // pred_region
        _
      $region16: #{mixed4e_forward.8} parent=11 // pred_fallthru
        _
      // Predicated region
      $region17: #{mixed4e_forward.8} parent=11 // pred_check
        %p121 = pneg %p77
      $region18: #{mixed4e_forward.8} parent=11 // pred_check_branch
        %123 = sbr.rel (%p121) target = $region20
      $region19: #{mixed4e_forward.8} parent=11 // pred_region
        _
      $region20: #{mixed4e_forward.8} parent=11 // pred_fallthru
        _
    $region12: #{mixed4e_forward.8} parent=5 // pred_fallthru
      _
    %p124 = scmp.lt.s32.totalorder %s9, 8
    // Predicated region
    $region21: #{mixed4e_forward.8} parent=5 // pred_check
      %p125 = pneg %p124
    $region22: #{mixed4e_forward.8} parent=5 // pred_check_branch
      %127 = sbr.rel (%p125) target = $region24
    $region23: #{mixed4e_forward.8} parent=5 // pred_region
      // Predicated region
      $region25: #{mixed4e_forward.8} parent=23 // pred_check
        %p128 = pneg %p29
      $region26: #{mixed4e_forward.8} parent=23 // pred_check_branch
        %130 = sbr.rel (%p128) target = $region28
      $region27: #{mixed4e_forward.8} parent=23 // pred_region
        %p131 = scmp.lt.s32.totalorder %s9, 7
        %s132 = scalar_select %p131, %s9, 7
        %s133 = smul.addr %s132, 28
        %s134 = smul.addr %s133, 8
        %s135 = scalar_lea.vmem %s0, %s134
      $region28: #{mixed4e_forward.8} parent=23 // pred_fallthru
        _
    $region24: #{mixed4e_forward.8} parent=5 // pred_fallthru
      _
    %p136 = scmp.le.s32.totalorder 1, %s9
    %p137 = scmp.lt.s32.totalorder %s9, 9
    %p138 = pnand %p136, %p137
    %p139 = pneg %p138
    // Predicated region
    $region29: #{mixed4e_forward.8} parent=5 // pred_check
      _
    $region30: #{mixed4e_forward.8} parent=5 // pred_check_branch
      %141 = sbr.rel (%p138) target = $region32
    $region31: #{mixed4e_forward.8} parent=5 // pred_region
      %s142 = ssub.s32 %s9, 1
      %p143 = scmp.lt.s32.totalorder %s14, 7
      %s144 = scalar_select %p143, %s14, 7
      %s145 = smul.addr %s144, 28
      %s146 = smul.addr %s145, 8
      %s147 = scalar_lea.vmem %s0, %s146
      %p148 = pneg %p35
      %p149 = pneg %p32
      %p150 = pneg %p56
      %p151 = pneg %p53
      %p152 = pneg %p77
      %p153 = pneg %p74
      %p154 = pneg %p103
      %p155 = pneg %p100
      %p156 = scmp.lt.s32.totalorder %s14, 7
      %s157 = scalar_select %p156, %s14, 7
      %s158 = smul.addr %s157, 30
      %s159 = smul.addr %s158, 4
      %s160 = scalar_lea.vmem %s3, %s159
      %p161 = scmp.lt.s32.totalorder %s14, 7
      %s162 = scalar_select %p161, %s14, 7
      %s163 = smul.addr %s162, 28
      %s164 = smul.addr %s163, 8
      %s165 = scalar_lea.vmem %s0, %s164
      %p166 = scmp.lt.s32.totalorder %s14, 7
      %s167 = scalar_select %p166, %s14, 7
      %s168 = smul.addr %s167, 30
      %s169 = smul.addr %s168, 4
      %s170 = scalar_lea.vmem %s3, %s169
      %v172 = vld [vmem:[%s165] sm:$0xff]
      %v173 = vld [vmem:[%s165 + $0x8] sm:$0xff]
      %v174 = vld [vmem:[%s165 + $0x10] sm:$0xff]
      %v175 = vld [vmem:[%s165 + $0x18] sm:$0xff]
      %v176 = vld [vmem:[%s165 + $0x20] sm:$0xff]
      %v177 = vld [vmem:[%s165 + $0x28] sm:$0xff]
      %v178 = vld [vmem:[%s165 + $0x30] sm:$0xff]
      %v179 = vld [vmem:[%s165 + $0x38] sm:$0xff]
      %v180 = vld [vmem:[%s165 + $0x40] sm:$0xff]
      %v181 = vld [vmem:[%s165 + $0x48] sm:$0xff]
      %v182 = vld [vmem:[%s165 + $0x50] sm:$0xff]
      %v183 = vld [vmem:[%s165 + $0x58] sm:$0xff]
      %v184 = vld [vmem:[%s165 + $0x60] sm:$0xff]
      %v185 = vld [vmem:[%s165 + $0x68] sm:$0xff]
      %v186 = vld [vmem:[%s165 + $0x70] sm:$0xff]
      %v187 = vld [vmem:[%s165 + $0x78] sm:$0xff]
      %v188 = vld [vmem:[%s165 + $0x80] sm:$0xff]
      %v189 = vld [vmem:[%s165 + $0x88] sm:$0xff]
      %v190 = vld [vmem:[%s165 + $0x90] sm:$0xff]
      %v191 = vld [vmem:[%s165 + $0x98] sm:$0xff]
      %v192 = vpack.c.bf16 %v174, %v172
      %v193 = vpack.c.bf16 %v175, %v173
      %v194 = vpack.c.bf16 %v178, %v176
      %v195 = vpack.c.bf16 %v179, %v177
      %v196 = vpack.c.bf16 %v182, %v180
      %v197 = vpack.c.bf16 %v183, %v181
      %v198 = vpack.c.bf16 %v186, %v184
      %v199 = vpack.c.bf16 %v187, %v185
      %v200 = vpack.c.bf16 %v190, %v188
      %v201 = vpack.c.bf16 %v191, %v189
      %v202 = vld [vmem:[%s1] sm:$0xff]
      %v203 = vld [vmem:[%s1 + $0x8] sm:$0xf]
      %v204 = vld [vmem:[%s1 + $0xc] sm:$0xff]
      %v205 = vld [vmem:[%s1 + $0x14] sm:$0xf]
      %v206 = vld [vmem:[%s1 + $0x18] sm:$0xff]
      %v207 = vld [vmem:[%s1 + $0x20] sm:$0xf]
      %v208 = vld [vmem:[%s1 + $0x24] sm:$0xff]
      %v209 = vld [vmem:[%s1 + $0x2c] sm:$0xf]
      %v210 = vld [vmem:[%s1 + $0x30] sm:$0xff]
      %v211 = vld [vmem:[%s1 + $0x38] sm:$0xf]
      %v212 = vld [vmem:[%s1 + $0x3c] sm:$0xff]
      %v213 = vld [vmem:[%s1 + $0x44] sm:$0xf]
      %v214 = vld [vmem:[%s1 + $0x48] sm:$0xff]
      %v215 = vld [vmem:[%s1 + $0x50] sm:$0xf]
      %v216 = vld [vmem:[%s1 + $0x54] sm:$0xff]
      %v217 = vld [vmem:[%s1 + $0x5c] sm:$0xf]
      %v218 = vld [vmem:[%s1 + $0x60] sm:$0xff]
      %v219 = vld [vmem:[%s1 + $0x68] sm:$0xf]
      %v220 = vld [vmem:[%s1 + $0x6c] sm:$0xff]
      %v221 = vld [vmem:[%s1 + $0x74] sm:$0xf]
      %v222 = vld [vmem:[%s1 + $0x78] sm:$0xff]
      %v223 = vld [vmem:[%s1 + $0x80] sm:$0xf]
      %v224 = vld [vmem:[%s1 + $0x84] sm:$0xff]
      %v225 = vld [vmem:[%s1 + $0x8c] sm:$0xf]
      %v226 = vld [vmem:[%s1 + $0x90] sm:$0xff]
      %v227 = vld [vmem:[%s1 + $0x98] sm:$0xf]
      %v228 = vld [vmem:[%s1 + $0x9c] sm:$0xff]
      %v229 = vld [vmem:[%s1 + $0xa4] sm:$0xf]
      %v230 = vld [vmem:[%s1 + $0xa8] sm:$0xff]
      %v231 = vld [vmem:[%s1 + $0xb0] sm:$0xf]
      %v232 = vld [vmem:[%s1 + $0xb4] sm:$0xff]
      %v233 = vld [vmem:[%s1 + $0xbc] sm:$0xf]
      %v234 = vld [vmem:[%s1 + $0xc0] sm:$0xff]
      %v235 = vld [vmem:[%s1 + $0xc8] sm:$0xf]
      %v236 = vld [vmem:[%s1 + $0xcc] sm:$0xff]
      %v237 = vld [vmem:[%s1 + $0xd4] sm:$0xf]
      %v238 = vld [vmem:[%s165] sm:$0xfe]
      %v239 = vld [vmem:[%s165 + $0x8] sm:$0xfe]
      %v240 = vld [vmem:[%s165 + $0xa0] sm:$0x1]
      %v241 = vld [vmem:[%s165 + $0xa8] sm:$0x1]
      %v242 = vpack.c.bf16 %v174, %v238
      %v243 = vpack.c.bf16 %v175, %v239
      %v244 = vpack.c.bf16 %v240, %v240
      %v245 = vpack.c.bf16 %v241, %v241
      %s246 = scalar_lea.vmem %s1, 216
      %v247 = vld [vmem:[%s246] sm:$0xff]
      %v248 = vld [vmem:[%s246 + $0x8] sm:$0xf]
      %v249 = vld [vmem:[%s246 + $0xc] sm:$0xff]
      %v250 = vld [vmem:[%s246 + $0x14] sm:$0xf]
      %v251 = vld [vmem:[%s246 + $0x18] sm:$0xff]
      %v252 = vld [vmem:[%s246 + $0x20] sm:$0xf]
      %v253 = vld [vmem:[%s246 + $0x24] sm:$0xff]
      %v254 = vld [vmem:[%s246 + $0x2c] sm:$0xf]
      %v255 = vld [vmem:[%s246 + $0x30] sm:$0xff]
      %v256 = vld [vmem:[%s246 + $0x38] sm:$0xf]
      %v257 = vld [vmem:[%s246 + $0x3c] sm:$0xff]
      %v258 = vld [vmem:[%s246 + $0x44] sm:$0xf]
      %v259 = vld [vmem:[%s246 + $0x48] sm:$0xff]
      %v260 = vld [vmem:[%s246 + $0x50] sm:$0xf]
      %v261 = vld [vmem:[%s246 + $0x54] sm:$0xff]
      %v262 = vld [vmem:[%s246 + $0x5c] sm:$0xf]
      %v263 = vld [vmem:[%s246 + $0x60] sm:$0xff]
      %v264 = vld [vmem:[%s246 + $0x68] sm:$0xf]
      %v265 = vld [vmem:[%s246 + $0x6c] sm:$0xff]
      %v266 = vld [vmem:[%s246 + $0x74] sm:$0xf]
      %v267 = vld [vmem:[%s246 + $0x78] sm:$0xff]
      %v268 = vld [vmem:[%s246 + $0x80] sm:$0xf]
      %v269 = vld [vmem:[%s246 + $0x84] sm:$0xff]
      %v270 = vld [vmem:[%s246 + $0x8c] sm:$0xf]
      %v271 = vld [vmem:[%s246 + $0x90] sm:$0xff]
      %v272 = vld [vmem:[%s246 + $0x98] sm:$0xf]
      %v273 = vld [vmem:[%s246 + $0x9c] sm:$0xff]
      %v274 = vld [vmem:[%s246 + $0xa4] sm:$0xf]
      %v275 = vld [vmem:[%s246 + $0xa8] sm:$0xff]
      %v276 = vld [vmem:[%s246 + $0xb0] sm:$0xf]
      %v277 = vld [vmem:[%s246 + $0xb4] sm:$0xff]
      %v278 = vld [vmem:[%s246 + $0xbc] sm:$0xf]
      %v279 = vld [vmem:[%s246 + $0xc0] sm:$0xff]
      %v280 = vld [vmem:[%s246 + $0xc8] sm:$0xf]
      %v281 = vld [vmem:[%s246 + $0xcc] sm:$0xff]
      %v282 = vld [vmem:[%s246 + $0xd4] sm:$0xf]
      %vm283 = vsmask.f32 7424
      %v285 = vshrl.u32 %v242, 16
      %v287 = vshll.u32 %v242, 16
      %v289 = vrot.slane %v287, 1
      %v290 = vor.u32 %v285, %v289
      %v292 = vshll.u32 %v194, 16
      %v294 = vrot.slane %v292, 1
      %v295 = vsel %vm283, %v290, %v294
      %v297 = vshrl.u32 %v243, 16
      %v299 = vshll.u32 %v243, 16
      %v301 = vrot.slane %v299, 1
      %v302 = vor.u32 %v297, %v301
      %v304 = vshll.u32 %v195, 16
      %v306 = vrot.slane %v304, 1
      %v307 = vsel %vm283, %v302, %v306
      %v308 = vshrl.u32 %v194, 16
      %v310 = vor.u32 %v308, %v294
      %v312 = vshll.u32 %v196, 16
      %v314 = vrot.slane %v312, 1
      %v315 = vsel %vm283, %v310, %v314
      %v316 = vshrl.u32 %v195, 16
      %v318 = vor.u32 %v316, %v306
      %v320 = vshll.u32 %v197, 16
      %v322 = vrot.slane %v320, 1
      %v323 = vsel %vm283, %v318, %v322
      %v324 = vshrl.u32 %v196, 16
      %v326 = vor.u32 %v324, %v314
      %v328 = vshll.u32 %v198, 16
      %v330 = vrot.slane %v328, 1
      %v331 = vsel %vm283, %v326, %v330
      %v332 = vshrl.u32 %v197, 16
      %v334 = vor.u32 %v332, %v322
      %v336 = vshll.u32 %v199, 16
      %v338 = vrot.slane %v336, 1
      %v339 = vsel %vm283, %v334, %v338
      %v340 = vshrl.u32 %v198, 16
      %v342 = vor.u32 %v340, %v330
      %v344 = vshll.u32 %v200, 16
      %v346 = vrot.slane %v344, 1
      %v347 = vsel %vm283, %v342, %v346
      %v348 = vshrl.u32 %v199, 16
      %v350 = vor.u32 %v348, %v338
      %v352 = vshll.u32 %v201, 16
      %v354 = vrot.slane %v352, 1
      %v355 = vsel %vm283, %v350, %v354
      %v356 = vshrl.u32 %v200, 16
      %v358 = vor.u32 %v356, %v346
      %v360 = vshll.u32 %v244, 16
      %v362 = vrot.slane %v360, 1
      %v363 = vsel %vm283, %v358, %v362
      %v364 = vshrl.u32 %v201, 16
      %v366 = vor.u32 %v364, %v354
      %v368 = vshll.u32 %v245, 16
      %v370 = vrot.slane %v368, 1
      %v371 = vsel %vm283, %v366, %v370
      %v413 = vunpack.c.l.b16 %v247
      %v414 = vunpack.c.h.b16 %v247
      %v415 = vunpack.c.l.b16 %v248
      %v416 = vunpack.c.l.b16 %v249
      %v417 = vunpack.c.h.b16 %v249
      %v418 = vunpack.c.l.b16 %v250
      %v419 = vunpack.c.l.b16 %v251
      %v420 = vunpack.c.h.b16 %v251
      %v421 = vunpack.c.l.b16 %v252
      %v422 = vunpack.c.l.b16 %v253
      %v423 = vunpack.c.h.b16 %v253
      %v424 = vunpack.c.l.b16 %v254
      %v425 = vunpack.c.l.b16 %v255
      %v426 = vunpack.c.h.b16 %v255
      %v427 = vunpack.c.l.b16 %v256
      %v428 = vunpack.c.l.b16 %v257
      %v429 = vunpack.c.h.b16 %v257
      %v430 = vunpack.c.l.b16 %v258
      %v431 = vunpack.c.l.b16 %v259
      %v432 = vunpack.c.h.b16 %v259
      %v433 = vunpack.c.l.b16 %v260
      %v434 = vunpack.c.l.b16 %v261
      %v435 = vunpack.c.h.b16 %v261
      %v436 = vunpack.c.l.b16 %v262
      %v437 = vunpack.c.l.b16 %v263
      %v438 = vunpack.c.h.b16 %v263
      %v439 = vunpack.c.l.b16 %v264
      %v440 = vunpack.c.l.b16 %v265
      %v441 = vunpack.c.h.b16 %v265
      %v442 = vunpack.c.l.b16 %v266
      %v443 = vunpack.c.l.b16 %v267
      %v444 = vunpack.c.h.b16 %v267
      %v445 = vunpack.c.l.b16 %v268
      %v446 = vunpack.c.l.b16 %v269
      %v447 = vunpack.c.h.b16 %v269
      %v448 = vunpack.c.l.b16 %v270
      %v449 = vunpack.c.l.b16 %v271
      %v450 = vunpack.c.h.b16 %v271
      %v451 = vunpack.c.l.b16 %v272
      %v452 = vunpack.c.l.b16 %v273
      %v453 = vunpack.c.h.b16 %v273
      %v454 = vunpack.c.l.b16 %v274
      %v455 = vunpack.c.l.b16 %v275
      %v456 = vunpack.c.h.b16 %v275
      %v457 = vunpack.c.l.b16 %v276
      %v458 = vunpack.c.l.b16 %v277
      %v459 = vunpack.c.h.b16 %v277
      %v460 = vunpack.c.l.b16 %v278
      %v461 = vunpack.c.l.b16 %v279
      %v462 = vunpack.c.h.b16 %v279
      %v463 = vunpack.c.l.b16 %v280
      %v464 = vunpack.c.l.b16 %v281
      %v465 = vunpack.c.h.b16 %v281
      %v466 = vunpack.c.l.b16 %v282
      %v467 = vpack.c.b16 %v416, %v413
      %v468 = vpack.c.b16 %v417, %v414
      %v469 = vpack.c.b16 %v418, %v415
      %v470 = vpack.c.b16 %v422, %v419
      %v471 = vpack.c.b16 %v423, %v420
      %v472 = vpack.c.b16 %v424, %v421
      %v473 = vpack.c.b16 %v428, %v425
      %v474 = vpack.c.b16 %v429, %v426
      %v475 = vpack.c.b16 %v430, %v427
      %v476 = vpack.c.b16 %v434, %v431
      %v477 = vpack.c.b16 %v435, %v432
      %v478 = vpack.c.b16 %v436, %v433
      %v479 = vpack.c.b16 %v440, %v437
      %v480 = vpack.c.b16 %v441, %v438
      %v481 = vpack.c.b16 %v442, %v439
      %v482 = vpack.c.b16 %v446, %v443
      %v483 = vpack.c.b16 %v447, %v444
      %v484 = vpack.c.b16 %v448, %v445
      %v485 = vpack.c.b16 %v452, %v449
      %v486 = vpack.c.b16 %v453, %v450
      %v487 = vpack.c.b16 %v454, %v451
      %v488 = vpack.c.b16 %v458, %v455
      %v489 = vpack.c.b16 %v459, %v456
      %v490 = vpack.c.b16 %v460, %v457
      %v491 = vpack.c.b16 %v464, %v461
      %v492 = vpack.c.b16 %v465, %v462
      %v493 = vpack.c.b16 %v466, %v463
      %vm521 = vcmask 130048
      %v523 = vsel %vm521, %v307, 0
      %v526 = vsel %vm521, %v323, 0
      %v529 = vsel %vm521, %v339, 0
      %v532 = vsel %vm521, %v355, 0
      %v535 = vsel %vm521, %v371, 0
      %537 = vmatprep.subr.bf16.mxu0 %v489
      %538 = vmatpush1.bf16.msra.mxu0 %v488
      %539 = vmatprep.subr.bf16.mxu0 %v486
      %540 = vmatpush1.bf16.msra.mxu0 %v485
      %541 = vmatprep.subr.bf16.mxu0 %v483
      %542 = vmatpush1.bf16.msra.mxu0 %v482
      %543 = vmatprep.subr.bf16.mxu0 %v480
      %544 = vmatpush1.bf16.msra.mxu0 %v479
      %545 = vmatprep.subr.bf16.mxu0 %v477
      %546 = vmatpush1.bf16.msra.mxu0 %v476
      %547 = vmatprep.subr.bf16.mxu0 %v474
      %548 = vmatpush1.bf16.msra.mxu0 %v473
      %549 = vmatprep.subr.bf16.mxu0 %v471
      %550 = vmatpush1.bf16.msra.mxu0 %v470
      %551 = vmatprep.subr.bf16.mxu0 %v468
      %552 = vmatpush1.bf16.msra.mxu0 %v467
      %553 = vmatprep.subr.bf16.mxu0 0
      %554 = vmatpush2.bf16.msra.mxu0 0
      %555 = vmatprep.subr.bf16.mxu0 0
      %556 = vmatpush2.bf16.msra.mxu0 0
      %557 = vmatprep.subr.bf16.mxu0 0
      %558 = vmatpush2.bf16.msra.mxu0 0
      %559 = vmatprep.subr.bf16.mxu0 0
      %560 = vmatpush2.bf16.msra.mxu0 0
      %561 = vmatprep.subr.bf16.mxu0 0
      %562 = vmatpush2.bf16.msra.mxu0 0
      %563 = vmatprep.subr.bf16.mxu0 0
      %564 = vmatpush2.bf16.msra.mxu0 0
      %565 = vmatprep.subr.bf16.mxu0 0
      %566 = vmatpush2.bf16.msra.mxu0 0
      %567 = vmatprep.subr.bf16.mxu0 %v492
      %568 = vmatpush2.bf16.msra.mxu0 %v491
      %569 = vmatprep.mubr.bf16.mxu0 %v523
      %570 = vmatmul.mubr.bf16.gmra.mxu0 %v295
      %v571 = vpop.f32.mrf.mxu0
      %v572 = vadd.f32 0.0, %v571
      %v573 = vpop.f32.mrf.mxu0
      %v574 = vadd.f32 0.0, %v573
      %v575 = vpop.f32.mrf.mxu0
      %v576 = vadd.f32 0.0, %v575
      %v577 = vpop.f32.mrf.mxu0
      %v578 = vadd.f32 0.0, %v577
      %579 = vmatprep.mubr.bf16.mxu0 %v526
      %580 = vmatmul.mubr.bf16.gmra.mxu0 %v315
      %v581 = vpop.f32.mrf.mxu0
      %v582 = vadd.f32 0.0, %v581
      %v583 = vpop.f32.mrf.mxu0
      %v584 = vadd.f32 0.0, %v583
      %v585 = vpop.f32.mrf.mxu0
      %v586 = vadd.f32 0.0, %v585
      %v587 = vpop.f32.mrf.mxu0
      %v588 = vadd.f32 0.0, %v587
      %589 = vmatprep.mubr.bf16.mxu0 %v529
      %590 = vmatmul.mubr.bf16.gmra.mxu0 %v331
      %v591 = vpop.f32.mrf.mxu0
      %v592 = vadd.f32 0.0, %v591
      %v593 = vpop.f32.mrf.mxu0
      %v594 = vadd.f32 0.0, %v593
      %v595 = vpop.f32.mrf.mxu0
      %v596 = vadd.f32 0.0, %v595
      %v597 = vpop.f32.mrf.mxu0
      %v598 = vadd.f32 0.0, %v597
      %599 = vmatprep.mubr.bf16.mxu0 %v532
      %600 = vmatmul.mubr.bf16.gmra.mxu0 %v347
      %v601 = vpop.f32.mrf.mxu0
      %v602 = vadd.f32 0.0, %v601
      %v603 = vpop.f32.mrf.mxu0
      %v604 = vadd.f32 0.0, %v603
      %v605 = vpop.f32.mrf.mxu0
      %v606 = vadd.f32 0.0, %v605
      %v607 = vpop.f32.mrf.mxu0
      %v608 = vadd.f32 0.0, %v607
      %609 = vmatprep.mubr.bf16.mxu0 %v535
      %610 = vmatmul.mubr.bf16.gmra.mxu0 %v363
      %v611 = vpop.f32.mrf.mxu0
      %v612 = vadd.f32 0.0, %v611
      %v613 = vpop.f32.mrf.mxu0
      %v614 = vadd.f32 0.0, %v613
      %v615 = vpop.f32.mrf.mxu0
      %v616 = vadd.f32 0.0, %v615
      %v617 = vpop.f32.mrf.mxu0
      %v618 = vadd.f32 0.0, %v617
      %619 = vdwg.mxu0
      %620 = vmatprep.subr.bf16.mxu0 0
      %621 = vmatpush1.bf16.msra.mxu0 %v490
      %622 = vmatprep.subr.bf16.mxu0 0
      %623 = vmatpush1.bf16.msra.mxu0 %v487
      %624 = vmatprep.subr.bf16.mxu0 0
      %625 = vmatpush1.bf16.msra.mxu0 %v484
      %626 = vmatprep.subr.bf16.mxu0 0
      %627 = vmatpush1.bf16.msra.mxu0 %v481
      %628 = vmatprep.subr.bf16.mxu0 0
      %629 = vmatpush1.bf16.msra.mxu0 %v478
      %630 = vmatprep.subr.bf16.mxu0 0
      %631 = vmatpush1.bf16.msra.mxu0 %v475
      %632 = vmatprep.subr.bf16.mxu0 0
      %633 = vmatpush1.bf16.msra.mxu0 %v472
      %634 = vmatprep.subr.bf16.mxu0 0
      %635 = vmatpush1.bf16.msra.mxu0 %v469
      %636 = vmatprep.subr.bf16.mxu0 0
      %637 = vmatpush2.bf16.msra.mxu0 0
      %638 = vmatprep.subr.bf16.mxu0 0
      %639 = vmatpush2.bf16.msra.mxu0 0
      %640 = vmatprep.subr.bf16.mxu0 0
      %641 = vmatpush2.bf16.msra.mxu0 0
      %642 = vmatprep.subr.bf16.mxu0 0
      %643 = vmatpush2.bf16.msra.mxu0 0
      %644 = vmatprep.subr.bf16.mxu0 0
      %645 = vmatpush2.bf16.msra.mxu0 0
      %646 = vmatprep.subr.bf16.mxu0 0
      %647 = vmatpush2.bf16.msra.mxu0 0
      %648 = vmatprep.subr.bf16.mxu0 0
      %649 = vmatpush2.bf16.msra.mxu0 0
      %650 = vmatprep.subr.bf16.mxu0 0
      %651 = vmatpush2.bf16.msra.mxu0 %v493
      %652 = vmatprep.mubr.bf16.mxu0 %v523
      %653 = vmatmul.mubr.bf16.gmra.mxu0 %v295
      %v654 = vpop.f32.mrf.mxu0
      %v655 = vadd.f32 0.0, %v654
      %v656 = vpop.f32.mrf.mxu0
      %v657 = vpop.f32.mrf.mxu0
      %v658 = vadd.f32 0.0, %v657
      %v659 = vpop.f32.mrf.mxu0
      %660 = vmatprep.mubr.bf16.mxu0 %v526
      %661 = vmatmul.mubr.bf16.gmra.mxu0 %v315
      %v662 = vpop.f32.mrf.mxu0
      %v663 = vadd.f32 0.0, %v662
      %v664 = vpop.f32.mrf.mxu0
      %v665 = vpop.f32.mrf.mxu0
      %v666 = vadd.f32 0.0, %v665
      %v667 = vpop.f32.mrf.mxu0
      %668 = vmatprep.mubr.bf16.mxu0 %v529
      %669 = vmatmul.mubr.bf16.gmra.mxu0 %v331
      %v670 = vpop.f32.mrf.mxu0
      %v671 = vadd.f32 0.0, %v670
      %v672 = vpop.f32.mrf.mxu0
      %v673 = vpop.f32.mrf.mxu0
      %v674 = vadd.f32 0.0, %v673
      %v675 = vpop.f32.mrf.mxu0
      %676 = vmatprep.mubr.bf16.mxu0 %v532
      %677 = vmatmul.mubr.bf16.gmra.mxu0 %v347
      %v678 = vpop.f32.mrf.mxu0
      %v679 = vadd.f32 0.0, %v678
      %v680 = vpop.f32.mrf.mxu0
      %v681 = vpop.f32.mrf.mxu0
      %v682 = vadd.f32 0.0, %v681
      %v683 = vpop.f32.mrf.mxu0
      %684 = vmatprep.mubr.bf16.mxu0 %v535
      %685 = vmatmul.mubr.bf16.gmra.mxu0 %v363
      %v686 = vpop.f32.mrf.mxu0
      %v687 = vadd.f32 0.0, %v686
      %v688 = vpop.f32.mrf.mxu0
      %v689 = vpop.f32.mrf.mxu0
      %v690 = vadd.f32 0.0, %v689
      %v691 = vpop.f32.mrf.mxu0
      %692 = vdwg.mxu0
      %v729 = vunpack.c.l.b16 %v202
      %v730 = vunpack.c.h.b16 %v202
      %v731 = vunpack.c.l.b16 %v203
      %v732 = vunpack.c.l.b16 %v204
      %v733 = vunpack.c.h.b16 %v204
      %v734 = vunpack.c.l.b16 %v205
      %v735 = vunpack.c.l.b16 %v206
      %v736 = vunpack.c.h.b16 %v206
      %v737 = vunpack.c.l.b16 %v207
      %v738 = vunpack.c.l.b16 %v208
      %v739 = vunpack.c.h.b16 %v208
      %v740 = vunpack.c.l.b16 %v209
      %v741 = vunpack.c.l.b16 %v210
      %v742 = vunpack.c.h.b16 %v210
      %v743 = vunpack.c.l.b16 %v211
      %v744 = vunpack.c.l.b16 %v212
      %v745 = vunpack.c.h.b16 %v212
      %v746 = vunpack.c.l.b16 %v213
      %v747 = vunpack.c.l.b16 %v214
      %v748 = vunpack.c.h.b16 %v214
      %v749 = vunpack.c.l.b16 %v215
      %v750 = vunpack.c.l.b16 %v216
      %v751 = vunpack.c.h.b16 %v216
      %v752 = vunpack.c.l.b16 %v217
      %v753 = vunpack.c.l.b16 %v218
      %v754 = vunpack.c.h.b16 %v218
      %v755 = vunpack.c.l.b16 %v219
      %v756 = vunpack.c.l.b16 %v220
      %v757 = vunpack.c.h.b16 %v220
      %v758 = vunpack.c.l.b16 %v221
      %v759 = vunpack.c.l.b16 %v222
      %v760 = vunpack.c.h.b16 %v222
      %v761 = vunpack.c.l.b16 %v223
      %v762 = vunpack.c.l.b16 %v224
      %v763 = vunpack.c.h.b16 %v224
      %v764 = vunpack.c.l.b16 %v225
      %v765 = vunpack.c.l.b16 %v226
      %v766 = vunpack.c.h.b16 %v226
      %v767 = vunpack.c.l.b16 %v227
      %v768 = vunpack.c.l.b16 %v228
      %v769 = vunpack.c.h.b16 %v228
      %v770 = vunpack.c.l.b16 %v229
      %v771 = vunpack.c.l.b16 %v230
      %v772 = vunpack.c.h.b16 %v230
      %v773 = vunpack.c.l.b16 %v231
      %v774 = vunpack.c.l.b16 %v232
      %v775 = vunpack.c.h.b16 %v232
      %v776 = vunpack.c.l.b16 %v233
      %v777 = vunpack.c.l.b16 %v234
      %v778 = vunpack.c.h.b16 %v234
      %v779 = vunpack.c.l.b16 %v235
      %v780 = vunpack.c.l.b16 %v236
      %v781 = vunpack.c.h.b16 %v236
      %v782 = vunpack.c.l.b16 %v237
      %v783 = vpack.c.b16 %v732, %v729
      %v784 = vpack.c.b16 %v733, %v730
      %v785 = vpack.c.b16 %v734, %v731
      %v786 = vpack.c.b16 %v738, %v735
      %v787 = vpack.c.b16 %v739, %v736
      %v788 = vpack.c.b16 %v740, %v737
      %v789 = vpack.c.b16 %v744, %v741
      %v790 = vpack.c.b16 %v745, %v742
      %v791 = vpack.c.b16 %v746, %v743
      %v792 = vpack.c.b16 %v750, %v747
      %v793 = vpack.c.b16 %v751, %v748
      %v794 = vpack.c.b16 %v752, %v749
      %v795 = vpack.c.b16 %v756, %v753
      %v796 = vpack.c.b16 %v757, %v754
      %v797 = vpack.c.b16 %v758, %v755
      %v798 = vpack.c.b16 %v762, %v759
      %v799 = vpack.c.b16 %v763, %v760
      %v800 = vpack.c.b16 %v764, %v761
      %v801 = vpack.c.b16 %v768, %v765
      %v802 = vpack.c.b16 %v769, %v766
      %v803 = vpack.c.b16 %v770, %v767
      %v804 = vpack.c.b16 %v774, %v771
      %v805 = vpack.c.b16 %v775, %v772
      %v806 = vpack.c.b16 %v776, %v773
      %v807 = vpack.c.b16 %v780, %v777
      %v808 = vpack.c.b16 %v781, %v778
      %v809 = vpack.c.b16 %v782, %v779
      %v838 = vsel %vm521, %v193, 0
      %v840 = vsel %vm521, %v195, 0
      %v842 = vsel %vm521, %v197, 0
      %v844 = vsel %vm521, %v199, 0
      %v846 = vsel %vm521, %v201, 0
      %848 = vmatprep.subr.bf16.mxu0 %v805
      %849 = vmatpush1.bf16.msra.mxu0 %v804
      %850 = vmatprep.subr.bf16.mxu0 %v802
      %851 = vmatpush1.bf16.msra.mxu0 %v801
      %852 = vmatprep.subr.bf16.mxu0 %v799
      %853 = vmatpush1.bf16.msra.mxu0 %v798
      %854 = vmatprep.subr.bf16.mxu0 %v796
      %855 = vmatpush1.bf16.msra.mxu0 %v795
      %856 = vmatprep.subr.bf16.mxu0 %v793
      %857 = vmatpush1.bf16.msra.mxu0 %v792
      %858 = vmatprep.subr.bf16.mxu0 %v790
      %859 = vmatpush1.bf16.msra.mxu0 %v789
      %860 = vmatprep.subr.bf16.mxu0 %v787
      %861 = vmatpush1.bf16.msra.mxu0 %v786
      %862 = vmatprep.subr.bf16.mxu0 %v784
      %863 = vmatpush1.bf16.msra.mxu0 %v783
      %864 = vmatprep.subr.bf16.mxu0 0
      %865 = vmatpush2.bf16.msra.mxu0 0
      %866 = vmatprep.subr.bf16.mxu0 0
      %867 = vmatpush2.bf16.msra.mxu0 0
      %868 = vmatprep.subr.bf16.mxu0 0
      %869 = vmatpush2.bf16.msra.mxu0 0
      %870 = vmatprep.subr.bf16.mxu0 0
      %871 = vmatpush2.bf16.msra.mxu0 0
      %872 = vmatprep.subr.bf16.mxu0 0
      %873 = vmatpush2.bf16.msra.mxu0 0
      %874 = vmatprep.subr.bf16.mxu0 0
      %875 = vmatpush2.bf16.msra.mxu0 0
      %876 = vmatprep.subr.bf16.mxu0 0
      %877 = vmatpush2.bf16.msra.mxu0 0
      %878 = vmatprep.subr.bf16.mxu0 %v808
      %879 = vmatpush2.bf16.msra.mxu0 %v807
      %880 = vmatprep.mubr.bf16.mxu0 %v838
      %881 = vmatmul.mubr.bf16.gmra.mxu0 %v192
      %v882 = vpop.f32.mrf.mxu0
      %v883 = vadd.f32 %v572, %v882
      %v884 = vpop.f32.mrf.mxu0
      %v885 = vadd.f32 %v574, %v884
      %v886 = vpop.f32.mrf.mxu0
      %v887 = vadd.f32 %v576, %v886
      %v888 = vpop.f32.mrf.mxu0
      %v889 = vadd.f32 %v578, %v888
      %890 = vmatprep.mubr.bf16.mxu0 %v840
      %891 = vmatmul.mubr.bf16.gmra.mxu0 %v194
      %v892 = vpop.f32.mrf.mxu0
      %v893 = vadd.f32 %v582, %v892
      %v894 = vpop.f32.mrf.mxu0
      %v895 = vadd.f32 %v584, %v894
      %v896 = vpop.f32.mrf.mxu0
      %v897 = vadd.f32 %v586, %v896
      %v898 = vpop.f32.mrf.mxu0
      %v899 = vadd.f32 %v588, %v898
      %900 = vmatprep.mubr.bf16.mxu0 %v842
      %901 = vmatmul.mubr.bf16.gmra.mxu0 %v196
      %v902 = vpop.f32.mrf.mxu0
      %v903 = vadd.f32 %v592, %v902
      %v904 = vpop.f32.mrf.mxu0
      %v905 = vadd.f32 %v594, %v904
      %v906 = vpop.f32.mrf.mxu0
      %v907 = vadd.f32 %v596, %v906
      %v908 = vpop.f32.mrf.mxu0
      %v909 = vadd.f32 %v598, %v908
      %910 = vmatprep.mubr.bf16.mxu0 %v844
      %911 = vmatmul.mubr.bf16.gmra.mxu0 %v198
      %v912 = vpop.f32.mrf.mxu0
      %v913 = vadd.f32 %v602, %v912
      %v914 = vpop.f32.mrf.mxu0
      %v915 = vadd.f32 %v604, %v914
      %v916 = vpop.f32.mrf.mxu0
      %v917 = vadd.f32 %v606, %v916
      %v918 = vpop.f32.mrf.mxu0
      %v919 = vadd.f32 %v608, %v918
      %920 = vmatprep.mubr.bf16.mxu0 %v846
      %921 = vmatmul.mubr.bf16.gmra.mxu0 %v200
      %v922 = vpop.f32.mrf.mxu0
      %v923 = vadd.f32 %v612, %v922
      %v924 = vpop.f32.mrf.mxu0
      %v925 = vadd.f32 %v614, %v924
      %v926 = vpop.f32.mrf.mxu0
      %v927 = vadd.f32 %v616, %v926
      %v928 = vpop.f32.mrf.mxu0
      %v929 = vadd.f32 %v618, %v928
      %930 = vdwg.mxu0
      %931 = vmatprep.subr.bf16.mxu0 0
      %932 = vmatpush1.bf16.msra.mxu0 %v806
      %933 = vmatprep.subr.bf16.mxu0 0
      %934 = vmatpush1.bf16.msra.mxu0 %v803
      %935 = vmatprep.subr.bf16.mxu0 0
      %936 = vmatpush1.bf16.msra.mxu0 %v800
      %937 = vmatprep.subr.bf16.mxu0 0
      %938 = vmatpush1.bf16.msra.mxu0 %v797
      %939 = vmatprep.subr.bf16.mxu0 0
      %940 = vmatpush1.bf16.msra.mxu0 %v794
      %941 = vmatprep.subr.bf16.mxu0 0
      %942 = vmatpush1.bf16.msra.mxu0 %v791
      %943 = vmatprep.subr.bf16.mxu0 0
      %944 = vmatpush1.bf16.msra.mxu0 %v788
      %945 = vmatprep.subr.bf16.mxu0 0
      %946 = vmatpush1.bf16.msra.mxu0 %v785
      %947 = vmatprep.subr.bf16.mxu0 0
      %948 = vmatpush2.bf16.msra.mxu0 0
      %949 = vmatprep.subr.bf16.mxu0 0
      %950 = vmatpush2.bf16.msra.mxu0 0
      %951 = vmatprep.subr.bf16.mxu0 0
      %952 = vmatpush2.bf16.msra.mxu0 0
      %953 = vmatprep.subr.bf16.mxu0 0
      %954 = vmatpush2.bf16.msra.mxu0 0
      %955 = vmatprep.subr.bf16.mxu0 0
      %956 = vmatpush2.bf16.msra.mxu0 0
      %957 = vmatprep.subr.bf16.mxu0 0
      %958 = vmatpush2.bf16.msra.mxu0 0
      %959 = vmatprep.subr.bf16.mxu0 0
      %960 = vmatpush2.bf16.msra.mxu0 0
      %961 = vmatprep.subr.bf16.mxu0 0
      %962 = vmatpush2.bf16.msra.mxu0 %v809
      %963 = vmatprep.mubr.bf16.mxu0 %v838
      %964 = vmatmul.mubr.bf16.gmra.mxu0 %v192
      %v965 = vpop.f32.mrf.mxu0
      %v966 = vadd.f32 %v655, %v965
      %v967 = vpop.f32.mrf.mxu0
      %v968 = vpop.f32.mrf.mxu0
      %v969 = vadd.f32 %v658, %v968
      %v970 = vpop.f32.mrf.mxu0
      %971 = vmatprep.mubr.bf16.mxu0 %v840
      %972 = vmatmul.mubr.bf16.gmra.mxu0 %v194
      %v973 = vpop.f32.mrf.mxu0
      %v974 = vadd.f32 %v663, %v973
      %v975 = vpop.f32.mrf.mxu0
      %v976 = vpop.f32.mrf.mxu0
      %v977 = vadd.f32 %v666, %v976
      %v978 = vpop.f32.mrf.mxu0
      %979 = vmatprep.mubr.bf16.mxu0 %v842
      %980 = vmatmul.mubr.bf16.gmra.mxu0 %v196
      %v981 = vpop.f32.mrf.mxu0
      %v982 = vadd.f32 %v671, %v981
      %v983 = vpop.f32.mrf.mxu0
      %v984 = vpop.f32.mrf.mxu0
      %v985 = vadd.f32 %v674, %v984
      %v986 = vpop.f32.mrf.mxu0
      %987 = vmatprep.mubr.bf16.mxu0 %v844
      %988 = vmatmul.mubr.bf16.gmra.mxu0 %v198
      %v989 = vpop.f32.mrf.mxu0
      %v990 = vadd.f32 %v679, %v989
      %v991 = vpop.f32.mrf.mxu0
      %v992 = vpop.f32.mrf.mxu0
      %v993 = vadd.f32 %v682, %v992
      %v994 = vpop.f32.mrf.mxu0
      %995 = vmatprep.mubr.bf16.mxu0 %v846
      %996 = vmatmul.mubr.bf16.gmra.mxu0 %v200
      %v997 = vpop.f32.mrf.mxu0
      %v998 = vadd.f32 %v687, %v997
      %v999 = vpop.f32.mrf.mxu0
      %v1000 = vpop.f32.mrf.mxu0
      %v1001 = vadd.f32 %v690, %v1000
      %v1002 = vpop.f32.mrf.mxu0
      %1003 = vdwg.mxu0
      %v1004 = vld [vmem:[%s165] sm:$0xfc]
      %v1005 = vld [vmem:[%s165 + $0x8] sm:$0xfc]
      %v1006 = vld [vmem:[%s165 + $0xa0] sm:$0x3]
      %v1007 = vld [vmem:[%s165 + $0xa8] sm:$0x3]
      %v1008 = vpack.c.bf16 %v174, %v1004
      %v1009 = vpack.c.bf16 %v175, %v1005
      %v1010 = vpack.c.bf16 %v1006, %v1006
      %v1011 = vpack.c.bf16 %v1007, %v1007
      %s1012 = scalar_lea.vmem %s1, 432
      %v1013 = vld [vmem:[%s1012] sm:$0xff]
      %v1014 = vld [vmem:[%s1012 + $0x8] sm:$0xf]
      %v1015 = vld [vmem:[%s1012 + $0xc] sm:$0xff]
      %v1016 = vld [vmem:[%s1012 + $0x14] sm:$0xf]
      %v1017 = vld [vmem:[%s1012 + $0x18] sm:$0xff]
      %v1018 = vld [vmem:[%s1012 + $0x20] sm:$0xf]
      %v1019 = vld [vmem:[%s1012 + $0x24] sm:$0xff]
      %v1020 = vld [vmem:[%s1012 + $0x2c] sm:$0xf]
      %v1021 = vld [vmem:[%s1012 + $0x30] sm:$0xff]
      %v1022 = vld [vmem:[%s1012 + $0x38] sm:$0xf]
      %v1023 = vld [vmem:[%s1012 + $0x3c] sm:$0xff]
      %v1024 = vld [vmem:[%s1012 + $0x44] sm:$0xf]
      %v1025 = vld [vmem:[%s1012 + $0x48] sm:$0xff]
      %v1026 = vld [vmem:[%s1012 + $0x50] sm:$0xf]
      %v1027 = vld [vmem:[%s1012 + $0x54] sm:$0xff]
      %v1028 = vld [vmem:[%s1012 + $0x5c] sm:$0xf]
      %v1029 = vld [vmem:[%s1012 + $0x60] sm:$0xff]
      %v1030 = vld [vmem:[%s1012 + $0x68] sm:$0xf]
      %v1031 = vld [vmem:[%s1012 + $0x6c] sm:$0xff]
      %v1032 = vld [vmem:[%s1012 + $0x74] sm:$0xf]
      %v1033 = vld [vmem:[%s1012 + $0x78] sm:$0xff]
      %v1034 = vld [vmem:[%s1012 + $0x80] sm:$0xf]
      %v1035 = vld [vmem:[%s1012 + $0x84] sm:$0xff]
      %v1036 = vld [vmem:[%s1012 + $0x8c] sm:$0xf]
      %v1037 = vld [vmem:[%s1012 + $0x90] sm:$0xff]
      %v1038 = vld [vmem:[%s1012 + $0x98] sm:$0xf]
      %v1039 = vld [vmem:[%s1012 + $0x9c] sm:$0xff]
      %v1040 = vld [vmem:[%s1012 + $0xa4] sm:$0xf]
      %v1041 = vld [vmem:[%s1012 + $0xa8] sm:$0xff]
      %v1042 = vld [vmem:[%s1012 + $0xb0] sm:$0xf]
      %v1043 = vld [vmem:[%s1012 + $0xb4] sm:$0xff]
      %v1044 = vld [vmem:[%s1012 + $0xbc] sm:$0xf]
      %v1045 = vld [vmem:[%s1012 + $0xc0] sm:$0xff]
      %v1046 = vld [vmem:[%s1012 + $0xc8] sm:$0xf]
      %v1047 = vld [vmem:[%s1012 + $0xcc] sm:$0xff]
      %v1048 = vld [vmem:[%s1012 + $0xd4] sm:$0xf]
      %vm1061 = vcmask 1046528
      %v1062 = vrot.slane %v1008, 1
      %v1063 = vrot.slane %v194, 1
      %v1064 = vsel %vm1061, %v1062, %v1063
      %v1065 = vrot.slane %v1009, 1
      %v1066 = vrot.slane %v195, 1
      %v1067 = vsel %vm1061, %v1065, %v1066
      %v1068 = vrot.slane %v196, 1
      %v1069 = vsel %vm1061, %v1063, %v1068
      %v1070 = vrot.slane %v197, 1
      %v1071 = vsel %vm1061, %v1066, %v1070
      %v1072 = vrot.slane %v198, 1
      %v1073 = vsel %vm1061, %v1068, %v1072
      %v1074 = vrot.slane %v199, 1
      %v1075 = vsel %vm1061, %v1070, %v1074
      %v1076 = vrot.slane %v200, 1
      %v1077 = vsel %vm1061, %v1072, %v1076
      %v1078 = vrot.slane %v201, 1
      %v1079 = vsel %vm1061, %v1074, %v1078
      %v1080 = vrot.slane %v1010, 1
      %v1081 = vsel %vm1061, %v1076, %v1080
      %v1082 = vrot.slane %v1011, 1
      %v1083 = vsel %vm1061, %v1078, %v1082
      %v1125 = vunpack.c.l.b16 %v1013
      %v1126 = vunpack.c.h.b16 %v1013
      %v1127 = vunpack.c.l.b16 %v1014
      %v1128 = vunpack.c.l.b16 %v1015
      %v1129 = vunpack.c.h.b16 %v1015
      %v1130 = vunpack.c.l.b16 %v1016
      %v1131 = vunpack.c.l.b16 %v1017
      %v1132 = vunpack.c.h.b16 %v1017
      %v1133 = vunpack.c.l.b16 %v1018
      %v1134 = vunpack.c.l.b16 %v1019
      %v1135 = vunpack.c.h.b16 %v1019
      %v1136 = vunpack.c.l.b16 %v1020
      %v1137 = vunpack.c.l.b16 %v1021
      %v1138 = vunpack.c.h.b16 %v1021
      %v1139 = vunpack.c.l.b16 %v1022
      %v1140 = vunpack.c.l.b16 %v1023
      %v1141 = vunpack.c.h.b16 %v1023
      %v1142 = vunpack.c.l.b16 %v1024
      %v1143 = vunpack.c.l.b16 %v1025
      %v1144 = vunpack.c.h.b16 %v1025
      %v1145 = vunpack.c.l.b16 %v1026
      %v1146 = vunpack.c.l.b16 %v1027
      %v1147 = vunpack.c.h.b16 %v1027
      %v1148 = vunpack.c.l.b16 %v1028
      %v1149 = vunpack.c.l.b16 %v1029
      %v1150 = vunpack.c.h.b16 %v1029
      %v1151 = vunpack.c.l.b16 %v1030
      %v1152 = vunpack.c.l.b16 %v1031
      %v1153 = vunpack.c.h.b16 %v1031
      %v1154 = vunpack.c.l.b16 %v1032
      %v1155 = vunpack.c.l.b16 %v1033
      %v1156 = vunpack.c.h.b16 %v1033
      %v1157 = vunpack.c.l.b16 %v1034
      %v1158 = vunpack.c.l.b16 %v1035
      %v1159 = vunpack.c.h.b16 %v1035
      %v1160 = vunpack.c.l.b16 %v1036
      %v1161 = vunpack.c.l.b16 %v1037
      %v1162 = vunpack.c.h.b16 %v1037
      %v1163 = vunpack.c.l.b16 %v1038
      %v1164 = vunpack.c.l.b16 %v1039
      %v1165 = vunpack.c.h.b16 %v1039
      %v1166 = vunpack.c.l.b16 %v1040
      %v1167 = vunpack.c.l.b16 %v1041
      %v1168 = vunpack.c.h.b16 %v1041
      %v1169 = vunpack.c.l.b16 %v1042
      %v1170 = vunpack.c.l.b16 %v1043
      %v1171 = vunpack.c.h.b16 %v1043
      %v1172 = vunpack.c.l.b16 %v1044
      %v1173 = vunpack.c.l.b16 %v1045
      %v1174 = vunpack.c.h.b16 %v1045
      %v1175 = vunpack.c.l.b16 %v1046
      %v1176 = vunpack.c.l.b16 %v1047
      %v1177 = vunpack.c.h.b16 %v1047
      %v1178 = vunpack.c.l.b16 %v1048
      %v1179 = vpack.c.b16 %v1128, %v1125
      %v1180 = vpack.c.b16 %v1129, %v1126
      %v1181 = vpack.c.b16 %v1130, %v1127
      %v1182 = vpack.c.b16 %v1134, %v1131
      %v1183 = vpack.c.b16 %v1135, %v1132
      %v1184 = vpack.c.b16 %v1136, %v1133
      %v1185 = vpack.c.b16 %v1140, %v1137
      %v1186 = vpack.c.b16 %v1141, %v1138
      %v1187 = vpack.c.b16 %v1142, %v1139
      %v1188 = vpack.c.b16 %v1146, %v1143
      %v1189 = vpack.c.b16 %v1147, %v1144
      %v1190 = vpack.c.b16 %v1148, %v1145
      %v1191 = vpack.c.b16 %v1152, %v1149
      %v1192 = vpack.c.b16 %v1153, %v1150
      %v1193 = vpack.c.b16 %v1154, %v1151
      %v1194 = vpack.c.b16 %v1158, %v1155
      %v1195 = vpack.c.b16 %v1159, %v1156
      %v1196 = vpack.c.b16 %v1160, %v1157
      %v1197 = vpack.c.b16 %v1164, %v1161
      %v1198 = vpack.c.b16 %v1165, %v1162
      %v1199 = vpack.c.b16 %v1166, %v1163
      %v1200 = vpack.c.b16 %v1170, %v1167
      %v1201 = vpack.c.b16 %v1171, %v1168
      %v1202 = vpack.c.b16 %v1172, %v1169
      %v1203 = vpack.c.b16 %v1176, %v1173
      %v1204 = vpack.c.b16 %v1177, %v1174
      %v1205 = vpack.c.b16 %v1178, %v1175
      %v1234 = vsel %vm521, %v1067, 0
      %v1237 = vsel %vm521, %v1071, 0
      %v1240 = vsel %vm521, %v1075, 0
      %v1243 = vsel %vm521, %v1079, 0
      %v1246 = vsel %vm521, %v1083, 0
      %1248 = vmatprep.subr.bf16.mxu0 %v1201
      %1249 = vmatpush1.bf16.msra.mxu0 %v1200
      %1250 = vmatprep.subr.bf16.mxu0 %v1198
      %1251 = vmatpush1.bf16.msra.mxu0 %v1197
      %1252 = vmatprep.subr.bf16.mxu0 %v1195
      %1253 = vmatpush1.bf16.msra.mxu0 %v1194
      %1254 = vmatprep.subr.bf16.mxu0 %v1192
      %1255 = vmatpush1.bf16.msra.mxu0 %v1191
      %1256 = vmatprep.subr.bf16.mxu0 %v1189
      %1257 = vmatpush1.bf16.msra.mxu0 %v1188
      %1258 = vmatprep.subr.bf16.mxu0 %v1186
      %1259 = vmatpush1.bf16.msra.mxu0 %v1185
      %1260 = vmatprep.subr.bf16.mxu0 %v1183
      %1261 = vmatpush1.bf16.msra.mxu0 %v1182
      %1262 = vmatprep.subr.bf16.mxu0 %v1180
      %1263 = vmatpush1.bf16.msra.mxu0 %v1179
      %1264 = vmatprep.subr.bf16.mxu0 0
      %1265 = vmatpush2.bf16.msra.mxu0 0
      %1266 = vmatprep.subr.bf16.mxu0 0
      %1267 = vmatpush2.bf16.msra.mxu0 0
      %1268 = vmatprep.subr.bf16.mxu0 0
      %1269 = vmatpush2.bf16.msra.mxu0 0
      %1270 = vmatprep.subr.bf16.mxu0 0
      %1271 = vmatpush2.bf16.msra.mxu0 0
      %1272 = vmatprep.subr.bf16.mxu0 0
      %1273 = vmatpush2.bf16.msra.mxu0 0
      %1274 = vmatprep.subr.bf16.mxu0 0
      %1275 = vmatpush2.bf16.msra.mxu0 0
      %1276 = vmatprep.subr.bf16.mxu0 0
      %1277 = vmatpush2.bf16.msra.mxu0 0
      %1278 = vmatprep.subr.bf16.mxu0 %v1204
      %1279 = vmatpush2.bf16.msra.mxu0 %v1203
      %1280 = vmatprep.mubr.bf16.mxu0 %v1234
      %1281 = vmatmul.mubr.bf16.gmra.mxu0 %v1064
      %v1282 = vpop.f32.mrf.mxu0
      %v1283 = vadd.f32 0.0, %v1282
      %v1284 = vpop.f32.mrf.mxu0
      %v1285 = vadd.f32 0.0, %v1284
      %v1286 = vpop.f32.mrf.mxu0
      %v1287 = vadd.f32 0.0, %v1286
      %v1288 = vpop.f32.mrf.mxu0
      %v1289 = vadd.f32 0.0, %v1288
      %1290 = vmatprep.mubr.bf16.mxu0 %v1237
      %1291 = vmatmul.mubr.bf16.gmra.mxu0 %v1069
      %v1292 = vpop.f32.mrf.mxu0
      %v1293 = vadd.f32 0.0, %v1292
      %v1294 = vpop.f32.mrf.mxu0
      %v1295 = vadd.f32 0.0, %v1294
      %v1296 = vpop.f32.mrf.mxu0
      %v1297 = vadd.f32 0.0, %v1296
      %v1298 = vpop.f32.mrf.mxu0
      %v1299 = vadd.f32 0.0, %v1298
      %1300 = vmatprep.mubr.bf16.mxu0 %v1240
      %1301 = vmatmul.mubr.bf16.gmra.mxu0 %v1073
      %v1302 = vpop.f32.mrf.mxu0
      %v1303 = vadd.f32 0.0, %v1302
      %v1304 = vpop.f32.mrf.mxu0
      %v1305 = vadd.f32 0.0, %v1304
      %v1306 = vpop.f32.mrf.mxu0
      %v1307 = vadd.f32 0.0, %v1306
      %v1308 = vpop.f32.mrf.mxu0
      %v1309 = vadd.f32 0.0, %v1308
      %1310 = vmatprep.mubr.bf16.mxu0 %v1243
      %1311 = vmatmul.mubr.bf16.gmra.mxu0 %v1077
      %v1312 = vpop.f32.mrf.mxu0
      %v1313 = vadd.f32 0.0, %v1312
      %v1314 = vpop.f32.mrf.mxu0
      %v1315 = vadd.f32 0.0, %v1314
      %v1316 = vpop.f32.mrf.mxu0
      %v1317 = vadd.f32 0.0, %v1316
      %v1318 = vpop.f32.mrf.mxu0
      %v1319 = vadd.f32 0.0, %v1318
      %1320 = vmatprep.mubr.bf16.mxu0 %v1246
      %1321 = vmatmul.mubr.bf16.gmra.mxu0 %v1081
      %v1322 = vpop.f32.mrf.mxu0
      %v1323 = vadd.f32 0.0, %v1322
      %v1324 = vpop.f32.mrf.mxu0
      %v1325 = vadd.f32 0.0, %v1324
      %v1326 = vpop.f32.mrf.mxu0
      %v1327 = vadd.f32 0.0, %v1326
      %v1328 = vpop.f32.mrf.mxu0
      %v1329 = vadd.f32 0.0, %v1328
      %1330 = vdwg.mxu0
      %1331 = vmatprep.subr.bf16.mxu0 0
      %1332 = vmatpush1.bf16.msra.mxu0 %v1202
      %1333 = vmatprep.subr.bf16.mxu0 0
      %1334 = vmatpush1.bf16.msra.mxu0 %v1199
      %1335 = vmatprep.subr.bf16.mxu0 0
      %1336 = vmatpush1.bf16.msra.mxu0 %v1196
      %1337 = vmatprep.subr.bf16.mxu0 0
      %1338 = vmatpush1.bf16.msra.mxu0 %v1193
      %1339 = vmatprep.subr.bf16.mxu0 0
      %1340 = vmatpush1.bf16.msra.mxu0 %v1190
      %1341 = vmatprep.subr.bf16.mxu0 0
      %1342 = vmatpush1.bf16.msra.mxu0 %v1187
      %1343 = vmatprep.subr.bf16.mxu0 0
      %1344 = vmatpush1.bf16.msra.mxu0 %v1184
      %1345 = vmatprep.subr.bf16.mxu0 0
      %1346 = vmatpush1.bf16.msra.mxu0 %v1181
      %1347 = vmatprep.subr.bf16.mxu0 0
      %1348 = vmatpush2.bf16.msra.mxu0 0
      %1349 = vmatprep.subr.bf16.mxu0 0
      %1350 = vmatpush2.bf16.msra.mxu0 0
      %1351 = vmatprep.subr.bf16.mxu0 0
      %1352 = vmatpush2.bf16.msra.mxu0 0
      %1353 = vmatprep.subr.bf16.mxu0 0
      %1354 = vmatpush2.bf16.msra.mxu0 0
      %1355 = vmatprep.subr.bf16.mxu0 0
      %1356 = vmatpush2.bf16.msra.mxu0 0
      %1357 = vmatprep.subr.bf16.mxu0 0
      %1358 = vmatpush2.bf16.msra.mxu0 0
      %1359 = vmatprep.subr.bf16.mxu0 0
      %1360 = vmatpush2.bf16.msra.mxu0 0
      %1361 = vmatprep.subr.bf16.mxu0 0
      %1362 = vmatpush2.bf16.msra.mxu0 %v1205
      %1363 = vmatprep.mubr.bf16.mxu0 %v1234
      %1364 = vmatmul.mubr.bf16.gmra.mxu0 %v1064
      %v1365 = vpop.f32.mrf.mxu0
      %v1366 = vadd.f32 0.0, %v1365
      %v1367 = vpop.f32.mrf.mxu0
      %v1368 = vpop.f32.mrf.mxu0
      %v1369 = vadd.f32 0.0, %v1368
      %v1370 = vpop.f32.mrf.mxu0
      %1371 = vmatprep.mubr.bf16.mxu0 %v1237
      %1372 = vmatmul.mubr.bf16.gmra.mxu0 %v1069
      %v1373 = vpop.f32.mrf.mxu0
      %v1374 = vadd.f32 0.0, %v1373
      %v1375 = vpop.f32.mrf.mxu0
      %v1376 = vpop.f32.mrf.mxu0
      %v1377 = vadd.f32 0.0, %v1376
      %v1378 = vpop.f32.mrf.mxu0
      %1379 = vmatprep.mubr.bf16.mxu0 %v1240
      %1380 = vmatmul.mubr.bf16.gmra.mxu0 %v1073
      %v1381 = vpop.f32.mrf.mxu0
      %v1382 = vadd.f32 0.0, %v1381
      %v1383 = vpop.f32.mrf.mxu0
      %v1384 = vpop.f32.mrf.mxu0
      %v1385 = vadd.f32 0.0, %v1384
      %v1386 = vpop.f32.mrf.mxu0
      %1387 = vmatprep.mubr.bf16.mxu0 %v1243
      %1388 = vmatmul.mubr.bf16.gmra.mxu0 %v1077
      %v1389 = vpop.f32.mrf.mxu0
      %v1390 = vadd.f32 0.0, %v1389
      %v1391 = vpop.f32.mrf.mxu0
      %v1392 = vpop.f32.mrf.mxu0
      %v1393 = vadd.f32 0.0, %v1392
      %v1394 = vpop.f32.mrf.mxu0
      %1395 = vmatprep.mubr.bf16.mxu0 %v1246
      %1396 = vmatmul.mubr.bf16.gmra.mxu0 %v1081
      %v1397 = vpop.f32.mrf.mxu0
      %v1398 = vadd.f32 0.0, %v1397
      %v1399 = vpop.f32.mrf.mxu0
      %v1400 = vpop.f32.mrf.mxu0
      %v1401 = vadd.f32 0.0, %v1400
      %v1402 = vpop.f32.mrf.mxu0
      %1403 = vdwg.mxu0
      %v1404 = vadd.f32 %v883, %v1283
      %v1405 = vadd.f32 %v885, %v1285
      %v1406 = vadd.f32 %v966, %v1366
      %v1407 = vadd.f32 %v887, %v1287
      %v1408 = vadd.f32 %v889, %v1289
      %v1409 = vadd.f32 %v969, %v1369
      %v1410 = vadd.f32 %v893, %v1293
      %v1411 = vadd.f32 %v895, %v1295
      %v1412 = vadd.f32 %v974, %v1374
      %v1413 = vadd.f32 %v897, %v1297
      %v1414 = vadd.f32 %v899, %v1299
      %v1415 = vadd.f32 %v977, %v1377
      %v1416 = vadd.f32 %v903, %v1303
      %v1417 = vadd.f32 %v905, %v1305
      %v1418 = vadd.f32 %v982, %v1382
      %v1419 = vadd.f32 %v907, %v1307
      %v1420 = vadd.f32 %v909, %v1309
      %v1421 = vadd.f32 %v985, %v1385
      %v1422 = vadd.f32 %v913, %v1313
      %v1423 = vadd.f32 %v915, %v1315
      %v1424 = vadd.f32 %v990, %v1390
      %v1425 = vadd.f32 %v917, %v1317
      %v1426 = vadd.f32 %v919, %v1319
      %v1427 = vadd.f32 %v993, %v1393
      %v1428 = vadd.f32 %v923, %v1323
      %v1429 = vadd.f32 %v925, %v1325
      %v1430 = vadd.f32 %v998, %v1398
      %v1431 = vadd.f32 %v927, %v1327
      %v1432 = vadd.f32 %v929, %v1329
      %v1433 = vadd.f32 %v1001, %v1401
      %v1434 = vld [vmem:[%s165 + $0x10] sm:$0xfc]
      %v1435 = vld [vmem:[%s165 + $0x18] sm:$0xfc]
      %v1436 = vld [vmem:[%s165 + $0x20] sm:$0xff]
      %v1437 = vld [vmem:[%s165 + $0x28] sm:$0xff]
      %v1438 = vld [vmem:[%s165 + $0x30] sm:$0xff]
      %v1439 = vld [vmem:[%s165 + $0x38] sm:$0xff]
      %v1440 = vld [vmem:[%s165 + $0x40] sm:$0xff]
      %v1441 = vld [vmem:[%s165 + $0x48] sm:$0xff]
      %v1442 = vld [vmem:[%s165 + $0x50] sm:$0xff]
      %v1443 = vld [vmem:[%s165 + $0x58] sm:$0xff]
      %v1444 = vld [vmem:[%s165 + $0x60] sm:$0xff]
      %v1445 = vld [vmem:[%s165 + $0x68] sm:$0xff]
      %v1446 = vld [vmem:[%s165 + $0x70] sm:$0xff]
      %v1447 = vld [vmem:[%s165 + $0x78] sm:$0xff]
      %v1448 = vld [vmem:[%s165 + $0x80] sm:$0xff]
      %v1449 = vld [vmem:[%s165 + $0x88] sm:$0xff]
      %v1450 = vld [vmem:[%s165 + $0x90] sm:$0xff]
      %v1451 = vld [vmem:[%s165 + $0x98] sm:$0xff]
      %v1452 = vld [vmem:[%s165 + $0xa0] sm:$0xff]
      %v1453 = vld [vmem:[%s165 + $0xa8] sm:$0xff]
      %v1454 = vld [vmem:[%s165 + $0xb0] sm:$0x3]
      %v1455 = vld [vmem:[%s165 + $0xb8] sm:$0x3]
      %v1456 = vpack.c.bf16 %v1436, %v1434
      %v1457 = vpack.c.bf16 %v1437, %v1435
      %v1458 = vpack.c.bf16 %v1440, %v1438
      %v1459 = vpack.c.bf16 %v1441, %v1439
      %v1460 = vpack.c.bf16 %v1444, %v1442
      %v1461 = vpack.c.bf16 %v1445, %v1443
      %v1462 = vpack.c.bf16 %v1448, %v1446
      %v1463 = vpack.c.bf16 %v1449, %v1447
      %v1464 = vpack.c.bf16 %v1452, %v1450
      %v1465 = vpack.c.bf16 %v1453, %v1451
      %v1466 = vpack.c.bf16 %v1454, %v1454
      %v1467 = vpack.c.bf16 %v1455, %v1455
      %s1468 = scalar_lea.vmem %s1, 648
      %v1469 = vld [vmem:[%s1468] sm:$0xff]
      %v1470 = vld [vmem:[%s1468 + $0x8] sm:$0xf]
      %v1471 = vld [vmem:[%s1468 + $0xc] sm:$0xff]
      %v1472 = vld [vmem:[%s1468 + $0x14] sm:$0xf]
      %v1473 = vld [vmem:[%s1468 + $0x18] sm:$0xff]
      %v1474 = vld [vmem:[%s1468 + $0x20] sm:$0xf]
      %v1475 = vld [vmem:[%s1468 + $0x24] sm:$0xff]
      %v1476 = vld [vmem:[%s1468 + $0x2c] sm:$0xf]
      %v1477 = vld [vmem:[%s1468 + $0x30] sm:$0xff]
      %v1478 = vld [vmem:[%s1468 + $0x38] sm:$0xf]
      %v1479 = vld [vmem:[%s1468 + $0x3c] sm:$0xff]
      %v1480 = vld [vmem:[%s1468 + $0x44] sm:$0xf]
      %v1481 = vld [vmem:[%s1468 + $0x48] sm:$0xff]
      %v1482 = vld [vmem:[%s1468 + $0x50] sm:$0xf]
      %v1483 = vld [vmem:[%s1468 + $0x54] sm:$0xff]
      %v1484 = vld [vmem:[%s1468 + $0x5c] sm:$0xf]
      %v1485 = vld [vmem:[%s1468 + $0x60] sm:$0xff]
      %v1486 = vld [vmem:[%s1468 + $0x68] sm:$0xf]
      %v1487 = vld [vmem:[%s1468 + $0x6c] sm:$0xff]
      %v1488 = vld [vmem:[%s1468 + $0x74] sm:$0xf]
      %v1489 = vld [vmem:[%s1468 + $0x78] sm:$0xff]
      %v1490 = vld [vmem:[%s1468 + $0x80] sm:$0xf]
      %v1491 = vld [vmem:[%s1468 + $0x84] sm:$0xff]
      %v1492 = vld [vmem:[%s1468 + $0x8c] sm:$0xf]
      %v1493 = vld [vmem:[%s1468 + $0x90] sm:$0xff]
      %v1494 = vld [vmem:[%s1468 + $0x98] sm:$0xf]
      %v1495 = vld [vmem:[%s1468 + $0x9c] sm:$0xff]
      %v1496 = vld [vmem:[%s1468 + $0xa4] sm:$0xf]
      %v1497 = vld [vmem:[%s1468 + $0xa8] sm:$0xff]
      %v1498 = vld [vmem:[%s1468 + $0xb0] sm:$0xf]
      %v1499 = vld [vmem:[%s1468 + $0xb4] sm:$0xff]
      %v1500 = vld [vmem:[%s1468 + $0xbc] sm:$0xf]
      %v1501 = vld [vmem:[%s1468 + $0xc0] sm:$0xff]
      %v1502 = vld [vmem:[%s1468 + $0xc8] sm:$0xf]
      %v1503 = vld [vmem:[%s1468 + $0xcc] sm:$0xff]
      %v1504 = vld [vmem:[%s1468 + $0xd4] sm:$0xf]
      %v1517 = vrot.slane %v1456, 1
      %v1518 = vrot.slane %v1458, 1
      %v1519 = vsel %vm1061, %v1517, %v1518
      %v1520 = vrot.slane %v1457, 1
      %v1521 = vrot.slane %v1459, 1
      %v1522 = vsel %vm1061, %v1520, %v1521
      %v1523 = vrot.slane %v1460, 1
      %v1524 = vsel %vm1061, %v1518, %v1523
      %v1525 = vrot.slane %v1461, 1
      %v1526 = vsel %vm1061, %v1521, %v1525
      %v1527 = vrot.slane %v1462, 1
      %v1528 = vsel %vm1061, %v1523, %v1527
      %v1529 = vrot.slane %v1463, 1
      %v1530 = vsel %vm1061, %v1525, %v1529
      %v1531 = vrot.slane %v1464, 1
      %v1532 = vsel %vm1061, %v1527, %v1531
      %v1533 = vrot.slane %v1465, 1
      %v1534 = vsel %vm1061, %v1529, %v1533
      %v1535 = vrot.slane %v1466, 1
      %v1536 = vsel %vm1061, %v1531, %v1535
      %v1537 = vrot.slane %v1467, 1
      %v1538 = vsel %vm1061, %v1533, %v1537
      %v1580 = vunpack.c.l.b16 %v1469
      %v1581 = vunpack.c.h.b16 %v1469
      %v1582 = vunpack.c.l.b16 %v1470
      %v1583 = vunpack.c.l.b16 %v1471
      %v1584 = vunpack.c.h.b16 %v1471
      %v1585 = vunpack.c.l.b16 %v1472
      %v1586 = vunpack.c.l.b16 %v1473
      %v1587 = vunpack.c.h.b16 %v1473
      %v1588 = vunpack.c.l.b16 %v1474
      %v1589 = vunpack.c.l.b16 %v1475
      %v1590 = vunpack.c.h.b16 %v1475
      %v1591 = vunpack.c.l.b16 %v1476
      %v1592 = vunpack.c.l.b16 %v1477
      %v1593 = vunpack.c.h.b16 %v1477
      %v1594 = vunpack.c.l.b16 %v1478
      %v1595 = vunpack.c.l.b16 %v1479
      %v1596 = vunpack.c.h.b16 %v1479
      %v1597 = vunpack.c.l.b16 %v1480
      %v1598 = vunpack.c.l.b16 %v1481
      %v1599 = vunpack.c.h.b16 %v1481
      %v1600 = vunpack.c.l.b16 %v1482
      %v1601 = vunpack.c.l.b16 %v1483
      %v1602 = vunpack.c.h.b16 %v1483
      %v1603 = vunpack.c.l.b16 %v1484
      %v1604 = vunpack.c.l.b16 %v1485
      %v1605 = vunpack.c.h.b16 %v1485
      %v1606 = vunpack.c.l.b16 %v1486
      %v1607 = vunpack.c.l.b16 %v1487
      %v1608 = vunpack.c.h.b16 %v1487
      %v1609 = vunpack.c.l.b16 %v1488
      %v1610 = vunpack.c.l.b16 %v1489
      %v1611 = vunpack.c.h.b16 %v1489
      %v1612 = vunpack.c.l.b16 %v1490
      %v1613 = vunpack.c.l.b16 %v1491
      %v1614 = vunpack.c.h.b16 %v1491
      %v1615 = vunpack.c.l.b16 %v1492
      %v1616 = vunpack.c.l.b16 %v1493
      %v1617 = vunpack.c.h.b16 %v1493
      %v1618 = vunpack.c.l.b16 %v1494
      %v1619 = vunpack.c.l.b16 %v1495
      %v1620 = vunpack.c.h.b16 %v1495
      %v1621 = vunpack.c.l.b16 %v1496
      %v1622 = vunpack.c.l.b16 %v1497
      %v1623 = vunpack.c.h.b16 %v1497
      %v1624 = vunpack.c.l.b16 %v1498
      %v1625 = vunpack.c.l.b16 %v1499
      %v1626 = vunpack.c.h.b16 %v1499
      %v1627 = vunpack.c.l.b16 %v1500
      %v1628 = vunpack.c.l.b16 %v1501
      %v1629 = vunpack.c.h.b16 %v1501
      %v1630 = vunpack.c.l.b16 %v1502
      %v1631 = vunpack.c.l.b16 %v1503
      %v1632 = vunpack.c.h.b16 %v1503
      %v1633 = vunpack.c.l.b16 %v1504
      %v1634 = vpack.c.b16 %v1583, %v1580
      %v1635 = vpack.c.b16 %v1584, %v1581
      %v1636 = vpack.c.b16 %v1585, %v1582
      %v1637 = vpack.c.b16 %v1589, %v1586
      %v1638 = vpack.c.b16 %v1590, %v1587
      %v1639 = vpack.c.b16 %v1591, %v1588
      %v1640 = vpack.c.b16 %v1595, %v1592
      %v1641 = vpack.c.b16 %v1596, %v1593
      %v1642 = vpack.c.b16 %v1597, %v1594
      %v1643 = vpack.c.b16 %v1601, %v1598
      %v1644 = vpack.c.b16 %v1602, %v1599
      %v1645 = vpack.c.b16 %v1603, %v1600
      %v1646 = vpack.c.b16 %v1607, %v1604
      %v1647 = vpack.c.b16 %v1608, %v1605
      %v1648 = vpack.c.b16 %v1609, %v1606
      %v1649 = vpack.c.b16 %v1613, %v1610
      %v1650 = vpack.c.b16 %v1614, %v1611
      %v1651 = vpack.c.b16 %v1615, %v1612
      %v1652 = vpack.c.b16 %v1619, %v1616
      %v1653 = vpack.c.b16 %v1620, %v1617
      %v1654 = vpack.c.b16 %v1621, %v1618
      %v1655 = vpack.c.b16 %v1625, %v1622
      %v1656 = vpack.c.b16 %v1626, %v1623
      %v1657 = vpack.c.b16 %v1627, %v1624
      %v1658 = vpack.c.b16 %v1631, %v1628
      %v1659 = vpack.c.b16 %v1632, %v1629
      %v1660 = vpack.c.b16 %v1633, %v1630
      %v1689 = vsel %vm521, %v1522, 0
      %v1692 = vsel %vm521, %v1526, 0
      %v1695 = vsel %vm521, %v1530, 0
      %v1698 = vsel %vm521, %v1534, 0
      %v1701 = vsel %vm521, %v1538, 0
      %1703 = vmatprep.subr.bf16.mxu0 %v1656
      %1704 = vmatpush1.bf16.msra.mxu0 %v1655
      %1705 = vmatprep.subr.bf16.mxu0 %v1653
      %1706 = vmatpush1.bf16.msra.mxu0 %v1652
      %1707 = vmatprep.subr.bf16.mxu0 %v1650
      %1708 = vmatpush1.bf16.msra.mxu0 %v1649
      %1709 = vmatprep.subr.bf16.mxu0 %v1647
      %1710 = vmatpush1.bf16.msra.mxu0 %v1646
      %1711 = vmatprep.subr.bf16.mxu0 %v1644
      %1712 = vmatpush1.bf16.msra.mxu0 %v1643
      %1713 = vmatprep.subr.bf16.mxu0 %v1641
      %1714 = vmatpush1.bf16.msra.mxu0 %v1640
      %1715 = vmatprep.subr.bf16.mxu0 %v1638
      %1716 = vmatpush1.bf16.msra.mxu0 %v1637
      %1717 = vmatprep.subr.bf16.mxu0 %v1635
      %1718 = vmatpush1.bf16.msra.mxu0 %v1634
      %1719 = vmatprep.subr.bf16.mxu0 0
      %1720 = vmatpush2.bf16.msra.mxu0 0
      %1721 = vmatprep.subr.bf16.mxu0 0
      %1722 = vmatpush2.bf16.msra.mxu0 0
      %1723 = vmatprep.subr.bf16.mxu0 0
      %1724 = vmatpush2.bf16.msra.mxu0 0
      %1725 = vmatprep.subr.bf16.mxu0 0
      %1726 = vmatpush2.bf16.msra.mxu0 0
      %1727 = vmatprep.subr.bf16.mxu0 0
      %1728 = vmatpush2.bf16.msra.mxu0 0
      %1729 = vmatprep.subr.bf16.mxu0 0
      %1730 = vmatpush2.bf16.msra.mxu0 0
      %1731 = vmatprep.subr.bf16.mxu0 0
      %1732 = vmatpush2.bf16.msra.mxu0 0
      %1733 = vmatprep.subr.bf16.mxu0 %v1659
      %1734 = vmatpush2.bf16.msra.mxu0 %v1658
      %1735 = vmatprep.mubr.bf16.mxu0 %v1689
      %1736 = vmatmul.mubr.bf16.gmra.mxu0 %v1519
      %v1737 = vpop.f32.mrf.mxu0
      %v1738 = vadd.f32 0.0, %v1737
      %v1739 = vpop.f32.mrf.mxu0
      %v1740 = vadd.f32 0.0, %v1739
      %v1741 = vpop.f32.mrf.mxu0
      %v1742 = vadd.f32 0.0, %v1741
      %v1743 = vpop.f32.mrf.mxu0
      %v1744 = vadd.f32 0.0, %v1743
      %1745 = vmatprep.mubr.bf16.mxu0 %v1692
      %1746 = vmatmul.mubr.bf16.gmra.mxu0 %v1524
      %v1747 = vpop.f32.mrf.mxu0
      %v1748 = vadd.f32 0.0, %v1747
      %v1749 = vpop.f32.mrf.mxu0
      %v1750 = vadd.f32 0.0, %v1749
      %v1751 = vpop.f32.mrf.mxu0
      %v1752 = vadd.f32 0.0, %v1751
      %v1753 = vpop.f32.mrf.mxu0
      %v1754 = vadd.f32 0.0, %v1753
      %1755 = vmatprep.mubr.bf16.mxu0 %v1695
      %1756 = vmatmul.mubr.bf16.gmra.mxu0 %v1528
      %v1757 = vpop.f32.mrf.mxu0
      %v1758 = vadd.f32 0.0, %v1757
      %v1759 = vpop.f32.mrf.mxu0
      %v1760 = vadd.f32 0.0, %v1759
      %v1761 = vpop.f32.mrf.mxu0
      %v1762 = vadd.f32 0.0, %v1761
      %v1763 = vpop.f32.mrf.mxu0
      %v1764 = vadd.f32 0.0, %v1763
      %1765 = vmatprep.mubr.bf16.mxu0 %v1698
      %1766 = vmatmul.mubr.bf16.gmra.mxu0 %v1532
      %v1767 = vpop.f32.mrf.mxu0
      %v1768 = vadd.f32 0.0, %v1767
      %v1769 = vpop.f32.mrf.mxu0
      %v1770 = vadd.f32 0.0, %v1769
      %v1771 = vpop.f32.mrf.mxu0
      %v1772 = vadd.f32 0.0, %v1771
      %v1773 = vpop.f32.mrf.mxu0
      %v1774 = vadd.f32 0.0, %v1773
      %1775 = vmatprep.mubr.bf16.mxu0 %v1701
      %1776 = vmatmul.mubr.bf16.gmra.mxu0 %v1536
      %v1777 = vpop.f32.mrf.mxu0
      %v1778 = vadd.f32 0.0, %v1777
      %v1779 = vpop.f32.mrf.mxu0
      %v1780 = vadd.f32 0.0, %v1779
      %v1781 = vpop.f32.mrf.mxu0
      %v1782 = vadd.f32 0.0, %v1781
      %v1783 = vpop.f32.mrf.mxu0
      %v1784 = vadd.f32 0.0, %v1783
      %1785 = vdwg.mxu0
      %1786 = vmatprep.subr.bf16.mxu0 0
      %1787 = vmatpush1.bf16.msra.mxu0 %v1657
      %1788 = vmatprep.subr.bf16.mxu0 0
      %1789 = vmatpush1.bf16.msra.mxu0 %v1654
      %1790 = vmatprep.subr.bf16.mxu0 0
      %1791 = vmatpush1.bf16.msra.mxu0 %v1651
      %1792 = vmatprep.subr.bf16.mxu0 0
      %1793 = vmatpush1.bf16.msra.mxu0 %v1648
      %1794 = vmatprep.subr.bf16.mxu0 0
      %1795 = vmatpush1.bf16.msra.mxu0 %v1645
      %1796 = vmatprep.subr.bf16.mxu0 0
      %1797 = vmatpush1.bf16.msra.mxu0 %v1642
      %1798 = vmatprep.subr.bf16.mxu0 0
      %1799 = vmatpush1.bf16.msra.mxu0 %v1639
      %1800 = vmatprep.subr.bf16.mxu0 0
      %1801 = vmatpush1.bf16.msra.mxu0 %v1636
      %1802 = vmatprep.subr.bf16.mxu0 0
      %1803 = vmatpush2.bf16.msra.mxu0 0
      %1804 = vmatprep.subr.bf16.mxu0 0
      %1805 = vmatpush2.bf16.msra.mxu0 0
      %1806 = vmatprep.subr.bf16.mxu0 0
      %1807 = vmatpush2.bf16.msra.mxu0 0
      %1808 = vmatprep.subr.bf16.mxu0 0
      %1809 = vmatpush2.bf16.msra.mxu0 0
      %1810 = vmatprep.subr.bf16.mxu0 0
      %1811 = vmatpush2.bf16.msra.mxu0 0
      %1812 = vmatprep.subr.bf16.mxu0 0
      %1813 = vmatpush2.bf16.msra.mxu0 0
      %1814 = vmatprep.subr.bf16.mxu0 0
      %1815 = vmatpush2.bf16.msra.mxu0 0
      %1816 = vmatprep.subr.bf16.mxu0 0
      %1817 = vmatpush2.bf16.msra.mxu0 %v1660
      %1818 = vmatprep.mubr.bf16.mxu0 %v1689
      %1819 = vmatmul.mubr.bf16.gmra.mxu0 %v1519
      %v1820 = vpop.f32.mrf.mxu0
      %v1821 = vadd.f32 0.0, %v1820
      %v1822 = vpop.f32.mrf.mxu0
      %v1823 = vpop.f32.mrf.mxu0
      %v1824 = vadd.f32 0.0, %v1823
      %v1825 = vpop.f32.mrf.mxu0
      %1826 = vmatprep.mubr.bf16.mxu0 %v1692
      %1827 = vmatmul.mubr.bf16.gmra.mxu0 %v1524
      %v1828 = vpop.f32.mrf.mxu0
      %v1829 = vadd.f32 0.0, %v1828
      %v1830 = vpop.f32.mrf.mxu0
      %v1831 = vpop.f32.mrf.mxu0
      %v1832 = vadd.f32 0.0, %v1831
      %v1833 = vpop.f32.mrf.mxu0
      %1834 = vmatprep.mubr.bf16.mxu0 %v1695
      %1835 = vmatmul.mubr.bf16.gmra.mxu0 %v1528
      %v1836 = vpop.f32.mrf.mxu0
      %v1837 = vadd.f32 0.0, %v1836
      %v1838 = vpop.f32.mrf.mxu0
      %v1839 = vpop.f32.mrf.mxu0
      %v1840 = vadd.f32 0.0, %v1839
      %v1841 = vpop.f32.mrf.mxu0
      %1842 = vmatprep.mubr.bf16.mxu0 %v1698
      %1843 = vmatmul.mubr.bf16.gmra.mxu0 %v1532
      %v1844 = vpop.f32.mrf.mxu0
      %v1845 = vadd.f32 0.0, %v1844
      %v1846 = vpop.f32.mrf.mxu0
      %v1847 = vpop.f32.mrf.mxu0
      %v1848 = vadd.f32 0.0, %v1847
      %v1849 = vpop.f32.mrf.mxu0
      %1850 = vmatprep.mubr.bf16.mxu0 %v1701
      %1851 = vmatmul.mubr.bf16.gmra.mxu0 %v1536
      %v1852 = vpop.f32.mrf.mxu0
      %v1853 = vadd.f32 0.0, %v1852
      %v1854 = vpop.f32.mrf.mxu0
      %v1855 = vpop.f32.mrf.mxu0
      %v1856 = vadd.f32 0.0, %v1855
      %v1857 = vpop.f32.mrf.mxu0
      %1858 = vdwg.mxu0
      %v1859 = vadd.f32 %v1404, %v1738
      %v1860 = vadd.f32 %v1405, %v1740
      %v1861 = vadd.f32 %v1406, %v1821
      %v1862 = vadd.f32 %v1407, %v1742
      %v1863 = vadd.f32 %v1408, %v1744
      %v1864 = vadd.f32 %v1409, %v1824
      %v1865 = vadd.f32 %v1410, %v1748
      %v1866 = vadd.f32 %v1411, %v1750
      %v1867 = vadd.f32 %v1412, %v1829
      %v1868 = vadd.f32 %v1413, %v1752
      %v1869 = vadd.f32 %v1414, %v1754
      %v1870 = vadd.f32 %v1415, %v1832
      %v1871 = vadd.f32 %v1416, %v1758
      %v1872 = vadd.f32 %v1417, %v1760
      %v1873 = vadd.f32 %v1418, %v1837
      %v1874 = vadd.f32 %v1419, %v1762
      %v1875 = vadd.f32 %v1420, %v1764
      %v1876 = vadd.f32 %v1421, %v1840
      %v1877 = vadd.f32 %v1422, %v1768
      %v1878 = vadd.f32 %v1423, %v1770
      %v1879 = vadd.f32 %v1424, %v1845
      %v1880 = vadd.f32 %v1425, %v1772
      %v1881 = vadd.f32 %v1426, %v1774
      %v1882 = vadd.f32 %v1427, %v1848
      %v1883 = vadd.f32 %v1428, %v1778
      %v1884 = vadd.f32 %v1429, %v1780
      %v1885 = vadd.f32 %v1430, %v1853
      %v1886 = vadd.f32 %v1431, %v1782
      %v1887 = vadd.f32 %v1432, %v1784
      %v1888 = vadd.f32 %v1433, %v1856
      %v1889 = vld [vmem:[%s165 + $0x10] sm:$0xf8]
      %v1890 = vld [vmem:[%s165 + $0x18] sm:$0xf8]
      %v1891 = vld [vmem:[%s165 + $0xb0] sm:$0x7]
      %v1892 = vld [vmem:[%s165 + $0xb8] sm:$0x7]
      %v1893 = vpack.c.bf16 %v1436, %v1889
      %v1894 = vpack.c.bf16 %v1437, %v1890
      %v1895 = vpack.c.bf16 %v1891, %v1891
      %v1896 = vpack.c.bf16 %v1892, %v1892
      %s1897 = scalar_lea.vmem %s1, 864
      %v1898 = vld [vmem:[%s1897] sm:$0xff]
      %v1899 = vld [vmem:[%s1897 + $0x8] sm:$0xf]
      %v1900 = vld [vmem:[%s1897 + $0xc] sm:$0xff]
      %v1901 = vld [vmem:[%s1897 + $0x14] sm:$0xf]
      %v1902 = vld [vmem:[%s1897 + $0x18] sm:$0xff]
      %v1903 = vld [vmem:[%s1897 + $0x20] sm:$0xf]
      %v1904 = vld [vmem:[%s1897 + $0x24] sm:$0xff]
      %v1905 = vld [vmem:[%s1897 + $0x2c] sm:$0xf]
      %v1906 = vld [vmem:[%s1897 + $0x30] sm:$0xff]
      %v1907 = vld [vmem:[%s1897 + $0x38] sm:$0xf]
      %v1908 = vld [vmem:[%s1897 + $0x3c] sm:$0xff]
      %v1909 = vld [vmem:[%s1897 + $0x44] sm:$0xf]
      %v1910 = vld [vmem:[%s1897 + $0x48] sm:$0xff]
      %v1911 = vld [vmem:[%s1897 + $0x50] sm:$0xf]
      %v1912 = vld [vmem:[%s1897 + $0x54] sm:$0xff]
      %v1913 = vld [vmem:[%s1897 + $0x5c] sm:$0xf]
      %v1914 = vld [vmem:[%s1897 + $0x60] sm:$0xff]
      %v1915 = vld [vmem:[%s1897 + $0x68] sm:$0xf]
      %v1916 = vld [vmem:[%s1897 + $0x6c] sm:$0xff]
      %v1917 = vld [vmem:[%s1897 + $0x74] sm:$0xf]
      %v1918 = vld [vmem:[%s1897 + $0x78] sm:$0xff]
      %v1919 = vld [vmem:[%s1897 + $0x80] sm:$0xf]
      %v1920 = vld [vmem:[%s1897 + $0x84] sm:$0xff]
      %v1921 = vld [vmem:[%s1897 + $0x8c] sm:$0xf]
      %v1922 = vld [vmem:[%s1897 + $0x90] sm:$0xff]
      %v1923 = vld [vmem:[%s1897 + $0x98] sm:$0xf]
      %v1924 = vld [vmem:[%s1897 + $0x9c] sm:$0xff]
      %v1925 = vld [vmem:[%s1897 + $0xa4] sm:$0xf]
      %v1926 = vld [vmem:[%s1897 + $0xa8] sm:$0xff]
      %v1927 = vld [vmem:[%s1897 + $0xb0] sm:$0xf]
      %v1928 = vld [vmem:[%s1897 + $0xb4] sm:$0xff]
      %v1929 = vld [vmem:[%s1897 + $0xbc] sm:$0xf]
      %v1930 = vld [vmem:[%s1897 + $0xc0] sm:$0xff]
      %v1931 = vld [vmem:[%s1897 + $0xc8] sm:$0xf]
      %v1932 = vld [vmem:[%s1897 + $0xcc] sm:$0xff]
      %v1933 = vld [vmem:[%s1897 + $0xd4] sm:$0xf]
      %vm1934 = vsmask.f32 6400
      %v1936 = vshrl.u32 %v1893, 16
      %v1938 = vrot.slane %v1936, 1
      %v1939 = vshll.u32 %v1893, 16
      %v1941 = vrot.slane %v1939, 2
      %v1942 = vor.u32 %v1938, %v1941
      %v1944 = vshrl.u32 %v1458, 16
      %v1946 = vrot.slane %v1944, 1
      %v1947 = vshll.u32 %v1458, 16
      %v1949 = vrot.slane %v1947, 2
      %v1950 = vor.u32 %v1946, %v1949
      %v1951 = vsel %vm1934, %v1942, %v1950
      %v1953 = vshrl.u32 %v1894, 16
      %v1955 = vrot.slane %v1953, 1
      %v1956 = vshll.u32 %v1894, 16
      %v1958 = vrot.slane %v1956, 2
      %v1959 = vor.u32 %v1955, %v1958
      %v1961 = vshrl.u32 %v1459, 16
      %v1963 = vrot.slane %v1961, 1
      %v1964 = vshll.u32 %v1459, 16
      %v1966 = vrot.slane %v1964, 2
      %v1967 = vor.u32 %v1963, %v1966
      %v1968 = vsel %vm1934, %v1959, %v1967
      %v1970 = vshrl.u32 %v1460, 16
      %v1972 = vrot.slane %v1970, 1
      %v1973 = vshll.u32 %v1460, 16
      %v1975 = vrot.slane %v1973, 2
      %v1976 = vor.u32 %v1972, %v1975
      %v1977 = vsel %vm1934, %v1950, %v1976
      %v1979 = vshrl.u32 %v1461, 16
      %v1981 = vrot.slane %v1979, 1
      %v1982 = vshll.u32 %v1461, 16
      %v1984 = vrot.slane %v1982, 2
      %v1985 = vor.u32 %v1981, %v1984
      %v1986 = vsel %vm1934, %v1967, %v1985
      %v1988 = vshrl.u32 %v1462, 16
      %v1990 = vrot.slane %v1988, 1
      %v1991 = vshll.u32 %v1462, 16
      %v1993 = vrot.slane %v1991, 2
      %v1994 = vor.u32 %v1990, %v1993
      %v1995 = vsel %vm1934, %v1976, %v1994
      %v1997 = vshrl.u32 %v1463, 16
      %v1999 = vrot.slane %v1997, 1
      %v2000 = vshll.u32 %v1463, 16
      %v2002 = vrot.slane %v2000, 2
      %v2003 = vor.u32 %v1999, %v2002
      %v2004 = vsel %vm1934, %v1985, %v2003
      %v2006 = vshrl.u32 %v1464, 16
      %v2008 = vrot.slane %v2006, 1
      %v2009 = vshll.u32 %v1464, 16
      %v2011 = vrot.slane %v2009, 2
      %v2012 = vor.u32 %v2008, %v2011
      %v2013 = vsel %vm1934, %v1994, %v2012
      %v2015 = vshrl.u32 %v1465, 16
      %v2017 = vrot.slane %v2015, 1
      %v2018 = vshll.u32 %v1465, 16
      %v2020 = vrot.slane %v2018, 2
      %v2021 = vor.u32 %v2017, %v2020
      %v2022 = vsel %vm1934, %v2003, %v2021
      %v2024 = vshrl.u32 %v1895, 16
      %v2026 = vrot.slane %v2024, 1
      %v2027 = vshll.u32 %v1895, 16
      %v2029 = vrot.slane %v2027, 2
      %v2030 = vor.u32 %v2026, %v2029
      %v2031 = vsel %vm1934, %v2012, %v2030
      %v2033 = vshrl.u32 %v1896, 16
      %v2035 = vrot.slane %v2033, 1
      %v2036 = vshll.u32 %v1896, 16
      %v2038 = vrot.slane %v2036, 2
      %v2039 = vor.u32 %v2035, %v2038
      %v2040 = vsel %vm1934, %v2021, %v2039
      %v2082 = vunpack.c.l.b16 %v1898
      %v2083 = vunpack.c.h.b16 %v1898
      %v2084 = vunpack.c.l.b16 %v1899
      %v2085 = vunpack.c.l.b16 %v1900
      %v2086 = vunpack.c.h.b16 %v1900
      %v2087 = vunpack.c.l.b16 %v1901
      %v2088 = vunpack.c.l.b16 %v1902
      %v2089 = vunpack.c.h.b16 %v1902
      %v2090 = vunpack.c.l.b16 %v1903
      %v2091 = vunpack.c.l.b16 %v1904
      %v2092 = vunpack.c.h.b16 %v1904
      %v2093 = vunpack.c.l.b16 %v1905
      %v2094 = vunpack.c.l.b16 %v1906
      %v2095 = vunpack.c.h.b16 %v1906
      %v2096 = vunpack.c.l.b16 %v1907
      %v2097 = vunpack.c.l.b16 %v1908
      %v2098 = vunpack.c.h.b16 %v1908
      %v2099 = vunpack.c.l.b16 %v1909
      %v2100 = vunpack.c.l.b16 %v1910
      %v2101 = vunpack.c.h.b16 %v1910
      %v2102 = vunpack.c.l.b16 %v1911
      %v2103 = vunpack.c.l.b16 %v1912
      %v2104 = vunpack.c.h.b16 %v1912
      %v2105 = vunpack.c.l.b16 %v1913
      %v2106 = vunpack.c.l.b16 %v1914
      %v2107 = vunpack.c.h.b16 %v1914
      %v2108 = vunpack.c.l.b16 %v1915
      %v2109 = vunpack.c.l.b16 %v1916
      %v2110 = vunpack.c.h.b16 %v1916
      %v2111 = vunpack.c.l.b16 %v1917
      %v2112 = vunpack.c.l.b16 %v1918
      %v2113 = vunpack.c.h.b16 %v1918
      %v2114 = vunpack.c.l.b16 %v1919
      %v2115 = vunpack.c.l.b16 %v1920
      %v2116 = vunpack.c.h.b16 %v1920
      %v2117 = vunpack.c.l.b16 %v1921
      %v2118 = vunpack.c.l.b16 %v1922
      %v2119 = vunpack.c.h.b16 %v1922
      %v2120 = vunpack.c.l.b16 %v1923
      %v2121 = vunpack.c.l.b16 %v1924
      %v2122 = vunpack.c.h.b16 %v1924
      %v2123 = vunpack.c.l.b16 %v1925
      %v2124 = vunpack.c.l.b16 %v1926
      %v2125 = vunpack.c.h.b16 %v1926
      %v2126 = vunpack.c.l.b16 %v1927
      %v2127 = vunpack.c.l.b16 %v1928
      %v2128 = vunpack.c.h.b16 %v1928
      %v2129 = vunpack.c.l.b16 %v1929
      %v2130 = vunpack.c.l.b16 %v1930
      %v2131 = vunpack.c.h.b16 %v1930
      %v2132 = vunpack.c.l.b16 %v1931
      %v2133 = vunpack.c.l.b16 %v1932
      %v2134 = vunpack.c.h.b16 %v1932
      %v2135 = vunpack.c.l.b16 %v1933
      %v2136 = vpack.c.b16 %v2085, %v2082
      %v2137 = vpack.c.b16 %v2086, %v2083
      %v2138 = vpack.c.b16 %v2087, %v2084
      %v2139 = vpack.c.b16 %v2091, %v2088
      %v2140 = vpack.c.b16 %v2092, %v2089
      %v2141 = vpack.c.b16 %v2093, %v2090
      %v2142 = vpack.c.b16 %v2097, %v2094
      %v2143 = vpack.c.b16 %v2098, %v2095
      %v2144 = vpack.c.b16 %v2099, %v2096
      %v2145 = vpack.c.b16 %v2103, %v2100
      %v2146 = vpack.c.b16 %v2104, %v2101
      %v2147 = vpack.c.b16 %v2105, %v2102
      %v2148 = vpack.c.b16 %v2109, %v2106
      %v2149 = vpack.c.b16 %v2110, %v2107
      %v2150 = vpack.c.b16 %v2111, %v2108
      %v2151 = vpack.c.b16 %v2115, %v2112
      %v2152 = vpack.c.b16 %v2116, %v2113
      %v2153 = vpack.c.b16 %v2117, %v2114
      %v2154 = vpack.c.b16 %v2121, %v2118
      %v2155 = vpack.c.b16 %v2122, %v2119
      %v2156 = vpack.c.b16 %v2123, %v2120
      %v2157 = vpack.c.b16 %v2127, %v2124
      %v2158 = vpack.c.b16 %v2128, %v2125
      %v2159 = vpack.c.b16 %v2129, %v2126
      %v2160 = vpack.c.b16 %v2133, %v2130
      %v2161 = vpack.c.b16 %v2134, %v2131
      %v2162 = vpack.c.b16 %v2135, %v2132
      %v2191 = vsel %vm521, %v1968, 0
      %v2194 = vsel %vm521, %v1986, 0
      %v2197 = vsel %vm521, %v2004, 0
      %v2200 = vsel %vm521, %v2022, 0
      %v2203 = vsel %vm521, %v2040, 0
      %2205 = vmatprep.subr.bf16.mxu0 %v2158
      %2206 = vmatpush1.bf16.msra.mxu0 %v2157
      %2207 = vmatprep.subr.bf16.mxu0 %v2155
      %2208 = vmatpush1.bf16.msra.mxu0 %v2154
      %2209 = vmatprep.subr.bf16.mxu0 %v2152
      %2210 = vmatpush1.bf16.msra.mxu0 %v2151
      %2211 = vmatprep.subr.bf16.mxu0 %v2149
      %2212 = vmatpush1.bf16.msra.mxu0 %v2148
      %2213 = vmatprep.subr.bf16.mxu0 %v2146
      %2214 = vmatpush1.bf16.msra.mxu0 %v2145
      %2215 = vmatprep.subr.bf16.mxu0 %v2143
      %2216 = vmatpush1.bf16.msra.mxu0 %v2142
      %2217 = vmatprep.subr.bf16.mxu0 %v2140
      %2218 = vmatpush1.bf16.msra.mxu0 %v2139
      %2219 = vmatprep.subr.bf16.mxu0 %v2137
      %2220 = vmatpush1.bf16.msra.mxu0 %v2136
      %2221 = vmatprep.subr.bf16.mxu0 0
      %2222 = vmatpush2.bf16.msra.mxu0 0
      %2223 = vmatprep.subr.bf16.mxu0 0
      %2224 = vmatpush2.bf16.msra.mxu0 0
      %2225 = vmatprep.subr.bf16.mxu0 0
      %2226 = vmatpush2.bf16.msra.mxu0 0
      %2227 = vmatprep.subr.bf16.mxu0 0
      %2228 = vmatpush2.bf16.msra.mxu0 0
      %2229 = vmatprep.subr.bf16.mxu0 0
      %2230 = vmatpush2.bf16.msra.mxu0 0
      %2231 = vmatprep.subr.bf16.mxu0 0
      %2232 = vmatpush2.bf16.msra.mxu0 0
      %2233 = vmatprep.subr.bf16.mxu0 0
      %2234 = vmatpush2.bf16.msra.mxu0 0
      %2235 = vmatprep.subr.bf16.mxu0 %v2161
      %2236 = vmatpush2.bf16.msra.mxu0 %v2160
      %2237 = vmatprep.mubr.bf16.mxu0 %v2191
      %2238 = vmatmul.mubr.bf16.gmra.mxu0 %v1951
      %v2239 = vpop.f32.mrf.mxu0
      %v2240 = vadd.f32 0.0, %v2239
      %v2241 = vpop.f32.mrf.mxu0
      %v2242 = vadd.f32 0.0, %v2241
      %v2243 = vpop.f32.mrf.mxu0
      %v2244 = vadd.f32 0.0, %v2243
      %v2245 = vpop.f32.mrf.mxu0
      %v2246 = vadd.f32 0.0, %v2245
      %2247 = vmatprep.mubr.bf16.mxu0 %v2194
      %2248 = vmatmul.mubr.bf16.gmra.mxu0 %v1977
      %v2249 = vpop.f32.mrf.mxu0
      %v2250 = vadd.f32 0.0, %v2249
      %v2251 = vpop.f32.mrf.mxu0
      %v2252 = vadd.f32 0.0, %v2251
      %v2253 = vpop.f32.mrf.mxu0
      %v2254 = vadd.f32 0.0, %v2253
      %v2255 = vpop.f32.mrf.mxu0
      %v2256 = vadd.f32 0.0, %v2255
      %2257 = vmatprep.mubr.bf16.mxu0 %v2197
      %2258 = vmatmul.mubr.bf16.gmra.mxu0 %v1995
      %v2259 = vpop.f32.mrf.mxu0
      %v2260 = vadd.f32 0.0, %v2259
      %v2261 = vpop.f32.mrf.mxu0
      %v2262 = vadd.f32 0.0, %v2261
      %v2263 = vpop.f32.mrf.mxu0
      %v2264 = vadd.f32 0.0, %v2263
      %v2265 = vpop.f32.mrf.mxu0
      %v2266 = vadd.f32 0.0, %v2265
      %2267 = vmatprep.mubr.bf16.mxu0 %v2200
      %2268 = vmatmul.mubr.bf16.gmra.mxu0 %v2013
      %v2269 = vpop.f32.mrf.mxu0
      %v2270 = vadd.f32 0.0, %v2269
      %v2271 = vpop.f32.mrf.mxu0
      %v2272 = vadd.f32 0.0, %v2271
      %v2273 = vpop.f32.mrf.mxu0
      %v2274 = vadd.f32 0.0, %v2273
      %v2275 = vpop.f32.mrf.mxu0
      %v2276 = vadd.f32 0.0, %v2275
      %2277 = vmatprep.mubr.bf16.mxu0 %v2203
      %2278 = vmatmul.mubr.bf16.gmra.mxu0 %v2031
      %v2279 = vpop.f32.mrf.mxu0
      %v2280 = vadd.f32 0.0, %v2279
      %v2281 = vpop.f32.mrf.mxu0
      %v2282 = vadd.f32 0.0, %v2281
      %v2283 = vpop.f32.mrf.mxu0
      %v2284 = vadd.f32 0.0, %v2283
      %v2285 = vpop.f32.mrf.mxu0
      %v2286 = vadd.f32 0.0, %v2285
      %2287 = vdwg.mxu0
      %2288 = vmatprep.subr.bf16.mxu0 0
      %2289 = vmatpush1.bf16.msra.mxu0 %v2159
      %2290 = vmatprep.subr.bf16.mxu0 0
      %2291 = vmatpush1.bf16.msra.mxu0 %v2156
      %2292 = vmatprep.subr.bf16.mxu0 0
      %2293 = vmatpush1.bf16.msra.mxu0 %v2153
      %2294 = vmatprep.subr.bf16.mxu0 0
      %2295 = vmatpush1.bf16.msra.mxu0 %v2150
      %2296 = vmatprep.subr.bf16.mxu0 0
      %2297 = vmatpush1.bf16.msra.mxu0 %v2147
      %2298 = vmatprep.subr.bf16.mxu0 0
      %2299 = vmatpush1.bf16.msra.mxu0 %v2144
      %2300 = vmatprep.subr.bf16.mxu0 0
      %2301 = vmatpush1.bf16.msra.mxu0 %v2141
      %2302 = vmatprep.subr.bf16.mxu0 0
      %2303 = vmatpush1.bf16.msra.mxu0 %v2138
      %2304 = vmatprep.subr.bf16.mxu0 0
      %2305 = vmatpush2.bf16.msra.mxu0 0
      %2306 = vmatprep.subr.bf16.mxu0 0
      %2307 = vmatpush2.bf16.msra.mxu0 0
      %2308 = vmatprep.subr.bf16.mxu0 0
      %2309 = vmatpush2.bf16.msra.mxu0 0
      %2310 = vmatprep.subr.bf16.mxu0 0
      %2311 = vmatpush2.bf16.msra.mxu0 0
      %2312 = vmatprep.subr.bf16.mxu0 0
      %2313 = vmatpush2.bf16.msra.mxu0 0
      %2314 = vmatprep.subr.bf16.mxu0 0
      %2315 = vmatpush2.bf16.msra.mxu0 0
      %2316 = vmatprep.subr.bf16.mxu0 0
      %2317 = vmatpush2.bf16.msra.mxu0 0
      %2318 = vmatprep.subr.bf16.mxu0 0
      %2319 = vmatpush2.bf16.msra.mxu0 %v2162
      %2320 = vmatprep.mubr.bf16.mxu0 %v2191
      %2321 = vmatmul.mubr.bf16.gmra.mxu0 %v1951
      %v2322 = vpop.f32.mrf.mxu0
      %v2323 = vadd.f32 0.0, %v2322
      %v2324 = vpop.f32.mrf.mxu0
      %v2325 = vpop.f32.mrf.mxu0
      %v2326 = vadd.f32 0.0, %v2325
      %v2327 = vpop.f32.mrf.mxu0
      %2328 = vmatprep.mubr.bf16.mxu0 %v2194
      %2329 = vmatmul.mubr.bf16.gmra.mxu0 %v1977
      %v2330 = vpop.f32.mrf.mxu0
      %v2331 = vadd.f32 0.0, %v2330
      %v2332 = vpop.f32.mrf.mxu0
      %v2333 = vpop.f32.mrf.mxu0
      %v2334 = vadd.f32 0.0, %v2333
      %v2335 = vpop.f32.mrf.mxu0
      %2336 = vmatprep.mubr.bf16.mxu0 %v2197
      %2337 = vmatmul.mubr.bf16.gmra.mxu0 %v1995
      %v2338 = vpop.f32.mrf.mxu0
      %v2339 = vadd.f32 0.0, %v2338
      %v2340 = vpop.f32.mrf.mxu0
      %v2341 = vpop.f32.mrf.mxu0
      %v2342 = vadd.f32 0.0, %v2341
      %v2343 = vpop.f32.mrf.mxu0
      %2344 = vmatprep.mubr.bf16.mxu0 %v2200
      %2345 = vmatmul.mubr.bf16.gmra.mxu0 %v2013
      %v2346 = vpop.f32.mrf.mxu0
      %v2347 = vadd.f32 0.0, %v2346
      %v2348 = vpop.f32.mrf.mxu0
      %v2349 = vpop.f32.mrf.mxu0
      %v2350 = vadd.f32 0.0, %v2349
      %v2351 = vpop.f32.mrf.mxu0
      %2352 = vmatprep.mubr.bf16.mxu0 %v2203
      %2353 = vmatmul.mubr.bf16.gmra.mxu0 %v2031
      %v2354 = vpop.f32.mrf.mxu0
      %v2355 = vadd.f32 0.0, %v2354
      %v2356 = vpop.f32.mrf.mxu0
      %v2357 = vpop.f32.mrf.mxu0
      %v2358 = vadd.f32 0.0, %v2357
      %v2359 = vpop.f32.mrf.mxu0
      %2360 = vdwg.mxu0
      %v2361 = vadd.f32 %v1859, %v2240
      %v2362 = vadd.f32 %v1860, %v2242
      %v2363 = vadd.f32 %v1861, %v2323
      %v2364 = vadd.f32 %v1862, %v2244
      %v2365 = vadd.f32 %v1863, %v2246
      %v2366 = vadd.f32 %v1864, %v2326
      %v2367 = vadd.f32 %v1865, %v2250
      %v2368 = vadd.f32 %v1866, %v2252
      %v2369 = vadd.f32 %v1867, %v2331
      %v2370 = vadd.f32 %v1868, %v2254
      %v2371 = vadd.f32 %v1869, %v2256
      %v2372 = vadd.f32 %v1870, %v2334
      %v2373 = vadd.f32 %v1871, %v2260
      %v2374 = vadd.f32 %v1872, %v2262
      %v2375 = vadd.f32 %v1873, %v2339
      %v2376 = vadd.f32 %v1874, %v2264
      %v2377 = vadd.f32 %v1875, %v2266
      %v2378 = vadd.f32 %v1876, %v2342
      %v2379 = vadd.f32 %v1877, %v2270
      %v2380 = vadd.f32 %v1878, %v2272
      %v2381 = vadd.f32 %v1879, %v2347
      %v2382 = vadd.f32 %v1880, %v2274
      %v2383 = vadd.f32 %v1881, %v2276
      %v2384 = vadd.f32 %v1882, %v2350
      %v2385 = vadd.f32 %v1883, %v2280
      %v2386 = vadd.f32 %v1884, %v2282
      %v2387 = vadd.f32 %v1885, %v2355
      %v2388 = vadd.f32 %v1886, %v2284
      %v2389 = vadd.f32 %v1887, %v2286
      %v2390 = vadd.f32 %v1888, %v2358
      %v2391 = vld [vmem:[%s165 + $0x10] sm:$0xf0]
      %v2392 = vld [vmem:[%s165 + $0x18] sm:$0xf0]
      %v2393 = vld [vmem:[%s165 + $0xb0] sm:$0xf]
      %v2394 = vld [vmem:[%s165 + $0xb8] sm:$0xf]
      %v2395 = vpack.c.bf16 %v1436, %v2391
      %v2396 = vpack.c.bf16 %v1437, %v2392
      %v2397 = vpack.c.bf16 %v2393, %v2393
      %v2398 = vpack.c.bf16 %v2394, %v2394
      %s2399 = scalar_lea.vmem %s1, 1080
      %v2400 = vld [vmem:[%s2399] sm:$0xff]
      %v2401 = vld [vmem:[%s2399 + $0x8] sm:$0xf]
      %v2402 = vld [vmem:[%s2399 + $0xc] sm:$0xff]
      %v2403 = vld [vmem:[%s2399 + $0x14] sm:$0xf]
      %v2404 = vld [vmem:[%s2399 + $0x18] sm:$0xff]
      %v2405 = vld [vmem:[%s2399 + $0x20] sm:$0xf]
      %v2406 = vld [vmem:[%s2399 + $0x24] sm:$0xff]
      %v2407 = vld [vmem:[%s2399 + $0x2c] sm:$0xf]
      %v2408 = vld [vmem:[%s2399 + $0x30] sm:$0xff]
      %v2409 = vld [vmem:[%s2399 + $0x38] sm:$0xf]
      %v2410 = vld [vmem:[%s2399 + $0x3c] sm:$0xff]
      %v2411 = vld [vmem:[%s2399 + $0x44] sm:$0xf]
      %v2412 = vld [vmem:[%s2399 + $0x48] sm:$0xff]
      %v2413 = vld [vmem:[%s2399 + $0x50] sm:$0xf]
      %v2414 = vld [vmem:[%s2399 + $0x54] sm:$0xff]
      %v2415 = vld [vmem:[%s2399 + $0x5c] sm:$0xf]
      %v2416 = vld [vmem:[%s2399 + $0x60] sm:$0xff]
      %v2417 = vld [vmem:[%s2399 + $0x68] sm:$0xf]
      %v2418 = vld [vmem:[%s2399 + $0x6c] sm:$0xff]
      %v2419 = vld [vmem:[%s2399 + $0x74] sm:$0xf]
      %v2420 = vld [vmem:[%s2399 + $0x78] sm:$0xff]
      %v2421 = vld [vmem:[%s2399 + $0x80] sm:$0xf]
      %v2422 = vld [vmem:[%s2399 + $0x84] sm:$0xff]
      %v2423 = vld [vmem:[%s2399 + $0x8c] sm:$0xf]
      %v2424 = vld [vmem:[%s2399 + $0x90] sm:$0xff]
      %v2425 = vld [vmem:[%s2399 + $0x98] sm:$0xf]
      %v2426 = vld [vmem:[%s2399 + $0x9c] sm:$0xff]
      %v2427 = vld [vmem:[%s2399 + $0xa4] sm:$0xf]
      %v2428 = vld [vmem:[%s2399 + $0xa8] sm:$0xff]
      %v2429 = vld [vmem:[%s2399 + $0xb0] sm:$0xf]
      %v2430 = vld [vmem:[%s2399 + $0xb4] sm:$0xff]
      %v2431 = vld [vmem:[%s2399 + $0xbc] sm:$0xf]
      %v2432 = vld [vmem:[%s2399 + $0xc0] sm:$0xff]
      %v2433 = vld [vmem:[%s2399 + $0xc8] sm:$0xf]
      %v2434 = vld [vmem:[%s2399 + $0xcc] sm:$0xff]
      %v2435 = vld [vmem:[%s2399 + $0xd4] sm:$0xf]
      %vm2440 = vcmask 1045504
      %v2441 = vrot.slane %v2395, 2
      %v2442 = vrot.slane %v1458, 2
      %v2443 = vsel %vm2440, %v2441, %v2442
      %v2444 = vrot.slane %v2396, 2
      %v2445 = vrot.slane %v1459, 2
      %v2446 = vsel %vm2440, %v2444, %v2445
      %v2447 = vrot.slane %v1460, 2
      %v2448 = vsel %vm2440, %v2442, %v2447
      %v2449 = vrot.slane %v1461, 2
      %v2450 = vsel %vm2440, %v2445, %v2449
      %v2451 = vrot.slane %v1462, 2
      %v2452 = vsel %vm2440, %v2447, %v2451
      %v2453 = vrot.slane %v1463, 2
      %v2454 = vsel %vm2440, %v2449, %v2453
      %v2455 = vrot.slane %v1464, 2
      %v2456 = vsel %vm2440, %v2451, %v2455
      %v2457 = vrot.slane %v1465, 2
      %v2458 = vsel %vm2440, %v2453, %v2457
      %v2459 = vrot.slane %v2397, 2
      %v2460 = vsel %vm2440, %v2455, %v2459
      %v2461 = vrot.slane %v2398, 2
      %v2462 = vsel %vm2440, %v2457, %v2461
      %v2504 = vunpack.c.l.b16 %v2400
      %v2505 = vunpack.c.h.b16 %v2400
      %v2506 = vunpack.c.l.b16 %v2401
      %v2507 = vunpack.c.l.b16 %v2402
      %v2508 = vunpack.c.h.b16 %v2402
      %v2509 = vunpack.c.l.b16 %v2403
      %v2510 = vunpack.c.l.b16 %v2404
      %v2511 = vunpack.c.h.b16 %v2404
      %v2512 = vunpack.c.l.b16 %v2405
      %v2513 = vunpack.c.l.b16 %v2406
      %v2514 = vunpack.c.h.b16 %v2406
      %v2515 = vunpack.c.l.b16 %v2407
      %v2516 = vunpack.c.l.b16 %v2408
      %v2517 = vunpack.c.h.b16 %v2408
      %v2518 = vunpack.c.l.b16 %v2409
      %v2519 = vunpack.c.l.b16 %v2410
      %v2520 = vunpack.c.h.b16 %v2410
      %v2521 = vunpack.c.l.b16 %v2411
      %v2522 = vunpack.c.l.b16 %v2412
      %v2523 = vunpack.c.h.b16 %v2412
      %v2524 = vunpack.c.l.b16 %v2413
      %v2525 = vunpack.c.l.b16 %v2414
      %v2526 = vunpack.c.h.b16 %v2414
      %v2527 = vunpack.c.l.b16 %v2415
      %v2528 = vunpack.c.l.b16 %v2416
      %v2529 = vunpack.c.h.b16 %v2416
      %v2530 = vunpack.c.l.b16 %v2417
      %v2531 = vunpack.c.l.b16 %v2418
      %v2532 = vunpack.c.h.b16 %v2418
      %v2533 = vunpack.c.l.b16 %v2419
      %v2534 = vunpack.c.l.b16 %v2420
      %v2535 = vunpack.c.h.b16 %v2420
      %v2536 = vunpack.c.l.b16 %v2421
      %v2537 = vunpack.c.l.b16 %v2422
      %v2538 = vunpack.c.h.b16 %v2422
      %v2539 = vunpack.c.l.b16 %v2423
      %v2540 = vunpack.c.l.b16 %v2424
      %v2541 = vunpack.c.h.b16 %v2424
      %v2542 = vunpack.c.l.b16 %v2425
      %v2543 = vunpack.c.l.b16 %v2426
      %v2544 = vunpack.c.h.b16 %v2426
      %v2545 = vunpack.c.l.b16 %v2427
      %v2546 = vunpack.c.l.b16 %v2428
      %v2547 = vunpack.c.h.b16 %v2428
      %v2548 = vunpack.c.l.b16 %v2429
      %v2549 = vunpack.c.l.b16 %v2430
      %v2550 = vunpack.c.h.b16 %v2430
      %v2551 = vunpack.c.l.b16 %v2431
      %v2552 = vunpack.c.l.b16 %v2432
      %v2553 = vunpack.c.h.b16 %v2432
      %v2554 = vunpack.c.l.b16 %v2433
      %v2555 = vunpack.c.l.b16 %v2434
      %v2556 = vunpack.c.h.b16 %v2434
      %v2557 = vunpack.c.l.b16 %v2435
      %v2558 = vpack.c.b16 %v2507, %v2504
      %v2559 = vpack.c.b16 %v2508, %v2505
      %v2560 = vpack.c.b16 %v2509, %v2506
      %v2561 = vpack.c.b16 %v2513, %v2510
      %v2562 = vpack.c.b16 %v2514, %v2511
      %v2563 = vpack.c.b16 %v2515, %v2512
      %v2564 = vpack.c.b16 %v2519, %v2516
      %v2565 = vpack.c.b16 %v2520, %v2517
      %v2566 = vpack.c.b16 %v2521, %v2518
      %v2567 = vpack.c.b16 %v2525, %v2522
      %v2568 = vpack.c.b16 %v2526, %v2523
      %v2569 = vpack.c.b16 %v2527, %v2524
      %v2570 = vpack.c.b16 %v2531, %v2528
      %v2571 = vpack.c.b16 %v2532, %v2529
      %v2572 = vpack.c.b16 %v2533, %v2530
      %v2573 = vpack.c.b16 %v2537, %v2534
      %v2574 = vpack.c.b16 %v2538, %v2535
      %v2575 = vpack.c.b16 %v2539, %v2536
      %v2576 = vpack.c.b16 %v2543, %v2540
      %v2577 = vpack.c.b16 %v2544, %v2541
      %v2578 = vpack.c.b16 %v2545, %v2542
      %v2579 = vpack.c.b16 %v2549, %v2546
      %v2580 = vpack.c.b16 %v2550, %v2547
      %v2581 = vpack.c.b16 %v2551, %v2548
      %v2582 = vpack.c.b16 %v2555, %v2552
      %v2583 = vpack.c.b16 %v2556, %v2553
      %v2584 = vpack.c.b16 %v2557, %v2554
      %v2613 = vsel %vm521, %v2446, 0
      %v2616 = vsel %vm521, %v2450, 0
      %v2619 = vsel %vm521, %v2454, 0
      %v2622 = vsel %vm521, %v2458, 0
      %v2625 = vsel %vm521, %v2462, 0
      %2627 = vmatprep.subr.bf16.mxu0 %v2580
      %2628 = vmatpush1.bf16.msra.mxu0 %v2579
      %2629 = vmatprep.subr.bf16.mxu0 %v2577
      %2630 = vmatpush1.bf16.msra.mxu0 %v2576
      %2631 = vmatprep.subr.bf16.mxu0 %v2574
      %2632 = vmatpush1.bf16.msra.mxu0 %v2573
      %2633 = vmatprep.subr.bf16.mxu0 %v2571
      %2634 = vmatpush1.bf16.msra.mxu0 %v2570
      %2635 = vmatprep.subr.bf16.mxu0 %v2568
      %2636 = vmatpush1.bf16.msra.mxu0 %v2567
      %2637 = vmatprep.subr.bf16.mxu0 %v2565
      %2638 = vmatpush1.bf16.msra.mxu0 %v2564
      %2639 = vmatprep.subr.bf16.mxu0 %v2562
      %2640 = vmatpush1.bf16.msra.mxu0 %v2561
      %2641 = vmatprep.subr.bf16.mxu0 %v2559
      %2642 = vmatpush1.bf16.msra.mxu0 %v2558
      %2643 = vmatprep.subr.bf16.mxu0 0
      %2644 = vmatpush2.bf16.msra.mxu0 0
      %2645 = vmatprep.subr.bf16.mxu0 0
      %2646 = vmatpush2.bf16.msra.mxu0 0
      %2647 = vmatprep.subr.bf16.mxu0 0
      %2648 = vmatpush2.bf16.msra.mxu0 0
      %2649 = vmatprep.subr.bf16.mxu0 0
      %2650 = vmatpush2.bf16.msra.mxu0 0
      %2651 = vmatprep.subr.bf16.mxu0 0
      %2652 = vmatpush2.bf16.msra.mxu0 0
      %2653 = vmatprep.subr.bf16.mxu0 0
      %2654 = vmatpush2.bf16.msra.mxu0 0
      %2655 = vmatprep.subr.bf16.mxu0 0
      %2656 = vmatpush2.bf16.msra.mxu0 0
      %2657 = vmatprep.subr.bf16.mxu0 %v2583
      %2658 = vmatpush2.bf16.msra.mxu0 %v2582
      %2659 = vmatprep.mubr.bf16.mxu0 %v2613
      %2660 = vmatmul.mubr.bf16.gmra.mxu0 %v2443
      %v2661 = vpop.f32.mrf.mxu0
      %v2662 = vadd.f32 0.0, %v2661
      %v2663 = vpop.f32.mrf.mxu0
      %v2664 = vadd.f32 0.0, %v2663
      %v2665 = vpop.f32.mrf.mxu0
      %v2666 = vadd.f32 0.0, %v2665
      %v2667 = vpop.f32.mrf.mxu0
      %v2668 = vadd.f32 0.0, %v2667
      %2669 = vmatprep.mubr.bf16.mxu0 %v2616
      %2670 = vmatmul.mubr.bf16.gmra.mxu0 %v2448
      %v2671 = vpop.f32.mrf.mxu0
      %v2672 = vadd.f32 0.0, %v2671
      %v2673 = vpop.f32.mrf.mxu0
      %v2674 = vadd.f32 0.0, %v2673
      %v2675 = vpop.f32.mrf.mxu0
      %v2676 = vadd.f32 0.0, %v2675
      %v2677 = vpop.f32.mrf.mxu0
      %v2678 = vadd.f32 0.0, %v2677
      %2679 = vmatprep.mubr.bf16.mxu0 %v2619
      %2680 = vmatmul.mubr.bf16.gmra.mxu0 %v2452
      %v2681 = vpop.f32.mrf.mxu0
      %v2682 = vadd.f32 0.0, %v2681
      %v2683 = vpop.f32.mrf.mxu0
      %v2684 = vadd.f32 0.0, %v2683
      %v2685 = vpop.f32.mrf.mxu0
      %v2686 = vadd.f32 0.0, %v2685
      %v2687 = vpop.f32.mrf.mxu0
      %v2688 = vadd.f32 0.0, %v2687
      %2689 = vmatprep.mubr.bf16.mxu0 %v2622
      %2690 = vmatmul.mubr.bf16.gmra.mxu0 %v2456
      %v2691 = vpop.f32.mrf.mxu0
      %v2692 = vadd.f32 0.0, %v2691
      %v2693 = vpop.f32.mrf.mxu0
      %v2694 = vadd.f32 0.0, %v2693
      %v2695 = vpop.f32.mrf.mxu0
      %v2696 = vadd.f32 0.0, %v2695
      %v2697 = vpop.f32.mrf.mxu0
      %v2698 = vadd.f32 0.0, %v2697
      %2699 = vmatprep.mubr.bf16.mxu0 %v2625
      %2700 = vmatmul.mubr.bf16.gmra.mxu0 %v2460
      %v2701 = vpop.f32.mrf.mxu0
      %v2702 = vadd.f32 0.0, %v2701
      %v2703 = vpop.f32.mrf.mxu0
      %v2704 = vadd.f32 0.0, %v2703
      %v2705 = vpop.f32.mrf.mxu0
      %v2706 = vadd.f32 0.0, %v2705
      %v2707 = vpop.f32.mrf.mxu0
      %v2708 = vadd.f32 0.0, %v2707
      %2709 = vdwg.mxu0
      %2710 = vmatprep.subr.bf16.mxu0 0
      %2711 = vmatpush1.bf16.msra.mxu0 %v2581
      %2712 = vmatprep.subr.bf16.mxu0 0
      %2713 = vmatpush1.bf16.msra.mxu0 %v2578
      %2714 = vmatprep.subr.bf16.mxu0 0
      %2715 = vmatpush1.bf16.msra.mxu0 %v2575
      %2716 = vmatprep.subr.bf16.mxu0 0
      %2717 = vmatpush1.bf16.msra.mxu0 %v2572
      %2718 = vmatprep.subr.bf16.mxu0 0
      %2719 = vmatpush1.bf16.msra.mxu0 %v2569
      %2720 = vmatprep.subr.bf16.mxu0 0
      %2721 = vmatpush1.bf16.msra.mxu0 %v2566
      %2722 = vmatprep.subr.bf16.mxu0 0
      %2723 = vmatpush1.bf16.msra.mxu0 %v2563
      %2724 = vmatprep.subr.bf16.mxu0 0
      %2725 = vmatpush1.bf16.msra.mxu0 %v2560
      %2726 = vmatprep.subr.bf16.mxu0 0
      %2727 = vmatpush2.bf16.msra.mxu0 0
      %2728 = vmatprep.subr.bf16.mxu0 0
      %2729 = vmatpush2.bf16.msra.mxu0 0
      %2730 = vmatprep.subr.bf16.mxu0 0
      %2731 = vmatpush2.bf16.msra.mxu0 0
      %2732 = vmatprep.subr.bf16.mxu0 0
      %2733 = vmatpush2.bf16.msra.mxu0 0
      %2734 = vmatprep.subr.bf16.mxu0 0
      %2735 = vmatpush2.bf16.msra.mxu0 0
      %2736 = vmatprep.subr.bf16.mxu0 0
      %2737 = vmatpush2.bf16.msra.mxu0 0
      %2738 = vmatprep.subr.bf16.mxu0 0
      %2739 = vmatpush2.bf16.msra.mxu0 0
      %2740 = vmatprep.subr.bf16.mxu0 0
      %2741 = vmatpush2.bf16.msra.mxu0 %v2584
      %2742 = vmatprep.mubr.bf16.mxu0 %v2613
      %2743 = vmatmul.mubr.bf16.gmra.mxu0 %v2443
      %v2744 = vpop.f32.mrf.mxu0
      %v2745 = vadd.f32 0.0, %v2744
      %v2746 = vpop.f32.mrf.mxu0
      %v2747 = vpop.f32.mrf.mxu0
      %v2748 = vadd.f32 0.0, %v2747
      %v2749 = vpop.f32.mrf.mxu0
      %2750 = vmatprep.mubr.bf16.mxu0 %v2616
      %2751 = vmatmul.mubr.bf16.gmra.mxu0 %v2448
      %v2752 = vpop.f32.mrf.mxu0
      %v2753 = vadd.f32 0.0, %v2752
      %v2754 = vpop.f32.mrf.mxu0
      %v2755 = vpop.f32.mrf.mxu0
      %v2756 = vadd.f32 0.0, %v2755
      %v2757 = vpop.f32.mrf.mxu0
      %2758 = vmatprep.mubr.bf16.mxu0 %v2619
      %2759 = vmatmul.mubr.bf16.gmra.mxu0 %v2452
      %v2760 = vpop.f32.mrf.mxu0
      %v2761 = vadd.f32 0.0, %v2760
      %v2762 = vpop.f32.mrf.mxu0
      %v2763 = vpop.f32.mrf.mxu0
      %v2764 = vadd.f32 0.0, %v2763
      %v2765 = vpop.f32.mrf.mxu0
      %2766 = vmatprep.mubr.bf16.mxu0 %v2622
      %2767 = vmatmul.mubr.bf16.gmra.mxu0 %v2456
      %v2768 = vpop.f32.mrf.mxu0
      %v2769 = vadd.f32 0.0, %v2768
      %v2770 = vpop.f32.mrf.mxu0
      %v2771 = vpop.f32.mrf.mxu0
      %v2772 = vadd.f32 0.0, %v2771
      %v2773 = vpop.f32.mrf.mxu0
      %2774 = vmatprep.mubr.bf16.mxu0 %v2625
      %2775 = vmatmul.mubr.bf16.gmra.mxu0 %v2460
      %v2776 = vpop.f32.mrf.mxu0
      %v2777 = vadd.f32 0.0, %v2776
      %v2778 = vpop.f32.mrf.mxu0
      %v2779 = vpop.f32.mrf.mxu0
      %v2780 = vadd.f32 0.0, %v2779
      %v2781 = vpop.f32.mrf.mxu0
      %2782 = vdwg.mxu0
      %v2783 = vadd.f32 %v2361, %v2662
      %v2784 = vadd.f32 %v2362, %v2664
      %v2785 = vadd.f32 %v2363, %v2745
      %v2786 = vadd.f32 %v2364, %v2666
      %v2787 = vadd.f32 %v2365, %v2668
      %v2788 = vadd.f32 %v2366, %v2748
      %v2789 = vadd.f32 %v2367, %v2672
      %v2790 = vadd.f32 %v2368, %v2674
      %v2791 = vadd.f32 %v2369, %v2753
      %v2792 = vadd.f32 %v2370, %v2676
      %v2793 = vadd.f32 %v2371, %v2678
      %v2794 = vadd.f32 %v2372, %v2756
      %v2795 = vadd.f32 %v2373, %v2682
      %v2796 = vadd.f32 %v2374, %v2684
      %v2797 = vadd.f32 %v2375, %v2761
      %v2798 = vadd.f32 %v2376, %v2686
      %v2799 = vadd.f32 %v2377, %v2688
      %v2800 = vadd.f32 %v2378, %v2764
      %v2801 = vadd.f32 %v2379, %v2692
      %v2802 = vadd.f32 %v2380, %v2694
      %v2803 = vadd.f32 %v2381, %v2769
      %v2804 = vadd.f32 %v2382, %v2696
      %v2805 = vadd.f32 %v2383, %v2698
      %v2806 = vadd.f32 %v2384, %v2772
      %v2807 = vadd.f32 %v2385, %v2702
      %v2808 = vadd.f32 %v2386, %v2704
      %v2809 = vadd.f32 %v2387, %v2777
      %v2810 = vadd.f32 %v2388, %v2706
      %v2811 = vadd.f32 %v2389, %v2708
      %v2812 = vadd.f32 %v2390, %v2780
      %v2813 = vld [vmem:[%s165 + $0x20] sm:$0xf0]
      %v2814 = vld [vmem:[%s165 + $0x28] sm:$0xf0]
      %v2815 = vld [vmem:[%s165 + $0x30] sm:$0xff]
      %v2816 = vld [vmem:[%s165 + $0x38] sm:$0xff]
      %v2817 = vld [vmem:[%s165 + $0x40] sm:$0xff]
      %v2818 = vld [vmem:[%s165 + $0x48] sm:$0xff]
      %v2819 = vld [vmem:[%s165 + $0x50] sm:$0xff]
      %v2820 = vld [vmem:[%s165 + $0x58] sm:$0xff]
      %v2821 = vld [vmem:[%s165 + $0x60] sm:$0xff]
      %v2822 = vld [vmem:[%s165 + $0x68] sm:$0xff]
      %v2823 = vld [vmem:[%s165 + $0x70] sm:$0xff]
      %v2824 = vld [vmem:[%s165 + $0x78] sm:$0xff]
      %v2825 = vld [vmem:[%s165 + $0x80] sm:$0xff]
      %v2826 = vld [vmem:[%s165 + $0x88] sm:$0xff]
      %v2827 = vld [vmem:[%s165 + $0x90] sm:$0xff]
      %v2828 = vld [vmem:[%s165 + $0x98] sm:$0xff]
      %v2829 = vld [vmem:[%s165 + $0xa0] sm:$0xff]
      %v2830 = vld [vmem:[%s165 + $0xa8] sm:$0xff]
      %v2831 = vld [vmem:[%s165 + $0xb0] sm:$0xff]
      %v2832 = vld [vmem:[%s165 + $0xb8] sm:$0xff]
      %v2833 = vld [vmem:[%s165 + $0xc0] sm:$0xf]
      %v2834 = vld [vmem:[%s165 + $0xc8] sm:$0xf]
      %v2835 = vpack.c.bf16 %v2815, %v2813
      %v2836 = vpack.c.bf16 %v2816, %v2814
      %v2837 = vpack.c.bf16 %v2819, %v2817
      %v2838 = vpack.c.bf16 %v2820, %v2818
      %v2839 = vpack.c.bf16 %v2823, %v2821
      %v2840 = vpack.c.bf16 %v2824, %v2822
      %v2841 = vpack.c.bf16 %v2827, %v2825
      %v2842 = vpack.c.bf16 %v2828, %v2826
      %v2843 = vpack.c.bf16 %v2831, %v2829
      %v2844 = vpack.c.bf16 %v2832, %v2830
      %v2845 = vpack.c.bf16 %v2833, %v2833
      %v2846 = vpack.c.bf16 %v2834, %v2834
      %s2847 = scalar_lea.vmem %s1, 1296
      %v2848 = vld [vmem:[%s2847] sm:$0xff]
      %v2849 = vld [vmem:[%s2847 + $0x8] sm:$0xf]
      %v2850 = vld [vmem:[%s2847 + $0xc] sm:$0xff]
      %v2851 = vld [vmem:[%s2847 + $0x14] sm:$0xf]
      %v2852 = vld [vmem:[%s2847 + $0x18] sm:$0xff]
      %v2853 = vld [vmem:[%s2847 + $0x20] sm:$0xf]
      %v2854 = vld [vmem:[%s2847 + $0x24] sm:$0xff]
      %v2855 = vld [vmem:[%s2847 + $0x2c] sm:$0xf]
      %v2856 = vld [vmem:[%s2847 + $0x30] sm:$0xff]
      %v2857 = vld [vmem:[%s2847 + $0x38] sm:$0xf]
      %v2858 = vld [vmem:[%s2847 + $0x3c] sm:$0xff]
      %v2859 = vld [vmem:[%s2847 + $0x44] sm:$0xf]
      %v2860 = vld [vmem:[%s2847 + $0x48] sm:$0xff]
      %v2861 = vld [vmem:[%s2847 + $0x50] sm:$0xf]
      %v2862 = vld [vmem:[%s2847 + $0x54] sm:$0xff]
      %v2863 = vld [vmem:[%s2847 + $0x5c] sm:$0xf]
      %v2864 = vld [vmem:[%s2847 + $0x60] sm:$0xff]
      %v2865 = vld [vmem:[%s2847 + $0x68] sm:$0xf]
      %v2866 = vld [vmem:[%s2847 + $0x6c] sm:$0xff]
      %v2867 = vld [vmem:[%s2847 + $0x74] sm:$0xf]
      %v2868 = vld [vmem:[%s2847 + $0x78] sm:$0xff]
      %v2869 = vld [vmem:[%s2847 + $0x80] sm:$0xf]
      %v2870 = vld [vmem:[%s2847 + $0x84] sm:$0xff]
      %v2871 = vld [vmem:[%s2847 + $0x8c] sm:$0xf]
      %v2872 = vld [vmem:[%s2847 + $0x90] sm:$0xff]
      %v2873 = vld [vmem:[%s2847 + $0x98] sm:$0xf]
      %v2874 = vld [vmem:[%s2847 + $0x9c] sm:$0xff]
      %v2875 = vld [vmem:[%s2847 + $0xa4] sm:$0xf]
      %v2876 = vld [vmem:[%s2847 + $0xa8] sm:$0xff]
      %v2877 = vld [vmem:[%s2847 + $0xb0] sm:$0xf]
      %v2878 = vld [vmem:[%s2847 + $0xb4] sm:$0xff]
      %v2879 = vld [vmem:[%s2847 + $0xbc] sm:$0xf]
      %v2880 = vld [vmem:[%s2847 + $0xc0] sm:$0xff]
      %v2881 = vld [vmem:[%s2847 + $0xc8] sm:$0xf]
      %v2882 = vld [vmem:[%s2847 + $0xcc] sm:$0xff]
      %v2883 = vld [vmem:[%s2847 + $0xd4] sm:$0xf]
      %v2896 = vrot.slane %v2835, 2
      %v2897 = vrot.slane %v2837, 2
      %v2898 = vsel %vm2440, %v2896, %v2897
      %v2899 = vrot.slane %v2836, 2
      %v2900 = vrot.slane %v2838, 2
      %v2901 = vsel %vm2440, %v2899, %v2900
      %v2902 = vrot.slane %v2839, 2
      %v2903 = vsel %vm2440, %v2897, %v2902
      %v2904 = vrot.slane %v2840, 2
      %v2905 = vsel %vm2440, %v2900, %v2904
      %v2906 = vrot.slane %v2841, 2
      %v2907 = vsel %vm2440, %v2902, %v2906
      %v2908 = vrot.slane %v2842, 2
      %v2909 = vsel %vm2440, %v2904, %v2908
      %v2910 = vrot.slane %v2843, 2
      %v2911 = vsel %vm2440, %v2906, %v2910
      %v2912 = vrot.slane %v2844, 2
      %v2913 = vsel %vm2440, %v2908, %v2912
      %v2914 = vrot.slane %v2845, 2
      %v2915 = vsel %vm2440, %v2910, %v2914
      %v2916 = vrot.slane %v2846, 2
      %v2917 = vsel %vm2440, %v2912, %v2916
      %v2959 = vunpack.c.l.b16 %v2848
      %v2960 = vunpack.c.h.b16 %v2848
      %v2961 = vunpack.c.l.b16 %v2849
      %v2962 = vunpack.c.l.b16 %v2850
      %v2963 = vunpack.c.h.b16 %v2850
      %v2964 = vunpack.c.l.b16 %v2851
      %v2965 = vunpack.c.l.b16 %v2852
      %v2966 = vunpack.c.h.b16 %v2852
      %v2967 = vunpack.c.l.b16 %v2853
      %v2968 = vunpack.c.l.b16 %v2854
      %v2969 = vunpack.c.h.b16 %v2854
      %v2970 = vunpack.c.l.b16 %v2855
      %v2971 = vunpack.c.l.b16 %v2856
      %v2972 = vunpack.c.h.b16 %v2856
      %v2973 = vunpack.c.l.b16 %v2857
      %v2974 = vunpack.c.l.b16 %v2858
      %v2975 = vunpack.c.h.b16 %v2858
      %v2976 = vunpack.c.l.b16 %v2859
      %v2977 = vunpack.c.l.b16 %v2860
      %v2978 = vunpack.c.h.b16 %v2860
      %v2979 = vunpack.c.l.b16 %v2861
      %v2980 = vunpack.c.l.b16 %v2862
      %v2981 = vunpack.c.h.b16 %v2862
      %v2982 = vunpack.c.l.b16 %v2863
      %v2983 = vunpack.c.l.b16 %v2864
      %v2984 = vunpack.c.h.b16 %v2864
      %v2985 = vunpack.c.l.b16 %v2865
      %v2986 = vunpack.c.l.b16 %v2866
      %v2987 = vunpack.c.h.b16 %v2866
      %v2988 = vunpack.c.l.b16 %v2867
      %v2989 = vunpack.c.l.b16 %v2868
      %v2990 = vunpack.c.h.b16 %v2868
      %v2991 = vunpack.c.l.b16 %v2869
      %v2992 = vunpack.c.l.b16 %v2870
      %v2993 = vunpack.c.h.b16 %v2870
      %v2994 = vunpack.c.l.b16 %v2871
      %v2995 = vunpack.c.l.b16 %v2872
      %v2996 = vunpack.c.h.b16 %v2872
      %v2997 = vunpack.c.l.b16 %v2873
      %v2998 = vunpack.c.l.b16 %v2874
      %v2999 = vunpack.c.h.b16 %v2874
      %v3000 = vunpack.c.l.b16 %v2875
      %v3001 = vunpack.c.l.b16 %v2876
      %v3002 = vunpack.c.h.b16 %v2876
      %v3003 = vunpack.c.l.b16 %v2877
      %v3004 = vunpack.c.l.b16 %v2878
      %v3005 = vunpack.c.h.b16 %v2878
      %v3006 = vunpack.c.l.b16 %v2879
      %v3007 = vunpack.c.l.b16 %v2880
      %v3008 = vunpack.c.h.b16 %v2880
      %v3009 = vunpack.c.l.b16 %v2881
      %v3010 = vunpack.c.l.b16 %v2882
      %v3011 = vunpack.c.h.b16 %v2882
      %v3012 = vunpack.c.l.b16 %v2883
      %v3013 = vpack.c.b16 %v2962, %v2959
      %v3014 = vpack.c.b16 %v2963, %v2960
      %v3015 = vpack.c.b16 %v2964, %v2961
      %v3016 = vpack.c.b16 %v2968, %v2965
      %v3017 = vpack.c.b16 %v2969, %v2966
      %v3018 = vpack.c.b16 %v2970, %v2967
      %v3019 = vpack.c.b16 %v2974, %v2971
      %v3020 = vpack.c.b16 %v2975, %v2972
      %v3021 = vpack.c.b16 %v2976, %v2973
      %v3022 = vpack.c.b16 %v2980, %v2977
      %v3023 = vpack.c.b16 %v2981, %v2978
      %v3024 = vpack.c.b16 %v2982, %v2979
      %v3025 = vpack.c.b16 %v2986, %v2983
      %v3026 = vpack.c.b16 %v2987, %v2984
      %v3027 = vpack.c.b16 %v2988, %v2985
      %v3028 = vpack.c.b16 %v2992, %v2989
      %v3029 = vpack.c.b16 %v2993, %v2990
      %v3030 = vpack.c.b16 %v2994, %v2991
      %v3031 = vpack.c.b16 %v2998, %v2995
      %v3032 = vpack.c.b16 %v2999, %v2996
      %v3033 = vpack.c.b16 %v3000, %v2997
      %v3034 = vpack.c.b16 %v3004, %v3001
      %v3035 = vpack.c.b16 %v3005, %v3002
      %v3036 = vpack.c.b16 %v3006, %v3003
      %v3037 = vpack.c.b16 %v3010, %v3007
      %v3038 = vpack.c.b16 %v3011, %v3008
      %v3039 = vpack.c.b16 %v3012, %v3009
      %v3068 = vsel %vm521, %v2901, 0
      %v3071 = vsel %vm521, %v2905, 0
      %v3074 = vsel %vm521, %v2909, 0
      %v3077 = vsel %vm521, %v2913, 0
      %v3080 = vsel %vm521, %v2917, 0
      %3082 = vmatprep.subr.bf16.mxu0 %v3035
      %3083 = vmatpush1.bf16.msra.mxu0 %v3034
      %3084 = vmatprep.subr.bf16.mxu0 %v3032
      %3085 = vmatpush1.bf16.msra.mxu0 %v3031
      %3086 = vmatprep.subr.bf16.mxu0 %v3029
      %3087 = vmatpush1.bf16.msra.mxu0 %v3028
      %3088 = vmatprep.subr.bf16.mxu0 %v3026
      %3089 = vmatpush1.bf16.msra.mxu0 %v3025
      %3090 = vmatprep.subr.bf16.mxu0 %v3023
      %3091 = vmatpush1.bf16.msra.mxu0 %v3022
      %3092 = vmatprep.subr.bf16.mxu0 %v3020
      %3093 = vmatpush1.bf16.msra.mxu0 %v3019
      %3094 = vmatprep.subr.bf16.mxu0 %v3017
      %3095 = vmatpush1.bf16.msra.mxu0 %v3016
      %3096 = vmatprep.subr.bf16.mxu0 %v3014
      %3097 = vmatpush1.bf16.msra.mxu0 %v3013
      %3098 = vmatprep.subr.bf16.mxu0 0
      %3099 = vmatpush2.bf16.msra.mxu0 0
      %3100 = vmatprep.subr.bf16.mxu0 0
      %3101 = vmatpush2.bf16.msra.mxu0 0
      %3102 = vmatprep.subr.bf16.mxu0 0
      %3103 = vmatpush2.bf16.msra.mxu0 0
      %3104 = vmatprep.subr.bf16.mxu0 0
      %3105 = vmatpush2.bf16.msra.mxu0 0
      %3106 = vmatprep.subr.bf16.mxu0 0
      %3107 = vmatpush2.bf16.msra.mxu0 0
      %3108 = vmatprep.subr.bf16.mxu0 0
      %3109 = vmatpush2.bf16.msra.mxu0 0
      %3110 = vmatprep.subr.bf16.mxu0 0
      %3111 = vmatpush2.bf16.msra.mxu0 0
      %3112 = vmatprep.subr.bf16.mxu0 %v3038
      %3113 = vmatpush2.bf16.msra.mxu0 %v3037
      %3114 = vmatprep.mubr.bf16.mxu0 %v3068
      %3115 = vmatmul.mubr.bf16.gmra.mxu0 %v2898
      %v3116 = vpop.f32.mrf.mxu0
      %v3117 = vadd.f32 0.0, %v3116
      %v3118 = vpop.f32.mrf.mxu0
      %v3119 = vadd.f32 0.0, %v3118
      %v3120 = vpop.f32.mrf.mxu0
      %v3121 = vadd.f32 0.0, %v3120
      %v3122 = vpop.f32.mrf.mxu0
      %v3123 = vadd.f32 0.0, %v3122
      %3124 = vmatprep.mubr.bf16.mxu0 %v3071
      %3125 = vmatmul.mubr.bf16.gmra.mxu0 %v2903
      %v3126 = vpop.f32.mrf.mxu0
      %v3127 = vadd.f32 0.0, %v3126
      %v3128 = vpop.f32.mrf.mxu0
      %v3129 = vadd.f32 0.0, %v3128
      %v3130 = vpop.f32.mrf.mxu0
      %v3131 = vadd.f32 0.0, %v3130
      %v3132 = vpop.f32.mrf.mxu0
      %v3133 = vadd.f32 0.0, %v3132
      %3134 = vmatprep.mubr.bf16.mxu0 %v3074
      %3135 = vmatmul.mubr.bf16.gmra.mxu0 %v2907
      %v3136 = vpop.f32.mrf.mxu0
      %v3137 = vadd.f32 0.0, %v3136
      %v3138 = vpop.f32.mrf.mxu0
      %v3139 = vadd.f32 0.0, %v3138
      %v3140 = vpop.f32.mrf.mxu0
      %v3141 = vadd.f32 0.0, %v3140
      %v3142 = vpop.f32.mrf.mxu0
      %v3143 = vadd.f32 0.0, %v3142
      %3144 = vmatprep.mubr.bf16.mxu0 %v3077
      %3145 = vmatmul.mubr.bf16.gmra.mxu0 %v2911
      %v3146 = vpop.f32.mrf.mxu0
      %v3147 = vadd.f32 0.0, %v3146
      %v3148 = vpop.f32.mrf.mxu0
      %v3149 = vadd.f32 0.0, %v3148
      %v3150 = vpop.f32.mrf.mxu0
      %v3151 = vadd.f32 0.0, %v3150
      %v3152 = vpop.f32.mrf.mxu0
      %v3153 = vadd.f32 0.0, %v3152
      %3154 = vmatprep.mubr.bf16.mxu0 %v3080
      %3155 = vmatmul.mubr.bf16.gmra.mxu0 %v2915
      %v3156 = vpop.f32.mrf.mxu0
      %v3157 = vadd.f32 0.0, %v3156
      %v3158 = vpop.f32.mrf.mxu0
      %v3159 = vadd.f32 0.0, %v3158
      %v3160 = vpop.f32.mrf.mxu0
      %v3161 = vadd.f32 0.0, %v3160
      %v3162 = vpop.f32.mrf.mxu0
      %v3163 = vadd.f32 0.0, %v3162
      %3164 = vdwg.mxu0
      %3165 = vmatprep.subr.bf16.mxu0 0
      %3166 = vmatpush1.bf16.msra.mxu0 %v3036
      %3167 = vmatprep.subr.bf16.mxu0 0
      %3168 = vmatpush1.bf16.msra.mxu0 %v3033
      %3169 = vmatprep.subr.bf16.mxu0 0
      %3170 = vmatpush1.bf16.msra.mxu0 %v3030
      %3171 = vmatprep.subr.bf16.mxu0 0
      %3172 = vmatpush1.bf16.msra.mxu0 %v3027
      %3173 = vmatprep.subr.bf16.mxu0 0
      %3174 = vmatpush1.bf16.msra.mxu0 %v3024
      %3175 = vmatprep.subr.bf16.mxu0 0
      %3176 = vmatpush1.bf16.msra.mxu0 %v3021
      %3177 = vmatprep.subr.bf16.mxu0 0
      %3178 = vmatpush1.bf16.msra.mxu0 %v3018
      %3179 = vmatprep.subr.bf16.mxu0 0
      %3180 = vmatpush1.bf16.msra.mxu0 %v3015
      %3181 = vmatprep.subr.bf16.mxu0 0
      %3182 = vmatpush2.bf16.msra.mxu0 0
      %3183 = vmatprep.subr.bf16.mxu0 0
      %3184 = vmatpush2.bf16.msra.mxu0 0
      %3185 = vmatprep.subr.bf16.mxu0 0
      %3186 = vmatpush2.bf16.msra.mxu0 0
      %3187 = vmatprep.subr.bf16.mxu0 0
      %3188 = vmatpush2.bf16.msra.mxu0 0
      %3189 = vmatprep.subr.bf16.mxu0 0
      %3190 = vmatpush2.bf16.msra.mxu0 0
      %3191 = vmatprep.subr.bf16.mxu0 0
      %3192 = vmatpush2.bf16.msra.mxu0 0
      %3193 = vmatprep.subr.bf16.mxu0 0
      %3194 = vmatpush2.bf16.msra.mxu0 0
      %3195 = vmatprep.subr.bf16.mxu0 0
      %3196 = vmatpush2.bf16.msra.mxu0 %v3039
      %3197 = vmatprep.mubr.bf16.mxu0 %v3068
      %3198 = vmatmul.mubr.bf16.gmra.mxu0 %v2898
      %v3199 = vpop.f32.mrf.mxu0
      %v3200 = vadd.f32 0.0, %v3199
      %v3201 = vpop.f32.mrf.mxu0
      %v3202 = vpop.f32.mrf.mxu0
      %v3203 = vadd.f32 0.0, %v3202
      %v3204 = vpop.f32.mrf.mxu0
      %3205 = vmatprep.mubr.bf16.mxu0 %v3071
      %3206 = vmatmul.mubr.bf16.gmra.mxu0 %v2903
      %v3207 = vpop.f32.mrf.mxu0
      %v3208 = vadd.f32 0.0, %v3207
      %v3209 = vpop.f32.mrf.mxu0
      %v3210 = vpop.f32.mrf.mxu0
      %v3211 = vadd.f32 0.0, %v3210
      %v3212 = vpop.f32.mrf.mxu0
      %3213 = vmatprep.mubr.bf16.mxu0 %v3074
      %3214 = vmatmul.mubr.bf16.gmra.mxu0 %v2907
      %v3215 = vpop.f32.mrf.mxu0
      %v3216 = vadd.f32 0.0, %v3215
      %v3217 = vpop.f32.mrf.mxu0
      %v3218 = vpop.f32.mrf.mxu0
      %v3219 = vadd.f32 0.0, %v3218
      %v3220 = vpop.f32.mrf.mxu0
      %3221 = vmatprep.mubr.bf16.mxu0 %v3077
      %3222 = vmatmul.mubr.bf16.gmra.mxu0 %v2911
      %v3223 = vpop.f32.mrf.mxu0
      %v3224 = vadd.f32 0.0, %v3223
      %v3225 = vpop.f32.mrf.mxu0
      %v3226 = vpop.f32.mrf.mxu0
      %v3227 = vadd.f32 0.0, %v3226
      %v3228 = vpop.f32.mrf.mxu0
      %3229 = vmatprep.mubr.bf16.mxu0 %v3080
      %3230 = vmatmul.mubr.bf16.gmra.mxu0 %v2915
      %v3231 = vpop.f32.mrf.mxu0
      %v3232 = vadd.f32 0.0, %v3231
      %v3233 = vpop.f32.mrf.mxu0
      %v3234 = vpop.f32.mrf.mxu0
      %v3235 = vadd.f32 0.0, %v3234
      %v3236 = vpop.f32.mrf.mxu0
      %3237 = vdwg.mxu0
      %v3238 = vadd.f32 %v2783, %v3117
      %v3239 = vadd.f32 %v2784, %v3119
      %v3240 = vadd.f32 %v2785, %v3200
      %v3241 = vadd.f32 %v2786, %v3121
      %v3242 = vadd.f32 %v2787, %v3123
      %v3243 = vadd.f32 %v2788, %v3203
      %v3244 = vadd.f32 %v2789, %v3127
      %v3245 = vadd.f32 %v2790, %v3129
      %v3246 = vadd.f32 %v2791, %v3208
      %v3247 = vadd.f32 %v2792, %v3131
      %v3248 = vadd.f32 %v2793, %v3133
      %v3249 = vadd.f32 %v2794, %v3211
      %v3250 = vadd.f32 %v2795, %v3137
      %v3251 = vadd.f32 %v2796, %v3139
      %v3252 = vadd.f32 %v2797, %v3216
      %v3253 = vadd.f32 %v2798, %v3141
      %v3254 = vadd.f32 %v2799, %v3143
      %v3255 = vadd.f32 %v2800, %v3219
      %v3256 = vadd.f32 %v2801, %v3147
      %v3257 = vadd.f32 %v2802, %v3149
      %v3258 = vadd.f32 %v2803, %v3224
      %v3259 = vadd.f32 %v2804, %v3151
      %v3260 = vadd.f32 %v2805, %v3153
      %v3261 = vadd.f32 %v2806, %v3227
      %v3262 = vadd.f32 %v2807, %v3157
      %v3263 = vadd.f32 %v2808, %v3159
      %v3264 = vadd.f32 %v2809, %v3232
      %v3265 = vadd.f32 %v2810, %v3161
      %v3266 = vadd.f32 %v2811, %v3163
      %v3267 = vadd.f32 %v2812, %v3235
      %v3268 = vld [vmem:[%s165 + $0x20] sm:$0xe0]
      %v3269 = vld [vmem:[%s165 + $0x28] sm:$0xe0]
      %v3270 = vld [vmem:[%s165 + $0xc0] sm:$0x1f]
      %v3271 = vld [vmem:[%s165 + $0xc8] sm:$0x1f]
      %v3272 = vpack.c.bf16 %v2815, %v3268
      %v3273 = vpack.c.bf16 %v2816, %v3269
      %v3274 = vpack.c.bf16 %v3270, %v3270
      %v3275 = vpack.c.bf16 %v3271, %v3271
      %s3276 = scalar_lea.vmem %s1, 1512
      %v3277 = vld [vmem:[%s3276] sm:$0xff]
      %v3278 = vld [vmem:[%s3276 + $0x8] sm:$0xf]
      %v3279 = vld [vmem:[%s3276 + $0xc] sm:$0xff]
      %v3280 = vld [vmem:[%s3276 + $0x14] sm:$0xf]
      %v3281 = vld [vmem:[%s3276 + $0x18] sm:$0xff]
      %v3282 = vld [vmem:[%s3276 + $0x20] sm:$0xf]
      %v3283 = vld [vmem:[%s3276 + $0x24] sm:$0xff]
      %v3284 = vld [vmem:[%s3276 + $0x2c] sm:$0xf]
      %v3285 = vld [vmem:[%s3276 + $0x30] sm:$0xff]
      %v3286 = vld [vmem:[%s3276 + $0x38] sm:$0xf]
      %v3287 = vld [vmem:[%s3276 + $0x3c] sm:$0xff]
      %v3288 = vld [vmem:[%s3276 + $0x44] sm:$0xf]
      %v3289 = vld [vmem:[%s3276 + $0x48] sm:$0xff]
      %v3290 = vld [vmem:[%s3276 + $0x50] sm:$0xf]
      %v3291 = vld [vmem:[%s3276 + $0x54] sm:$0xff]
      %v3292 = vld [vmem:[%s3276 + $0x5c] sm:$0xf]
      %v3293 = vld [vmem:[%s3276 + $0x60] sm:$0xff]
      %v3294 = vld [vmem:[%s3276 + $0x68] sm:$0xf]
      %v3295 = vld [vmem:[%s3276 + $0x6c] sm:$0xff]
      %v3296 = vld [vmem:[%s3276 + $0x74] sm:$0xf]
      %v3297 = vld [vmem:[%s3276 + $0x78] sm:$0xff]
      %v3298 = vld [vmem:[%s3276 + $0x80] sm:$0xf]
      %v3299 = vld [vmem:[%s3276 + $0x84] sm:$0xff]
      %v3300 = vld [vmem:[%s3276 + $0x8c] sm:$0xf]
      %v3301 = vld [vmem:[%s3276 + $0x90] sm:$0xff]
      %v3302 = vld [vmem:[%s3276 + $0x98] sm:$0xf]
      %v3303 = vld [vmem:[%s3276 + $0x9c] sm:$0xff]
      %v3304 = vld [vmem:[%s3276 + $0xa4] sm:$0xf]
      %v3305 = vld [vmem:[%s3276 + $0xa8] sm:$0xff]
      %v3306 = vld [vmem:[%s3276 + $0xb0] sm:$0xf]
      %v3307 = vld [vmem:[%s3276 + $0xb4] sm:$0xff]
      %v3308 = vld [vmem:[%s3276 + $0xbc] sm:$0xf]
      %v3309 = vld [vmem:[%s3276 + $0xc0] sm:$0xff]
      %v3310 = vld [vmem:[%s3276 + $0xc8] sm:$0xf]
      %v3311 = vld [vmem:[%s3276 + $0xcc] sm:$0xff]
      %v3312 = vld [vmem:[%s3276 + $0xd4] sm:$0xf]
      %vm3313 = vsmask.f32 5376
      %v3315 = vshrl.u32 %v3272, 16
      %v3317 = vrot.slane %v3315, 2
      %v3318 = vshll.u32 %v3272, 16
      %v3320 = vrot.slane %v3318, 3
      %v3321 = vor.u32 %v3317, %v3320
      %v3323 = vshrl.u32 %v2837, 16
      %v3325 = vrot.slane %v3323, 2
      %v3326 = vshll.u32 %v2837, 16
      %v3328 = vrot.slane %v3326, 3
      %v3329 = vor.u32 %v3325, %v3328
      %v3330 = vsel %vm3313, %v3321, %v3329
      %v3332 = vshrl.u32 %v3273, 16
      %v3334 = vrot.slane %v3332, 2
      %v3335 = vshll.u32 %v3273, 16
      %v3337 = vrot.slane %v3335, 3
      %v3338 = vor.u32 %v3334, %v3337
      %v3340 = vshrl.u32 %v2838, 16
      %v3342 = vrot.slane %v3340, 2
      %v3343 = vshll.u32 %v2838, 16
      %v3345 = vrot.slane %v3343, 3
      %v3346 = vor.u32 %v3342, %v3345
      %v3347 = vsel %vm3313, %v3338, %v3346
      %v3349 = vshrl.u32 %v2839, 16
      %v3351 = vrot.slane %v3349, 2
      %v3352 = vshll.u32 %v2839, 16
      %v3354 = vrot.slane %v3352, 3
      %v3355 = vor.u32 %v3351, %v3354
      %v3356 = vsel %vm3313, %v3329, %v3355
      %v3358 = vshrl.u32 %v2840, 16
      %v3360 = vrot.slane %v3358, 2
      %v3361 = vshll.u32 %v2840, 16
      %v3363 = vrot.slane %v3361, 3
      %v3364 = vor.u32 %v3360, %v3363
      %v3365 = vsel %vm3313, %v3346, %v3364
      %v3367 = vshrl.u32 %v2841, 16
      %v3369 = vrot.slane %v3367, 2
      %v3370 = vshll.u32 %v2841, 16
      %v3372 = vrot.slane %v3370, 3
      %v3373 = vor.u32 %v3369, %v3372
      %v3374 = vsel %vm3313, %v3355, %v3373
      %v3376 = vshrl.u32 %v2842, 16
      %v3378 = vrot.slane %v3376, 2
      %v3379 = vshll.u32 %v2842, 16
      %v3381 = vrot.slane %v3379, 3
      %v3382 = vor.u32 %v3378, %v3381
      %v3383 = vsel %vm3313, %v3364, %v3382
      %v3385 = vshrl.u32 %v2843, 16
      %v3387 = vrot.slane %v3385, 2
      %v3388 = vshll.u32 %v2843, 16
      %v3390 = vrot.slane %v3388, 3
      %v3391 = vor.u32 %v3387, %v3390
      %v3392 = vsel %vm3313, %v3373, %v3391
      %v3394 = vshrl.u32 %v2844, 16
      %v3396 = vrot.slane %v3394, 2
      %v3397 = vshll.u32 %v2844, 16
      %v3399 = vrot.slane %v3397, 3
      %v3400 = vor.u32 %v3396, %v3399
      %v3401 = vsel %vm3313, %v3382, %v3400
      %v3403 = vshrl.u32 %v3274, 16
      %v3405 = vrot.slane %v3403, 2
      %v3406 = vshll.u32 %v3274, 16
      %v3408 = vrot.slane %v3406, 3
      %v3409 = vor.u32 %v3405, %v3408
      %v3410 = vsel %vm3313, %v3391, %v3409
      %v3412 = vshrl.u32 %v3275, 16
      %v3414 = vrot.slane %v3412, 2
      %v3415 = vshll.u32 %v3275, 16
      %v3417 = vrot.slane %v3415, 3
      %v3418 = vor.u32 %v3414, %v3417
      %v3419 = vsel %vm3313, %v3400, %v3418
      %v3461 = vunpack.c.l.b16 %v3277
      %v3462 = vunpack.c.h.b16 %v3277
      %v3463 = vunpack.c.l.b16 %v3278
      %v3464 = vunpack.c.l.b16 %v3279
      %v3465 = vunpack.c.h.b16 %v3279
      %v3466 = vunpack.c.l.b16 %v3280
      %v3467 = vunpack.c.l.b16 %v3281
      %v3468 = vunpack.c.h.b16 %v3281
      %v3469 = vunpack.c.l.b16 %v3282
      %v3470 = vunpack.c.l.b16 %v3283
      %v3471 = vunpack.c.h.b16 %v3283
      %v3472 = vunpack.c.l.b16 %v3284
      %v3473 = vunpack.c.l.b16 %v3285
      %v3474 = vunpack.c.h.b16 %v3285
      %v3475 = vunpack.c.l.b16 %v3286
      %v3476 = vunpack.c.l.b16 %v3287
      %v3477 = vunpack.c.h.b16 %v3287
      %v3478 = vunpack.c.l.b16 %v3288
      %v3479 = vunpack.c.l.b16 %v3289
      %v3480 = vunpack.c.h.b16 %v3289
      %v3481 = vunpack.c.l.b16 %v3290
      %v3482 = vunpack.c.l.b16 %v3291
      %v3483 = vunpack.c.h.b16 %v3291
      %v3484 = vunpack.c.l.b16 %v3292
      %v3485 = vunpack.c.l.b16 %v3293
      %v3486 = vunpack.c.h.b16 %v3293
      %v3487 = vunpack.c.l.b16 %v3294
      %v3488 = vunpack.c.l.b16 %v3295
      %v3489 = vunpack.c.h.b16 %v3295
      %v3490 = vunpack.c.l.b16 %v3296
      %v3491 = vunpack.c.l.b16 %v3297
      %v3492 = vunpack.c.h.b16 %v3297
      %v3493 = vunpack.c.l.b16 %v3298
      %v3494 = vunpack.c.l.b16 %v3299
      %v3495 = vunpack.c.h.b16 %v3299
      %v3496 = vunpack.c.l.b16 %v3300
      %v3497 = vunpack.c.l.b16 %v3301
      %v3498 = vunpack.c.h.b16 %v3301
      %v3499 = vunpack.c.l.b16 %v3302
      %v3500 = vunpack.c.l.b16 %v3303
      %v3501 = vunpack.c.h.b16 %v3303
      %v3502 = vunpack.c.l.b16 %v3304
      %v3503 = vunpack.c.l.b16 %v3305
      %v3504 = vunpack.c.h.b16 %v3305
      %v3505 = vunpack.c.l.b16 %v3306
      %v3506 = vunpack.c.l.b16 %v3307
      %v3507 = vunpack.c.h.b16 %v3307
      %v3508 = vunpack.c.l.b16 %v3308
      %v3509 = vunpack.c.l.b16 %v3309
      %v3510 = vunpack.c.h.b16 %v3309
      %v3511 = vunpack.c.l.b16 %v3310
      %v3512 = vunpack.c.l.b16 %v3311
      %v3513 = vunpack.c.h.b16 %v3311
      %v3514 = vunpack.c.l.b16 %v3312
      %v3515 = vpack.c.b16 %v3464, %v3461
      %v3516 = vpack.c.b16 %v3465, %v3462
      %v3517 = vpack.c.b16 %v3466, %v3463
      %v3518 = vpack.c.b16 %v3470, %v3467
      %v3519 = vpack.c.b16 %v3471, %v3468
      %v3520 = vpack.c.b16 %v3472, %v3469
      %v3521 = vpack.c.b16 %v3476, %v3473
      %v3522 = vpack.c.b16 %v3477, %v3474
      %v3523 = vpack.c.b16 %v3478, %v3475
      %v3524 = vpack.c.b16 %v3482, %v3479
      %v3525 = vpack.c.b16 %v3483, %v3480
      %v3526 = vpack.c.b16 %v3484, %v3481
      %v3527 = vpack.c.b16 %v3488, %v3485
      %v3528 = vpack.c.b16 %v3489, %v3486
      %v3529 = vpack.c.b16 %v3490, %v3487
      %v3530 = vpack.c.b16 %v3494, %v3491
      %v3531 = vpack.c.b16 %v3495, %v3492
      %v3532 = vpack.c.b16 %v3496, %v3493
      %v3533 = vpack.c.b16 %v3500, %v3497
      %v3534 = vpack.c.b16 %v3501, %v3498
      %v3535 = vpack.c.b16 %v3502, %v3499
      %v3536 = vpack.c.b16 %v3506, %v3503
      %v3537 = vpack.c.b16 %v3507, %v3504
      %v3538 = vpack.c.b16 %v3508, %v3505
      %v3539 = vpack.c.b16 %v3512, %v3509
      %v3540 = vpack.c.b16 %v3513, %v3510
      %v3541 = vpack.c.b16 %v3514, %v3511
      %v3570 = vsel %vm521, %v3347, 0
      %v3573 = vsel %vm521, %v3365, 0
      %v3576 = vsel %vm521, %v3383, 0
      %v3579 = vsel %vm521, %v3401, 0
      %v3582 = vsel %vm521, %v3419, 0
      %3584 = vmatprep.subr.bf16.mxu0 %v3537
      %3585 = vmatpush1.bf16.msra.mxu0 %v3536
      %3586 = vmatprep.subr.bf16.mxu0 %v3534
      %3587 = vmatpush1.bf16.msra.mxu0 %v3533
      %3588 = vmatprep.subr.bf16.mxu0 %v3531
      %3589 = vmatpush1.bf16.msra.mxu0 %v3530
      %3590 = vmatprep.subr.bf16.mxu0 %v3528
      %3591 = vmatpush1.bf16.msra.mxu0 %v3527
      %3592 = vmatprep.subr.bf16.mxu0 %v3525
      %3593 = vmatpush1.bf16.msra.mxu0 %v3524
      %3594 = vmatprep.subr.bf16.mxu0 %v3522
      %3595 = vmatpush1.bf16.msra.mxu0 %v3521
      %3596 = vmatprep.subr.bf16.mxu0 %v3519
      %3597 = vmatpush1.bf16.msra.mxu0 %v3518
      %3598 = vmatprep.subr.bf16.mxu0 %v3516
      %3599 = vmatpush1.bf16.msra.mxu0 %v3515
      %3600 = vmatprep.subr.bf16.mxu0 0
      %3601 = vmatpush2.bf16.msra.mxu0 0
      %3602 = vmatprep.subr.bf16.mxu0 0
      %3603 = vmatpush2.bf16.msra.mxu0 0
      %3604 = vmatprep.subr.bf16.mxu0 0
      %3605 = vmatpush2.bf16.msra.mxu0 0
      %3606 = vmatprep.subr.bf16.mxu0 0
      %3607 = vmatpush2.bf16.msra.mxu0 0
      %3608 = vmatprep.subr.bf16.mxu0 0
      %3609 = vmatpush2.bf16.msra.mxu0 0
      %3610 = vmatprep.subr.bf16.mxu0 0
      %3611 = vmatpush2.bf16.msra.mxu0 0
      %3612 = vmatprep.subr.bf16.mxu0 0
      %3613 = vmatpush2.bf16.msra.mxu0 0
      %3614 = vmatprep.subr.bf16.mxu0 %v3540
      %3615 = vmatpush2.bf16.msra.mxu0 %v3539
      %3616 = vmatprep.mubr.bf16.mxu0 %v3570
      %3617 = vmatmul.mubr.bf16.gmra.mxu0 %v3330
      %v3618 = vpop.f32.mrf.mxu0
      %v3619 = vadd.f32 0.0, %v3618
      %v3620 = vpop.f32.mrf.mxu0
      %v3621 = vadd.f32 0.0, %v3620
      %v3622 = vpop.f32.mrf.mxu0
      %v3623 = vadd.f32 0.0, %v3622
      %v3624 = vpop.f32.mrf.mxu0
      %v3625 = vadd.f32 0.0, %v3624
      %3626 = vmatprep.mubr.bf16.mxu0 %v3573
      %3627 = vmatmul.mubr.bf16.gmra.mxu0 %v3356
      %v3628 = vpop.f32.mrf.mxu0
      %v3629 = vadd.f32 0.0, %v3628
      %v3630 = vpop.f32.mrf.mxu0
      %v3631 = vadd.f32 0.0, %v3630
      %v3632 = vpop.f32.mrf.mxu0
      %v3633 = vadd.f32 0.0, %v3632
      %v3634 = vpop.f32.mrf.mxu0
      %v3635 = vadd.f32 0.0, %v3634
      %3636 = vmatprep.mubr.bf16.mxu0 %v3576
      %3637 = vmatmul.mubr.bf16.gmra.mxu0 %v3374
      %v3638 = vpop.f32.mrf.mxu0
      %v3639 = vadd.f32 0.0, %v3638
      %v3640 = vpop.f32.mrf.mxu0
      %v3641 = vadd.f32 0.0, %v3640
      %v3642 = vpop.f32.mrf.mxu0
      %v3643 = vadd.f32 0.0, %v3642
      %v3644 = vpop.f32.mrf.mxu0
      %v3645 = vadd.f32 0.0, %v3644
      %3646 = vmatprep.mubr.bf16.mxu0 %v3579
      %3647 = vmatmul.mubr.bf16.gmra.mxu0 %v3392
      %v3648 = vpop.f32.mrf.mxu0
      %v3649 = vadd.f32 0.0, %v3648
      %v3650 = vpop.f32.mrf.mxu0
      %v3651 = vadd.f32 0.0, %v3650
      %v3652 = vpop.f32.mrf.mxu0
      %v3653 = vadd.f32 0.0, %v3652
      %v3654 = vpop.f32.mrf.mxu0
      %v3655 = vadd.f32 0.0, %v3654
      %3656 = vmatprep.mubr.bf16.mxu0 %v3582
      %3657 = vmatmul.mubr.bf16.gmra.mxu0 %v3410
      %v3658 = vpop.f32.mrf.mxu0
      %v3659 = vadd.f32 0.0, %v3658
      %v3660 = vpop.f32.mrf.mxu0
      %v3661 = vadd.f32 0.0, %v3660
      %v3662 = vpop.f32.mrf.mxu0
      %v3663 = vadd.f32 0.0, %v3662
      %v3664 = vpop.f32.mrf.mxu0
      %v3665 = vadd.f32 0.0, %v3664
      %3666 = vdwg.mxu0
      %3667 = vmatprep.subr.bf16.mxu0 0
      %3668 = vmatpush1.bf16.msra.mxu0 %v3538
      %3669 = vmatprep.subr.bf16.mxu0 0
      %3670 = vmatpush1.bf16.msra.mxu0 %v3535
      %3671 = vmatprep.subr.bf16.mxu0 0
      %3672 = vmatpush1.bf16.msra.mxu0 %v3532
      %3673 = vmatprep.subr.bf16.mxu0 0
      %3674 = vmatpush1.bf16.msra.mxu0 %v3529
      %3675 = vmatprep.subr.bf16.mxu0 0
      %3676 = vmatpush1.bf16.msra.mxu0 %v3526
      %3677 = vmatprep.subr.bf16.mxu0 0
      %3678 = vmatpush1.bf16.msra.mxu0 %v3523
      %3679 = vmatprep.subr.bf16.mxu0 0
      %3680 = vmatpush1.bf16.msra.mxu0 %v3520
      %3681 = vmatprep.subr.bf16.mxu0 0
      %3682 = vmatpush1.bf16.msra.mxu0 %v3517
      %3683 = vmatprep.subr.bf16.mxu0 0
      %3684 = vmatpush2.bf16.msra.mxu0 0
      %3685 = vmatprep.subr.bf16.mxu0 0
      %3686 = vmatpush2.bf16.msra.mxu0 0
      %3687 = vmatprep.subr.bf16.mxu0 0
      %3688 = vmatpush2.bf16.msra.mxu0 0
      %3689 = vmatprep.subr.bf16.mxu0 0
      %3690 = vmatpush2.bf16.msra.mxu0 0
      %3691 = vmatprep.subr.bf16.mxu0 0
      %3692 = vmatpush2.bf16.msra.mxu0 0
      %3693 = vmatprep.subr.bf16.mxu0 0
      %3694 = vmatpush2.bf16.msra.mxu0 0
      %3695 = vmatprep.subr.bf16.mxu0 0
      %3696 = vmatpush2.bf16.msra.mxu0 0
      %3697 = vmatprep.subr.bf16.mxu0 0
      %3698 = vmatpush2.bf16.msra.mxu0 %v3541
      %3699 = vmatprep.mubr.bf16.mxu0 %v3570
      %3700 = vmatmul.mubr.bf16.gmra.mxu0 %v3330
      %v3701 = vpop.f32.mrf.mxu0
      %v3702 = vadd.f32 0.0, %v3701
      %v3703 = vpop.f32.mrf.mxu0
      %v3704 = vpop.f32.mrf.mxu0
      %v3705 = vadd.f32 0.0, %v3704
      %v3706 = vpop.f32.mrf.mxu0
      %3707 = vmatprep.mubr.bf16.mxu0 %v3573
      %3708 = vmatmul.mubr.bf16.gmra.mxu0 %v3356
      %v3709 = vpop.f32.mrf.mxu0
      %v3710 = vadd.f32 0.0, %v3709
      %v3711 = vpop.f32.mrf.mxu0
      %v3712 = vpop.f32.mrf.mxu0
      %v3713 = vadd.f32 0.0, %v3712
      %v3714 = vpop.f32.mrf.mxu0
      %3715 = vmatprep.mubr.bf16.mxu0 %v3576
      %3716 = vmatmul.mubr.bf16.gmra.mxu0 %v3374
      %v3717 = vpop.f32.mrf.mxu0
      %v3718 = vadd.f32 0.0, %v3717
      %v3719 = vpop.f32.mrf.mxu0
      %v3720 = vpop.f32.mrf.mxu0
      %v3721 = vadd.f32 0.0, %v3720
      %v3722 = vpop.f32.mrf.mxu0
      %3723 = vmatprep.mubr.bf16.mxu0 %v3579
      %3724 = vmatmul.mubr.bf16.gmra.mxu0 %v3392
      %v3725 = vpop.f32.mrf.mxu0
      %v3726 = vadd.f32 0.0, %v3725
      %v3727 = vpop.f32.mrf.mxu0
      %v3728 = vpop.f32.mrf.mxu0
      %v3729 = vadd.f32 0.0, %v3728
      %v3730 = vpop.f32.mrf.mxu0
      %3731 = vmatprep.mubr.bf16.mxu0 %v3582
      %3732 = vmatmul.mubr.bf16.gmra.mxu0 %v3410
      %v3733 = vpop.f32.mrf.mxu0
      %v3734 = vadd.f32 0.0, %v3733
      %v3735 = vpop.f32.mrf.mxu0
      %v3736 = vpop.f32.mrf.mxu0
      %v3737 = vadd.f32 0.0, %v3736
      %v3738 = vpop.f32.mrf.mxu0
      %3739 = vdwg.mxu0
      %v3740 = vadd.f32 %v3238, %v3619
      %v3741 = vadd.f32 %v3239, %v3621
      %v3742 = vadd.f32 %v3240, %v3702
      %v3743 = vadd.f32 %v3241, %v3623
      %v3744 = vadd.f32 %v3242, %v3625
      %v3745 = vadd.f32 %v3243, %v3705
      %v3746 = vadd.f32 %v3244, %v3629
      %v3747 = vadd.f32 %v3245, %v3631
      %v3748 = vadd.f32 %v3246, %v3710
      %v3749 = vadd.f32 %v3247, %v3633
      %v3750 = vadd.f32 %v3248, %v3635
      %v3751 = vadd.f32 %v3249, %v3713
      %v3752 = vadd.f32 %v3250, %v3639
      %v3753 = vadd.f32 %v3251, %v3641
      %v3754 = vadd.f32 %v3252, %v3718
      %v3755 = vadd.f32 %v3253, %v3643
      %v3756 = vadd.f32 %v3254, %v3645
      %v3757 = vadd.f32 %v3255, %v3721
      %v3758 = vadd.f32 %v3256, %v3649
      %v3759 = vadd.f32 %v3257, %v3651
      %v3760 = vadd.f32 %v3258, %v3726
      %v3761 = vadd.f32 %v3259, %v3653
      %v3762 = vadd.f32 %v3260, %v3655
      %v3763 = vadd.f32 %v3261, %v3729
      %v3764 = vadd.f32 %v3262, %v3659
      %v3765 = vadd.f32 %v3263, %v3661
      %v3766 = vadd.f32 %v3264, %v3734
      %v3767 = vadd.f32 %v3265, %v3663
      %v3768 = vadd.f32 %v3266, %v3665
      %v3769 = vadd.f32 %v3267, %v3737
      %v3770 = vld [vmem:[%s165 + $0x20] sm:$0xc0]
      %v3771 = vld [vmem:[%s165 + $0x28] sm:$0xc0]
      %v3772 = vld [vmem:[%s165 + $0xc0] sm:$0x3f]
      %v3773 = vld [vmem:[%s165 + $0xc8] sm:$0x3f]
      %v3774 = vpack.c.bf16 %v2815, %v3770
      %v3775 = vpack.c.bf16 %v2816, %v3771
      %v3776 = vpack.c.bf16 %v3772, %v3772
      %v3777 = vpack.c.bf16 %v3773, %v3773
      %s3778 = scalar_lea.vmem %s1, 1728
      %v3779 = vld [vmem:[%s3778] sm:$0xff]
      %v3780 = vld [vmem:[%s3778 + $0x8] sm:$0xf]
      %v3781 = vld [vmem:[%s3778 + $0xc] sm:$0xff]
      %v3782 = vld [vmem:[%s3778 + $0x14] sm:$0xf]
      %v3783 = vld [vmem:[%s3778 + $0x18] sm:$0xff]
      %v3784 = vld [vmem:[%s3778 + $0x20] sm:$0xf]
      %v3785 = vld [vmem:[%s3778 + $0x24] sm:$0xff]
      %v3786 = vld [vmem:[%s3778 + $0x2c] sm:$0xf]
      %v3787 = vld [vmem:[%s3778 + $0x30] sm:$0xff]
      %v3788 = vld [vmem:[%s3778 + $0x38] sm:$0xf]
      %v3789 = vld [vmem:[%s3778 + $0x3c] sm:$0xff]
      %v3790 = vld [vmem:[%s3778 + $0x44] sm:$0xf]
      %v3791 = vld [vmem:[%s3778 + $0x48] sm:$0xff]
      %v3792 = vld [vmem:[%s3778 + $0x50] sm:$0xf]
      %v3793 = vld [vmem:[%s3778 + $0x54] sm:$0xff]
      %v3794 = vld [vmem:[%s3778 + $0x5c] sm:$0xf]
      %v3795 = vld [vmem:[%s3778 + $0x60] sm:$0xff]
      %v3796 = vld [vmem:[%s3778 + $0x68] sm:$0xf]
      %v3797 = vld [vmem:[%s3778 + $0x6c] sm:$0xff]
      %v3798 = vld [vmem:[%s3778 + $0x74] sm:$0xf]
      %v3799 = vld [vmem:[%s3778 + $0x78] sm:$0xff]
      %v3800 = vld [vmem:[%s3778 + $0x80] sm:$0xf]
      %v3801 = vld [vmem:[%s3778 + $0x84] sm:$0xff]
      %v3802 = vld [vmem:[%s3778 + $0x8c] sm:$0xf]
      %v3803 = vld [vmem:[%s3778 + $0x90] sm:$0xff]
      %v3804 = vld [vmem:[%s3778 + $0x98] sm:$0xf]
      %v3805 = vld [vmem:[%s3778 + $0x9c] sm:$0xff]
      %v3806 = vld [vmem:[%s3778 + $0xa4] sm:$0xf]
      %v3807 = vld [vmem:[%s3778 + $0xa8] sm:$0xff]
      %v3808 = vld [vmem:[%s3778 + $0xb0] sm:$0xf]
      %v3809 = vld [vmem:[%s3778 + $0xb4] sm:$0xff]
      %v3810 = vld [vmem:[%s3778 + $0xbc] sm:$0xf]
      %v3811 = vld [vmem:[%s3778 + $0xc0] sm:$0xff]
      %v3812 = vld [vmem:[%s3778 + $0xc8] sm:$0xf]
      %v3813 = vld [vmem:[%s3778 + $0xcc] sm:$0xff]
      %v3814 = vld [vmem:[%s3778 + $0xd4] sm:$0xf]
      %vm3819 = vcmask 1044480
      %v3820 = vrot.slane %v3774, 3
      %v3821 = vrot.slane %v2837, 3
      %v3822 = vsel %vm3819, %v3820, %v3821
      %v3823 = vrot.slane %v3775, 3
      %v3824 = vrot.slane %v2838, 3
      %v3825 = vsel %vm3819, %v3823, %v3824
      %v3826 = vrot.slane %v2839, 3
      %v3827 = vsel %vm3819, %v3821, %v3826
      %v3828 = vrot.slane %v2840, 3
      %v3829 = vsel %vm3819, %v3824, %v3828
      %v3830 = vrot.slane %v2841, 3
      %v3831 = vsel %vm3819, %v3826, %v3830
      %v3832 = vrot.slane %v2842, 3
      %v3833 = vsel %vm3819, %v3828, %v3832
      %v3834 = vrot.slane %v2843, 3
      %v3835 = vsel %vm3819, %v3830, %v3834
      %v3836 = vrot.slane %v2844, 3
      %v3837 = vsel %vm3819, %v3832, %v3836
      %v3838 = vrot.slane %v3776, 3
      %v3839 = vsel %vm3819, %v3834, %v3838
      %v3840 = vrot.slane %v3777, 3
      %v3841 = vsel %vm3819, %v3836, %v3840
      %v3883 = vunpack.c.l.b16 %v3779
      %v3884 = vunpack.c.h.b16 %v3779
      %v3885 = vunpack.c.l.b16 %v3780
      %v3886 = vunpack.c.l.b16 %v3781
      %v3887 = vunpack.c.h.b16 %v3781
      %v3888 = vunpack.c.l.b16 %v3782
      %v3889 = vunpack.c.l.b16 %v3783
      %v3890 = vunpack.c.h.b16 %v3783
      %v3891 = vunpack.c.l.b16 %v3784
      %v3892 = vunpack.c.l.b16 %v3785
      %v3893 = vunpack.c.h.b16 %v3785
      %v3894 = vunpack.c.l.b16 %v3786
      %v3895 = vunpack.c.l.b16 %v3787
      %v3896 = vunpack.c.h.b16 %v3787
      %v3897 = vunpack.c.l.b16 %v3788
      %v3898 = vunpack.c.l.b16 %v3789
      %v3899 = vunpack.c.h.b16 %v3789
      %v3900 = vunpack.c.l.b16 %v3790
      %v3901 = vunpack.c.l.b16 %v3791
      %v3902 = vunpack.c.h.b16 %v3791
      %v3903 = vunpack.c.l.b16 %v3792
      %v3904 = vunpack.c.l.b16 %v3793
      %v3905 = vunpack.c.h.b16 %v3793
      %v3906 = vunpack.c.l.b16 %v3794
      %v3907 = vunpack.c.l.b16 %v3795
      %v3908 = vunpack.c.h.b16 %v3795
      %v3909 = vunpack.c.l.b16 %v3796
      %v3910 = vunpack.c.l.b16 %v3797
      %v3911 = vunpack.c.h.b16 %v3797
      %v3912 = vunpack.c.l.b16 %v3798
      %v3913 = vunpack.c.l.b16 %v3799
      %v3914 = vunpack.c.h.b16 %v3799
      %v3915 = vunpack.c.l.b16 %v3800
      %v3916 = vunpack.c.l.b16 %v3801
      %v3917 = vunpack.c.h.b16 %v3801
      %v3918 = vunpack.c.l.b16 %v3802
      %v3919 = vunpack.c.l.b16 %v3803
      %v3920 = vunpack.c.h.b16 %v3803
      %v3921 = vunpack.c.l.b16 %v3804
      %v3922 = vunpack.c.l.b16 %v3805
      %v3923 = vunpack.c.h.b16 %v3805
      %v3924 = vunpack.c.l.b16 %v3806
      %v3925 = vunpack.c.l.b16 %v3807
      %v3926 = vunpack.c.h.b16 %v3807
      %v3927 = vunpack.c.l.b16 %v3808
      %v3928 = vunpack.c.l.b16 %v3809
      %v3929 = vunpack.c.h.b16 %v3809
      %v3930 = vunpack.c.l.b16 %v3810
      %v3931 = vunpack.c.l.b16 %v3811
      %v3932 = vunpack.c.h.b16 %v3811
      %v3933 = vunpack.c.l.b16 %v3812
      %v3934 = vunpack.c.l.b16 %v3813
      %v3935 = vunpack.c.h.b16 %v3813
      %v3936 = vunpack.c.l.b16 %v3814
      %v3937 = vpack.c.b16 %v3886, %v3883
      %v3938 = vpack.c.b16 %v3887, %v3884
      %v3939 = vpack.c.b16 %v3888, %v3885
      %v3940 = vpack.c.b16 %v3892, %v3889
      %v3941 = vpack.c.b16 %v3893, %v3890
      %v3942 = vpack.c.b16 %v3894, %v3891
      %v3943 = vpack.c.b16 %v3898, %v3895
      %v3944 = vpack.c.b16 %v3899, %v3896
      %v3945 = vpack.c.b16 %v3900, %v3897
      %v3946 = vpack.c.b16 %v3904, %v3901
      %v3947 = vpack.c.b16 %v3905, %v3902
      %v3948 = vpack.c.b16 %v3906, %v3903
      %v3949 = vpack.c.b16 %v3910, %v3907
      %v3950 = vpack.c.b16 %v3911, %v3908
      %v3951 = vpack.c.b16 %v3912, %v3909
      %v3952 = vpack.c.b16 %v3916, %v3913
      %v3953 = vpack.c.b16 %v3917, %v3914
      %v3954 = vpack.c.b16 %v3918, %v3915
      %v3955 = vpack.c.b16 %v3922, %v3919
      %v3956 = vpack.c.b16 %v3923, %v3920
      %v3957 = vpack.c.b16 %v3924, %v3921
      %v3958 = vpack.c.b16 %v3928, %v3925
      %v3959 = vpack.c.b16 %v3929, %v3926
      %v3960 = vpack.c.b16 %v3930, %v3927
      %v3961 = vpack.c.b16 %v3934, %v3931
      %v3962 = vpack.c.b16 %v3935, %v3932
      %v3963 = vpack.c.b16 %v3936, %v3933
      %v3992 = vsel %vm521, %v3825, 0
      %v3995 = vsel %vm521, %v3829, 0
      %v3998 = vsel %vm521, %v3833, 0
      %v4001 = vsel %vm521, %v3837, 0
      %v4004 = vsel %vm521, %v3841, 0
      %4006 = vmatprep.subr.bf16.mxu0 %v3959
      %4007 = vmatpush1.bf16.msra.mxu0 %v3958
      %4008 = vmatprep.subr.bf16.mxu0 %v3956
      %4009 = vmatpush1.bf16.msra.mxu0 %v3955
      %4010 = vmatprep.subr.bf16.mxu0 %v3953
      %4011 = vmatpush1.bf16.msra.mxu0 %v3952
      %4012 = vmatprep.subr.bf16.mxu0 %v3950
      %4013 = vmatpush1.bf16.msra.mxu0 %v3949
      %4014 = vmatprep.subr.bf16.mxu0 %v3947
      %4015 = vmatpush1.bf16.msra.mxu0 %v3946
      %4016 = vmatprep.subr.bf16.mxu0 %v3944
      %4017 = vmatpush1.bf16.msra.mxu0 %v3943
      %4018 = vmatprep.subr.bf16.mxu0 %v3941
      %4019 = vmatpush1.bf16.msra.mxu0 %v3940
      %4020 = vmatprep.subr.bf16.mxu0 %v3938
      %4021 = vmatpush1.bf16.msra.mxu0 %v3937
      %4022 = vmatprep.subr.bf16.mxu0 0
      %4023 = vmatpush2.bf16.msra.mxu0 0
      %4024 = vmatprep.subr.bf16.mxu0 0
      %4025 = vmatpush2.bf16.msra.mxu0 0
      %4026 = vmatprep.subr.bf16.mxu0 0
      %4027 = vmatpush2.bf16.msra.mxu0 0
      %4028 = vmatprep.subr.bf16.mxu0 0
      %4029 = vmatpush2.bf16.msra.mxu0 0
      %4030 = vmatprep.subr.bf16.mxu0 0
      %4031 = vmatpush2.bf16.msra.mxu0 0
      %4032 = vmatprep.subr.bf16.mxu0 0
      %4033 = vmatpush2.bf16.msra.mxu0 0
      %4034 = vmatprep.subr.bf16.mxu0 0
      %4035 = vmatpush2.bf16.msra.mxu0 0
      %4036 = vmatprep.subr.bf16.mxu0 %v3962
      %4037 = vmatpush2.bf16.msra.mxu0 %v3961
      %4038 = vmatprep.mubr.bf16.mxu0 %v3992
      %4039 = vmatmul.mubr.bf16.gmra.mxu0 %v3822
      %v4040 = vpop.f32.mrf.mxu0
      %v4041 = vadd.f32 0.0, %v4040
      %v4042 = vpop.f32.mrf.mxu0
      %v4043 = vadd.f32 0.0, %v4042
      %v4044 = vpop.f32.mrf.mxu0
      %v4045 = vadd.f32 0.0, %v4044
      %v4046 = vpop.f32.mrf.mxu0
      %v4047 = vadd.f32 0.0, %v4046
      %4048 = vmatprep.mubr.bf16.mxu0 %v3995
      %4049 = vmatmul.mubr.bf16.gmra.mxu0 %v3827
      %v4050 = vpop.f32.mrf.mxu0
      %v4051 = vadd.f32 0.0, %v4050
      %v4052 = vpop.f32.mrf.mxu0
      %v4053 = vadd.f32 0.0, %v4052
      %v4054 = vpop.f32.mrf.mxu0
      %v4055 = vadd.f32 0.0, %v4054
      %v4056 = vpop.f32.mrf.mxu0
      %v4057 = vadd.f32 0.0, %v4056
      %4058 = vmatprep.mubr.bf16.mxu0 %v3998
      %4059 = vmatmul.mubr.bf16.gmra.mxu0 %v3831
      %v4060 = vpop.f32.mrf.mxu0
      %v4061 = vadd.f32 0.0, %v4060
      %v4062 = vpop.f32.mrf.mxu0
      %v4063 = vadd.f32 0.0, %v4062
      %v4064 = vpop.f32.mrf.mxu0
      %v4065 = vadd.f32 0.0, %v4064
      %v4066 = vpop.f32.mrf.mxu0
      %v4067 = vadd.f32 0.0, %v4066
      %4068 = vmatprep.mubr.bf16.mxu0 %v4001
      %4069 = vmatmul.mubr.bf16.gmra.mxu0 %v3835
      %v4070 = vpop.f32.mrf.mxu0
      %v4071 = vadd.f32 0.0, %v4070
      %v4072 = vpop.f32.mrf.mxu0
      %v4073 = vadd.f32 0.0, %v4072
      %v4074 = vpop.f32.mrf.mxu0
      %v4075 = vadd.f32 0.0, %v4074
      %v4076 = vpop.f32.mrf.mxu0
      %v4077 = vadd.f32 0.0, %v4076
      %4078 = vmatprep.mubr.bf16.mxu0 %v4004
      %4079 = vmatmul.mubr.bf16.gmra.mxu0 %v3839
      %v4080 = vpop.f32.mrf.mxu0
      %v4081 = vadd.f32 0.0, %v4080
      %v4082 = vpop.f32.mrf.mxu0
      %v4083 = vadd.f32 0.0, %v4082
      %v4084 = vpop.f32.mrf.mxu0
      %v4085 = vadd.f32 0.0, %v4084
      %v4086 = vpop.f32.mrf.mxu0
      %v4087 = vadd.f32 0.0, %v4086
      %4088 = vdwg.mxu0
      %4089 = vmatprep.subr.bf16.mxu0 0
      %4090 = vmatpush1.bf16.msra.mxu0 %v3960
      %4091 = vmatprep.subr.bf16.mxu0 0
      %4092 = vmatpush1.bf16.msra.mxu0 %v3957
      %4093 = vmatprep.subr.bf16.mxu0 0
      %4094 = vmatpush1.bf16.msra.mxu0 %v3954
      %4095 = vmatprep.subr.bf16.mxu0 0
      %4096 = vmatpush1.bf16.msra.mxu0 %v3951
      %4097 = vmatprep.subr.bf16.mxu0 0
      %4098 = vmatpush1.bf16.msra.mxu0 %v3948
      %4099 = vmatprep.subr.bf16.mxu0 0
      %4100 = vmatpush1.bf16.msra.mxu0 %v3945
      %4101 = vmatprep.subr.bf16.mxu0 0
      %4102 = vmatpush1.bf16.msra.mxu0 %v3942
      %4103 = vmatprep.subr.bf16.mxu0 0
      %4104 = vmatpush1.bf16.msra.mxu0 %v3939
      %4105 = vmatprep.subr.bf16.mxu0 0
      %4106 = vmatpush2.bf16.msra.mxu0 0
      %4107 = vmatprep.subr.bf16.mxu0 0
      %4108 = vmatpush2.bf16.msra.mxu0 0
      %4109 = vmatprep.subr.bf16.mxu0 0
      %4110 = vmatpush2.bf16.msra.mxu0 0
      %4111 = vmatprep.subr.bf16.mxu0 0
      %4112 = vmatpush2.bf16.msra.mxu0 0
      %4113 = vmatprep.subr.bf16.mxu0 0
      %4114 = vmatpush2.bf16.msra.mxu0 0
      %4115 = vmatprep.subr.bf16.mxu0 0
      %4116 = vmatpush2.bf16.msra.mxu0 0
      %4117 = vmatprep.subr.bf16.mxu0 0
      %4118 = vmatpush2.bf16.msra.mxu0 0
      %4119 = vmatprep.subr.bf16.mxu0 0
      %4120 = vmatpush2.bf16.msra.mxu0 %v3963
      %4121 = vmatprep.mubr.bf16.mxu0 %v3992
      %4122 = vmatmul.mubr.bf16.gmra.mxu0 %v3822
      %v4123 = vpop.f32.mrf.mxu0
      %v4124 = vadd.f32 0.0, %v4123
      %v4125 = vpop.f32.mrf.mxu0
      %v4126 = vpop.f32.mrf.mxu0
      %v4127 = vadd.f32 0.0, %v4126
      %v4128 = vpop.f32.mrf.mxu0
      %4129 = vmatprep.mubr.bf16.mxu0 %v3995
      %4130 = vmatmul.mubr.bf16.gmra.mxu0 %v3827
      %v4131 = vpop.f32.mrf.mxu0
      %v4132 = vadd.f32 0.0, %v4131
      %v4133 = vpop.f32.mrf.mxu0
      %v4134 = vpop.f32.mrf.mxu0
      %v4135 = vadd.f32 0.0, %v4134
      %v4136 = vpop.f32.mrf.mxu0
      %4137 = vmatprep.mubr.bf16.mxu0 %v3998
      %4138 = vmatmul.mubr.bf16.gmra.mxu0 %v3831
      %v4139 = vpop.f32.mrf.mxu0
      %v4140 = vadd.f32 0.0, %v4139
      %v4141 = vpop.f32.mrf.mxu0
      %v4142 = vpop.f32.mrf.mxu0
      %v4143 = vadd.f32 0.0, %v4142
      %v4144 = vpop.f32.mrf.mxu0
      %4145 = vmatprep.mubr.bf16.mxu0 %v4001
      %4146 = vmatmul.mubr.bf16.gmra.mxu0 %v3835
      %v4147 = vpop.f32.mrf.mxu0
      %v4148 = vadd.f32 0.0, %v4147
      %v4149 = vpop.f32.mrf.mxu0
      %v4150 = vpop.f32.mrf.mxu0
      %v4151 = vadd.f32 0.0, %v4150
      %v4152 = vpop.f32.mrf.mxu0
      %4153 = vmatprep.mubr.bf16.mxu0 %v4004
      %4154 = vmatmul.mubr.bf16.gmra.mxu0 %v3839
      %v4155 = vpop.f32.mrf.mxu0
      %v4156 = vadd.f32 0.0, %v4155
      %v4157 = vpop.f32.mrf.mxu0
      %v4158 = vpop.f32.mrf.mxu0
      %v4159 = vadd.f32 0.0, %v4158
      %v4160 = vpop.f32.mrf.mxu0
      %4161 = vdwg.mxu0
      %v4162 = vadd.f32 %v3740, %v4041
      %v4163 = vadd.f32 %v3741, %v4043
      %v4164 = vadd.f32 %v3742, %v4124
      %v4165 = vadd.f32 %v3743, %v4045
      %v4166 = vadd.f32 %v3744, %v4047
      %v4167 = vadd.f32 %v3745, %v4127
      %v4168 = vadd.f32 %v3746, %v4051
      %v4169 = vadd.f32 %v3747, %v4053
      %v4170 = vadd.f32 %v3748, %v4132
      %v4171 = vadd.f32 %v3749, %v4055
      %v4172 = vadd.f32 %v3750, %v4057
      %v4173 = vadd.f32 %v3751, %v4135
      %v4174 = vadd.f32 %v3752, %v4061
      %v4175 = vadd.f32 %v3753, %v4063
      %v4176 = vadd.f32 %v3754, %v4140
      %v4177 = vadd.f32 %v3755, %v4065
      %v4178 = vadd.f32 %v3756, %v4067
      %v4179 = vadd.f32 %v3757, %v4143
      %v4180 = vadd.f32 %v3758, %v4071
      %v4181 = vadd.f32 %v3759, %v4073
      %v4182 = vadd.f32 %v3760, %v4148
      %v4183 = vadd.f32 %v3761, %v4075
      %v4184 = vadd.f32 %v3762, %v4077
      %v4185 = vadd.f32 %v3763, %v4151
      %v4186 = vadd.f32 %v3764, %v4081
      %v4187 = vadd.f32 %v3765, %v4083
      %v4188 = vadd.f32 %v3766, %v4156
      %v4189 = vadd.f32 %v3767, %v4085
      %v4190 = vadd.f32 %v3768, %v4087
      %v4191 = vadd.f32 %v3769, %v4159
      %v4192 = vld [vmem:[%s2] sm:$0x7]
      %v4194 = vlaneseq
      %v4195 = vshrl.u32 %v4194, 7
      %v4196 = vsub.s32 0, %v4195
      %v4197 = vrot.slane %v4192, %v4196
      %v4198 = vlaneseq
      %v4199 = vshrl.u32 %v4198, 7
      %v4200 = vsub.s32 1, %v4199
      %v4201 = vrot.slane %v4192, %v4200
      %v4202 = vlaneseq
      %v4203 = vshrl.u32 %v4202, 7
      %v4204 = vsub.s32 2, %v4203
      %v4205 = vrot.slane %v4192, %v4204
      %v4209 = vadd.f32 %v4162, %v4197
      %v4210 = vadd.f32 %v4163, %v4201
      %v4211 = vadd.f32 %v4164, %v4205
      %v4212 = vadd.f32 %v4165, %v4197
      %v4213 = vadd.f32 %v4166, %v4201
      %v4214 = vadd.f32 %v4167, %v4205
      %v4215 = vadd.f32 %v4168, %v4197
      %v4216 = vadd.f32 %v4169, %v4201
      %v4217 = vadd.f32 %v4170, %v4205
      %v4218 = vadd.f32 %v4171, %v4197
      %v4219 = vadd.f32 %v4172, %v4201
      %v4220 = vadd.f32 %v4173, %v4205
      %v4221 = vadd.f32 %v4174, %v4197
      %v4222 = vadd.f32 %v4175, %v4201
      %v4223 = vadd.f32 %v4176, %v4205
      %v4224 = vadd.f32 %v4177, %v4197
      %v4225 = vadd.f32 %v4178, %v4201
      %v4226 = vadd.f32 %v4179, %v4205
      %v4227 = vadd.f32 %v4180, %v4197
      %v4228 = vadd.f32 %v4181, %v4201
      %v4229 = vadd.f32 %v4182, %v4205
      %v4230 = vadd.f32 %v4183, %v4197
      %v4231 = vadd.f32 %v4184, %v4201
      %v4232 = vadd.f32 %v4185, %v4205
      %v4233 = vadd.f32 %v4186, %v4197
      %v4234 = vadd.f32 %v4187, %v4201
      %v4235 = vadd.f32 %v4188, %v4205
      %v4236 = vadd.f32 %v4189, %v4197
      %v4237 = vadd.f32 %v4190, %v4201
      %v4238 = vadd.f32 %v4191, %v4205
      %v4239 = vmax.f32 %v4209, 0.0
      %v4240 = vmax.f32 %v4210, 0.0
      %v4241 = vmax.f32 %v4211, 0.0
      %v4242 = vmax.f32 %v4212, 0.0
      %v4243 = vmax.f32 %v4213, 0.0
      %v4244 = vmax.f32 %v4214, 0.0
      %v4245 = vmax.f32 %v4215, 0.0
      %v4246 = vmax.f32 %v4216, 0.0
      %v4247 = vmax.f32 %v4217, 0.0
      %v4248 = vmax.f32 %v4218, 0.0
      %v4249 = vmax.f32 %v4219, 0.0
      %v4250 = vmax.f32 %v4220, 0.0
      %v4251 = vmax.f32 %v4221, 0.0
      %v4252 = vmax.f32 %v4222, 0.0
      %v4253 = vmax.f32 %v4223, 0.0
      %v4254 = vmax.f32 %v4224, 0.0
      %v4255 = vmax.f32 %v4225, 0.0
      %v4256 = vmax.f32 %v4226, 0.0
      %v4257 = vmax.f32 %v4227, 0.0
      %v4258 = vmax.f32 %v4228, 0.0
      %v4259 = vmax.f32 %v4229, 0.0
      %v4260 = vmax.f32 %v4230, 0.0
      %v4261 = vmax.f32 %v4231, 0.0
      %v4262 = vmax.f32 %v4232, 0.0
      %v4263 = vmax.f32 %v4233, 0.0
      %v4264 = vmax.f32 %v4234, 0.0
      %v4265 = vmax.f32 %v4235, 0.0
      %v4266 = vmax.f32 %v4236, 0.0
      %v4267 = vmax.f32 %v4237, 0.0
      %v4268 = vmax.f32 %v4238, 0.0
      %v4269 = vpack.c.bf16 %v4242, %v4239
      %v4270 = vpack.c.bf16 %v4243, %v4240
      %v4271 = vpack.c.bf16 %v4244, %v4241
      %v4272 = vpack.c.bf16 %v4248, %v4245
      %v4273 = vpack.c.bf16 %v4249, %v4246
      %v4274 = vpack.c.bf16 %v4250, %v4247
      %v4275 = vpack.c.bf16 %v4254, %v4251
      %v4276 = vpack.c.bf16 %v4255, %v4252
      %v4277 = vpack.c.bf16 %v4256, %v4253
      %v4278 = vpack.c.bf16 %v4260, %v4257
      %v4279 = vpack.c.bf16 %v4261, %v4258
      %v4280 = vpack.c.bf16 %v4262, %v4259
      %v4281 = vpack.c.bf16 %v4266, %v4263
      %v4282 = vpack.c.bf16 %v4267, %v4264
      %v4283 = vpack.c.bf16 %v4268, %v4265
      %v4299 = vunpack.c.l.b16 %v4269
      %v4300 = vunpack.c.l.b16 %v4270
      %v4301 = vunpack.c.l.b16 %v4271
      %v4302 = vunpack.c.h.b16 %v4269
      %v4303 = vunpack.c.h.b16 %v4270
      %v4304 = vunpack.c.h.b16 %v4271
      %v4305 = vunpack.c.l.b16 %v4272
      %v4306 = vunpack.c.l.b16 %v4273
      %v4307 = vunpack.c.l.b16 %v4274
      %v4308 = vunpack.c.h.b16 %v4272
      %v4309 = vunpack.c.h.b16 %v4273
      %v4310 = vunpack.c.h.b16 %v4274
      %v4311 = vunpack.c.l.b16 %v4275
      %v4312 = vunpack.c.l.b16 %v4276
      %v4313 = vunpack.c.l.b16 %v4277
      %v4314 = vunpack.c.h.b16 %v4275
      %v4315 = vunpack.c.h.b16 %v4276
      %v4316 = vunpack.c.h.b16 %v4277
      %v4317 = vunpack.c.l.b16 %v4278
      %v4318 = vunpack.c.l.b16 %v4279
      %v4319 = vunpack.c.l.b16 %v4280
      %v4320 = vunpack.c.h.b16 %v4278
      %v4321 = vunpack.c.h.b16 %v4279
      %v4322 = vunpack.c.h.b16 %v4280
      %v4323 = vunpack.c.l.b16 %v4281
      %v4324 = vunpack.c.l.b16 %v4282
      %v4325 = vunpack.c.l.b16 %v4283
      %v4326 = vunpack.c.h.b16 %v4281
      %v4327 = vunpack.c.h.b16 %v4282
      %v4328 = vunpack.c.h.b16 %v4283
      %v4329 = vpack.c.b16 %v4300, %v4299
      %v4330 = vpack.c.b16 %v4301, %v4301
      %v4331 = vpack.c.b16 %v4303, %v4302
      %v4332 = vpack.c.b16 %v4304, %v4304
      %v4333 = vpack.c.b16 %v4306, %v4305
      %v4334 = vpack.c.b16 %v4307, %v4307
      %v4335 = vpack.c.b16 %v4309, %v4308
      %v4336 = vpack.c.b16 %v4310, %v4310
      %v4337 = vpack.c.b16 %v4312, %v4311
      %v4338 = vpack.c.b16 %v4313, %v4313
      %v4339 = vpack.c.b16 %v4315, %v4314
      %v4340 = vpack.c.b16 %v4316, %v4316
      %v4341 = vpack.c.b16 %v4318, %v4317
      %v4342 = vpack.c.b16 %v4319, %v4319
      %v4343 = vpack.c.b16 %v4321, %v4320
      %v4344 = vpack.c.b16 %v4322, %v4322
      %v4345 = vpack.c.b16 %v4324, %v4323
      %v4346 = vpack.c.b16 %v4325, %v4325
      %v4347 = vpack.c.b16 %v4327, %v4326
      %v4348 = vpack.c.b16 %v4328, %v4328
      %4369 = vst [vmem:[%s170] sm:$0xff] %v4329
      %vm4370 = vcmask 257024
      %4371 = vst.msk [vmem:[%s170 + $0x8] sm:$0xf] %vm4370, %v4330
      %4372 = vst [vmem:[%s170 + $0xc] sm:$0xff] %v4331
      %4373 = vst.msk [vmem:[%s170 + $0x14] sm:$0xf] %vm4370, %v4332
      %4374 = vst [vmem:[%s170 + $0x18] sm:$0xff] %v4333
      %4375 = vst.msk [vmem:[%s170 + $0x20] sm:$0xf] %vm4370, %v4334
      %4376 = vst [vmem:[%s170 + $0x24] sm:$0xff] %v4335
      %4377 = vst.msk [vmem:[%s170 + $0x2c] sm:$0xf] %vm4370, %v4336
      %4378 = vst [vmem:[%s170 + $0x30] sm:$0xff] %v4337
      %4379 = vst.msk [vmem:[%s170 + $0x38] sm:$0xf] %vm4370, %v4338
      %4380 = vst [vmem:[%s170 + $0x3c] sm:$0xff] %v4339
      %4381 = vst.msk [vmem:[%s170 + $0x44] sm:$0xf] %vm4370, %v4340
      %4382 = vst [vmem:[%s170 + $0x48] sm:$0xff] %v4341
      %4383 = vst.msk [vmem:[%s170 + $0x50] sm:$0xf] %vm4370, %v4342
      %4384 = vst [vmem:[%s170 + $0x54] sm:$0xff] %v4343
      %4385 = vst.msk [vmem:[%s170 + $0x5c] sm:$0xf] %vm4370, %v4344
      %4386 = vst [vmem:[%s170 + $0x60] sm:$0xff] %v4345
      %4387 = vst.msk [vmem:[%s170 + $0x68] sm:$0xf] %vm4370, %v4346
      %4388 = vst [vmem:[%s170 + $0x6c] sm:$0xff] %v4347
      %4389 = vst.msk [vmem:[%s170 + $0x74] sm:$0xf] %vm4370, %v4348
      %p4390 = scmp.lt.s32.totalorder %s14, 7
      %s4391 = scalar_select %p4390, %s14, 7
      %s4392 = smul.addr %s4391, 30
      %s4393 = smul.addr %s4392, 4
      %s4394 = scalar_lea.vmem %s3, %s4393
      // Predicated region
      $region33: #{mixed4e_forward.8} parent=31 // pred_check
        %p4395 = pneg %p100
      $region34: #{mixed4e_forward.8} parent=31 // pred_check_branch
        %4397 = sbr.rel (%p4395) target = $region36
      $region35: #{mixed4e_forward.8} parent=31 // pred_region
        _
      $region36: #{mixed4e_forward.8} parent=31 // pred_fallthru
        _
    $region32: #{mixed4e_forward.8} parent=5 // pred_fallthru
      _
    %p4398 = scmp.le.s32.totalorder 2, %s9
    // Predicated region
    $region37: #{mixed4e_forward.8} parent=5 // pred_check
      %p4399 = pneg %p4398
    $region38: #{mixed4e_forward.8} parent=5 // pred_check_branch
      %4401 = sbr.rel (%p4399) target = $region40
    $region39: #{mixed4e_forward.8} parent=5 // pred_region
      %s4402 = ssub.s32 %s9, 2
      // Predicated region
      $region41: #{mixed4e_forward.8} parent=39 // pred_check
        %p4403 = pneg %p106
      $region42: #{mixed4e_forward.8} parent=39 // pred_check_branch
        %4405 = sbr.rel (%p4403) target = $region44
      $region43: #{mixed4e_forward.8} parent=39 // pred_region
        %p4406 = scmp.lt.s32.totalorder %s15, 7
        %s4407 = scalar_select %p4406, %s15, 7
        %s4408 = smul.addr %s4407, 30
        %s4409 = smul.addr %s4408, 4
        %s4410 = scalar_lea.vmem %s3, %s4409
      $region44: #{mixed4e_forward.8} parent=39 // pred_fallthru
        _
    $region40: #{mixed4e_forward.8} parent=5 // pred_fallthru
      _
  $region6: #{mixed4e_forward.8} parent=0 // loop_footer
    %s13 = sadd.s32 1, %s9
  $region7: #{mixed4e_forward.8} parent=0 // loop_footer_branch
    %8 = sbr.rel target = $region3
  $region8: #{mixed4e_forward.8} parent=0 // loop_exit
    _

// kernel: mixed4e_forward.9
$region0: #{mixed4e_forward.9}
  #allocation0 [shape = 'u32[]', space=smem, size = 0x4, offset = 0x4, fixed_abs, tag = 'smem constant byte address 0x4 - core index']
  #allocation1 [shape = 'u32[144,128]{1,0:T(1,128)}', space=vmem, size = 0x12000, scoped, tag = 'internal scratch']
  #allocation2 [shape = 'f32[64,288]{1,0:T(8,128)}', space=vmem, size = 0x18000, scoped, tag = 'scratch operand']
  %s0 = inlined_call_operand.vmem [shape: bf16[2,6,64,288], index: 0, kind: input, shape index: {}]
  %s1 = inlined_call_operand.vmem [shape: bf16[3,288,288], index: 1, kind: input, shape index: {}]
  %s2 = inlined_call_operand.vmem [shape: f32[1,288], index: 2, kind: input, shape index: {}]
  %s3 = inlined_call_operand.vmem [shape: f32[2,4,64,288], index: 3, kind: output, shape index: {}]
  %s4 = sld [smem:[#allocation0]]
  $region53: #{mixed4e_forward.9} parent=0
    _
  %s6 = ssub.s32 1, %s4
  %s7 = scalar_select 0, %s6, %s4
  loop: start=0, step=1, limit=26
  $region2: #{mixed4e_forward.9} parent=0 // loop_pre_header
    _
  $region3: #{mixed4e_forward.9} parent=0 // loop_header
    %s9 = sphi 0, %s13
    %p10 = scmp.ge.s32.totalorder %s9, 26
    %s16 = sphi 0, %s35
    %s17 = sphi 0, %s31
    %s18 = sphi 0, %s27
    %s19 = sphi 0, %s16
    %s20 = sphi 0, %s17
    %s21 = sphi 0, %s18
    %s22 = sphi 0, %s19
    %s23 = sphi 0, %s20
    %s24 = sphi 0, %s21
    %s42 = sphi 0, %s44
    %s45 = sphi 0, %s42
    %s46 = sphi 0, %s45
    %s62 = sphi 0, %s46
    %s68 = sphi 0, %s70
    %s71 = sphi 0, %s68
    %s72 = sphi 0, %s71
    %s88 = sphi 0, %s72
    %s92 = sphi 0, %s92
    %s94 = sphi 0, %s92
    %s95 = sphi 0, %s94
    %s109 = sphi 0, %s95
    %s117 = sphi 0, %s119
    %s120 = sphi 0, %s117
    %s121 = sphi 0, %s120
    %s137 = sphi 0, %s121
  $region4: #{mixed4e_forward.9} parent=0 // loop_header_branch
    %12 = sbr.rel (%p10) target = $region8
  $region5: #{mixed4e_forward.9} parent=0 // loop_body
    %s14 = ssub.s32 %s9, 1
    %s15 = ssub.s32 %s9, 2
    %s25 = sadd.s32 1, %s18
    %p26 = scmp.ge.s32.totalorder %s25, 3
    %s27 = scalar_select %p26, 0, %s25
    %s28 = sadd.s32 1, %s17
    %s29 = scalar_select %p26, %s28, %s17
    %p30 = scmp.ge.s32.totalorder %s29, 4
    %s31 = scalar_select %p30, 0, %s29
    %s32 = sadd.s32 1, %s16
    %s33 = scalar_select %p30, %s32, %s16
    %p34 = scmp.ge.s32.totalorder %s33, 2
    %s35 = scalar_select %p34, 0, %s33
    %s36 = sadd.s32 %s17, %s18
    %s37 = sadd.s32 %s31, %s27
    %s38 = ssub.s32 %s16, %s35
    %s39 = ssub.s32 %s36, %s37
    %s40 = sor.u32 %s38, %s39
    %p41 = scmp.eq.s32.totalorder %s40, 0
    %s43 = sadd.s32 %s42, 1
    %s44 = scalar_select %p41, %s42, %s43
    %p47 = pneg %p41
    %p48 = scmp.eq.s32.totalorder %s9, 23
    %p49 = por %p47, %p48
    %p50 = scmp.ne.s32.totalorder %s42, %s45
    %p51 = scmp.eq.s32.totalorder %s9, 0
    %p52 = por %p50, %p51
    %p53 = scmp.ne.s32.totalorder %s42, %s45
    %p54 = scmp.eq.s32.totalorder %s14, 23
    %p55 = por %p53, %p54
    %p56 = scmp.ne.s32.totalorder %s45, %s46
    %p57 = scmp.eq.s32.totalorder %s14, 0
    %p58 = por %p56, %p57
    %p59 = scmp.ne.s32.totalorder %s45, %s46
    %p60 = scmp.eq.s32.totalorder %s15, 23
    %p61 = por %p59, %p60
    %p63 = scmp.ne.s32.totalorder %s46, %s62
    %p64 = scmp.eq.s32.totalorder %s15, 0
    %p65 = por %p63, %p64
    %s66 = ssub.s32 %s18, %s27
    %p67 = scmp.eq.s32.totalorder %s66, 0
    %s69 = sadd.s32 %s68, 1
    %s70 = scalar_select %p67, %s68, %s69
    %p73 = pneg %p67
    %p74 = scmp.eq.s32.totalorder %s9, 23
    %p75 = por %p73, %p74
    %p76 = scmp.ne.s32.totalorder %s68, %s71
    %p77 = scmp.eq.s32.totalorder %s9, 0
    %p78 = por %p76, %p77
    %p79 = scmp.ne.s32.totalorder %s68, %s71
    %p80 = scmp.eq.s32.totalorder %s14, 23
    %p81 = por %p79, %p80
    %p82 = scmp.ne.s32.totalorder %s71, %s72
    %p83 = scmp.eq.s32.totalorder %s14, 0
    %p84 = por %p82, %p83
    %p85 = scmp.ne.s32.totalorder %s71, %s72
    %p86 = scmp.eq.s32.totalorder %s15, 23
    %p87 = por %p85, %p86
    %p89 = scmp.ne.s32.totalorder %s72, %s88
    %p90 = scmp.eq.s32.totalorder %s15, 0
    %p91 = por %p89, %p90
    %s93 = sadd.s32 %s92, 1
    %p96 = scmp.eq.s32.totalorder %s9, 23
    %p97 = scmp.ne.s32.totalorder %s92, %s94
    %p98 = scmp.eq.s32.totalorder %s9, 0
    %p99 = por %p97, %p98
    %p100 = scmp.ne.s32.totalorder %s92, %s94
    %p101 = scmp.eq.s32.totalorder %s14, 23
    %p102 = por %p100, %p101
    %p103 = scmp.ne.s32.totalorder %s94, %s95
    %p104 = scmp.eq.s32.totalorder %s14, 0
    %p105 = por %p103, %p104
    %p106 = scmp.ne.s32.totalorder %s94, %s95
    %p107 = scmp.eq.s32.totalorder %s15, 23
    %p108 = por %p106, %p107
    %p110 = scmp.ne.s32.totalorder %s95, %s109
    %p111 = scmp.eq.s32.totalorder %s15, 0
    %p112 = por %p110, %p111
    %s113 = ssub.s32 %s16, %s35
    %s114 = ssub.s32 %s17, %s31
    %s115 = sor.u32 %s113, %s114
    %p116 = scmp.eq.s32.totalorder %s115, 0
    %s118 = sadd.s32 %s117, 1
    %s119 = scalar_select %p116, %s117, %s118
    %p122 = pneg %p116
    %p123 = scmp.eq.s32.totalorder %s9, 23
    %p124 = por %p122, %p123
    %p125 = scmp.ne.s32.totalorder %s117, %s120
    %p126 = scmp.eq.s32.totalorder %s9, 0
    %p127 = por %p125, %p126
    %p128 = scmp.ne.s32.totalorder %s117, %s120
    %p129 = scmp.eq.s32.totalorder %s14, 23
    %p130 = por %p128, %p129
    %p131 = scmp.ne.s32.totalorder %s120, %s121
    %p132 = scmp.eq.s32.totalorder %s14, 0
    %p133 = por %p131, %p132
    %p134 = scmp.ne.s32.totalorder %s120, %s121
    %p135 = scmp.eq.s32.totalorder %s15, 23
    %p136 = por %p134, %p135
    %p138 = scmp.ne.s32.totalorder %s121, %s137
    %p139 = scmp.eq.s32.totalorder %s15, 0
    %p140 = por %p138, %p139
    %p141 = scmp.le.s32.totalorder 1, %s9
    %p142 = scmp.lt.s32.totalorder %s9, 25
    %p143 = pnand %p141, %p142
    %p144 = pneg %p143
    // Predicated region
    $region9: #{mixed4e_forward.9} parent=5 // pred_check
      _
    $region10: #{mixed4e_forward.9} parent=5 // pred_check_branch
      %146 = sbr.rel (%p143) target = $region12
    $region11: #{mixed4e_forward.9} parent=5 // pred_region
      %s147 = ssub.s32 %s9, 1
      // Predicated region
      $region13: #{mixed4e_forward.9} parent=11 // pred_check
        %p148 = pneg %p105
      $region14: #{mixed4e_forward.9} parent=11 // pred_check_branch
        %150 = sbr.rel (%p148) target = $region16
      $region15: #{mixed4e_forward.9} parent=11 // pred_region
        _
      $region16: #{mixed4e_forward.9} parent=11 // pred_fallthru
        _
    $region12: #{mixed4e_forward.9} parent=5 // pred_fallthru
      _
    %p151 = scmp.lt.s32.totalorder %s9, 24
    // Predicated region
    $region17: #{mixed4e_forward.9} parent=5 // pred_check
      %p152 = pneg %p151
    $region18: #{mixed4e_forward.9} parent=5 // pred_check_branch
      %154 = sbr.rel (%p152) target = $region20
    $region19: #{mixed4e_forward.9} parent=5 // pred_region
      // Predicated region
      $region21: #{mixed4e_forward.9} parent=19 // pred_check
        %p155 = pneg %p52
      $region22: #{mixed4e_forward.9} parent=19 // pred_check_branch
        %157 = sbr.rel (%p155) target = $region24
      $region23: #{mixed4e_forward.9} parent=19 // pred_region
        %s158 = sadd.s32 %s17, %s18
        %p159 = scmp.lt.s32.totalorder %s16, 1
        %s160 = scalar_select %p159, %s16, 1
        %p161 = scmp.lt.s32.totalorder %s158, 5
        %s162 = scalar_select %p161, %s158, 5
        %s163 = smul.addr %s162, 24
        %s164 = smul.addr %s160, 144
        %s165 = sadd.s32 %s163, %s164
        %s166 = smul.addr %s165, 4
        %s167 = scalar_lea.vmem %s0, %s166
        %s168 = sadd.s32 %s17, %s18
      $region24: #{mixed4e_forward.9} parent=19 // pred_fallthru
        _
      // Predicated region
      $region25: #{mixed4e_forward.9} parent=19 // pred_check
        %p169 = pneg %p78
      $region26: #{mixed4e_forward.9} parent=19 // pred_check_branch
        %171 = sbr.rel (%p169) target = $region28
      $region27: #{mixed4e_forward.9} parent=19 // pred_region
        %p172 = scmp.lt.s32.totalorder %s18, 2
        %s173 = scalar_select %p172, %s18, 2
        %s174 = smul.addr %s173, 108
        %s175 = smul.addr %s174, 4
        %s176 = scalar_lea.vmem %s1, %s175
      $region28: #{mixed4e_forward.9} parent=19 // pred_fallthru
        _
    $region20: #{mixed4e_forward.9} parent=5 // pred_fallthru
      _
    %p177 = scmp.le.s32.totalorder 1, %s9
    %p178 = scmp.lt.s32.totalorder %s9, 25
    %p179 = pnand %p177, %p178
    %p180 = pneg %p179
    // Predicated region
    $region29: #{mixed4e_forward.9} parent=5 // pred_check
      _
    $region30: #{mixed4e_forward.9} parent=5 // pred_check_branch
      %182 = sbr.rel (%p179) target = $region32
    $region31: #{mixed4e_forward.9} parent=5 // pred_region
      %s183 = ssub.s32 %s9, 1
      %s184 = sadd.s32 %s20, %s21
      %p185 = scmp.lt.s32.totalorder %s19, 1
      %s186 = scalar_select %p185, %s19, 1
      %p187 = scmp.lt.s32.totalorder %s184, 5
      %s188 = scalar_select %p187, %s184, 5
      %s189 = smul.addr %s188, 24
      %s190 = smul.addr %s186, 144
      %s191 = sadd.s32 %s189, %s190
      %s192 = smul.addr %s191, 4
      %s193 = scalar_lea.vmem %s0, %s192
      %p194 = pneg %p58
      %p195 = pneg %p55
      %p196 = scmp.lt.s32.totalorder %s21, 2
      %s197 = scalar_select %p196, %s21, 2
      %s198 = smul.addr %s197, 108
      %s199 = smul.addr %s198, 4
      %s200 = scalar_lea.vmem %s1, %s199
      %p201 = pneg %p84
      %p202 = pneg %p81
      %p203 = pneg %p105
      %p204 = pneg %p102
      %p205 = pneg %p133
      %p206 = pneg %p130
      %p207 = scmp.lt.s32.totalorder %s19, 1
      %s208 = scalar_select %p207, %s19, 1
      %p209 = scmp.lt.s32.totalorder %s20, 3
      %s210 = scalar_select %p209, %s20, 3
      %s211 = smul.addr %s210, 24
      %s212 = smul.addr %s208, 96
      %s213 = sadd.s32 %s211, %s212
      %s214 = smul.addr %s213, 8
      %s215 = scalar_lea.vmem %s3, %s214
      %s216 = sadd.s32 %s20, %s21
      %p217 = scmp.lt.s32.totalorder %s19, 1
      %s218 = scalar_select %p217, %s19, 1
      %p219 = scmp.lt.s32.totalorder %s216, 5
      %s220 = scalar_select %p219, %s216, 5
      %s221 = smul.addr %s220, 24
      %s222 = smul.addr %s218, 144
      %s223 = sadd.s32 %s221, %s222
      %s224 = smul.addr %s223, 4
      %s225 = scalar_lea.vmem %s0, %s224
      %s226 = sadd.s32 %s20, %s21
      %p227 = scmp.lt.s32.totalorder %s21, 2
      %s228 = scalar_select %p227, %s21, 2
      %s229 = smul.addr %s228, 108
      %s230 = smul.addr %s229, 4
      %s231 = scalar_lea.vmem %s1, %s230
      %p232 = scmp.lt.s32.totalorder %s19, 1
      %s233 = scalar_select %p232, %s19, 1
      %p234 = scmp.lt.s32.totalorder %s20, 3
      %s235 = scalar_select %p234, %s20, 3
      %s236 = smul.addr %s235, 24
      %s237 = smul.addr %s233, 96
      %s238 = sadd.s32 %s236, %s237
      %s239 = smul.addr %s238, 8
      %s240 = scalar_lea.vmem %s3, %s239
      %p242 = scmp.eq.s32.totalorder %s21, 0
      // Predicated region
      $region33: #{mixed4e_forward.9} parent=31 // pred_check
        %p243 = pneg %p242
      $region34: #{mixed4e_forward.9} parent=31 // pred_check_branch
        %245 = sbr.rel (%p243) target = $region36
      $region35: #{mixed4e_forward.9} parent=31 // pred_region
        %246 = vst [vmem:[#allocation2] sm:$0xff] 0.0
        %247 = vst [vmem:[#allocation2 + $0x8] sm:$0xff] 0.0
        %vm248 = vcmask 261120
        %249 = vst.msk [vmem:[#allocation2 + $0x10] sm:$0xff] %vm248, 0.0
        %250 = vst [vmem:[#allocation2 + $0x18] sm:$0xff] 0.0
        %251 = vst [vmem:[#allocation2 + $0x20] sm:$0xff] 0.0
        %252 = vst.msk [vmem:[#allocation2 + $0x28] sm:$0xff] %vm248, 0.0
        %253 = vst [vmem:[#allocation2 + $0x30] sm:$0xff] 0.0
        %254 = vst [vmem:[#allocation2 + $0x38] sm:$0xff] 0.0
        %255 = vst.msk [vmem:[#allocation2 + $0x40] sm:$0xff] %vm248, 0.0
        %256 = vst [vmem:[#allocation2 + $0x48] sm:$0xff] 0.0
        %257 = vst [vmem:[#allocation2 + $0x50] sm:$0xff] 0.0
        %258 = vst.msk [vmem:[#allocation2 + $0x58] sm:$0xff] %vm248, 0.0
        %259 = vst [vmem:[#allocation2 + $0x60] sm:$0xff] 0.0
        %260 = vst [vmem:[#allocation2 + $0x68] sm:$0xff] 0.0
        %261 = vst.msk [vmem:[#allocation2 + $0x70] sm:$0xff] %vm248, 0.0
        %262 = vst [vmem:[#allocation2 + $0x78] sm:$0xff] 0.0
        %263 = vst [vmem:[#allocation2 + $0x80] sm:$0xff] 0.0
        %264 = vst.msk [vmem:[#allocation2 + $0x88] sm:$0xff] %vm248, 0.0
        %265 = vst [vmem:[#allocation2 + $0x90] sm:$0xff] 0.0
        %266 = vst [vmem:[#allocation2 + $0x98] sm:$0xff] 0.0
        %267 = vst.msk [vmem:[#allocation2 + $0xa0] sm:$0xff] %vm248, 0.0
        %268 = vst [vmem:[#allocation2 + $0xa8] sm:$0xff] 0.0
        %269 = vst [vmem:[#allocation2 + $0xb0] sm:$0xff] 0.0
        %270 = vst.msk [vmem:[#allocation2 + $0xb8] sm:$0xff] %vm248, 0.0
      $region36: #{mixed4e_forward.9} parent=31 // pred_fallthru
        _
      %v271 = vld [vmem:[#allocation2] sm:$0xff]
      %v272 = vld [vmem:[#allocation2 + $0x8] sm:$0xff]
      %v273 = vld [vmem:[#allocation2 + $0x10] sm:$0xff]
      %v274 = vld [vmem:[#allocation2 + $0x18] sm:$0xff]
      %v275 = vld [vmem:[#allocation2 + $0x20] sm:$0xff]
      %v276 = vld [vmem:[#allocation2 + $0x28] sm:$0xff]
      %v277 = vld [vmem:[#allocation2 + $0x30] sm:$0xff]
      %v278 = vld [vmem:[#allocation2 + $0x38] sm:$0xff]
      %v279 = vld [vmem:[#allocation2 + $0x40] sm:$0xff]
      %v280 = vld [vmem:[#allocation2 + $0x48] sm:$0xff]
      %v281 = vld [vmem:[#allocation2 + $0x50] sm:$0xff]
      %v282 = vld [vmem:[#allocation2 + $0x58] sm:$0xff]
      %v283 = vld [vmem:[#allocation2 + $0x60] sm:$0xff]
      %v284 = vld [vmem:[#allocation2 + $0x68] sm:$0xff]
      %v285 = vld [vmem:[#allocation2 + $0x70] sm:$0xff]
      %v286 = vld [vmem:[#allocation2 + $0x78] sm:$0xff]
      %v287 = vld [vmem:[#allocation2 + $0x80] sm:$0xff]
      %v288 = vld [vmem:[#allocation2 + $0x88] sm:$0xff]
      %v289 = vld [vmem:[#allocation2 + $0x90] sm:$0xff]
      %v290 = vld [vmem:[#allocation2 + $0x98] sm:$0xff]
      %v291 = vld [vmem:[#allocation2 + $0xa0] sm:$0xff]
      %v292 = vld [vmem:[#allocation2 + $0xa8] sm:$0xff]
      %v293 = vld [vmem:[#allocation2 + $0xb0] sm:$0xff]
      %v294 = vld [vmem:[#allocation2 + $0xb8] sm:$0xff]
      %v295 = vld [vmem:[%s225] sm:$0xff]
      %v296 = vld [vmem:[%s225 + $0x8] sm:$0xf]
      %v297 = vld [vmem:[%s225 + $0xc] sm:$0xff]
      %v298 = vld [vmem:[%s225 + $0x14] sm:$0xf]
      %v299 = vld [vmem:[%s225 + $0x18] sm:$0xff]
      %v300 = vld [vmem:[%s225 + $0x20] sm:$0xf]
      %v301 = vld [vmem:[%s225 + $0x24] sm:$0xff]
      %v302 = vld [vmem:[%s225 + $0x2c] sm:$0xf]
      %v303 = vld [vmem:[%s225 + $0x30] sm:$0xff]
      %v304 = vld [vmem:[%s225 + $0x38] sm:$0xf]
      %v305 = vld [vmem:[%s225 + $0x3c] sm:$0xff]
      %v306 = vld [vmem:[%s225 + $0x44] sm:$0xf]
      %v307 = vld [vmem:[%s225 + $0x48] sm:$0xff]
      %v308 = vld [vmem:[%s225 + $0x50] sm:$0xf]
      %v309 = vld [vmem:[%s225 + $0x54] sm:$0xff]
      %v310 = vld [vmem:[%s225 + $0x5c] sm:$0xf]
      %v311 = vld [vmem:[%s231] sm:$0xff]
      %v312 = vld [vmem:[%s231 + $0x8] sm:$0xf]
      %v313 = vld [vmem:[%s231 + $0xc] sm:$0xff]
      %v314 = vld [vmem:[%s231 + $0x14] sm:$0xf]
      %v315 = vld [vmem:[%s231 + $0x18] sm:$0xff]
      %v316 = vld [vmem:[%s231 + $0x20] sm:$0xf]
      %v317 = vld [vmem:[%s231 + $0x24] sm:$0xff]
      %v318 = vld [vmem:[%s231 + $0x2c] sm:$0xf]
      %v319 = vld [vmem:[%s231 + $0x30] sm:$0xff]
      %v320 = vld [vmem:[%s231 + $0x38] sm:$0xf]
      %v321 = vld [vmem:[%s231 + $0x3c] sm:$0xff]
      %v322 = vld [vmem:[%s231 + $0x44] sm:$0xf]
      %v323 = vld [vmem:[%s231 + $0x48] sm:$0xff]
      %v324 = vld [vmem:[%s231 + $0x50] sm:$0xf]
      %v325 = vld [vmem:[%s231 + $0x54] sm:$0xff]
      %v326 = vld [vmem:[%s231 + $0x5c] sm:$0xf]
      %v327 = vld [vmem:[%s231 + $0x60] sm:$0xff]
      %v328 = vld [vmem:[%s231 + $0x68] sm:$0xf]
      %v329 = vld [vmem:[%s231 + $0x6c] sm:$0xff]
      %v330 = vld [vmem:[%s231 + $0x74] sm:$0xf]
      %v331 = vld [vmem:[%s231 + $0x78] sm:$0xff]
      %v332 = vld [vmem:[%s231 + $0x80] sm:$0xf]
      %v333 = vld [vmem:[%s231 + $0x84] sm:$0xff]
      %v334 = vld [vmem:[%s231 + $0x8c] sm:$0xf]
      %v335 = vld [vmem:[%s231 + $0x90] sm:$0xff]
      %v336 = vld [vmem:[%s231 + $0x98] sm:$0xf]
      %v337 = vld [vmem:[%s231 + $0x9c] sm:$0xff]
      %v338 = vld [vmem:[%s231 + $0xa4] sm:$0xf]
      %v339 = vld [vmem:[%s231 + $0xa8] sm:$0xff]
      %v340 = vld [vmem:[%s231 + $0xb0] sm:$0xf]
      %v341 = vld [vmem:[%s231 + $0xb4] sm:$0xff]
      %v342 = vld [vmem:[%s231 + $0xbc] sm:$0xf]
      %v343 = vld [vmem:[%s231 + $0xc0] sm:$0xff]
      %v344 = vld [vmem:[%s231 + $0xc8] sm:$0xf]
      %v345 = vld [vmem:[%s231 + $0xcc] sm:$0xff]
      %v346 = vld [vmem:[%s231 + $0xd4] sm:$0xf]
      %v347 = vld [vmem:[%s231 + $0xd8] sm:$0xff]
      %v348 = vld [vmem:[%s231 + $0xe0] sm:$0xf]
      %v349 = vld [vmem:[%s231 + $0xe4] sm:$0xff]
      %v350 = vld [vmem:[%s231 + $0xec] sm:$0xf]
      %v351 = vld [vmem:[%s231 + $0xf0] sm:$0xff]
      %v352 = vld [vmem:[%s231 + $0xf8] sm:$0xf]
      %v353 = vld [vmem:[%s231 + $0xfc] sm:$0xff]
      %v354 = vld [vmem:[%s231 + $0x104] sm:$0xf]
      %v355 = vld [vmem:[%s231 + $0x108] sm:$0xff]
      %v356 = vld [vmem:[%s231 + $0x110] sm:$0xf]
      %v357 = vld [vmem:[%s231 + $0x114] sm:$0xff]
      %v358 = vld [vmem:[%s231 + $0x11c] sm:$0xf]
      %v359 = vld [vmem:[%s231 + $0x120] sm:$0xff]
      %v360 = vld [vmem:[%s231 + $0x128] sm:$0xf]
      %v361 = vld [vmem:[%s231 + $0x12c] sm:$0xff]
      %v362 = vld [vmem:[%s231 + $0x134] sm:$0xf]
      %v363 = vld [vmem:[%s231 + $0x138] sm:$0xff]
      %v364 = vld [vmem:[%s231 + $0x140] sm:$0xf]
      %v365 = vld [vmem:[%s231 + $0x144] sm:$0xff]
      %v366 = vld [vmem:[%s231 + $0x14c] sm:$0xf]
      %v367 = vld [vmem:[%s231 + $0x150] sm:$0xff]
      %v368 = vld [vmem:[%s231 + $0x158] sm:$0xf]
      %v369 = vld [vmem:[%s231 + $0x15c] sm:$0xff]
      %v370 = vld [vmem:[%s231 + $0x164] sm:$0xf]
      %v371 = vld [vmem:[%s231 + $0x168] sm:$0xff]
      %v372 = vld [vmem:[%s231 + $0x170] sm:$0xf]
      %v373 = vld [vmem:[%s231 + $0x174] sm:$0xff]
      %v374 = vld [vmem:[%s231 + $0x17c] sm:$0xf]
      %v375 = vld [vmem:[%s231 + $0x180] sm:$0xff]
      %v376 = vld [vmem:[%s231 + $0x188] sm:$0xf]
      %v377 = vld [vmem:[%s231 + $0x18c] sm:$0xff]
      %v378 = vld [vmem:[%s231 + $0x194] sm:$0xf]
      %v379 = vld [vmem:[%s231 + $0x198] sm:$0xff]
      %v380 = vld [vmem:[%s231 + $0x1a0] sm:$0xf]
      %v381 = vld [vmem:[%s231 + $0x1a4] sm:$0xff]
      %v382 = vld [vmem:[%s231 + $0x1ac] sm:$0xf]
      %v399 = vunpack.c.l.b16 %v295
      %v400 = vunpack.c.h.b16 %v295
      %v401 = vunpack.c.l.b16 %v296
      %v402 = vunpack.c.l.b16 %v297
      %v403 = vunpack.c.h.b16 %v297
      %v404 = vunpack.c.l.b16 %v298
      %v405 = vunpack.c.l.b16 %v299
      %v406 = vunpack.c.h.b16 %v299
      %v407 = vunpack.c.l.b16 %v300
      %v408 = vunpack.c.l.b16 %v301
      %v409 = vunpack.c.h.b16 %v301
      %v410 = vunpack.c.l.b16 %v302
      %v411 = vunpack.c.l.b16 %v303
      %v412 = vunpack.c.h.b16 %v303
      %v413 = vunpack.c.l.b16 %v304
      %v414 = vunpack.c.l.b16 %v305
      %v415 = vunpack.c.h.b16 %v305
      %v416 = vunpack.c.l.b16 %v306
      %v417 = vunpack.c.l.b16 %v307
      %v418 = vunpack.c.h.b16 %v307
      %v419 = vunpack.c.l.b16 %v308
      %v420 = vunpack.c.l.b16 %v309
      %v421 = vunpack.c.h.b16 %v309
      %v422 = vunpack.c.l.b16 %v310
      %v423 = vpack.c.b16 %v402, %v399
      %v424 = vpack.c.b16 %v403, %v400
      %v425 = vpack.c.b16 %v404, %v401
      %v426 = vpack.c.b16 %v408, %v405
      %v427 = vpack.c.b16 %v409, %v406
      %v428 = vpack.c.b16 %v410, %v407
      %v429 = vpack.c.b16 %v414, %v411
      %v430 = vpack.c.b16 %v415, %v412
      %v431 = vpack.c.b16 %v416, %v413
      %v432 = vpack.c.b16 %v420, %v417
      %v433 = vpack.c.b16 %v421, %v418
      %v434 = vpack.c.b16 %v422, %v419
      %v515 = vunpack.c.l.b16 %v311
      %v516 = vunpack.c.h.b16 %v311
      %v517 = vunpack.c.l.b16 %v312
      %v518 = vunpack.c.l.b16 %v313
      %v519 = vunpack.c.h.b16 %v313
      %v520 = vunpack.c.l.b16 %v314
      %v521 = vunpack.c.l.b16 %v315
      %v522 = vunpack.c.h.b16 %v315
      %v523 = vunpack.c.l.b16 %v316
      %v524 = vunpack.c.l.b16 %v317
      %v525 = vunpack.c.h.b16 %v317
      %v526 = vunpack.c.l.b16 %v318
      %v527 = vunpack.c.l.b16 %v319
      %v528 = vunpack.c.h.b16 %v319
      %v529 = vunpack.c.l.b16 %v320
      %v530 = vunpack.c.l.b16 %v321
      %v531 = vunpack.c.h.b16 %v321
      %v532 = vunpack.c.l.b16 %v322
      %v533 = vunpack.c.l.b16 %v323
      %v534 = vunpack.c.h.b16 %v323
      %v535 = vunpack.c.l.b16 %v324
      %v536 = vunpack.c.l.b16 %v325
      %v537 = vunpack.c.h.b16 %v325
      %v538 = vunpack.c.l.b16 %v326
      %v539 = vunpack.c.l.b16 %v327
      %v540 = vunpack.c.h.b16 %v327
      %v541 = vunpack.c.l.b16 %v328
      %v542 = vunpack.c.l.b16 %v329
      %v543 = vunpack.c.h.b16 %v329
      %v544 = vunpack.c.l.b16 %v330
      %v545 = vunpack.c.l.b16 %v331
      %v546 = vunpack.c.h.b16 %v331
      %v547 = vunpack.c.l.b16 %v332
      %v548 = vunpack.c.l.b16 %v333
      %v549 = vunpack.c.h.b16 %v333
      %v550 = vunpack.c.l.b16 %v334
      %v551 = vunpack.c.l.b16 %v335
      %v552 = vunpack.c.h.b16 %v335
      %v553 = vunpack.c.l.b16 %v336
      %v554 = vunpack.c.l.b16 %v337
      %v555 = vunpack.c.h.b16 %v337
      %v556 = vunpack.c.l.b16 %v338
      %v557 = vunpack.c.l.b16 %v339
      %v558 = vunpack.c.h.b16 %v339
      %v559 = vunpack.c.l.b16 %v340
      %v560 = vunpack.c.l.b16 %v341
      %v561 = vunpack.c.h.b16 %v341
      %v562 = vunpack.c.l.b16 %v342
      %v563 = vunpack.c.l.b16 %v343
      %v564 = vunpack.c.h.b16 %v343
      %v565 = vunpack.c.l.b16 %v344
      %v566 = vunpack.c.l.b16 %v345
      %v567 = vunpack.c.h.b16 %v345
      %v568 = vunpack.c.l.b16 %v346
      %v569 = vunpack.c.l.b16 %v347
      %v570 = vunpack.c.h.b16 %v347
      %v571 = vunpack.c.l.b16 %v348
      %v572 = vunpack.c.l.b16 %v349
      %v573 = vunpack.c.h.b16 %v349
      %v574 = vunpack.c.l.b16 %v350
      %v575 = vunpack.c.l.b16 %v351
      %v576 = vunpack.c.h.b16 %v351
      %v577 = vunpack.c.l.b16 %v352
      %v578 = vunpack.c.l.b16 %v353
      %v579 = vunpack.c.h.b16 %v353
      %v580 = vunpack.c.l.b16 %v354
      %v581 = vunpack.c.l.b16 %v355
      %v582 = vunpack.c.h.b16 %v355
      %v583 = vunpack.c.l.b16 %v356
      %v584 = vunpack.c.l.b16 %v357
      %v585 = vunpack.c.h.b16 %v357
      %v586 = vunpack.c.l.b16 %v358
      %v587 = vunpack.c.l.b16 %v359
      %v588 = vunpack.c.h.b16 %v359
      %v589 = vunpack.c.l.b16 %v360
      %v590 = vunpack.c.l.b16 %v361
      %v591 = vunpack.c.h.b16 %v361
      %v592 = vunpack.c.l.b16 %v362
      %v593 = vunpack.c.l.b16 %v363
      %v594 = vunpack.c.h.b16 %v363
      %v595 = vunpack.c.l.b16 %v364
      %v596 = vunpack.c.l.b16 %v365
      %v597 = vunpack.c.h.b16 %v365
      %v598 = vunpack.c.l.b16 %v366
      %v599 = vunpack.c.l.b16 %v367
      %v600 = vunpack.c.h.b16 %v367
      %v601 = vunpack.c.l.b16 %v368
      %v602 = vunpack.c.l.b16 %v369
      %v603 = vunpack.c.h.b16 %v369
      %v604 = vunpack.c.l.b16 %v370
      %v605 = vunpack.c.l.b16 %v371
      %v606 = vunpack.c.h.b16 %v371
      %v607 = vunpack.c.l.b16 %v372
      %v608 = vunpack.c.l.b16 %v373
      %v609 = vunpack.c.h.b16 %v373
      %v610 = vunpack.c.l.b16 %v374
      %v611 = vunpack.c.l.b16 %v375
      %v612 = vunpack.c.h.b16 %v375
      %v613 = vunpack.c.l.b16 %v376
      %v614 = vunpack.c.l.b16 %v377
      %v615 = vunpack.c.h.b16 %v377
      %v616 = vunpack.c.l.b16 %v378
      %v617 = vunpack.c.l.b16 %v379
      %v618 = vunpack.c.h.b16 %v379
      %v619 = vunpack.c.l.b16 %v380
      %v620 = vunpack.c.l.b16 %v381
      %v621 = vunpack.c.h.b16 %v381
      %v622 = vunpack.c.l.b16 %v382
      %v623 = vpack.c.b16 %v518, %v515
      %v624 = vpack.c.b16 %v519, %v516
      %v625 = vpack.c.b16 %v520, %v517
      %v626 = vpack.c.b16 %v524, %v521
      %v627 = vpack.c.b16 %v525, %v522
      %v628 = vpack.c.b16 %v526, %v523
      %v629 = vpack.c.b16 %v530, %v527
      %v630 = vpack.c.b16 %v531, %v528
      %v631 = vpack.c.b16 %v532, %v529
      %v632 = vpack.c.b16 %v536, %v533
      %v633 = vpack.c.b16 %v537, %v534
      %v634 = vpack.c.b16 %v538, %v535
      %v635 = vpack.c.b16 %v542, %v539
      %v636 = vpack.c.b16 %v543, %v540
      %v637 = vpack.c.b16 %v544, %v541
      %v638 = vpack.c.b16 %v548, %v545
      %v639 = vpack.c.b16 %v549, %v546
      %v640 = vpack.c.b16 %v550, %v547
      %v641 = vpack.c.b16 %v554, %v551
      %v642 = vpack.c.b16 %v555, %v552
      %v643 = vpack.c.b16 %v556, %v553
      %v644 = vpack.c.b16 %v560, %v557
      %v645 = vpack.c.b16 %v561, %v558
      %v646 = vpack.c.b16 %v562, %v559
      %v647 = vpack.c.b16 %v566, %v563
      %v648 = vpack.c.b16 %v567, %v564
      %v649 = vpack.c.b16 %v568, %v565
      %v650 = vpack.c.b16 %v572, %v569
      %v651 = vpack.c.b16 %v573, %v570
      %v652 = vpack.c.b16 %v574, %v571
      %v653 = vpack.c.b16 %v578, %v575
      %v654 = vpack.c.b16 %v579, %v576
      %v655 = vpack.c.b16 %v580, %v577
      %v656 = vpack.c.b16 %v584, %v581
      %v657 = vpack.c.b16 %v585, %v582
      %v658 = vpack.c.b16 %v586, %v583
      %v659 = vpack.c.b16 %v590, %v587
      %v660 = vpack.c.b16 %v591, %v588
      %v661 = vpack.c.b16 %v592, %v589
      %v662 = vpack.c.b16 %v596, %v593
      %v663 = vpack.c.b16 %v597, %v594
      %v664 = vpack.c.b16 %v598, %v595
      %v665 = vpack.c.b16 %v602, %v599
      %v666 = vpack.c.b16 %v603, %v600
      %v667 = vpack.c.b16 %v604, %v601
      %v668 = vpack.c.b16 %v608, %v605
      %v669 = vpack.c.b16 %v609, %v606
      %v670 = vpack.c.b16 %v610, %v607
      %v671 = vpack.c.b16 %v614, %v611
      %v672 = vpack.c.b16 %v615, %v612
      %v673 = vpack.c.b16 %v616, %v613
      %v674 = vpack.c.b16 %v620, %v617
      %v675 = vpack.c.b16 %v621, %v618
      %v676 = vpack.c.b16 %v622, %v619
      %vm731 = vcmask 261120
      %v733 = vsel %vm731, %v425, 0
      %v736 = vsel %vm731, %v428, 0
      %v739 = vsel %vm731, %v431, 0
      %v742 = vsel %vm731, %v434, 0
      %744 = vmatprep.subr.bf16.mxu0 %v645
      %745 = vmatpush1.bf16.msra.mxu0 %v644
      %746 = vmatprep.subr.bf16.mxu0 %v642
      %747 = vmatpush1.bf16.msra.mxu0 %v641
      %748 = vmatprep.subr.bf16.mxu0 %v639
      %749 = vmatpush1.bf16.msra.mxu0 %v638
      %750 = vmatprep.subr.bf16.mxu0 %v636
      %751 = vmatpush1.bf16.msra.mxu0 %v635
      %752 = vmatprep.subr.bf16.mxu0 %v633
      %753 = vmatpush1.bf16.msra.mxu0 %v632
      %754 = vmatprep.subr.bf16.mxu0 %v630
      %755 = vmatpush1.bf16.msra.mxu0 %v629
      %756 = vmatprep.subr.bf16.mxu0 %v627
      %757 = vmatpush1.bf16.msra.mxu0 %v626
      %758 = vmatprep.subr.bf16.mxu0 %v624
      %759 = vmatpush1.bf16.msra.mxu0 %v623
      %760 = vmatprep.subr.bf16.mxu0 %v669
      %761 = vmatpush2.bf16.msra.mxu0 %v668
      %762 = vmatprep.subr.bf16.mxu0 %v666
      %763 = vmatpush2.bf16.msra.mxu0 %v665
      %764 = vmatprep.subr.bf16.mxu0 %v663
      %765 = vmatpush2.bf16.msra.mxu0 %v662
      %766 = vmatprep.subr.bf16.mxu0 %v660
      %767 = vmatpush2.bf16.msra.mxu0 %v659
      %768 = vmatprep.subr.bf16.mxu0 %v657
      %769 = vmatpush2.bf16.msra.mxu0 %v656
      %770 = vmatprep.subr.bf16.mxu0 %v654
      %771 = vmatpush2.bf16.msra.mxu0 %v653
      %772 = vmatprep.subr.bf16.mxu0 %v651
      %773 = vmatpush2.bf16.msra.mxu0 %v650
      %774 = vmatprep.subr.bf16.mxu0 %v648
      %775 = vmatpush2.bf16.msra.mxu0 %v647
      %776 = vmatprep.mubr.bf16.mxu0 %v424
      %777 = vmatmul.mubr.bf16.gmra.mxu0 %v423
      %v778 = vpop.f32.mrf.mxu0
      %v779 = vadd.f32 0.0, %v778
      %v780 = vpop.f32.mrf.mxu0
      %v781 = vadd.f32 0.0, %v780
      %v782 = vpop.f32.mrf.mxu0
      %v783 = vadd.f32 0.0, %v782
      %v784 = vpop.f32.mrf.mxu0
      %v785 = vadd.f32 0.0, %v784
      %786 = vmatprep.mubr.bf16.mxu0 %v427
      %787 = vmatmul.mubr.bf16.gmra.mxu0 %v426
      %v788 = vpop.f32.mrf.mxu0
      %v789 = vadd.f32 0.0, %v788
      %v790 = vpop.f32.mrf.mxu0
      %v791 = vadd.f32 0.0, %v790
      %v792 = vpop.f32.mrf.mxu0
      %v793 = vadd.f32 0.0, %v792
      %v794 = vpop.f32.mrf.mxu0
      %v795 = vadd.f32 0.0, %v794
      %796 = vmatprep.mubr.bf16.mxu0 %v430
      %797 = vmatmul.mubr.bf16.gmra.mxu0 %v429
      %v798 = vpop.f32.mrf.mxu0
      %v799 = vadd.f32 0.0, %v798
      %v800 = vpop.f32.mrf.mxu0
      %v801 = vadd.f32 0.0, %v800
      %v802 = vpop.f32.mrf.mxu0
      %v803 = vadd.f32 0.0, %v802
      %v804 = vpop.f32.mrf.mxu0
      %v805 = vadd.f32 0.0, %v804
      %806 = vmatprep.mubr.bf16.mxu0 %v433
      %807 = vmatmul.mubr.bf16.gmra.mxu0 %v432
      %v808 = vpop.f32.mrf.mxu0
      %v809 = vadd.f32 0.0, %v808
      %v810 = vpop.f32.mrf.mxu0
      %v811 = vadd.f32 0.0, %v810
      %v812 = vpop.f32.mrf.mxu0
      %v813 = vadd.f32 0.0, %v812
      %v814 = vpop.f32.mrf.mxu0
      %v815 = vadd.f32 0.0, %v814
      %816 = vdwg.mxu0
      %817 = vmatprep.subr.bf16.mxu0 0
      %818 = vmatpush1.bf16.msra.mxu0 0
      %819 = vmatprep.subr.bf16.mxu0 0
      %820 = vmatpush1.bf16.msra.mxu0 0
      %821 = vmatprep.subr.bf16.mxu0 0
      %822 = vmatpush1.bf16.msra.mxu0 0
      %823 = vmatprep.subr.bf16.mxu0 0
      %824 = vmatpush1.bf16.msra.mxu0 0
      %825 = vmatprep.subr.bf16.mxu0 0
      %826 = vmatpush1.bf16.msra.mxu0 0
      %827 = vmatprep.subr.bf16.mxu0 0
      %828 = vmatpush1.bf16.msra.mxu0 0
      %829 = vmatprep.subr.bf16.mxu0 %v675
      %830 = vmatpush1.bf16.msra.mxu0 %v674
      %831 = vmatprep.subr.bf16.mxu0 %v672
      %832 = vmatpush1.bf16.msra.mxu0 %v671
      %833 = vmatprep.subr.bf16.mxu0 0
      %834 = vmatpush2.bf16.msra.mxu0 0
      %835 = vmatprep.subr.bf16.mxu0 0
      %836 = vmatpush2.bf16.msra.mxu0 0
      %837 = vmatprep.subr.bf16.mxu0 0
      %838 = vmatpush2.bf16.msra.mxu0 0
      %839 = vmatprep.subr.bf16.mxu0 0
      %840 = vmatpush2.bf16.msra.mxu0 0
      %841 = vmatprep.subr.bf16.mxu0 0
      %842 = vmatpush2.bf16.msra.mxu0 0
      %843 = vmatprep.subr.bf16.mxu0 0
      %844 = vmatpush2.bf16.msra.mxu0 0
      %845 = vmatprep.subr.bf16.mxu0 0
      %846 = vmatpush2.bf16.msra.mxu0 0
      %847 = vmatprep.subr.bf16.mxu0 0
      %848 = vmatpush2.bf16.msra.mxu0 0
      %849 = vmatprep.mubr.bf16.mxu0 0
      %850 = vmatmul.mubr.bf16.gmra.mxu0 %v733
      %v851 = vpop.f32.mrf.mxu0
      %v852 = vadd.f32 %v779, %v851
      %v853 = vpop.f32.mrf.mxu0
      %v854 = vadd.f32 %v781, %v853
      %v855 = vpop.f32.mrf.mxu0
      %v856 = vadd.f32 %v783, %v855
      %v857 = vpop.f32.mrf.mxu0
      %v858 = vadd.f32 %v785, %v857
      %859 = vmatprep.mubr.bf16.mxu0 0
      %860 = vmatmul.mubr.bf16.gmra.mxu0 %v736
      %v861 = vpop.f32.mrf.mxu0
      %v862 = vadd.f32 %v789, %v861
      %v863 = vpop.f32.mrf.mxu0
      %v864 = vadd.f32 %v791, %v863
      %v865 = vpop.f32.mrf.mxu0
      %v866 = vadd.f32 %v793, %v865
      %v867 = vpop.f32.mrf.mxu0
      %v868 = vadd.f32 %v795, %v867
      %869 = vmatprep.mubr.bf16.mxu0 0
      %870 = vmatmul.mubr.bf16.gmra.mxu0 %v739
      %v871 = vpop.f32.mrf.mxu0
      %v872 = vadd.f32 %v799, %v871
      %v873 = vpop.f32.mrf.mxu0
      %v874 = vadd.f32 %v801, %v873
      %v875 = vpop.f32.mrf.mxu0
      %v876 = vadd.f32 %v803, %v875
      %v877 = vpop.f32.mrf.mxu0
      %v878 = vadd.f32 %v805, %v877
      %879 = vmatprep.mubr.bf16.mxu0 0
      %880 = vmatmul.mubr.bf16.gmra.mxu0 %v742
      %v881 = vpop.f32.mrf.mxu0
      %v882 = vadd.f32 %v809, %v881
      %v883 = vpop.f32.mrf.mxu0
      %v884 = vadd.f32 %v811, %v883
      %v885 = vpop.f32.mrf.mxu0
      %v886 = vadd.f32 %v813, %v885
      %v887 = vpop.f32.mrf.mxu0
      %v888 = vadd.f32 %v815, %v887
      %889 = vdwg.mxu0
      %890 = vmatprep.subr.bf16.mxu0 0
      %891 = vmatpush1.bf16.msra.mxu0 %v646
      %892 = vmatprep.subr.bf16.mxu0 0
      %893 = vmatpush1.bf16.msra.mxu0 %v643
      %894 = vmatprep.subr.bf16.mxu0 0
      %895 = vmatpush1.bf16.msra.mxu0 %v640
      %896 = vmatprep.subr.bf16.mxu0 0
      %897 = vmatpush1.bf16.msra.mxu0 %v637
      %898 = vmatprep.subr.bf16.mxu0 0
      %899 = vmatpush1.bf16.msra.mxu0 %v634
      %900 = vmatprep.subr.bf16.mxu0 0
      %901 = vmatpush1.bf16.msra.mxu0 %v631
      %902 = vmatprep.subr.bf16.mxu0 0
      %903 = vmatpush1.bf16.msra.mxu0 %v628
      %904 = vmatprep.subr.bf16.mxu0 0
      %905 = vmatpush1.bf16.msra.mxu0 %v625
      %906 = vmatprep.subr.bf16.mxu0 0
      %907 = vmatpush2.bf16.msra.mxu0 %v670
      %908 = vmatprep.subr.bf16.mxu0 0
      %909 = vmatpush2.bf16.msra.mxu0 %v667
      %910 = vmatprep.subr.bf16.mxu0 0
      %911 = vmatpush2.bf16.msra.mxu0 %v664
      %912 = vmatprep.subr.bf16.mxu0 0
      %913 = vmatpush2.bf16.msra.mxu0 %v661
      %914 = vmatprep.subr.bf16.mxu0 0
      %915 = vmatpush2.bf16.msra.mxu0 %v658
      %916 = vmatprep.subr.bf16.mxu0 0
      %917 = vmatpush2.bf16.msra.mxu0 %v655
      %918 = vmatprep.subr.bf16.mxu0 0
      %919 = vmatpush2.bf16.msra.mxu0 %v652
      %920 = vmatprep.subr.bf16.mxu0 0
      %921 = vmatpush2.bf16.msra.mxu0 %v649
      %922 = vmatprep.mubr.bf16.mxu0 %v424
      %923 = vmatmul.mubr.bf16.gmra.mxu0 %v423
      %v924 = vpop.f32.mrf.mxu0
      %v925 = vadd.f32 0.0, %v924
      %v926 = vpop.f32.mrf.mxu0
      %v927 = vpop.f32.mrf.mxu0
      %v928 = vadd.f32 0.0, %v927
      %v929 = vpop.f32.mrf.mxu0
      %930 = vmatprep.mubr.bf16.mxu0 %v427
      %931 = vmatmul.mubr.bf16.gmra.mxu0 %v426
      %v932 = vpop.f32.mrf.mxu0
      %v933 = vadd.f32 0.0, %v932
      %v934 = vpop.f32.mrf.mxu0
      %v935 = vpop.f32.mrf.mxu0
      %v936 = vadd.f32 0.0, %v935
      %v937 = vpop.f32.mrf.mxu0
      %938 = vmatprep.mubr.bf16.mxu0 %v430
      %939 = vmatmul.mubr.bf16.gmra.mxu0 %v429
      %v940 = vpop.f32.mrf.mxu0
      %v941 = vadd.f32 0.0, %v940
      %v942 = vpop.f32.mrf.mxu0
      %v943 = vpop.f32.mrf.mxu0
      %v944 = vadd.f32 0.0, %v943
      %v945 = vpop.f32.mrf.mxu0
      %946 = vmatprep.mubr.bf16.mxu0 %v433
      %947 = vmatmul.mubr.bf16.gmra.mxu0 %v432
      %v948 = vpop.f32.mrf.mxu0
      %v949 = vadd.f32 0.0, %v948
      %v950 = vpop.f32.mrf.mxu0
      %v951 = vpop.f32.mrf.mxu0
      %v952 = vadd.f32 0.0, %v951
      %v953 = vpop.f32.mrf.mxu0
      %954 = vdwg.mxu0
      %955 = vmatprep.subr.bf16.mxu0 0
      %956 = vmatpush1.bf16.msra.mxu0 0
      %957 = vmatprep.subr.bf16.mxu0 0
      %958 = vmatpush1.bf16.msra.mxu0 0
      %959 = vmatprep.subr.bf16.mxu0 0
      %960 = vmatpush1.bf16.msra.mxu0 0
      %961 = vmatprep.subr.bf16.mxu0 0
      %962 = vmatpush1.bf16.msra.mxu0 0
      %963 = vmatprep.subr.bf16.mxu0 0
      %964 = vmatpush1.bf16.msra.mxu0 0
      %965 = vmatprep.subr.bf16.mxu0 0
      %966 = vmatpush1.bf16.msra.mxu0 0
      %967 = vmatprep.subr.bf16.mxu0 0
      %968 = vmatpush1.bf16.msra.mxu0 %v676
      %969 = vmatprep.subr.bf16.mxu0 0
      %970 = vmatpush1.bf16.msra.mxu0 %v673
      %971 = vmatprep.subr.bf16.mxu0 0
      %972 = vmatpush2.bf16.msra.mxu0 0
      %973 = vmatprep.subr.bf16.mxu0 0
      %974 = vmatpush2.bf16.msra.mxu0 0
      %975 = vmatprep.subr.bf16.mxu0 0
      %976 = vmatpush2.bf16.msra.mxu0 0
      %977 = vmatprep.subr.bf16.mxu0 0
      %978 = vmatpush2.bf16.msra.mxu0 0
      %979 = vmatprep.subr.bf16.mxu0 0
      %980 = vmatpush2.bf16.msra.mxu0 0
      %981 = vmatprep.subr.bf16.mxu0 0
      %982 = vmatpush2.bf16.msra.mxu0 0
      %983 = vmatprep.subr.bf16.mxu0 0
      %984 = vmatpush2.bf16.msra.mxu0 0
      %985 = vmatprep.subr.bf16.mxu0 0
      %986 = vmatpush2.bf16.msra.mxu0 0
      %987 = vmatprep.mubr.bf16.mxu0 0
      %988 = vmatmul.mubr.bf16.gmra.mxu0 %v733
      %v989 = vpop.f32.mrf.mxu0
      %v990 = vadd.f32 %v925, %v989
      %v991 = vpop.f32.mrf.mxu0
      %v992 = vpop.f32.mrf.mxu0
      %v993 = vadd.f32 %v928, %v992
      %v994 = vpop.f32.mrf.mxu0
      %995 = vmatprep.mubr.bf16.mxu0 0
      %996 = vmatmul.mubr.bf16.gmra.mxu0 %v736
      %v997 = vpop.f32.mrf.mxu0
      %v998 = vadd.f32 %v933, %v997
      %v999 = vpop.f32.mrf.mxu0
      %v1000 = vpop.f32.mrf.mxu0
      %v1001 = vadd.f32 %v936, %v1000
      %v1002 = vpop.f32.mrf.mxu0
      %1003 = vmatprep.mubr.bf16.mxu0 0
      %1004 = vmatmul.mubr.bf16.gmra.mxu0 %v739
      %v1005 = vpop.f32.mrf.mxu0
      %v1006 = vadd.f32 %v941, %v1005
      %v1007 = vpop.f32.mrf.mxu0
      %v1008 = vpop.f32.mrf.mxu0
      %v1009 = vadd.f32 %v944, %v1008
      %v1010 = vpop.f32.mrf.mxu0
      %1011 = vmatprep.mubr.bf16.mxu0 0
      %1012 = vmatmul.mubr.bf16.gmra.mxu0 %v742
      %v1013 = vpop.f32.mrf.mxu0
      %v1014 = vadd.f32 %v949, %v1013
      %v1015 = vpop.f32.mrf.mxu0
      %v1016 = vpop.f32.mrf.mxu0
      %v1017 = vadd.f32 %v952, %v1016
      %v1018 = vpop.f32.mrf.mxu0
      %1019 = vdwg.mxu0
      %v1020 = vadd.f32 %v271, %v852
      %v1021 = vadd.f32 %v272, %v854
      %v1022 = vadd.f32 %v273, %v990
      %v1023 = vadd.f32 %v274, %v856
      %v1024 = vadd.f32 %v275, %v858
      %v1025 = vadd.f32 %v276, %v993
      %v1026 = vadd.f32 %v277, %v862
      %v1027 = vadd.f32 %v278, %v864
      %v1028 = vadd.f32 %v279, %v998
      %v1029 = vadd.f32 %v280, %v866
      %v1030 = vadd.f32 %v281, %v868
      %v1031 = vadd.f32 %v282, %v1001
      %v1032 = vadd.f32 %v283, %v872
      %v1033 = vadd.f32 %v284, %v874
      %v1034 = vadd.f32 %v285, %v1006
      %v1035 = vadd.f32 %v286, %v876
      %v1036 = vadd.f32 %v287, %v878
      %v1037 = vadd.f32 %v288, %v1009
      %v1038 = vadd.f32 %v289, %v882
      %v1039 = vadd.f32 %v290, %v884
      %v1040 = vadd.f32 %v291, %v1014
      %v1041 = vadd.f32 %v292, %v886
      %v1042 = vadd.f32 %v293, %v888
      %v1043 = vadd.f32 %v294, %v1017
      %1044 = vst [vmem:[#allocation2] sm:$0xff] %v1020
      %1045 = vst [vmem:[#allocation2 + $0x8] sm:$0xff] %v1021
      %1046 = vst.msk [vmem:[#allocation2 + $0x10] sm:$0xff] %vm731, %v1022
      %1047 = vst [vmem:[#allocation2 + $0x18] sm:$0xff] %v1023
      %1048 = vst [vmem:[#allocation2 + $0x20] sm:$0xff] %v1024
      %1049 = vst.msk [vmem:[#allocation2 + $0x28] sm:$0xff] %vm731, %v1025
      %1050 = vst [vmem:[#allocation2 + $0x30] sm:$0xff] %v1026
      %1051 = vst [vmem:[#allocation2 + $0x38] sm:$0xff] %v1027
      %1052 = vst.msk [vmem:[#allocation2 + $0x40] sm:$0xff] %vm731, %v1028
      %1053 = vst [vmem:[#allocation2 + $0x48] sm:$0xff] %v1029
      %1054 = vst [vmem:[#allocation2 + $0x50] sm:$0xff] %v1030
      %1055 = vst.msk [vmem:[#allocation2 + $0x58] sm:$0xff] %vm731, %v1031
      %1056 = vst [vmem:[#allocation2 + $0x60] sm:$0xff] %v1032
      %1057 = vst [vmem:[#allocation2 + $0x68] sm:$0xff] %v1033
      %1058 = vst.msk [vmem:[#allocation2 + $0x70] sm:$0xff] %vm731, %v1034
      %1059 = vst [vmem:[#allocation2 + $0x78] sm:$0xff] %v1035
      %1060 = vst [vmem:[#allocation2 + $0x80] sm:$0xff] %v1036
      %1061 = vst.msk [vmem:[#allocation2 + $0x88] sm:$0xff] %vm731, %v1037
      %1062 = vst [vmem:[#allocation2 + $0x90] sm:$0xff] %v1038
      %1063 = vst [vmem:[#allocation2 + $0x98] sm:$0xff] %v1039
      %1064 = vst.msk [vmem:[#allocation2 + $0xa0] sm:$0xff] %vm731, %v1040
      %1065 = vst [vmem:[#allocation2 + $0xa8] sm:$0xff] %v1041
      %1066 = vst [vmem:[#allocation2 + $0xb0] sm:$0xff] %v1042
      %1067 = vst.msk [vmem:[#allocation2 + $0xb8] sm:$0xff] %vm731, %v1043
      %p1068 = scmp.eq.s32.totalorder %s21, 2
      // Predicated region
      $region37: #{mixed4e_forward.9} parent=31 // pred_check
        %p1069 = pneg %p1068
      $region38: #{mixed4e_forward.9} parent=31 // pred_check_branch
        %1071 = sbr.rel (%p1069) target = $region40
      $region39: #{mixed4e_forward.9} parent=31 // pred_region
        %v1072 = vld [vmem:[#allocation2] sm:$0xff]
        %v1073 = vld [vmem:[#allocation2 + $0x8] sm:$0xff]
        %v1074 = vld [vmem:[#allocation2 + $0x10] sm:$0xff]
        %v1075 = vld [vmem:[#allocation2 + $0x18] sm:$0xff]
        %v1076 = vld [vmem:[#allocation2 + $0x20] sm:$0xff]
        %v1077 = vld [vmem:[#allocation2 + $0x28] sm:$0xff]
        %v1078 = vld [vmem:[#allocation2 + $0x30] sm:$0xff]
        %v1079 = vld [vmem:[#allocation2 + $0x38] sm:$0xff]
        %v1080 = vld [vmem:[#allocation2 + $0x40] sm:$0xff]
        %v1081 = vld [vmem:[#allocation2 + $0x48] sm:$0xff]
        %v1082 = vld [vmem:[#allocation2 + $0x50] sm:$0xff]
        %v1083 = vld [vmem:[#allocation2 + $0x58] sm:$0xff]
        %v1084 = vld [vmem:[#allocation2 + $0x60] sm:$0xff]
        %v1085 = vld [vmem:[#allocation2 + $0x68] sm:$0xff]
        %v1086 = vld [vmem:[#allocation2 + $0x70] sm:$0xff]
        %v1087 = vld [vmem:[#allocation2 + $0x78] sm:$0xff]
        %v1088 = vld [vmem:[#allocation2 + $0x80] sm:$0xff]
        %v1089 = vld [vmem:[#allocation2 + $0x88] sm:$0xff]
        %v1090 = vld [vmem:[#allocation2 + $0x90] sm:$0xff]
        %v1091 = vld [vmem:[#allocation2 + $0x98] sm:$0xff]
        %v1092 = vld [vmem:[#allocation2 + $0xa0] sm:$0xff]
        %v1093 = vld [vmem:[#allocation2 + $0xa8] sm:$0xff]
        %v1094 = vld [vmem:[#allocation2 + $0xb0] sm:$0xff]
        %v1095 = vld [vmem:[#allocation2 + $0xb8] sm:$0xff]
        %v1096 = vld [vmem:[%s2] sm:$0x7]
        %v1098 = vlaneseq
        %v1099 = vshrl.u32 %v1098, 7
        %v1100 = vsub.s32 0, %v1099
        %v1101 = vrot.slane %v1096, %v1100
        %v1102 = vlaneseq
        %v1103 = vshrl.u32 %v1102, 7
        %v1104 = vsub.s32 1, %v1103
        %v1105 = vrot.slane %v1096, %v1104
        %v1106 = vlaneseq
        %v1107 = vshrl.u32 %v1106, 7
        %v1108 = vsub.s32 2, %v1107
        %v1109 = vrot.slane %v1096, %v1108
        %v1113 = vadd.f32 %v1072, %v1101
        %v1114 = vadd.f32 %v1073, %v1105
        %v1115 = vadd.f32 %v1074, %v1109
        %v1116 = vadd.f32 %v1075, %v1101
        %v1117 = vadd.f32 %v1076, %v1105
        %v1118 = vadd.f32 %v1077, %v1109
        %v1119 = vadd.f32 %v1078, %v1101
        %v1120 = vadd.f32 %v1079, %v1105
        %v1121 = vadd.f32 %v1080, %v1109
        %v1122 = vadd.f32 %v1081, %v1101
        %v1123 = vadd.f32 %v1082, %v1105
        %v1124 = vadd.f32 %v1083, %v1109
        %v1125 = vadd.f32 %v1084, %v1101
        %v1126 = vadd.f32 %v1085, %v1105
        %v1127 = vadd.f32 %v1086, %v1109
        %v1128 = vadd.f32 %v1087, %v1101
        %v1129 = vadd.f32 %v1088, %v1105
        %v1130 = vadd.f32 %v1089, %v1109
        %v1131 = vadd.f32 %v1090, %v1101
        %v1132 = vadd.f32 %v1091, %v1105
        %v1133 = vadd.f32 %v1092, %v1109
        %v1134 = vadd.f32 %v1093, %v1101
        %v1135 = vadd.f32 %v1094, %v1105
        %v1136 = vadd.f32 %v1095, %v1109
        %v1137 = vmax.f32 %v1113, 0.0
        %v1138 = vmax.f32 %v1114, 0.0
        %v1139 = vmax.f32 %v1115, 0.0
        %v1140 = vmax.f32 %v1116, 0.0
        %v1141 = vmax.f32 %v1117, 0.0
        %v1142 = vmax.f32 %v1118, 0.0
        %v1143 = vmax.f32 %v1119, 0.0
        %v1144 = vmax.f32 %v1120, 0.0
        %v1145 = vmax.f32 %v1121, 0.0
        %v1146 = vmax.f32 %v1122, 0.0
        %v1147 = vmax.f32 %v1123, 0.0
        %v1148 = vmax.f32 %v1124, 0.0
        %v1149 = vmax.f32 %v1125, 0.0
        %v1150 = vmax.f32 %v1126, 0.0
        %v1151 = vmax.f32 %v1127, 0.0
        %v1152 = vmax.f32 %v1128, 0.0
        %v1153 = vmax.f32 %v1129, 0.0
        %v1154 = vmax.f32 %v1130, 0.0
        %v1155 = vmax.f32 %v1131, 0.0
        %v1156 = vmax.f32 %v1132, 0.0
        %v1157 = vmax.f32 %v1133, 0.0
        %v1158 = vmax.f32 %v1134, 0.0
        %v1159 = vmax.f32 %v1135, 0.0
        %v1160 = vmax.f32 %v1136, 0.0
        %1161 = vst [vmem:[%s240] sm:$0xff] %v1137
        %1162 = vst [vmem:[%s240 + $0x8] sm:$0xff] %v1138
        %1163 = vst.msk [vmem:[%s240 + $0x10] sm:$0xff] %vm731, %v1139
        %1164 = vst [vmem:[%s240 + $0x18] sm:$0xff] %v1140
        %1165 = vst [vmem:[%s240 + $0x20] sm:$0xff] %v1141
        %1166 = vst.msk [vmem:[%s240 + $0x28] sm:$0xff] %vm731, %v1142
        %1167 = vst [vmem:[%s240 + $0x30] sm:$0xff] %v1143
        %1168 = vst [vmem:[%s240 + $0x38] sm:$0xff] %v1144
        %1169 = vst.msk [vmem:[%s240 + $0x40] sm:$0xff] %vm731, %v1145
        %1170 = vst [vmem:[%s240 + $0x48] sm:$0xff] %v1146
        %1171 = vst [vmem:[%s240 + $0x50] sm:$0xff] %v1147
        %1172 = vst.msk [vmem:[%s240 + $0x58] sm:$0xff] %vm731, %v1148
        %1173 = vst [vmem:[%s240 + $0x60] sm:$0xff] %v1149
        %1174 = vst [vmem:[%s240 + $0x68] sm:$0xff] %v1150
        %1175 = vst.msk [vmem:[%s240 + $0x70] sm:$0xff] %vm731, %v1151
        %1176 = vst [vmem:[%s240 + $0x78] sm:$0xff] %v1152
        %1177 = vst [vmem:[%s240 + $0x80] sm:$0xff] %v1153
        %1178 = vst.msk [vmem:[%s240 + $0x88] sm:$0xff] %vm731, %v1154
        %1179 = vst [vmem:[%s240 + $0x90] sm:$0xff] %v1155
        %1180 = vst [vmem:[%s240 + $0x98] sm:$0xff] %v1156
        %1181 = vst.msk [vmem:[%s240 + $0xa0] sm:$0xff] %vm731, %v1157
        %1182 = vst [vmem:[%s240 + $0xa8] sm:$0xff] %v1158
        %1183 = vst [vmem:[%s240 + $0xb0] sm:$0xff] %v1159
        %1184 = vst.msk [vmem:[%s240 + $0xb8] sm:$0xff] %vm731, %v1160
      $region40: #{mixed4e_forward.9} parent=31 // pred_fallthru
        _
      %p1185 = scmp.lt.s32.totalorder %s19, 1
      %s1186 = scalar_select %p1185, %s19, 1
      %p1187 = scmp.lt.s32.totalorder %s20, 3
      %s1188 = scalar_select %p1187, %s20, 3
      %s1189 = smul.addr %s1188, 24
      %s1190 = smul.addr %s1186, 96
      %s1191 = sadd.s32 %s1189, %s1190
      %s1192 = smul.addr %s1191, 8
      %s1193 = scalar_lea.vmem %s3, %s1192
      // Predicated region
      $region41: #{mixed4e_forward.9} parent=31 // pred_check
        %p1194 = pneg %p130
      $region42: #{mixed4e_forward.9} parent=31 // pred_check_branch
        %1196 = sbr.rel (%p1194) target = $region44
      $region43: #{mixed4e_forward.9} parent=31 // pred_region
        _
      $region44: #{mixed4e_forward.9} parent=31 // pred_fallthru
        _
    $region32: #{mixed4e_forward.9} parent=5 // pred_fallthru
      _
    %p1197 = scmp.le.s32.totalorder 2, %s9
    // Predicated region
    $region45: #{mixed4e_forward.9} parent=5 // pred_check
      %p1198 = pneg %p1197
    $region46: #{mixed4e_forward.9} parent=5 // pred_check_branch
      %1200 = sbr.rel (%p1198) target = $region48
    $region47: #{mixed4e_forward.9} parent=5 // pred_region
      %s1201 = ssub.s32 %s9, 2
      // Predicated region
      $region49: #{mixed4e_forward.9} parent=47 // pred_check
        %p1202 = pneg %p136
      $region50: #{mixed4e_forward.9} parent=47 // pred_check_branch
        %1204 = sbr.rel (%p1202) target = $region52
      $region51: #{mixed4e_forward.9} parent=47 // pred_region
        %p1205 = scmp.lt.s32.totalorder %s22, 1
        %s1206 = scalar_select %p1205, %s22, 1
        %p1207 = scmp.lt.s32.totalorder %s23, 3
        %s1208 = scalar_select %p1207, %s23, 3
        %s1209 = smul.addr %s1208, 24
        %s1210 = smul.addr %s1206, 96
        %s1211 = sadd.s32 %s1209, %s1210
        %s1212 = smul.addr %s1211, 8
        %s1213 = scalar_lea.vmem %s3, %s1212
      $region52: #{mixed4e_forward.9} parent=47 // pred_fallthru
        _
    $region48: #{mixed4e_forward.9} parent=5 // pred_fallthru
      _
  $region6: #{mixed4e_forward.9} parent=0 // loop_footer
    %s13 = sadd.s32 1, %s9
  $region7: #{mixed4e_forward.9} parent=0 // loop_footer_branch
    %8 = sbr.rel target = $region3
  $region8: #{mixed4e_forward.9} parent=0 // loop_exit
    _

</llo_original>
